<compile_context>
chip_gen: v6e
topology: v6e:2x2x1
jax: 0.10.0
libtpu: 0.0.40
codegen_flags: <defaults>
</compile_context>

<pallas_src>
import math
from functools import partial

import numpy as np
import jax
import jax.numpy as jnp
from jax.experimental import pallas as pl
from jax.experimental.pallas import tpu as pltpu

F32 = jnp.float32
BF16 = jnp.bfloat16


# --------------------------------------------------------------------------------------
# In-kernel helpers (pure jnp / pltpu, traced inside Pallas kernels)
# --------------------------------------------------------------------------------------
def _dot(a, w):
    """MXU matmul: activations cast to bf16, weights already bf16, f32 accumulation."""
    return jnp.dot(a.astype(BF16), w, preferred_element_type=F32)


def _erf(x):
    # Abramowitz & Stegun 7.1.26 (|err| <= 1.5e-7): keeps PyTorch's exact-erf gelu
    # semantics without relying on an erf lowering inside Mosaic.
    a1, a2, a3, a4, a5 = 0.254829592, -0.284496736, 1.421413741, -1.453152027, 1.061405429
    p = 0.3275911
    sgn = jnp.where(x >= 0.0, 1.0, -1.0)
    z = jnp.abs(x)
    t = 1.0 / (1.0 + p * z)
    poly = ((((a5 * t + a4) * t + a3) * t + a2) * t + a1) * t
    return sgn * (1.0 - poly * jnp.exp(-z * z))


def _gelu(x):
    return 0.5 * x * (1.0 + _erf(x * 0.7071067811865476))


def _roll_t(x, shift):
    """Circular roll along time (axis 0): out[t] = x[(t - shift) % L].
       Static shifts map onto the XLU via pltpu.roll; slice+concat fallback only for
       time lengths that are not sublane (8) aligned."""
    L = x.shape[0]
    s = shift % L
    if s == 0:
        return x
    if L % 8 == 0:
        return pltpu.roll(x, s, axis=0)
    return jnp.concatenate([x[L - s:, :], x[:L - s, :]], axis=0)


def _corr_from_qk(q, k):
    """corr[tau] = sum_t <Q[t,:], K[(t-tau)%L,:]>
       (== the reference's irfft(rfft(Q)*conj(rfft(K))) summed over head channels).
       One MXU matmul S = Q K^T, then a log2(L)-step wrapped-diagonal alignment
       (static sublane rotations, selected per column by the column-index bits) and one
       lane reduction.  Returns an (L, 1) column."""
    L = q.shape[0]
    s = jax.lax.dot_general(q.astype(BF16), k.astype(BF16),
                            (((1,), (1,)), ((), ())),
                            preferred_element_type=F32)          # S[t, u] = Q[t] . K[u]
    col = jax.lax.broadcasted_iota(jnp.int32, (L, L), 1)
    w = s
    bit = 0
    while (1 << bit) < L:
        rolled = _roll_t(w, -(1 << bit))        # rolled[r, :] = w[(r + 2^bit) % L, :]
        w = jnp.where(((col >> bit) & 1) == 1, rolled, w)
        bit += 1
    # w[r, u] = S[(r + u) % L, u]  =>  corr[tau] = sum_u w[tau, u]
    return jnp.sum(w, axis=1, keepdims=True)


def _my_layernorm(x, g, b):
    """my_Layernorm: LayerNorm over channels then subtract the time-mean. x: (L, d)."""
    mu = jnp.mean(x, axis=1, keepdims=True)
    xc = x - mu
    var = jnp.mean(xc * xc, axis=1, keepdims=True)
    xhat = xc * jax.lax.rsqrt(var + 1e-5) * g + b
    return xhat - jnp.mean(xhat, axis=0, keepdims=True)


def _agg_topk(vd_scr, v, dly_ref, wts_ref, b, top_k):
    """time_delay_agg_inference: agg[t,:] = sum_i w[b,i] * V[(t + delay[b,i]) % L, :],
       realized as k dynamic-start slices of a time-doubled VMEM copy of V.
       delays / softmaxed weights are SMEM scalars (no HBM (L,L) matrix, no gather HLO)."""
    L, d = v.shape
    vd_scr[pl.ds(0, L), :] = v
    vd_scr[pl.ds(L, L), :] = v
    agg = jnp.zeros((L, d), F32)
    for i in range(top_k):
        agg = agg + wts_ref[b, i] * vd_scr[pl.ds(dly_ref[b, i], L), :]
    return agg


# --------------------------------------------------------------------------------------
# Fused Pallas kernels (grid-less; static loop over the folded batch inside the body)
# --------------------------------------------------------------------------------------
def _embed_kernel(x_ref, xm_ref, tok_w_ref, time_w_ref, o_ref):
    """DataEmbedding_wo_pos: 3-tap circular TokenEmbedding conv (taps built with XLU rolls)
       + TimeFeatureEmbedding linear, both on the MXU."""
    B = x_ref.shape[0]
    for b in range(B):
        x = x_ref[b]                                                        # (L, c_in)
        xcat = jnp.concatenate([_roll_t(x, 1), x, _roll_t(x, -1)], axis=1)  # (L, 3*c_in)
        o_ref[b] = _dot(xcat, tok_w_ref[...]) + _dot(xm_ref[b], time_w_ref[...])


def _self_core_kernel(x_ref, wqkv_ref, bqkv_ref, v_ref, corr_ref, *, d_model):
    """Self-attention core: one fused (L,d)x(d,3d) Q|K|V projection + MXU auto-correlation."""
    B = x_ref.shape[0]
    inv_d = 1.0 / d_model
    for b in range(B):
        qkv = _dot(x_ref[b], wqkv_ref[...]) + bqkv_ref[...]                 # (L, 3d)
        q = qkv[:, :d_model]
        k = qkv[:, d_model:2 * d_model]
        v_ref[b] = qkv[:, 2 * d_model:]
        corr_ref[b] = _corr_from_qk(q, k) * inv_d                           # (L, 1)


def _enc_tail_kernel(dly_ref, wts_ref, v_ref, x_ref, wo_ref, bo_ref, ma_ref,
                     w1_ref, w2_ref, ng_ref, nb_ref, o_ref, vd_scr, *, top_k, do_norm):
    """Encoder layer tail: top-k delay aggregation (SMEM-scalar driven), out-proj, residual,
       series_decomp (banded MXU moving average), gelu FFN, decomp; optional fused
       my_Layernorm for the last encoder layer."""
    B = x_ref.shape[0]
    for b in range(B):
        agg = _agg_topk(vd_scr, v_ref[b], dly_ref, wts_ref, b, top_k)
        x1 = x_ref[b] + _dot(agg, wo_ref[...]) + bo_ref[...]
        s1 = x1 - jnp.dot(ma_ref[...], x1, preferred_element_type=F32)
        y = _dot(_gelu(_dot(s1, w1_ref[...])), w2_ref[...])
        x2 = s1 + y
        out = x2 - jnp.dot(ma_ref[...], x2, preferred_element_type=F32)
        if do_norm:
            out = _my_layernorm(out, ng_ref[...], nb_ref[...])
        o_ref[b] = out


def _dec_mid_kernel(dly_ref, wts_ref, v_ref, x_ref, cross_ref, wo_ref, bo_ref, ma_ref,
                    wq_ref, bq_ref, wkv_ref, bkv_ref,
                    s1_ref, t1_ref, vc_ref, corrc_ref, vd_scr, *, top_k, d_model):
    """Decoder: self-attention tail (aggregate, out-proj, residual, decomp1) fused with the
       cross-attention core (Q from s1, fused K|V from enc_out, MXU auto-correlation)."""
    B, L, _ = x_ref.shape
    S = cross_ref.shape[1]
    s_keep = min(S, L)
    inv_d = 1.0 / d_model
    for b in range(B):
        agg = _agg_topk(vd_scr, v_ref[b], dly_ref, wts_ref, b, top_k)
        x1 = x_ref[b] + _dot(agg, wo_ref[...]) + bo_ref[...]
        ma = jnp.dot(ma_ref[...], x1, preferred_element_type=F32)
        s1 = x1 - ma
        s1_ref[b] = s1
        t1_ref[b] = ma
        # cross-attention projections
        q = _dot(s1, wq_ref[...]) + bq_ref[...]
        xkv = cross_ref[b]
        if s_keep < S:
            xkv = xkv[:s_keep, :]
        kv = _dot(xkv, wkv_ref[...]) + bkv_ref[...]
        kc = kv[:, :d_model]
        vc = kv[:, d_model:]
        if s_keep < L:     # zero-pad the *projected* K/V (matches the reference)
            zpad = jnp.zeros((L - s_keep, d_model), F32)
            kc = jnp.concatenate([kc, zpad], axis=0)
            vc = jnp.concatenate([vc, zpad], axis=0)
        vc_ref[b] = vc
        corrc_ref[b] = _corr_from_qk(q, kc) * inv_d


def _dec_cross_common(dly_ref, wts_ref, vc_ref, s1_ref, t1_ref, wo_ref, bo_ref, ma_ref,
                      w1_ref, w2_ref, trend_w_ref, vd_scr, b, top_k):
    """Decoder layer after cross-attention: aggregate, out-proj, residual, decomp2, FFN,
       decomp3, trend accumulation + 3-tap circular trend projection (d_model -> c_out)."""
    agg = _agg_topk(vd_scr, vc_ref[b], dly_ref, wts_ref, b, top_k)
    x2 = s1_ref[b] + _dot(agg, wo_ref[...]) + bo_ref[...]
    ma2 = jnp.dot(ma_ref[...], x2, preferred_element_type=F32)
    s2 = x2 - ma2
    y = _dot(_gelu(_dot(s2, w1_ref[...])), w2_ref[...])
    x3 = s2 + y
    ma3 = jnp.dot(ma_ref[...], x3, preferred_element_type=F32)
    s3 = x3 - ma3
    trend = t1_ref[b] + ma2 + ma3
    tcat = jnp.concatenate([_roll_t(trend, 1), trend, _roll_t(trend, -1)], axis=1)
    rtrend = _dot(tcat, trend_w_ref[...])
    return s3, rtrend


def _dec_cross_tail_kernel(dly_ref, wts_ref, vc_ref, s1_ref, t1_ref, wo_ref, bo_ref, ma_ref,
                           w1_ref, w2_ref, trend_w_ref, s_ref, tr_ref, vd_scr, *, top_k):
    """Non-final decoder layer: emits (seasonal, residual_trend)."""
    B = s1_ref.shape[0]
    for b in range(B):
        s3, rtrend = _dec_cross_common(dly_ref, wts_ref, vc_ref, s1_ref, t1_ref, wo_ref,
                                       bo_ref, ma_ref, w1_ref, w2_ref, trend_w_ref,
                                       vd_scr, b, top_k)
        s_ref[b] = s3
        tr_ref[b] = rtrend


def _dec_cross_final_kernel(dly_ref, wts_ref, vc_ref, s1_ref, t1_ref, wo_ref, bo_ref, ma_ref,
                            w1_ref, w2_ref, trend_w_ref, trend_in_ref, ng_ref, nb_ref,
                            wp_ref, bp_ref, o_ref, vd_scr, *, top_k):
    """Last decoder layer: cross tail fused with the decoder norm, the final Linear
       projection and the trend addition -> final (B, L, c_out) output."""
    B = s1_ref.shape[0]
    for b in range(B):
        s3, rtrend = _dec_cross_common(dly_ref, wts_ref, vc_ref, s1_ref, t1_ref, wo_ref,
                                       bo_ref, ma_ref, w1_ref, w2_ref, trend_w_ref,
                                       vd_scr, b, top_k)
        xhat = _my_layernorm(s3, ng_ref[...], nb_ref[...])
        o_ref[b] = trend_in_ref[b] + rtrend + _dot(xhat, wp_ref[...]) + bp_ref[...]


# --------------------------------------------------------------------------------------
# Grid-less pallas_call wrapper: whole (batch-folded) problem per invocation
# --------------------------------------------------------------------------------------
def _call(kernel, inputs, smem, out_shapes, scratch=()):
    in_specs = [
        pl.BlockSpec(memory_space=pltpu.MemorySpace.SMEM) if is_smem
        else pl.BlockSpec(memory_space=pltpu.MemorySpace.VMEM)
        for is_smem in smem
    ]
    out_specs = tuple(pl.BlockSpec(memory_space=pltpu.MemorySpace.VMEM) for _ in out_shapes)
    out_shape = tuple(jax.ShapeDtypeStruct(tuple(s), dt) for s, dt in out_shapes)
    if len(out_shapes) == 1:
        out_specs, out_shape = out_specs[0], out_shape[0]
    return pl.pallas_call(
        kernel,
        in_specs=in_specs,
        out_specs=out_specs,
        out_shape=out_shape,
        scratch_shapes=list(scratch),
    )(*inputs)


# --------------------------------------------------------------------------------------
# Model blocks (XLA glue is tiny: initial decomp, top-k selection, trend accumulation)
# --------------------------------------------------------------------------------------
def series_decomp_jax(x, k):
    """Initial decomposition of the raw encoder input (tiny; kept in plain JAX)."""
    pad = (k - 1) // 2
    L = x.shape[1]
    front = jnp.repeat(x[:, :1, :], pad, axis=1)
    end = jnp.repeat(x[:, -1:, :], pad, axis=1)
    xp = jnp.concatenate([front, x, end], axis=1)
    trend = sum(xp[:, o:o + L, :] for o in range(k)) / float(k)
    return x - trend, trend


def build_ma_matrix(L, k):
    """Banded (L, L) matrix equal to replicate-pad + AvgPool1d(k, stride=1): applied on the
       MXU inside the tail kernels (review item 8)."""
    pad = (k - 1) // 2
    a = np.zeros((L, L), np.float32)
    for t in range(L):
        for j in range(k):
            s = min(max(t + j - pad, 0), L - 1)
            a[t, s] += 1.0 / k
    return jnp.asarray(a)


def topk_delays(corr, factor):
    # TODO(synk): lax.top_k has no Pallas TPU lowering; per the review's Option B the (B, k)
    # delay selection + softmax stay in XLA and are fed to the tail kernels as SMEM scalars.
    B, L = corr.shape
    k = max(min(int(factor * math.log(L)), L), 1)
    w, dly = jax.lax.top_k(corr, k)
    return dly.astype(jnp.int32), jax.nn.softmax(w, axis=-1).astype(F32)


def data_embedding(x, x_mark, emb):
    B, L, _ = x.shape
    d_model = emb["time_w"].shape[1]
    return _call(_embed_kernel,
                 [x, x_mark, emb["token_w"], emb["time_w"]],
                 [False, False, False, False],
                 [((B, L, d_model), F32)])


def encoder_layer(x, lp, ma_mat, factor, norm_g, norm_b, do_norm):
    B, L, d = x.shape
    a = lp["attn"]
    v, corr = _call(partial(_self_core_kernel, d_model=d),
                    [x, a["wqkv"], a["bqkv"]],
                    [False, False, False],
                    [((B, L, d), F32), ((B, L, 1), F32)])
    dly, wts = topk_delays(corr[:, :, 0], factor)
    return _call(partial(_enc_tail_kernel, top_k=dly.shape[1], do_norm=do_norm),
                 [dly, wts, v, x, a["wo"], a["bo"], ma_mat,
                  lp["ff_w1"], lp["ff_w2"], norm_g, norm_b],
                 [True, True] + [False] * 9,
                 [((B, L, d), F32)],
                 scratch=[pltpu.VMEM((2 * L, d), F32)])


def decoder_layer(x, cross, lp, ma_mat, factor, *, final, trend_in=None,
                  norm_g=None, norm_b=None, proj_w=None, proj_b=None):
    B, L, d = x.shape
    c_out = lp["trend_w"].shape[1]
    sa, ca = lp["self_attn"], lp["cross_attn"]

    v_s, corr_s = _call(partial(_self_core_kernel, d_model=d),
                        [x, sa["wqkv"], sa["bqkv"]],
                        [False, False, False],
                        [((B, L, d), F32), ((B, L, 1), F32)])
    dly_s, wts_s = topk_delays(corr_s[:, :, 0], factor)

    s1, t1, v_c, corr_c = _call(
        partial(_dec_mid_kernel, top_k=dly_s.shape[1], d_model=d),
        [dly_s, wts_s, v_s, x, cross, sa["wo"], sa["bo"], ma_mat,
         ca["wq"], ca["bq"], ca["wkv"], ca["bkv"]],
        [True, True] + [False] * 10,
        [((B, L, d), F32), ((B, L, d), F32), ((B, L, d), F32), ((B, L, 1), F32)],
        scratch=[pltpu.VMEM((2 * L, d), F32)])
    dly_c, wts_c = topk_delays(corr_c[:, :, 0], factor)

    if final:
        out = _call(partial(_dec_cross_final_kernel, top_k=dly_c.shape[1]),
                    [dly_c, wts_c, v_c, s1, t1, ca["wo"], ca["bo"], ma_mat,
                     lp["ff_w1"], lp["ff_w2"], lp["trend_w"],
                     trend_in, norm_g, norm_b, proj_w, proj_b],
                    [True, True] + [False] * 14,
                    [((B, L, c_out), F32)],
                    scratch=[pltpu.VMEM((2 * L, d), F32)])
        return out, None
    s3, rtrend = _call(partial(_dec_cross_tail_kernel, top_k=dly_c.shape[1]),
                       [dly_c, wts_c, v_c, s1, t1, ca["wo"], ca["bo"], ma_mat,
                        lp["ff_w1"], lp["ff_w2"], lp["trend_w"]],
                       [True, True] + [False] * 9,
                       [((B, L, d), F32), ((B, L, c_out), F32)],
                       scratch=[pltpu.VMEM((2 * L, d), F32)])
    return s3, rtrend


def autoformer_forward(kp, cfg, x_enc, x_mark_enc, x_dec, x_mark_dec, enc_mask, dec_mask):
    pred_len, label_len = cfg["pred_len"], cfg["label_len"]
    k_ma, factor = cfg["moving_avg"], cfg["factor"]

    mean = jnp.repeat(jnp.mean(x_enc, axis=1, keepdims=True), pred_len, axis=1)
    zeros = jnp.zeros((x_dec.shape[0], pred_len, x_dec.shape[2]), x_enc.dtype)
    seasonal_init, trend_init = series_decomp_jax(x_enc, k_ma)
    trend_init = jnp.concatenate([trend_init[:, -label_len:, :], mean], axis=1)
    seasonal_init = jnp.concatenate([seasonal_init[:, -label_len:, :], zeros], axis=1)

    # attn == 'auto' => TemporalDecay / gamma branch never taken (enc_mask/dec_mask unused).
    enc_out = data_embedding(x_enc, x_mark_enc, kp["enc_emb"])
    n_enc = len(kp["enc_layers"])
    for li, lp in enumerate(kp["enc_layers"]):
        enc_out = encoder_layer(enc_out, lp, kp["ma_mat_enc"], factor,
                                kp["enc_norm_g"], kp["enc_norm_b"],
                                do_norm=(li == n_enc - 1))

    x = data_embedding(seasonal_init, x_mark_dec, kp["dec_emb"])
    trend = trend_init
    out = None
    n_dec = len(kp["dec_layers"])
    for li, lp in enumerate(kp["dec_layers"]):
        if li == n_dec - 1:
            out, _ = decoder_layer(x, enc_out, lp, kp["ma_mat_dec"], factor, final=True,
                                   trend_in=trend, norm_g=kp["dec_norm_g"],
                                   norm_b=kp["dec_norm_b"], proj_w=kp["proj_w"],
                                   proj_b=kp["proj_b"])
        else:
            x, rtrend = decoder_layer(x, enc_out, lp, kp["ma_mat_dec"], factor, final=False)
            trend = trend + rtrend
    return out[:, -pred_len:, :]


# --------------------------------------------------------------------------------------
# Deterministic parameter init (shapes follow the module's __init__) + kernel-ready prep
# --------------------------------------------------------------------------------------
def init_params(key, cfg):
    d_model, d_ff = cfg["d_model"], cfg["d_ff"]
    enc_in, dec_in, c_out = cfg["enc_in"], cfg["dec_in"], cfg["c_out"]
    d_mark = cfg["d_mark"]
    keys = iter(jax.random.split(key, 256))

    def nrm(*shape, scale=0.1):
        return (scale * jax.random.normal(next(keys), shape)).astype(F32)

    def attn_params():
        return dict(wq=nrm(d_model, d_model), bq=nrm(d_model),
                    wk=nrm(d_model, d_model), bk=nrm(d_model),
                    wv=nrm(d_model, d_model), bv=nrm(d_model),
                    wo=nrm(d_model, d_model), bo=nrm(d_model))

    def emb_params(c_in):
        # NOTE: tap/channel layout is self-consistent here; porting real PyTorch Conv1d
        # checkpoints requires matching (out, in, kw) -> (kw*in, out) ordering.
        return dict(token_w=nrm(3, c_in, d_model),     # TokenEmbedding Conv1d(c_in, d_model, 3)
                    time_w=nrm(d_mark, d_model))       # TimeFeatureEmbedding Linear (no bias)

    return dict(
        enc_emb=emb_params(enc_in),
        dec_emb=emb_params(dec_in),
        enc_layers=[dict(attn=attn_params(),
                         ff_w1=nrm(d_model, d_ff), ff_w2=nrm(d_ff, d_model))
                    for _ in range(cfg["e_layers"])],
        enc_norm_g=jnp.ones((d_model,), F32),
        enc_norm_b=jnp.zeros((d_model,), F32),
        dec_layers=[dict(self_attn=attn_params(), cross_attn=attn_params(),
                         ff_w1=nrm(d_model, d_ff), ff_w2=nrm(d_ff, d_model),
                         trend_w=nrm(3, d_model, c_out))
                    for _ in range(cfg["d_layers"])],
        dec_norm_g=jnp.ones((d_model,), F32),
        dec_norm_b=jnp.zeros((d_model,), F32),
        proj_w=nrm(d_model, c_out),
        proj_b=nrm(c_out),
    )


def prepare_params(p, cfg):
    """Kernel-ready weights: fused Q|K|V (self) / K|V (cross) projections, bf16 MXU operands,
       2-D biases, unfolded 3-tap circular convolutions, banded moving-average matrices."""
    def self_attn(a):
        return dict(
            wqkv=jnp.concatenate([a["wq"], a["wk"], a["wv"]], axis=1).astype(BF16),
            bqkv=jnp.concatenate([a["bq"], a["bk"], a["bv"]]).reshape(1, -1).astype(F32),
            wo=a["wo"].astype(BF16), bo=a["bo"].reshape(1, -1).astype(F32))

    def cross_attn(a):
        return dict(
            wq=a["wq"].astype(BF16), bq=a["bq"].reshape(1, -1).astype(F32),
            wkv=jnp.concatenate([a["wk"], a["wv"]], axis=1).astype(BF16),
            bkv=jnp.concatenate([a["bk"], a["bv"]]).reshape(1, -1).astype(F32),
            wo=a["wo"].astype(BF16), bo=a["bo"].reshape(1, -1).astype(F32))

    def emb(e):
        t = e["token_w"]
        return dict(token_w=t.reshape(t.shape[0] * t.shape[1], t.shape[2]).astype(BF16),
                    time_w=e["time_w"].astype(BF16))

    L_enc = cfg["seq_len"]
    L_dec = cfg["label_len"] + cfg["pred_len"]

    return dict(
        enc_emb=emb(p["enc_emb"]),
        dec_emb=emb(p["dec_emb"]),
        enc_layers=[dict(attn=self_attn(l["attn"]),
                         ff_w1=l["ff_w1"].astype(BF16), ff_w2=l["ff_w2"].astype(BF16))
                    for l in p["enc_layers"]],
        enc_norm_g=p["enc_norm_g"].reshape(1, -1),
        enc_norm_b=p["enc_norm_b"].reshape(1, -1),
        dec_layers=[dict(self_attn=self_attn(l["self_attn"]),
                         cross_attn=cross_attn(l["cross_attn"]),
                         ff_w1=l["ff_w1"].astype(BF16), ff_w2=l["ff_w2"].astype(BF16),
                         trend_w=l["trend_w"].reshape(-1, l["trend_w"].shape[2]).astype(BF16))
                    for l in p["dec_layers"]],
        dec_norm_g=p["dec_norm_g"].reshape(1, -1),
        dec_norm_b=p["dec_norm_b"].reshape(1, -1),
        proj_w=p["proj_w"].astype(BF16),
        proj_b=p["proj_b"].reshape(1, -1),
        ma_mat_enc=build_ma_matrix(L_enc, cfg["moving_avg"]),
        ma_mat_dec=build_ma_matrix(L_dec, cfg["moving_avg"]),
    )


# --------------------------------------------------------------------------------------
if __name__ == "__main__":
    cfg = dict(seq_len=16, label_len=8, pred_len=8,
               enc_in=4, dec_in=4, c_out=4,
               d_model=32, n_heads=4, d_ff=64,
               e_layers=1, d_layers=1,
               moving_avg=5, factor=1, d_mark=4)

    key = jax.random.PRNGKey(0)
    k1, k2, k3, k4, kparam = jax.random.split(key, 5)

    B = 2
    dec_len = cfg["label_len"] + cfg["pred_len"]
    x_enc = jax.random.normal(k1, (B, cfg["seq_len"], cfg["enc_in"]), F32)
    x_mark_enc = jax.random.normal(k2, (B, cfg["seq_len"], cfg["d_mark"]), F32)
    x_dec = jax.random.normal(k3, (B, dec_len, cfg["dec_in"]), F32)
    x_mark_dec = jax.random.normal(k4, (B, dec_len, cfg["d_mark"]), F32)
    enc_mask = jnp.ones((B, cfg["seq_len"], cfg["enc_in"]), F32)
    dec_mask = jnp.ones((B, dec_len, cfg["dec_in"]), F32)

    params = prepare_params(init_params(kparam, cfg), cfg)

    @jax.jit
    def fwd(kp, xe, xme, xd, xmd, em, dm):
        return autoformer_forward(kp, cfg, xe, xme, xd, xmd, em, dm)

    out = fwd(params, x_enc, x_mark_enc, x_dec, x_mark_dec, enc_mask, dec_mask)
    out = jax.block_until_ready(out)
    assert out.shape == (B, cfg["pred_len"], cfg["c_out"]), out.shape
    assert bool(jnp.all(jnp.isfinite(out)))
    print("KERNEL_OK")
</pallas_src>

<mosaic_0001>
module attributes {stable_mosaic.version = 11 : i64} {
  func.func @_embed_kernel(%arg0: memref<2x16x4xf32, #tpu.memory_space<vmem>>, %arg1: memref<2x16x4xf32, #tpu.memory_space<vmem>>, %arg2: memref<12x32xbf16, #tpu.memory_space<vmem>>, %arg3: memref<4x32xbf16, #tpu.memory_space<vmem>>, %arg4: memref<2x16x32xf32, #tpu.memory_space<vmem>>) attributes {dimension_semantics = [], scalar_prefetch = 0 : i64, scratch_operands = 0 : i64, tpu.core_type = #tpu.core_type<tc>} {
    %c0 = arith.constant 0 : index
    %c0_0 = arith.constant 0 : index
    %c0_1 = arith.constant 0 : index
    %0 = vector.load %arg0[%c0, %c0_0, %c0_1] : memref<2x16x4xf32, #tpu.memory_space<vmem>>, vector<1x16x4xf32>
    %1 = vector.shape_cast %0 : vector<1x16x4xf32> to vector<16x4xf32>
    %c1_i32 = arith.constant 1 : i32
    %2 = tpu.dynamic_rotate %1 by %c1_i32 dim 0 : vector<16x4xf32>, i32 -> vector<16x4xf32>
    %c15_i32 = arith.constant 15 : i32
    %3 = tpu.dynamic_rotate %1 by %c15_i32 dim 0 : vector<16x4xf32>, i32 -> vector<16x4xf32>
    %4 = tpu.concatenate %2, %1, %3 in 1 : vector<16x4xf32>, vector<16x4xf32>, vector<16x4xf32> -> vector<16x12xf32>
    %c0_2 = arith.constant 0 : index
    %c0_3 = arith.constant 0 : index
    %5 = vector.load %arg2[%c0_2, %c0_3] : memref<12x32xbf16, #tpu.memory_space<vmem>>, vector<12x32xbf16>
    %6 = arith.truncf %4 : vector<16x12xf32> to vector<16x12xbf16>
    %cst = arith.constant dense<0.000000e+00> : vector<16x32xf32>
    %7 = tpu.matmul %6, %5, %cst {dimension_numbers = #tpu.dot_dimension_numbers<[1], [0], [0], [1], [0, 0, 1, 1], [], []>} : vector<16x12xbf16>, vector<12x32xbf16>, vector<16x32xf32> -> vector<16x32xf32>
    %c0_4 = arith.constant 0 : index
    %c0_5 = arith.constant 0 : index
    %c0_6 = arith.constant 0 : index
    %8 = vector.load %arg1[%c0_4, %c0_5, %c0_6] : memref<2x16x4xf32, #tpu.memory_space<vmem>>, vector<1x16x4xf32>
    %9 = vector.shape_cast %8 : vector<1x16x4xf32> to vector<16x4xf32>
    %c0_7 = arith.constant 0 : index
    %c0_8 = arith.constant 0 : index
    %10 = vector.load %arg3[%c0_7, %c0_8] : memref<4x32xbf16, #tpu.memory_space<vmem>>, vector<4x32xbf16>
    %11 = arith.truncf %9 : vector<16x4xf32> to vector<16x4xbf16>
    %cst_9 = arith.constant dense<0.000000e+00> : vector<16x32xf32>
    %12 = tpu.matmul %11, %10, %cst_9 {dimension_numbers = #tpu.dot_dimension_numbers<[1], [0], [0], [1], [0, 0, 1, 1], [], []>} : vector<16x4xbf16>, vector<4x32xbf16>, vector<16x32xf32> -> vector<16x32xf32>
    %13 = arith.addf %7, %12 : vector<16x32xf32>
    %c0_10 = arith.constant 0 : index
    %c0_11 = arith.constant 0 : index
    %c0_12 = arith.constant 0 : index
    %14 = vector.load %arg4[%c0_10, %c0_11, %c0_12] : memref<2x16x32xf32, #tpu.memory_space<vmem>>, vector<1x16x32xf32>
    %15 = vector.shape_cast %14 : vector<1x16x32xf32> to vector<16x32xf32>
    %16 = vector.shape_cast %13 : vector<16x32xf32> to vector<1x16x32xf32>
    tpu.vector_store %arg4[%c0_10, %c0_11, %c0_12], %16 {strides = array<i32>} : memref<2x16x32xf32, #tpu.memory_space<vmem>>, vector<1x16x32xf32>,
    %c1 = arith.constant 1 : index
    %c0_13 = arith.constant 0 : index
    %c0_14 = arith.constant 0 : index
    %17 = vector.load %arg0[%c1, %c0_13, %c0_14] : memref<2x16x4xf32, #tpu.memory_space<vmem>>, vector<1x16x4xf32>
    %18 = vector.shape_cast %17 : vector<1x16x4xf32> to vector<16x4xf32>
    %c1_i32_15 = arith.constant 1 : i32
    %19 = tpu.dynamic_rotate %18 by %c1_i32_15 dim 0 : vector<16x4xf32>, i32 -> vector<16x4xf32>
    %c15_i32_16 = arith.constant 15 : i32
    %20 = tpu.dynamic_rotate %18 by %c15_i32_16 dim 0 : vector<16x4xf32>, i32 -> vector<16x4xf32>
    %21 = tpu.concatenate %19, %18, %20 in 1 : vector<16x4xf32>, vector<16x4xf32>, vector<16x4xf32> -> vector<16x12xf32>
    %c0_17 = arith.constant 0 : index
    %c0_18 = arith.constant 0 : index
    %22 = vector.load %arg2[%c0_17, %c0_18] : memref<12x32xbf16, #tpu.memory_space<vmem>>, vector<12x32xbf16>
    %23 = arith.truncf %21 : vector<16x12xf32> to vector<16x12xbf16>
    %cst_19 = arith.constant dense<0.000000e+00> : vector<16x32xf32>
    %24 = tpu.matmul %23, %22, %cst_19 {dimension_numbers = #tpu.dot_dimension_numbers<[1], [0], [0], [1], [0, 0, 1, 1], [], []>} : vector<16x12xbf16>, vector<12x32xbf16>, vector<16x32xf32> -> vector<16x32xf32>
    %c1_20 = arith.constant 1 : index
    %c0_21 = arith.constant 0 : index
    %c0_22 = arith.constant 0 : index
    %25 = vector.load %arg1[%c1_20, %c0_21, %c0_22] : memref<2x16x4xf32, #tpu.memory_space<vmem>>, vector<1x16x4xf32>
    %26 = vector.shape_cast %25 : vector<1x16x4xf32> to vector<16x4xf32>
    %c0_23 = arith.constant 0 : index
    %c0_24 = arith.constant 0 : index
    %27 = vector.load %arg3[%c0_23, %c0_24] : memref<4x32xbf16, #tpu.memory_space<vmem>>, vector<4x32xbf16>
    %28 = arith.truncf %26 : vector<16x4xf32> to vector<16x4xbf16>
    %cst_25 = arith.constant dense<0.000000e+00> : vector<16x32xf32>
    %29 = tpu.matmul %28, %27, %cst_25 {dimension_numbers = #tpu.dot_dimension_numbers<[1], [0], [0], [1], [0, 0, 1, 1], [], []>} : vector<16x4xbf16>, vector<4x32xbf16>, vector<16x32xf32> -> vector<16x32xf32>
    %30 = arith.addf %24, %29 : vector<16x32xf32>
    %c1_26 = arith.constant 1 : index
    %c0_27 = arith.constant 0 : index
    %c0_28 = arith.constant 0 : index
    %31 = vector.load %arg4[%c1_26, %c0_27, %c0_28] : memref<2x16x32xf32, #tpu.memory_space<vmem>>, vector<1x16x32xf32>
    %32 = vector.shape_cast %31 : vector<1x16x32xf32> to vector<16x32xf32>
    %33 = vector.shape_cast %30 : vector<16x32xf32> to vector<1x16x32xf32>
    tpu.vector_store %arg4[%c1_26, %c0_27, %c0_28], %33 {strides = array<i32>} : memref<2x16x32xf32, #tpu.memory_space<vmem>>, vector<1x16x32xf32>,
    return
  }
}

module attributes {stable_mosaic.version = 11 : i64} {
  func.func @_self_core_kernel(%arg0: memref<2x16x32xf32, #tpu.memory_space<vmem>>, %arg1: memref<32x96xbf16, #tpu.memory_space<vmem>>, %arg2: memref<1x96xf32, #tpu.memory_space<vmem>>, %arg3: memref<2x16x32xf32, #tpu.memory_space<vmem>>, %arg4: memref<2x16x1xf32, #tpu.memory_space<vmem>>) attributes {dimension_semantics = [], scalar_prefetch = 0 : i64, scratch_operands = 0 : i64, tpu.core_type = #tpu.core_type<tc>} {
    %c0 = arith.constant 0 : index
    %c0_0 = arith.constant 0 : index
    %c0_1 = arith.constant 0 : index
    %0 = vector.load %arg0[%c0, %c0_0, %c0_1] : memref<2x16x32xf32, #tpu.memory_space<vmem>>, vector<1x16x32xf32>
    %1 = vector.shape_cast %0 : vector<1x16x32xf32> to vector<16x32xf32>
    %c0_2 = arith.constant 0 : index
    %c0_3 = arith.constant 0 : index
    %2 = vector.load %arg1[%c0_2, %c0_3] : memref<32x96xbf16, #tpu.memory_space<vmem>>, vector<32x96xbf16>
    %3 = arith.truncf %1 : vector<16x32xf32> to vector<16x32xbf16>
    %cst = arith.constant dense<0.000000e+00> : vector<16x96xf32>
    %4 = tpu.matmul %3, %2, %cst {dimension_numbers = #tpu.dot_dimension_numbers<[1], [0], [0], [1], [0, 0, 1, 1], [], []>} : vector<16x32xbf16>, vector<32x96xbf16>, vector<16x96xf32> -> vector<16x96xf32>
    %c0_4 = arith.constant 0 : index
    %c0_5 = arith.constant 0 : index
    %5 = vector.load %arg2[%c0_4, %c0_5] : memref<1x96xf32, #tpu.memory_space<vmem>>, vector<1x96xf32>
    %6 = vector.broadcast %5 : vector<1x96xf32> to vector<16x96xf32>
    %7 = arith.addf %4, %6 : vector<16x96xf32>
    %8 = vector.extract_strided_slice %7 {offsets = [0, 0], sizes = [16, 32], strides = [1, 1]} : vector<16x96xf32> to vector<16x32xf32>
    %9 = vector.extract_strided_slice %7 {offsets = [0, 32], sizes = [16, 32], strides = [1, 1]} : vector<16x96xf32> to vector<16x32xf32>
    %10 = vector.extract_strided_slice %7 {offsets = [0, 64], sizes = [16, 32], strides = [1, 1]} : vector<16x96xf32> to vector<16x32xf32>
    %c0_6 = arith.constant 0 : index
    %c0_7 = arith.constant 0 : index
    %c0_8 = arith.constant 0 : index
    %11 = vector.load %arg3[%c0_6, %c0_7, %c0_8] : memref<2x16x32xf32, #tpu.memory_space<vmem>>, vector<1x16x32xf32>
    %12 = vector.shape_cast %11 : vector<1x16x32xf32> to vector<16x32xf32>
    %13 = vector.shape_cast %10 : vector<16x32xf32> to vector<1x16x32xf32>
    tpu.vector_store %arg3[%c0_6, %c0_7, %c0_8], %13 {strides = array<i32>} : memref<2x16x32xf32, #tpu.memory_space<vmem>>, vector<1x16x32xf32>,
    %14 = arith.truncf %8 : vector<16x32xf32> to vector<16x32xbf16>
    %15 = arith.truncf %9 : vector<16x32xf32> to vector<16x32xbf16>
    %cst_9 = arith.constant dense<0.000000e+00> : vector<16x16xf32>
    %16 = tpu.matmul %14, %15, %cst_9 {dimension_numbers = #tpu.dot_dimension_numbers<[1], [1], [0], [0], [0, 0, 1, 0], [], []>} : vector<16x32xbf16>, vector<16x32xbf16>, vector<16x16xf32> -> vector<16x16xf32>
    %17 = tpu.iota {dimensions = array<i32: 1>} : vector<16x16xi32>
    %c15_i32 = arith.constant 15 : i32
    %18 = tpu.dynamic_rotate %16 by %c15_i32 dim 0 : vector<16x16xf32>, i32 -> vector<16x16xf32>
    %c0_i32 = arith.constant 0 : i32
    %19 = vector.broadcast %c0_i32 : i32 to vector<16x16xi32>
    %20 = arith.shrsi %17, %19 : vector<16x16xi32>
    %c1_i32 = arith.constant 1 : i32
    %21 = vector.broadcast %c1_i32 : i32 to vector<16x16xi32>
    %22 = arith.andi %20, %21 : vector<16x16xi32>
    %c1_i32_10 = arith.constant 1 : i32
    %23 = vector.broadcast %c1_i32_10 : i32 to vector<16x16xi32>
    %24 = arith.cmpi eq, %22, %23 : vector<16x16xi32>
    %25 = arith.select %24, %18, %16 : vector<16x16xi1>, vector<16x16xf32>
    %c14_i32 = arith.constant 14 : i32
    %26 = tpu.dynamic_rotate %25 by %c14_i32 dim 0 : vector<16x16xf32>, i32 -> vector<16x16xf32>
    %c1_i32_11 = arith.constant 1 : i32
    %27 = vector.broadcast %c1_i32_11 : i32 to vector<16x16xi32>
    %28 = arith.shrsi %17, %27 : vector<16x16xi32>
    %c1_i32_12 = arith.constant 1 : i32
    %29 = vector.broadcast %c1_i32_12 : i32 to vector<16x16xi32>
    %30 = arith.andi %28, %29 : vector<16x16xi32>
    %c1_i32_13 = arith.constant 1 : i32
    %31 = vector.broadcast %c1_i32_13 : i32 to vector<16x16xi32>
    %32 = arith.cmpi eq, %30, %31 : vector<16x16xi32>
    %33 = arith.select %32, %26, %25 : vector<16x16xi1>, vector<16x16xf32>
    %c12_i32 = arith.constant 12 : i32
    %34 = tpu.dynamic_rotate %33 by %c12_i32 dim 0 : vector<16x16xf32>, i32 -> vector<16x16xf32>
    %c2_i32 = arith.constant 2 : i32
    %35 = vector.broadcast %c2_i32 : i32 to vector<16x16xi32>
    %36 = arith.shrsi %17, %35 : vector<16x16xi32>
    %c1_i32_14 = arith.constant 1 : i32
    %37 = vector.broadcast %c1_i32_14 : i32 to vector<16x16xi32>
    %38 = arith.andi %36, %37 : vector<16x16xi32>
    %c1_i32_15 = arith.constant 1 : i32
    %39 = vector.broadcast %c1_i32_15 : i32 to vector<16x16xi32>
    %40 = arith.cmpi eq, %38, %39 : vector<16x16xi32>
    %41 = arith.select %40, %34, %33 : vector<16x16xi1>, vector<16x16xf32>
    %c8_i32 = arith.constant 8 : i32
    %42 = tpu.dynamic_rotate %41 by %c8_i32 dim 0 : vector<16x16xf32>, i32 -> vector<16x16xf32>
    %c3_i32 = arith.constant 3 : i32
    %43 = vector.broadcast %c3_i32 : i32 to vector<16x16xi32>
    %44 = arith.shrsi %17, %43 : vector<16x16xi32>
    %c1_i32_16 = arith.constant 1 : i32
    %45 = vector.broadcast %c1_i32_16 : i32 to vector<16x16xi32>
    %46 = arith.andi %44, %45 : vector<16x16xi32>
    %c1_i32_17 = arith.constant 1 : i32
    %47 = vector.broadcast %c1_i32_17 : i32 to vector<16x16xi32>
    %48 = arith.cmpi eq, %46, %47 : vector<16x16xi32>
    %49 = arith.select %48, %42, %41 : vector<16x16xi1>, vector<16x16xf32>
    %cst_18 = arith.constant dense<0.000000e+00> : vector<16xf32>
    %50 = vector.multi_reduction <add>, %49, %cst_18 [1] : vector<16x16xf32> to vector<16xf32>
    %51 = vector.shape_cast %50 : vector<16xf32> to vector<16x1xf32>
    %cst_19 = arith.constant 3.125000e-02 : f32
    %52 = vector.broadcast %cst_19 : f32 to vector<16x1xf32>
    %53 = arith.mulf %51, %52 : vector<16x1xf32>
    %c0_20 = arith.constant 0 : index
    %c0_21 = arith.constant 0 : index
    %c0_22 = arith.constant 0 : index
    %54 = vector.load %arg4[%c0_20, %c0_21, %c0_22] : memref<2x16x1xf32, #tpu.memory_space<vmem>>, vector<1x16x1xf32>
    %55 = vector.shape_cast %54 : vector<1x16x1xf32> to vector<16x1xf32>
    %56 = vector.shape_cast %53 : vector<16x1xf32> to vector<1x16x1xf32>
    tpu.vector_store %arg4[%c0_20, %c0_21, %c0_22], %56 {strides = array<i32>} : memref<2x16x1xf32, #tpu.memory_space<vmem>>, vector<1x16x1xf32>,
    %c1 = arith.constant 1 : index
    %c0_23 = arith.constant 0 : index
    %c0_24 = arith.constant 0 : index
    %57 = vector.load %arg0[%c1, %c0_23, %c0_24] : memref<2x16x32xf32, #tpu.memory_space<vmem>>, vector<1x16x32xf32>
    %58 = vector.shape_cast %57 : vector<1x16x32xf32> to vector<16x32xf32>
    %c0_25 = arith.constant 0 : index
    %c0_26 = arith.constant 0 : index
    %59 = vector.load %arg1[%c0_25, %c0_26] : memref<32x96xbf16, #tpu.memory_space<vmem>>, vector<32x96xbf16>
    %60 = arith.truncf %58 : vector<16x32xf32> to vector<16x32xbf16>
    %cst_27 = arith.constant dense<0.000000e+00> : vector<16x96xf32>
    %61 = tpu.matmul %60, %59, %cst_27 {dimension_numbers = #tpu.dot_dimension_numbers<[1], [0], [0], [1], [0, 0, 1, 1], [], []>} : vector<16x32xbf16>, vector<32x96xbf16>, vector<16x96xf32> -> vector<16x96xf32>
    %c0_28 = arith.constant 0 : index
    %c0_29 = arith.constant 0 : index
    %62 = vector.load %arg2[%c0_28, %c0_29] : memref<1x96xf32, #tpu.memory_space<vmem>>, vector<1x96xf32>
    %63 = vector.broadcast %62 : vector<1x96xf32> to vector<16x96xf32>
    %64 = arith.addf %61, %63 : vector<16x96xf32>
    %65 = vector.extract_strided_slice %64 {offsets = [0, 0], sizes = [16, 32], strides = [1, 1]} : vector<16x96xf32> to vector<16x32xf32>
    %66 = vector.extract_strided_slice %64 {offsets = [0, 32], sizes = [16, 32], strides = [1, 1]} : vector<16x96xf32> to vector<16x32xf32>
    %67 = vector.extract_strided_slice %64 {offsets = [0, 64], sizes = [16, 32], strides = [1, 1]} : vector<16x96xf32> to vector<16x32xf32>
    %c1_30 = arith.constant 1 : index
    %c0_31 = arith.constant 0 : index
    %c0_32 = arith.constant 0 : index
    %68 = vector.load %arg3[%c1_30, %c0_31, %c0_32] : memref<2x16x32xf32, #tpu.memory_space<vmem>>, vector<1x16x32xf32>
    %69 = vector.shape_cast %68 : vector<1x16x32xf32> to vector<16x32xf32>
    %70 = vector.shape_cast %67 : vector<16x32xf32> to vector<1x16x32xf32>
    tpu.vector_store %arg3[%c1_30, %c0_31, %c0_32], %70 {strides = array<i32>} : memref<2x16x32xf32, #tpu.memory_space<vmem>>, vector<1x16x32xf32>,
    %71 = arith.truncf %65 : vector<16x32xf32> to vector<16x32xbf16>
    %72 = arith.truncf %66 : vector<16x32xf32> to vector<16x32xbf16>
    %cst_33 = arith.constant dense<0.000000e+00> : vector<16x16xf32>
    %73 = tpu.matmul %71, %72, %cst_33 {dimension_numbers = #tpu.dot_dimension_numbers<[1], [1], [0], [0], [0, 0, 1, 0], [], []>} : vector<16x32xbf16>, vector<16x32xbf16>, vector<16x16xf32> -> vector<16x16xf32>
    %74 = tpu.iota {dimensions = array<i32: 1>} : vector<16x16xi32>
    %c15_i32_34 = arith.constant 15 : i32
    %75 = tpu.dynamic_rotate %73 by %c15_i32_34 dim 0 : vector<16x16xf32>, i32 -> vector<16x16xf32>
    %c0_i32_35 = arith.constant 0 : i32
    %76 = vector.broadcast %c0_i32_35 : i32 to vector<16x16xi32>
    %77 = arith.shrsi %74, %76 : vector<16x16xi32>
    %c1_i32_36 = arith.constant 1 : i32
    %78 = vector.broadcast %c1_i32_36 : i32 to vector<16x16xi32>
    %79 = arith.andi %77, %78 : vector<16x16xi32>
    %c1_i32_37 = arith.constant 1 : i32
    %80 = vector.broadcast %c1_i32_37 : i32 to vector<16x16xi32>
    %81 = arith.cmpi eq, %79, %80 : vector<16x16xi32>
    %82 = arith.select %81, %75, %73 : vector<16x16xi1>, vector<16x16xf32>
    %c14_i32_38 = arith.constant 14 : i32
    %83 = tpu.dynamic_rotate %82 by %c14_i32_38 dim 0 : vector<16x16xf32>, i32 -> vector<16x16xf32>
    %c1_i32_39 = arith.constant 1 : i32
    %84 = vector.broadcast %c1_i32_39 : i32 to vector<16x16xi32>
    %85 = arith.shrsi %74, %84 : vector<16x16xi32>
    %c1_i32_40 = arith.constant 1 : i32
    %86 = vector.broadcast %c1_i32_40 : i32 to vector<16x16xi32>
    %87 = arith.andi %85, %86 : vector<16x16xi32>
    %c1_i32_41 = arith.constant 1 : i32
    %88 = vector.broadcast %c1_i32_41 : i32 to vector<16x16xi32>
    %89 = arith.cmpi eq, %87, %88 : vector<16x16xi32>
    %90 = arith.select %89, %83, %82 : vector<16x16xi1>, vector<16x16xf32>
    %c12_i32_42 = arith.constant 12 : i32
    %91 = tpu.dynamic_rotate %90 by %c12_i32_42 dim 0 : vector<16x16xf32>, i32 -> vector<16x16xf32>
    %c2_i32_43 = arith.constant 2 : i32
    %92 = vector.broadcast %c2_i32_43 : i32 to vector<16x16xi32>
    %93 = arith.shrsi %74, %92 : vector<16x16xi32>
    %c1_i32_44 = arith.constant 1 : i32
    %94 = vector.broadcast %c1_i32_44 : i32 to vector<16x16xi32>
    %95 = arith.andi %93, %94 : vector<16x16xi32>
    %c1_i32_45 = arith.constant 1 : i32
    %96 = vector.broadcast %c1_i32_45 : i32 to vector<16x16xi32>
    %97 = arith.cmpi eq, %95, %96 : vector<16x16xi32>
    %98 = arith.select %97, %91, %90 : vector<16x16xi1>, vector<16x16xf32>
    %c8_i32_46 = arith.constant 8 : i32
    %99 = tpu.dynamic_rotate %98 by %c8_i32_46 dim 0 : vector<16x16xf32>, i32 -> vector<16x16xf32>
    %c3_i32_47 = arith.constant 3 : i32
    %100 = vector.broadcast %c3_i32_47 : i32 to vector<16x16xi32>
    %101 = arith.shrsi %74, %100 : vector<16x16xi32>
    %c1_i32_48 = arith.constant 1 : i32
    %102 = vector.broadcast %c1_i32_48 : i32 to vector<16x16xi32>
    %103 = arith.andi %101, %102 : vector<16x16xi32>
    %c1_i32_49 = arith.constant 1 : i32
    %104 = vector.broadcast %c1_i32_49 : i32 to vector<16x16xi32>
    %105 = arith.cmpi eq, %103, %104 : vector<16x16xi32>
    %106 = arith.select %105, %99, %98 : vector<16x16xi1>, vector<16x16xf32>
    %cst_50 = arith.constant dense<0.000000e+00> : vector<16xf32>
    %107 = vector.multi_reduction <add>, %106, %cst_50 [1] : vector<16x16xf32> to vector<16xf32>
    %108 = vector.shape_cast %107 : vector<16xf32> to vector<16x1xf32>
    %cst_51 = arith.constant 3.125000e-02 : f32
    %109 = vector.broadcast %cst_51 : f32 to vector<16x1xf32>
    %110 = arith.mulf %108, %109 : vector<16x1xf32>
    %c1_52 = arith.constant 1 : index
    %c0_53 = arith.constant 0 : index
    %c0_54 = arith.constant 0 : index
    %111 = vector.load %arg4[%c1_52, %c0_53, %c0_54] : memref<2x16x1xf32, #tpu.memory_space<vmem>>, vector<1x16x1xf32>
    %112 = vector.shape_cast %111 : vector<1x16x1xf32> to vector<16x1xf32>
    %113 = vector.shape_cast %110 : vector<16x1xf32> to vector<1x16x1xf32>
    tpu.vector_store %arg4[%c1_52, %c0_53, %c0_54], %113 {strides = array<i32>} : memref<2x16x1xf32, #tpu.memory_space<vmem>>, vector<1x16x1xf32>,
    return
  }
}

module attributes {stable_mosaic.version = 11 : i64} {
  func.func @_enc_tail_kernel(%arg0: memref<2x2xi32, #tpu.memory_space<smem>>, %arg1: memref<2x2xf32, #tpu.memory_space<smem>>, %arg2: memref<2x16x32xf32, #tpu.memory_space<vmem>>, %arg3: memref<2x16x32xf32, #tpu.memory_space<vmem>>, %arg4: memref<32x32xbf16, #tpu.memory_space<vmem>>, %arg5: memref<1x32xf32, #tpu.memory_space<vmem>>, %arg6: memref<16x16xf32, #tpu.memory_space<vmem>>, %arg7: memref<32x64xbf16, #tpu.memory_space<vmem>>, %arg8: memref<64x32xbf16, #tpu.memory_space<vmem>>, %arg9: memref<1x32xf32, #tpu.memory_space<vmem>>, %arg10: memref<1x32xf32, #tpu.memory_space<vmem>>, %arg11: memref<2x16x32xf32, #tpu.memory_space<vmem>>, %arg12: memref<32x32xf32, #tpu.memory_space<vmem>>) attributes {dimension_semantics = [], scalar_prefetch = 0 : i64, scratch_operands = 1 : i64, tpu.core_type = #tpu.core_type<tc>} {
    %c0 = arith.constant 0 : index
    %c0_0 = arith.constant 0 : index
    %c0_1 = arith.constant 0 : index
    %0 = vector.load %arg2[%c0, %c0_0, %c0_1] : memref<2x16x32xf32, #tpu.memory_space<vmem>>, vector<1x16x32xf32>
    %1 = vector.shape_cast %0 : vector<1x16x32xf32> to vector<16x32xf32>
    %c0_2 = arith.constant 0 : index
    %c0_3 = arith.constant 0 : index
    %2 = vector.load %arg12[%c0_2, %c0_3] : memref<32x32xf32, #tpu.memory_space<vmem>>, vector<16x32xf32>
    tpu.vector_store %arg12[%c0_2, %c0_3], %1 {strides = array<i32>} : memref<32x32xf32, #tpu.memory_space<vmem>>, vector<16x32xf32>,
    %c16 = arith.constant 16 : index
    %c0_4 = arith.constant 0 : index
    %3 = vector.load %arg12[%c16, %c0_4] : memref<32x32xf32, #tpu.memory_space<vmem>>, vector<16x32xf32>
    tpu.vector_store %arg12[%c16, %c0_4], %1 {strides = array<i32>} : memref<32x32xf32, #tpu.memory_space<vmem>>, vector<16x32xf32>,
    %cst = arith.constant 0.000000e+00 : f32
    %4 = vector.broadcast %cst : f32 to vector<16x32xf32>
    %c0_5 = arith.constant 0 : index
    %c0_6 = arith.constant 0 : index
    %5 = memref.load %arg1[%c0_5, %c0_6] : memref<2x2xf32, #tpu.memory_space<smem>>
    %c0_7 = arith.constant 0 : index
    %c0_8 = arith.constant 0 : index
    %6 = memref.load %arg0[%c0_7, %c0_8] : memref<2x2xi32, #tpu.memory_space<smem>>
    %7 = arith.index_cast %6 : i32 to index
    %c0_9 = arith.constant 0 : index
    %8 = vector.load %arg12[%7, %c0_9] : memref<32x32xf32, #tpu.memory_space<vmem>>, vector<16x32xf32>
    %9 = vector.broadcast %5 : f32 to vector<16x32xf32>
    %10 = arith.mulf %9, %8 : vector<16x32xf32>
    %11 = arith.addf %4, %10 : vector<16x32xf32>
    %c0_10 = arith.constant 0 : index
    %c1 = arith.constant 1 : index
    %12 = memref.load %arg1[%c0_10, %c1] : memref<2x2xf32, #tpu.memory_space<smem>>
    %c0_11 = arith.constant 0 : index
    %c1_12 = arith.constant 1 : index
    %13 = memref.load %arg0[%c0_11, %c1_12] : memref<2x2xi32, #tpu.memory_space<smem>>
    %14 = arith.index_cast %13 : i32 to index
    %c0_13 = arith.constant 0 : index
    %15 = vector.load %arg12[%14, %c0_13] : memref<32x32xf32, #tpu.memory_space<vmem>>, vector<16x32xf32>
    %16 = vector.broadcast %12 : f32 to vector<16x32xf32>
    %17 = arith.mulf %16, %15 : vector<16x32xf32>
    %18 = arith.addf %11, %17 : vector<16x32xf32>
    %c0_14 = arith.constant 0 : index
    %c0_15 = arith.constant 0 : index
    %c0_16 = arith.constant 0 : index
    %19 = vector.load %arg3[%c0_14, %c0_15, %c0_16] : memref<2x16x32xf32, #tpu.memory_space<vmem>>, vector<1x16x32xf32>
    %20 = vector.shape_cast %19 : vector<1x16x32xf32> to vector<16x32xf32>
    %c0_17 = arith.constant 0 : index
    %c0_18 = arith.constant 0 : index
    %21 = vector.load %arg4[%c0_17, %c0_18] : memref<32x32xbf16, #tpu.memory_space<vmem>>, vector<32x32xbf16>
    %22 = arith.truncf %18 : vector<16x32xf32> to vector<16x32xbf16>
    %cst_19 = arith.constant dense<0.000000e+00> : vector<16x32xf32>
    %23 = tpu.matmul %22, %21, %cst_19 {dimension_numbers = #tpu.dot_dimension_numbers<[1], [0], [0], [1], [0, 0, 1, 1], [], []>} : vector<16x32xbf16>, vector<32x32xbf16>, vector<16x32xf32> -> vector<16x32xf32>
    %24 = arith.addf %20, %23 : vector<16x32xf32>
    %c0_20 = arith.constant 0 : index
    %c0_21 = arith.constant 0 : index
    %25 = vector.load %arg5[%c0_20, %c0_21] : memref<1x32xf32, #tpu.memory_space<vmem>>, vector<1x32xf32>
    %26 = vector.broadcast %25 : vector<1x32xf32> to vector<16x32xf32>
    %27 = arith.addf %24, %26 : vector<16x32xf32>
    %c0_22 = arith.constant 0 : index
    %c0_23 = arith.constant 0 : index
    %28 = vector.load %arg6[%c0_22, %c0_23] : memref<16x16xf32, #tpu.memory_space<vmem>>, vector<16x16xf32>
    %cst_24 = arith.constant dense<0.000000e+00> : vector<16x32xf32>
    %29 = tpu.matmul %28, %27, %cst_24 {dimension_numbers = #tpu.dot_dimension_numbers<[1], [0], [0], [1], [0, 0, 1, 1], [], []>} : vector<16x16xf32>, vector<16x32xf32>, vector<16x32xf32> -> vector<16x32xf32>
    %30 = arith.subf %27, %29 : vector<16x32xf32>
    %c0_25 = arith.constant 0 : index
    %c0_26 = arith.constant 0 : index
    %31 = vector.load %arg7[%c0_25, %c0_26] : memref<32x64xbf16, #tpu.memory_space<vmem>>, vector<32x64xbf16>
    %32 = arith.truncf %30 : vector<16x32xf32> to vector<16x32xbf16>
    %cst_27 = arith.constant dense<0.000000e+00> : vector<16x64xf32>
    %33 = tpu.matmul %32, %31, %cst_27 {dimension_numbers = #tpu.dot_dimension_numbers<[1], [0], [0], [1], [0, 0, 1, 1], [], []>} : vector<16x32xbf16>, vector<32x64xbf16>, vector<16x64xf32> -> vector<16x64xf32>
    %cst_28 = arith.constant 5.000000e-01 : f32
    %34 = vector.broadcast %cst_28 : f32 to vector<16x64xf32>
    %35 = arith.mulf %34, %33 : vector<16x64xf32>
    %cst_29 = arith.constant 0.707106769 : f32
    %36 = vector.broadcast %cst_29 : f32 to vector<16x64xf32>
    %37 = arith.mulf %33, %36 : vector<16x64xf32>
    %cst_30 = arith.constant 0.000000e+00 : f32
    %38 = vector.broadcast %cst_30 : f32 to vector<16x64xf32>
    %39 = arith.cmpf oge, %37, %38 : vector<16x64xf32>
    %cst_31 = arith.constant 1.000000e+00 : f32
    %cst_32 = arith.constant -1.000000e+00 : f32
    %40 = vector.broadcast %cst_31 : f32 to vector<16x64xf32>
    %41 = vector.broadcast %cst_32 : f32 to vector<16x64xf32>
    %42 = arith.select %39, %40, %41 : vector<16x64xi1>, vector<16x64xf32>
    %43 = math.absf %37 : vector<16x64xf32>
    %cst_33 = arith.constant 0.327591091 : f32
    %44 = vector.broadcast %cst_33 : f32 to vector<16x64xf32>
    %45 = arith.mulf %44, %43 : vector<16x64xf32>
    %cst_34 = arith.constant 1.000000e+00 : f32
    %46 = vector.broadcast %cst_34 : f32 to vector<16x64xf32>
    %47 = arith.addf %46, %45 : vector<16x64xf32>
    %cst_35 = arith.constant 1.000000e+00 : f32
    %48 = vector.broadcast %cst_35 : f32 to vector<16x64xf32>
    %49 = arith.divf %48, %47 : vector<16x64xf32>
    %cst_36 = arith.constant 1.06140542 : f32
    %50 = vector.broadcast %cst_36 : f32 to vector<16x64xf32>
    %51 = arith.mulf %50, %49 : vector<16x64xf32>
    %cst_37 = arith.constant -1.45315206 : f32
    %52 = vector.broadcast %cst_37 : f32 to vector<16x64xf32>
    %53 = arith.addf %51, %52 : vector<16x64xf32>
    %54 = arith.mulf %53, %49 : vector<16x64xf32>
    %cst_38 = arith.constant 1.42141378 : f32
    %55 = vector.broadcast %cst_38 : f32 to vector<16x64xf32>
    %56 = arith.addf %54, %55 : vector<16x64xf32>
    %57 = arith.mulf %56, %49 : vector<16x64xf32>
    %cst_39 = arith.constant -0.284496725 : f32
    %58 = vector.broadcast %cst_39 : f32 to vector<16x64xf32>
    %59 = arith.addf %57, %58 : vector<16x64xf32>
    %60 = arith.mulf %59, %49 : vector<16x64xf32>
    %cst_40 = arith.constant 0.254829586 : f32
    %61 = vector.broadcast %cst_40 : f32 to vector<16x64xf32>
    %62 = arith.addf %60, %61 : vector<16x64xf32>
    %63 = arith.mulf %62, %49 : vector<16x64xf32>
    %cst_41 = arith.constant 0.000000e+00 : f32
    %64 = vector.broadcast %cst_41 : f32 to vector<16x64xf32>
    %65 = arith.subf %64, %43 : vector<16x64xf32>
    %66 = arith.mulf %65, %43 : vector<16x64xf32>
    %67 = math.exp %66 : vector<16x64xf32>
    %68 = arith.mulf %63, %67 : vector<16x64xf32>
    %cst_42 = arith.constant 1.000000e+00 : f32
    %69 = vector.broadcast %cst_42 : f32 to vector<16x64xf32>
    %70 = arith.subf %69, %68 : vector<16x64xf32>
    %71 = arith.mulf %42, %70 : vector<16x64xf32>
    %cst_43 = arith.constant 1.000000e+00 : f32
    %72 = vector.broadcast %cst_43 : f32 to vector<16x64xf32>
    %73 = arith.addf %72, %71 : vector<16x64xf32>
    %74 = arith.mulf %35, %73 : vector<16x64xf32>
    %c0_44 = arith.constant 0 : index
    %c0_45 = arith.constant 0 : index
    %75 = vector.load %arg8[%c0_44, %c0_45] : memref<64x32xbf16, #tpu.memory_space<vmem>>, vector<64x32xbf16>
    %76 = arith.truncf %74 : vector<16x64xf32> to vector<16x64xbf16>
    %cst_46 = arith.constant dense<0.000000e+00> : vector<16x32xf32>
    %77 = tpu.matmul %76, %75, %cst_46 {dimension_numbers = #tpu.dot_dimension_numbers<[1], [0], [0], [1], [0, 0, 1, 1], [], []>} : vector<16x64xbf16>, vector<64x32xbf16>, vector<16x32xf32> -> vector<16x32xf32>
    %78 = arith.addf %30, %77 : vector<16x32xf32>
    %c0_47 = arith.constant 0 : index
    %c0_48 = arith.constant 0 : index
    %79 = vector.load %arg6[%c0_47, %c0_48] : memref<16x16xf32, #tpu.memory_space<vmem>>, vector<16x16xf32>
    %cst_49 = arith.constant dense<0.000000e+00> : vector<16x32xf32>
    %80 = tpu.matmul %79, %78, %cst_49 {dimension_numbers = #tpu.dot_dimension_numbers<[1], [0], [0], [1], [0, 0, 1, 1], [], []>} : vector<16x16xf32>, vector<16x32xf32>, vector<16x32xf32> -> vector<16x32xf32>
    %81 = arith.subf %78, %80 : vector<16x32xf32>
    %c0_50 = arith.constant 0 : index
    %c0_51 = arith.constant 0 : index
    %82 = vector.load %arg9[%c0_50, %c0_51] : memref<1x32xf32, #tpu.memory_space<vmem>>, vector<1x32xf32>
    %c0_52 = arith.constant 0 : index
    %c0_53 = arith.constant 0 : index
    %83 = vector.load %arg10[%c0_52, %c0_53] : memref<1x32xf32, #tpu.memory_space<vmem>>, vector<1x32xf32>
    %cst_54 = arith.constant dense<0.000000e+00> : vector<16xf32>
    %84 = vector.multi_reduction <add>, %81, %cst_54 [1] : vector<16x32xf32> to vector<16xf32>
    %85 = vector.shape_cast %84 : vector<16xf32> to vector<16x1xf32>
    %cst_55 = arith.constant 3.200000e+01 : f32
    %86 = vector.broadcast %cst_55 : f32 to vector<16x1xf32>
    %87 = arith.divf %85, %86 : vector<16x1xf32>
    %88 = vector.broadcast %87 : vector<16x1xf32> to vector<16x32xf32>
    %89 = arith.subf %81, %88 : vector<16x32xf32>
    %90 = arith.mulf %89, %89 : vector<16x32xf32>
    %cst_56 = arith.constant dense<0.000000e+00> : vector<16xf32>
    %91 = vector.multi_reduction <add>, %90, %cst_56 [1] : vector<16x32xf32> to vector<16xf32>
    %92 = vector.shape_cast %91 : vector<16xf32> to vector<16x1xf32>
    %cst_57 = arith.constant 3.200000e+01 : f32
    %93 = vector.broadcast %cst_57 : f32 to vector<16x1xf32>
    %94 = arith.divf %92, %93 : vector<16x1xf32>
    %cst_58 = arith.constant 9.99999974E-6 : f32
    %95 = vector.broadcast %cst_58 : f32 to vector<16x1xf32>
    %96 = arith.addf %94, %95 : vector<16x1xf32>
    %97 = math.rsqrt %96 : vector<16x1xf32>
    %98 = vector.broadcast %97 : vector<16x1xf32> to vector<16x32xf32>
    %99 = arith.mulf %89, %98 : vector<16x32xf32>
    %100 = vector.broadcast %82 : vector<1x32xf32> to vector<16x32xf32>
    %101 = arith.mulf %99, %100 : vector<16x32xf32>
    %102 = vector.broadcast %83 : vector<1x32xf32> to vector<16x32xf32>
    %103 = arith.addf %101, %102 : vector<16x32xf32>
    %cst_59 = arith.constant dense<0.000000e+00> : vector<32xf32>
    %104 = vector.multi_reduction <add>, %103, %cst_59 [0] : vector<16x32xf32> to vector<32xf32>
    %105 = vector.shape_cast %104 : vector<32xf32> to vector<1x32xf32>
    %cst_60 = arith.constant 1.600000e+01 : f32
    %106 = vector.broadcast %cst_60 : f32 to vector<1x32xf32>
    %107 = arith.divf %105, %106 : vector<1x32xf32>
    %108 = vector.broadcast %107 : vector<1x32xf32> to vector<16x32xf32>
    %109 = arith.subf %103, %108 : vector<16x32xf32>
    %c0_61 = arith.constant 0 : index
    %c0_62 = arith.constant 0 : index
    %c0_63 = arith.constant 0 : index
    %110 = vector.load %arg11[%c0_61, %c0_62, %c0_63] : memref<2x16x32xf32, #tpu.memory_space<vmem>>, vector<1x16x32xf32>
    %111 = vector.shape_cast %110 : vector<1x16x32xf32> to vector<16x32xf32>
    %112 = vector.shape_cast %109 : vector<16x32xf32> to vector<1x16x32xf32>
    tpu.vector_store %arg11[%c0_61, %c0_62, %c0_63], %112 {strides = array<i32>} : memref<2x16x32xf32, #tpu.memory_space<vmem>>, vector<1x16x32xf32>,
    %c1_64 = arith.constant 1 : index
    %c0_65 = arith.constant 0 : index
    %c0_66 = arith.constant 0 : index
    %113 = vector.load %arg2[%c1_64, %c0_65, %c0_66] : memref<2x16x32xf32, #tpu.memory_space<vmem>>, vector<1x16x32xf32>
    %114 = vector.shape_cast %113 : vector<1x16x32xf32> to vector<16x32xf32>
    %c0_67 = arith.constant 0 : index
    %c0_68 = arith.constant 0 : index
    %115 = vector.load %arg12[%c0_67, %c0_68] : memref<32x32xf32, #tpu.memory_space<vmem>>, vector<16x32xf32>
    tpu.vector_store %arg12[%c0_67, %c0_68], %114 {strides = array<i32>} : memref<32x32xf32, #tpu.memory_space<vmem>>, vector<16x32xf32>,
    %c16_69 = arith.constant 16 : index
    %c0_70 = arith.constant 0 : index
    %116 = vector.load %arg12[%c16_69, %c0_70] : memref<32x32xf32, #tpu.memory_space<vmem>>, vector<16x32xf32>
    tpu.vector_store %arg12[%c16_69, %c0_70], %114 {strides = array<i32>} : memref<32x32xf32, #tpu.memory_space<vmem>>, vector<16x32xf32>,
    %cst_71 = arith.constant 0.000000e+00 : f32
    %117 = vector.broadcast %cst_71 : f32 to vector<16x32xf32>
    %c1_72 = arith.constant 1 : index
    %c0_73 = arith.constant 0 : index
    %118 = memref.load %arg1[%c1_72, %c0_73] : memref<2x2xf32, #tpu.memory_space<smem>>
    %c1_74 = arith.constant 1 : index
    %c0_75 = arith.constant 0 : index
    %119 = memref.load %arg0[%c1_74, %c0_75] : memref<2x2xi32, #tpu.memory_space<smem>>
    %120 = arith.index_cast %119 : i32 to index
    %c0_76 = arith.constant 0 : index
    %121 = vector.load %arg12[%120, %c0_76] : memref<32x32xf32, #tpu.memory_space<vmem>>, vector<16x32xf32>
    %122 = vector.broadcast %118 : f32 to vector<16x32xf32>
    %123 = arith.mulf %122, %121 : vector<16x32xf32>
    %124 = arith.addf %117, %123 : vector<16x32xf32>
    %c1_77 = arith.constant 1 : index
    %c1_78 = arith.constant 1 : index
    %125 = memref.load %arg1[%c1_77, %c1_78] : memref<2x2xf32, #tpu.memory_space<smem>>
    %c1_79 = arith.constant 1 : index
    %c1_80 = arith.constant 1 : index
    %126 = memref.load %arg0[%c1_79, %c1_80] : memref<2x2xi32, #tpu.memory_space<smem>>
    %127 = arith.index_cast %126 : i32 to index
    %c0_81 = arith.constant 0 : index
    %128 = vector.load %arg12[%127, %c0_81] : memref<32x32xf32, #tpu.memory_space<vmem>>, vector<16x32xf32>
    %129 = vector.broadcast %125 : f32 to vector<16x32xf32>
    %130 = arith.mulf %129, %128 : vector<16x32xf32>
    %131 = arith.addf %124, %130 : vector<16x32xf32>
    %c1_82 = arith.constant 1 : index
    %c0_83 = arith.constant 0 : index
    %c0_84 = arith.constant 0 : index
    %132 = vector.load %arg3[%c1_82, %c0_83, %c0_84] : memref<2x16x32xf32, #tpu.memory_space<vmem>>, vector<1x16x32xf32>
    %133 = vector.shape_cast %132 : vector<1x16x32xf32> to vector<16x32xf32>
    %c0_85 = arith.constant 0 : index
    %c0_86 = arith.constant 0 : index
    %134 = vector.load %arg4[%c0_85, %c0_86] : memref<32x32xbf16, #tpu.memory_space<vmem>>, vector<32x32xbf16>
    %135 = arith.truncf %131 : vector<16x32xf32> to vector<16x32xbf16>
    %cst_87 = arith.constant dense<0.000000e+00> : vector<16x32xf32>
    %136 = tpu.matmul %135, %134, %cst_87 {dimension_numbers = #tpu.dot_dimension_numbers<[1], [0], [0], [1], [0, 0, 1, 1], [], []>} : vector<16x32xbf16>, vector<32x32xbf16>, vector<16x32xf32> -> vector<16x32xf32>
    %137 = arith.addf %133, %136 : vector<16x32xf32>
    %c0_88 = arith.constant 0 : index
    %c0_89 = arith.constant 0 : index
    %138 = vector.load %arg5[%c0_88, %c0_89] : memref<1x32xf32, #tpu.memory_space<vmem>>, vector<1x32xf32>
    %139 = vector.broadcast %138 : vector<1x32xf32> to vector<16x32xf32>
    %140 = arith.addf %137, %139 : vector<16x32xf32>
    %c0_90 = arith.constant 0 : index
    %c0_91 = arith.constant 0 : index
    %141 = vector.load %arg6[%c0_90, %c0_91] : memref<16x16xf32, #tpu.memory_space<vmem>>, vector<16x16xf32>
    %cst_92 = arith.constant dense<0.000000e+00> : vector<16x32xf32>
    %142 = tpu.matmul %141, %140, %cst_92 {dimension_numbers = #tpu.dot_dimension_numbers<[1], [0], [0], [1], [0, 0, 1, 1], [], []>} : vector<16x16xf32>, vector<16x32xf32>, vector<16x32xf32> -> vector<16x32xf32>
    %143 = arith.subf %140, %142 : vector<16x32xf32>
    %c0_93 = arith.constant 0 : index
    %c0_94 = arith.constant 0 : index
    %144 = vector.load %arg7[%c0_93, %c0_94] : memref<32x64xbf16, #tpu.memory_space<vmem>>, vector<32x64xbf16>
    %145 = arith.truncf %143 : vector<16x32xf32> to vector<16x32xbf16>
    %cst_95 = arith.constant dense<0.000000e+00> : vector<16x64xf32>
    %146 = tpu.matmul %145, %144, %cst_95 {dimension_numbers = #tpu.dot_dimension_numbers<[1], [0], [0], [1], [0, 0, 1, 1], [], []>} : vector<16x32xbf16>, vector<32x64xbf16>, vector<16x64xf32> -> vector<16x64xf32>
    %cst_96 = arith.constant 5.000000e-01 : f32
    %147 = vector.broadcast %cst_96 : f32 to vector<16x64xf32>
    %148 = arith.mulf %147, %146 : vector<16x64xf32>
    %cst_97 = arith.constant 0.707106769 : f32
    %149 = vector.broadcast %cst_97 : f32 to vector<16x64xf32>
    %150 = arith.mulf %146, %149 : vector<16x64xf32>
    %cst_98 = arith.constant 0.000000e+00 : f32
    %151 = vector.broadcast %cst_98 : f32 to vector<16x64xf32>
    %152 = arith.cmpf oge, %150, %151 : vector<16x64xf32>
    %cst_99 = arith.constant 1.000000e+00 : f32
    %cst_100 = arith.constant -1.000000e+00 : f32
    %153 = vector.broadcast %cst_99 : f32 to vector<16x64xf32>
    %154 = vector.broadcast %cst_100 : f32 to vector<16x64xf32>
    %155 = arith.select %152, %153, %154 : vector<16x64xi1>, vector<16x64xf32>
    %156 = math.absf %150 : vector<16x64xf32>
    %cst_101 = arith.constant 0.327591091 : f32
    %157 = vector.broadcast %cst_101 : f32 to vector<16x64xf32>
    %158 = arith.mulf %157, %156 : vector<16x64xf32>
    %cst_102 = arith.constant 1.000000e+00 : f32
    %159 = vector.broadcast %cst_102 : f32 to vector<16x64xf32>
    %160 = arith.addf %159, %158 : vector<16x64xf32>
    %cst_103 = arith.constant 1.000000e+00 : f32
    %161 = vector.broadcast %cst_103 : f32 to vector<16x64xf32>
    %162 = arith.divf %161, %160 : vector<16x64xf32>
    %cst_104 = arith.constant 1.06140542 : f32
    %163 = vector.broadcast %cst_104 : f32 to vector<16x64xf32>
    %164 = arith.mulf %163, %162 : vector<16x64xf32>
    %cst_105 = arith.constant -1.45315206 : f32
    %165 = vector.broadcast %cst_105 : f32 to vector<16x64xf32>
    %166 = arith.addf %164, %165 : vector<16x64xf32>
    %167 = arith.mulf %166, %162 : vector<16x64xf32>
    %cst_106 = arith.constant 1.42141378 : f32
    %168 = vector.broadcast %cst_106 : f32 to vector<16x64xf32>
    %169 = arith.addf %167, %168 : vector<16x64xf32>
    %170 = arith.mulf %169, %162 : vector<16x64xf32>
    %cst_107 = arith.constant -0.284496725 : f32
    %171 = vector.broadcast %cst_107 : f32 to vector<16x64xf32>
    %172 = arith.addf %170, %171 : vector<16x64xf32>
    %173 = arith.mulf %172, %162 : vector<16x64xf32>
    %cst_108 = arith.constant 0.254829586 : f32
    %174 = vector.broadcast %cst_108 : f32 to vector<16x64xf32>
    %175 = arith.addf %173, %174 : vector<16x64xf32>
    %176 = arith.mulf %175, %162 : vector<16x64xf32>
    %cst_109 = arith.constant 0.000000e+00 : f32
    %177 = vector.broadcast %cst_109 : f32 to vector<16x64xf32>
    %178 = arith.subf %177, %156 : vector<16x64xf32>
    %179 = arith.mulf %178, %156 : vector<16x64xf32>
    %180 = math.exp %179 : vector<16x64xf32>
    %181 = arith.mulf %176, %180 : vector<16x64xf32>
    %cst_110 = arith.constant 1.000000e+00 : f32
    %182 = vector.broadcast %cst_110 : f32 to vector<16x64xf32>
    %183 = arith.subf %182, %181 : vector<16x64xf32>
    %184 = arith.mulf %155, %183 : vector<16x64xf32>
    %cst_111 = arith.constant 1.000000e+00 : f32
    %185 = vector.broadcast %cst_111 : f32 to vector<16x64xf32>
    %186 = arith.addf %185, %184 : vector<16x64xf32>
    %187 = arith.mulf %148, %186 : vector<16x64xf32>
    %c0_112 = arith.constant 0 : index
    %c0_113 = arith.constant 0 : index
    %188 = vector.load %arg8[%c0_112, %c0_113] : memref<64x32xbf16, #tpu.memory_space<vmem>>, vector<64x32xbf16>
    %189 = arith.truncf %187 : vector<16x64xf32> to vector<16x64xbf16>
    %cst_114 = arith.constant dense<0.000000e+00> : vector<16x32xf32>
    %190 = tpu.matmul %189, %188, %cst_114 {dimension_numbers = #tpu.dot_dimension_numbers<[1], [0], [0], [1], [0, 0, 1, 1], [], []>} : vector<16x64xbf16>, vector<64x32xbf16>, vector<16x32xf32> -> vector<16x32xf32>
    %191 = arith.addf %143, %190 : vector<16x32xf32>
    %c0_115 = arith.constant 0 : index
    %c0_116 = arith.constant 0 : index
    %192 = vector.load %arg6[%c0_115, %c0_116] : memref<16x16xf32, #tpu.memory_space<vmem>>, vector<16x16xf32>
    %cst_117 = arith.constant dense<0.000000e+00> : vector<16x32xf32>
    %193 = tpu.matmul %192, %191, %cst_117 {dimension_numbers = #tpu.dot_dimension_numbers<[1], [0], [0], [1], [0, 0, 1, 1], [], []>} : vector<16x16xf32>, vector<16x32xf32>, vector<16x32xf32> -> vector<16x32xf32>
    %194 = arith.subf %191, %193 : vector<16x32xf32>
    %c0_118 = arith.constant 0 : index
    %c0_119 = arith.constant 0 : index
    %195 = vector.load %arg9[%c0_118, %c0_119] : memref<1x32xf32, #tpu.memory_space<vmem>>, vector<1x32xf32>
    %c0_120 = arith.constant 0 : index
    %c0_121 = arith.constant 0 : index
    %196 = vector.load %arg10[%c0_120, %c0_121] : memref<1x32xf32, #tpu.memory_space<vmem>>, vector<1x32xf32>
    %cst_122 = arith.constant dense<0.000000e+00> : vector<16xf32>
    %197 = vector.multi_reduction <add>, %194, %cst_122 [1] : vector<16x32xf32> to vector<16xf32>
    %198 = vector.shape_cast %197 : vector<16xf32> to vector<16x1xf32>
    %cst_123 = arith.constant 3.200000e+01 : f32
    %199 = vector.broadcast %cst_123 : f32 to vector<16x1xf32>
    %200 = arith.divf %198, %199 : vector<16x1xf32>
    %201 = vector.broadcast %200 : vector<16x1xf32> to vector<16x32xf32>
    %202 = arith.subf %194, %201 : vector<16x32xf32>
    %203 = arith.mulf %202, %202 : vector<16x32xf32>
    %cst_124 = arith.constant dense<0.000000e+00> : vector<16xf32>
    %204 = vector.multi_reduction <add>, %203, %cst_124 [1] : vector<16x32xf32> to vector<16xf32>
    %205 = vector.shape_cast %204 : vector<16xf32> to vector<16x1xf32>
    %cst_125 = arith.constant 3.200000e+01 : f32
    %206 = vector.broadcast %cst_125 : f32 to vector<16x1xf32>
    %207 = arith.divf %205, %206 : vector<16x1xf32>
    %cst_126 = arith.constant 9.99999974E-6 : f32
    %208 = vector.broadcast %cst_126 : f32 to vector<16x1xf32>
    %209 = arith.addf %207, %208 : vector<16x1xf32>
    %210 = math.rsqrt %209 : vector<16x1xf32>
    %211 = vector.broadcast %210 : vector<16x1xf32> to vector<16x32xf32>
    %212 = arith.mulf %202, %211 : vector<16x32xf32>
    %213 = vector.broadcast %195 : vector<1x32xf32> to vector<16x32xf32>
    %214 = arith.mulf %212, %213 : vector<16x32xf32>
    %215 = vector.broadcast %196 : vector<1x32xf32> to vector<16x32xf32>
    %216 = arith.addf %214, %215 : vector<16x32xf32>
    %cst_127 = arith.constant dense<0.000000e+00> : vector<32xf32>
    %217 = vector.multi_reduction <add>, %216, %cst_127 [0] : vector<16x32xf32> to vector<32xf32>
    %218 = vector.shape_cast %217 : vector<32xf32> to vector<1x32xf32>
    %cst_128 = arith.constant 1.600000e+01 : f32
    %219 = vector.broadcast %cst_128 : f32 to vector<1x32xf32>
    %220 = arith.divf %218, %219 : vector<1x32xf32>
    %221 = vector.broadcast %220 : vector<1x32xf32> to vector<16x32xf32>
    %222 = arith.subf %216, %221 : vector<16x32xf32>
    %c1_129 = arith.constant 1 : index
    %c0_130 = arith.constant 0 : index
    %c0_131 = arith.constant 0 : index
    %223 = vector.load %arg11[%c1_129, %c0_130, %c0_131] : memref<2x16x32xf32, #tpu.memory_space<vmem>>, vector<1x16x32xf32>
    %224 = vector.shape_cast %223 : vector<1x16x32xf32> to vector<16x32xf32>
    %225 = vector.shape_cast %222 : vector<16x32xf32> to vector<1x16x32xf32>
    tpu.vector_store %arg11[%c1_129, %c0_130, %c0_131], %225 {strides = array<i32>} : memref<2x16x32xf32, #tpu.memory_space<vmem>>, vector<1x16x32xf32>,
    return
  }
}

module attributes {stable_mosaic.version = 11 : i64} {
  func.func @_dec_mid_kernel(%arg0: memref<2x2xi32, #tpu.memory_space<smem>>, %arg1: memref<2x2xf32, #tpu.memory_space<smem>>, %arg2: memref<2x16x32xf32, #tpu.memory_space<vmem>>, %arg3: memref<2x16x32xf32, #tpu.memory_space<vmem>>, %arg4: memref<2x16x32xf32, #tpu.memory_space<vmem>>, %arg5: memref<32x32xbf16, #tpu.memory_space<vmem>>, %arg6: memref<1x32xf32, #tpu.memory_space<vmem>>, %arg7: memref<16x16xf32, #tpu.memory_space<vmem>>, %arg8: memref<32x32xbf16, #tpu.memory_space<vmem>>, %arg9: memref<1x32xf32, #tpu.memory_space<vmem>>, %arg10: memref<32x64xbf16, #tpu.memory_space<vmem>>, %arg11: memref<1x64xf32, #tpu.memory_space<vmem>>, %arg12: memref<2x16x32xf32, #tpu.memory_space<vmem>>, %arg13: memref<2x16x32xf32, #tpu.memory_space<vmem>>, %arg14: memref<2x16x32xf32, #tpu.memory_space<vmem>>, %arg15: memref<2x16x1xf32, #tpu.memory_space<vmem>>, %arg16: memref<32x32xf32, #tpu.memory_space<vmem>>) attributes {dimension_semantics = [], scalar_prefetch = 0 : i64, scratch_operands = 1 : i64, tpu.core_type = #tpu.core_type<tc>} {
    %c0 = arith.constant 0 : index
    %c0_0 = arith.constant 0 : index
    %c0_1 = arith.constant 0 : index
    %0 = vector.load %arg2[%c0, %c0_0, %c0_1] : memref<2x16x32xf32, #tpu.memory_space<vmem>>, vector<1x16x32xf32>
    %1 = vector.shape_cast %0 : vector<1x16x32xf32> to vector<16x32xf32>
    %c0_2 = arith.constant 0 : index
    %c0_3 = arith.constant 0 : index
    %2 = vector.load %arg16[%c0_2, %c0_3] : memref<32x32xf32, #tpu.memory_space<vmem>>, vector<16x32xf32>
    tpu.vector_store %arg16[%c0_2, %c0_3], %1 {strides = array<i32>} : memref<32x32xf32, #tpu.memory_space<vmem>>, vector<16x32xf32>,
    %c16 = arith.constant 16 : index
    %c0_4 = arith.constant 0 : index
    %3 = vector.load %arg16[%c16, %c0_4] : memref<32x32xf32, #tpu.memory_space<vmem>>, vector<16x32xf32>
    tpu.vector_store %arg16[%c16, %c0_4], %1 {strides = array<i32>} : memref<32x32xf32, #tpu.memory_space<vmem>>, vector<16x32xf32>,
    %cst = arith.constant 0.000000e+00 : f32
    %4 = vector.broadcast %cst : f32 to vector<16x32xf32>
    %c0_5 = arith.constant 0 : index
    %c0_6 = arith.constant 0 : index
    %5 = memref.load %arg1[%c0_5, %c0_6] : memref<2x2xf32, #tpu.memory_space<smem>>
    %c0_7 = arith.constant 0 : index
    %c0_8 = arith.constant 0 : index
    %6 = memref.load %arg0[%c0_7, %c0_8] : memref<2x2xi32, #tpu.memory_space<smem>>
    %7 = arith.index_cast %6 : i32 to index
    %c0_9 = arith.constant 0 : index
    %8 = vector.load %arg16[%7, %c0_9] : memref<32x32xf32, #tpu.memory_space<vmem>>, vector<16x32xf32>
    %9 = vector.broadcast %5 : f32 to vector<16x32xf32>
    %10 = arith.mulf %9, %8 : vector<16x32xf32>
    %11 = arith.addf %4, %10 : vector<16x32xf32>
    %c0_10 = arith.constant 0 : index
    %c1 = arith.constant 1 : index
    %12 = memref.load %arg1[%c0_10, %c1] : memref<2x2xf32, #tpu.memory_space<smem>>
    %c0_11 = arith.constant 0 : index
    %c1_12 = arith.constant 1 : index
    %13 = memref.load %arg0[%c0_11, %c1_12] : memref<2x2xi32, #tpu.memory_space<smem>>
    %14 = arith.index_cast %13 : i32 to index
    %c0_13 = arith.constant 0 : index
    %15 = vector.load %arg16[%14, %c0_13] : memref<32x32xf32, #tpu.memory_space<vmem>>, vector<16x32xf32>
    %16 = vector.broadcast %12 : f32 to vector<16x32xf32>
    %17 = arith.mulf %16, %15 : vector<16x32xf32>
    %18 = arith.addf %11, %17 : vector<16x32xf32>
    %c0_14 = arith.constant 0 : index
    %c0_15 = arith.constant 0 : index
    %c0_16 = arith.constant 0 : index
    %19 = vector.load %arg3[%c0_14, %c0_15, %c0_16] : memref<2x16x32xf32, #tpu.memory_space<vmem>>, vector<1x16x32xf32>
    %20 = vector.shape_cast %19 : vector<1x16x32xf32> to vector<16x32xf32>
    %c0_17 = arith.constant 0 : index
    %c0_18 = arith.constant 0 : index
    %21 = vector.load %arg5[%c0_17, %c0_18] : memref<32x32xbf16, #tpu.memory_space<vmem>>, vector<32x32xbf16>
    %22 = arith.truncf %18 : vector<16x32xf32> to vector<16x32xbf16>
    %cst_19 = arith.constant dense<0.000000e+00> : vector<16x32xf32>
    %23 = tpu.matmul %22, %21, %cst_19 {dimension_numbers = #tpu.dot_dimension_numbers<[1], [0], [0], [1], [0, 0, 1, 1], [], []>} : vector<16x32xbf16>, vector<32x32xbf16>, vector<16x32xf32> -> vector<16x32xf32>
    %24 = arith.addf %20, %23 : vector<16x32xf32>
    %c0_20 = arith.constant 0 : index
    %c0_21 = arith.constant 0 : index
    %25 = vector.load %arg6[%c0_20, %c0_21] : memref<1x32xf32, #tpu.memory_space<vmem>>, vector<1x32xf32>
    %26 = vector.broadcast %25 : vector<1x32xf32> to vector<16x32xf32>
    %27 = arith.addf %24, %26 : vector<16x32xf32>
    %c0_22 = arith.constant 0 : index
    %c0_23 = arith.constant 0 : index
    %28 = vector.load %arg7[%c0_22, %c0_23] : memref<16x16xf32, #tpu.memory_space<vmem>>, vector<16x16xf32>
    %cst_24 = arith.constant dense<0.000000e+00> : vector<16x32xf32>
    %29 = tpu.matmul %28, %27, %cst_24 {dimension_numbers = #tpu.dot_dimension_numbers<[1], [0], [0], [1], [0, 0, 1, 1], [], []>} : vector<16x16xf32>, vector<16x32xf32>, vector<16x32xf32> -> vector<16x32xf32>
    %30 = arith.subf %27, %29 : vector<16x32xf32>
    %c0_25 = arith.constant 0 : index
    %c0_26 = arith.constant 0 : index
    %c0_27 = arith.constant 0 : index
    %31 = vector.load %arg12[%c0_25, %c0_26, %c0_27] : memref<2x16x32xf32, #tpu.memory_space<vmem>>, vector<1x16x32xf32>
    %32 = vector.shape_cast %31 : vector<1x16x32xf32> to vector<16x32xf32>
    %33 = vector.shape_cast %30 : vector<16x32xf32> to vector<1x16x32xf32>
    tpu.vector_store %arg12[%c0_25, %c0_26, %c0_27], %33 {strides = array<i32>} : memref<2x16x32xf32, #tpu.memory_space<vmem>>, vector<1x16x32xf32>,
    %c0_28 = arith.constant 0 : index
    %c0_29 = arith.constant 0 : index
    %c0_30 = arith.constant 0 : index
    %34 = vector.load %arg13[%c0_28, %c0_29, %c0_30] : memref<2x16x32xf32, #tpu.memory_space<vmem>>, vector<1x16x32xf32>
    %35 = vector.shape_cast %34 : vector<1x16x32xf32> to vector<16x32xf32>
    %36 = vector.shape_cast %29 : vector<16x32xf32> to vector<1x16x32xf32>
    tpu.vector_store %arg13[%c0_28, %c0_29, %c0_30], %36 {strides = array<i32>} : memref<2x16x32xf32, #tpu.memory_space<vmem>>, vector<1x16x32xf32>,
    %c0_31 = arith.constant 0 : index
    %c0_32 = arith.constant 0 : index
    %37 = vector.load %arg8[%c0_31, %c0_32] : memref<32x32xbf16, #tpu.memory_space<vmem>>, vector<32x32xbf16>
    %38 = arith.truncf %30 : vector<16x32xf32> to vector<16x32xbf16>
    %cst_33 = arith.constant dense<0.000000e+00> : vector<16x32xf32>
    %39 = tpu.matmul %38, %37, %cst_33 {dimension_numbers = #tpu.dot_dimension_numbers<[1], [0], [0], [1], [0, 0, 1, 1], [], []>} : vector<16x32xbf16>, vector<32x32xbf16>, vector<16x32xf32> -> vector<16x32xf32>
    %c0_34 = arith.constant 0 : index
    %c0_35 = arith.constant 0 : index
    %40 = vector.load %arg9[%c0_34, %c0_35] : memref<1x32xf32, #tpu.memory_space<vmem>>, vector<1x32xf32>
    %41 = vector.broadcast %40 : vector<1x32xf32> to vector<16x32xf32>
    %42 = arith.addf %39, %41 : vector<16x32xf32>
    %c0_36 = arith.constant 0 : index
    %c0_37 = arith.constant 0 : index
    %c0_38 = arith.constant 0 : index
    %43 = vector.load %arg4[%c0_36, %c0_37, %c0_38] : memref<2x16x32xf32, #tpu.memory_space<vmem>>, vector<1x16x32xf32>
    %44 = vector.shape_cast %43 : vector<1x16x32xf32> to vector<16x32xf32>
    %c0_39 = arith.constant 0 : index
    %c0_40 = arith.constant 0 : index
    %45 = vector.load %arg10[%c0_39, %c0_40] : memref<32x64xbf16, #tpu.memory_space<vmem>>, vector<32x64xbf16>
    %46 = arith.truncf %44 : vector<16x32xf32> to vector<16x32xbf16>
    %cst_41 = arith.constant dense<0.000000e+00> : vector<16x64xf32>
    %47 = tpu.matmul %46, %45, %cst_41 {dimension_numbers = #tpu.dot_dimension_numbers<[1], [0], [0], [1], [0, 0, 1, 1], [], []>} : vector<16x32xbf16>, vector<32x64xbf16>, vector<16x64xf32> -> vector<16x64xf32>
    %c0_42 = arith.constant 0 : index
    %c0_43 = arith.constant 0 : index
    %48 = vector.load %arg11[%c0_42, %c0_43] : memref<1x64xf32, #tpu.memory_space<vmem>>, vector<1x64xf32>
    %49 = vector.broadcast %48 : vector<1x64xf32> to vector<16x64xf32>
    %50 = arith.addf %47, %49 : vector<16x64xf32>
    %51 = vector.extract_strided_slice %50 {offsets = [0, 0], sizes = [16, 32], strides = [1, 1]} : vector<16x64xf32> to vector<16x32xf32>
    %52 = vector.extract_strided_slice %50 {offsets = [0, 32], sizes = [16, 32], strides = [1, 1]} : vector<16x64xf32> to vector<16x32xf32>
    %c0_44 = arith.constant 0 : index
    %c0_45 = arith.constant 0 : index
    %c0_46 = arith.constant 0 : index
    %53 = vector.load %arg14[%c0_44, %c0_45, %c0_46] : memref<2x16x32xf32, #tpu.memory_space<vmem>>, vector<1x16x32xf32>
    %54 = vector.shape_cast %53 : vector<1x16x32xf32> to vector<16x32xf32>
    %55 = vector.shape_cast %52 : vector<16x32xf32> to vector<1x16x32xf32>
    tpu.vector_store %arg14[%c0_44, %c0_45, %c0_46], %55 {strides = array<i32>} : memref<2x16x32xf32, #tpu.memory_space<vmem>>, vector<1x16x32xf32>,
    %56 = arith.truncf %42 : vector<16x32xf32> to vector<16x32xbf16>
    %57 = arith.truncf %51 : vector<16x32xf32> to vector<16x32xbf16>
    %cst_47 = arith.constant dense<0.000000e+00> : vector<16x16xf32>
    %58 = tpu.matmul %56, %57, %cst_47 {dimension_numbers = #tpu.dot_dimension_numbers<[1], [1], [0], [0], [0, 0, 1, 0], [], []>} : vector<16x32xbf16>, vector<16x32xbf16>, vector<16x16xf32> -> vector<16x16xf32>
    %59 = tpu.iota {dimensions = array<i32: 1>} : vector<16x16xi32>
    %c15_i32 = arith.constant 15 : i32
    %60 = tpu.dynamic_rotate %58 by %c15_i32 dim 0 : vector<16x16xf32>, i32 -> vector<16x16xf32>
    %c0_i32 = arith.constant 0 : i32
    %61 = vector.broadcast %c0_i32 : i32 to vector<16x16xi32>
    %62 = arith.shrsi %59, %61 : vector<16x16xi32>
    %c1_i32 = arith.constant 1 : i32
    %63 = vector.broadcast %c1_i32 : i32 to vector<16x16xi32>
    %64 = arith.andi %62, %63 : vector<16x16xi32>
    %c1_i32_48 = arith.constant 1 : i32
    %65 = vector.broadcast %c1_i32_48 : i32 to vector<16x16xi32>
    %66 = arith.cmpi eq, %64, %65 : vector<16x16xi32>
    %67 = arith.select %66, %60, %58 : vector<16x16xi1>, vector<16x16xf32>
    %c14_i32 = arith.constant 14 : i32
    %68 = tpu.dynamic_rotate %67 by %c14_i32 dim 0 : vector<16x16xf32>, i32 -> vector<16x16xf32>
    %c1_i32_49 = arith.constant 1 : i32
    %69 = vector.broadcast %c1_i32_49 : i32 to vector<16x16xi32>
    %70 = arith.shrsi %59, %69 : vector<16x16xi32>
    %c1_i32_50 = arith.constant 1 : i32
    %71 = vector.broadcast %c1_i32_50 : i32 to vector<16x16xi32>
    %72 = arith.andi %70, %71 : vector<16x16xi32>
    %c1_i32_51 = arith.constant 1 : i32
    %73 = vector.broadcast %c1_i32_51 : i32 to vector<16x16xi32>
    %74 = arith.cmpi eq, %72, %73 : vector<16x16xi32>
    %75 = arith.select %74, %68, %67 : vector<16x16xi1>, vector<16x16xf32>
    %c12_i32 = arith.constant 12 : i32
    %76 = tpu.dynamic_rotate %75 by %c12_i32 dim 0 : vector<16x16xf32>, i32 -> vector<16x16xf32>
    %c2_i32 = arith.constant 2 : i32
    %77 = vector.broadcast %c2_i32 : i32 to vector<16x16xi32>
    %78 = arith.shrsi %59, %77 : vector<16x16xi32>
    %c1_i32_52 = arith.constant 1 : i32
    %79 = vector.broadcast %c1_i32_52 : i32 to vector<16x16xi32>
    %80 = arith.andi %78, %79 : vector<16x16xi32>
    %c1_i32_53 = arith.constant 1 : i32
    %81 = vector.broadcast %c1_i32_53 : i32 to vector<16x16xi32>
    %82 = arith.cmpi eq, %80, %81 : vector<16x16xi32>
    %83 = arith.select %82, %76, %75 : vector<16x16xi1>, vector<16x16xf32>
    %c8_i32 = arith.constant 8 : i32
    %84 = tpu.dynamic_rotate %83 by %c8_i32 dim 0 : vector<16x16xf32>, i32 -> vector<16x16xf32>
    %c3_i32 = arith.constant 3 : i32
    %85 = vector.broadcast %c3_i32 : i32 to vector<16x16xi32>
    %86 = arith.shrsi %59, %85 : vector<16x16xi32>
    %c1_i32_54 = arith.constant 1 : i32
    %87 = vector.broadcast %c1_i32_54 : i32 to vector<16x16xi32>
    %88 = arith.andi %86, %87 : vector<16x16xi32>
    %c1_i32_55 = arith.constant 1 : i32
    %89 = vector.broadcast %c1_i32_55 : i32 to vector<16x16xi32>
    %90 = arith.cmpi eq, %88, %89 : vector<16x16xi32>
    %91 = arith.select %90, %84, %83 : vector<16x16xi1>, vector<16x16xf32>
    %cst_56 = arith.constant dense<0.000000e+00> : vector<16xf32>
    %92 = vector.multi_reduction <add>, %91, %cst_56 [1] : vector<16x16xf32> to vector<16xf32>
    %93 = vector.shape_cast %92 : vector<16xf32> to vector<16x1xf32>
    %cst_57 = arith.constant 3.125000e-02 : f32
    %94 = vector.broadcast %cst_57 : f32 to vector<16x1xf32>
    %95 = arith.mulf %93, %94 : vector<16x1xf32>
    %c0_58 = arith.constant 0 : index
    %c0_59 = arith.constant 0 : index
    %c0_60 = arith.constant 0 : index
    %96 = vector.load %arg15[%c0_58, %c0_59, %c0_60] : memref<2x16x1xf32, #tpu.memory_space<vmem>>, vector<1x16x1xf32>
    %97 = vector.shape_cast %96 : vector<1x16x1xf32> to vector<16x1xf32>
    %98 = vector.shape_cast %95 : vector<16x1xf32> to vector<1x16x1xf32>
    tpu.vector_store %arg15[%c0_58, %c0_59, %c0_60], %98 {strides = array<i32>} : memref<2x16x1xf32, #tpu.memory_space<vmem>>, vector<1x16x1xf32>,
    %c1_61 = arith.constant 1 : index
    %c0_62 = arith.constant 0 : index
    %c0_63 = arith.constant 0 : index
    %99 = vector.load %arg2[%c1_61, %c0_62, %c0_63] : memref<2x16x32xf32, #tpu.memory_space<vmem>>, vector<1x16x32xf32>
    %100 = vector.shape_cast %99 : vector<1x16x32xf32> to vector<16x32xf32>
    %c0_64 = arith.constant 0 : index
    %c0_65 = arith.constant 0 : index
    %101 = vector.load %arg16[%c0_64, %c0_65] : memref<32x32xf32, #tpu.memory_space<vmem>>, vector<16x32xf32>
    tpu.vector_store %arg16[%c0_64, %c0_65], %100 {strides = array<i32>} : memref<32x32xf32, #tpu.memory_space<vmem>>, vector<16x32xf32>,
    %c16_66 = arith.constant 16 : index
    %c0_67 = arith.constant 0 : index
    %102 = vector.load %arg16[%c16_66, %c0_67] : memref<32x32xf32, #tpu.memory_space<vmem>>, vector<16x32xf32>
    tpu.vector_store %arg16[%c16_66, %c0_67], %100 {strides = array<i32>} : memref<32x32xf32, #tpu.memory_space<vmem>>, vector<16x32xf32>,
    %cst_68 = arith.constant 0.000000e+00 : f32
    %103 = vector.broadcast %cst_68 : f32 to vector<16x32xf32>
    %c1_69 = arith.constant 1 : index
    %c0_70 = arith.constant 0 : index
    %104 = memref.load %arg1[%c1_69, %c0_70] : memref<2x2xf32, #tpu.memory_space<smem>>
    %c1_71 = arith.constant 1 : index
    %c0_72 = arith.constant 0 : index
    %105 = memref.load %arg0[%c1_71, %c0_72] : memref<2x2xi32, #tpu.memory_space<smem>>
    %106 = arith.index_cast %105 : i32 to index
    %c0_73 = arith.constant 0 : index
    %107 = vector.load %arg16[%106, %c0_73] : memref<32x32xf32, #tpu.memory_space<vmem>>, vector<16x32xf32>
    %108 = vector.broadcast %104 : f32 to vector<16x32xf32>
    %109 = arith.mulf %108, %107 : vector<16x32xf32>
    %110 = arith.addf %103, %109 : vector<16x32xf32>
    %c1_74 = arith.constant 1 : index
    %c1_75 = arith.constant 1 : index
    %111 = memref.load %arg1[%c1_74, %c1_75] : memref<2x2xf32, #tpu.memory_space<smem>>
    %c1_76 = arith.constant 1 : index
    %c1_77 = arith.constant 1 : index
    %112 = memref.load %arg0[%c1_76, %c1_77] : memref<2x2xi32, #tpu.memory_space<smem>>
    %113 = arith.index_cast %112 : i32 to index
    %c0_78 = arith.constant 0 : index
    %114 = vector.load %arg16[%113, %c0_78] : memref<32x32xf32, #tpu.memory_space<vmem>>, vector<16x32xf32>
    %115 = vector.broadcast %111 : f32 to vector<16x32xf32>
    %116 = arith.mulf %115, %114 : vector<16x32xf32>
    %117 = arith.addf %110, %116 : vector<16x32xf32>
    %c1_79 = arith.constant 1 : index
    %c0_80 = arith.constant 0 : index
    %c0_81 = arith.constant 0 : index
    %118 = vector.load %arg3[%c1_79, %c0_80, %c0_81] : memref<2x16x32xf32, #tpu.memory_space<vmem>>, vector<1x16x32xf32>
    %119 = vector.shape_cast %118 : vector<1x16x32xf32> to vector<16x32xf32>
    %c0_82 = arith.constant 0 : index
    %c0_83 = arith.constant 0 : index
    %120 = vector.load %arg5[%c0_82, %c0_83] : memref<32x32xbf16, #tpu.memory_space<vmem>>, vector<32x32xbf16>
    %121 = arith.truncf %117 : vector<16x32xf32> to vector<16x32xbf16>
    %cst_84 = arith.constant dense<0.000000e+00> : vector<16x32xf32>
    %122 = tpu.matmul %121, %120, %cst_84 {dimension_numbers = #tpu.dot_dimension_numbers<[1], [0], [0], [1], [0, 0, 1, 1], [], []>} : vector<16x32xbf16>, vector<32x32xbf16>, vector<16x32xf32> -> vector<16x32xf32>
    %123 = arith.addf %119, %122 : vector<16x32xf32>
    %c0_85 = arith.constant 0 : index
    %c0_86 = arith.constant 0 : index
    %124 = vector.load %arg6[%c0_85, %c0_86] : memref<1x32xf32, #tpu.memory_space<vmem>>, vector<1x32xf32>
    %125 = vector.broadcast %124 : vector<1x32xf32> to vector<16x32xf32>
    %126 = arith.addf %123, %125 : vector<16x32xf32>
    %c0_87 = arith.constant 0 : index
    %c0_88 = arith.constant 0 : index
    %127 = vector.load %arg7[%c0_87, %c0_88] : memref<16x16xf32, #tpu.memory_space<vmem>>, vector<16x16xf32>
    %cst_89 = arith.constant dense<0.000000e+00> : vector<16x32xf32>
    %128 = tpu.matmul %127, %126, %cst_89 {dimension_numbers = #tpu.dot_dimension_numbers<[1], [0], [0], [1], [0, 0, 1, 1], [], []>} : vector<16x16xf32>, vector<16x32xf32>, vector<16x32xf32> -> vector<16x32xf32>
    %129 = arith.subf %126, %128 : vector<16x32xf32>
    %c1_90 = arith.constant 1 : index
    %c0_91 = arith.constant 0 : index
    %c0_92 = arith.constant 0 : index
    %130 = vector.load %arg12[%c1_90, %c0_91, %c0_92] : memref<2x16x32xf32, #tpu.memory_space<vmem>>, vector<1x16x32xf32>
    %131 = vector.shape_cast %130 : vector<1x16x32xf32> to vector<16x32xf32>
    %132 = vector.shape_cast %129 : vector<16x32xf32> to vector<1x16x32xf32>
    tpu.vector_store %arg12[%c1_90, %c0_91, %c0_92], %132 {strides = array<i32>} : memref<2x16x32xf32, #tpu.memory_space<vmem>>, vector<1x16x32xf32>,
    %c1_93 = arith.constant 1 : index
    %c0_94 = arith.constant 0 : index
    %c0_95 = arith.constant 0 : index
    %133 = vector.load %arg13[%c1_93, %c0_94, %c0_95] : memref<2x16x32xf32, #tpu.memory_space<vmem>>, vector<1x16x32xf32>
    %134 = vector.shape_cast %133 : vector<1x16x32xf32> to vector<16x32xf32>
    %135 = vector.shape_cast %128 : vector<16x32xf32> to vector<1x16x32xf32>
    tpu.vector_store %arg13[%c1_93, %c0_94, %c0_95], %135 {strides = array<i32>} : memref<2x16x32xf32, #tpu.memory_space<vmem>>, vector<1x16x32xf32>,
    %c0_96 = arith.constant 0 : index
    %c0_97 = arith.constant 0 : index
    %136 = vector.load %arg8[%c0_96, %c0_97] : memref<32x32xbf16, #tpu.memory_space<vmem>>, vector<32x32xbf16>
    %137 = arith.truncf %129 : vector<16x32xf32> to vector<16x32xbf16>
    %cst_98 = arith.constant dense<0.000000e+00> : vector<16x32xf32>
    %138 = tpu.matmul %137, %136, %cst_98 {dimension_numbers = #tpu.dot_dimension_numbers<[1], [0], [0], [1], [0, 0, 1, 1], [], []>} : vector<16x32xbf16>, vector<32x32xbf16>, vector<16x32xf32> -> vector<16x32xf32>
    %c0_99 = arith.constant 0 : index
    %c0_100 = arith.constant 0 : index
    %139 = vector.load %arg9[%c0_99, %c0_100] : memref<1x32xf32, #tpu.memory_space<vmem>>, vector<1x32xf32>
    %140 = vector.broadcast %139 : vector<1x32xf32> to vector<16x32xf32>
    %141 = arith.addf %138, %140 : vector<16x32xf32>
    %c1_101 = arith.constant 1 : index
    %c0_102 = arith.constant 0 : index
    %c0_103 = arith.constant 0 : index
    %142 = vector.load %arg4[%c1_101, %c0_102, %c0_103] : memref<2x16x32xf32, #tpu.memory_space<vmem>>, vector<1x16x32xf32>
    %143 = vector.shape_cast %142 : vector<1x16x32xf32> to vector<16x32xf32>
    %c0_104 = arith.constant 0 : index
    %c0_105 = arith.constant 0 : index
    %144 = vector.load %arg10[%c0_104, %c0_105] : memref<32x64xbf16, #tpu.memory_space<vmem>>, vector<32x64xbf16>
    %145 = arith.truncf %143 : vector<16x32xf32> to vector<16x32xbf16>
    %cst_106 = arith.constant dense<0.000000e+00> : vector<16x64xf32>
    %146 = tpu.matmul %145, %144, %cst_106 {dimension_numbers = #tpu.dot_dimension_numbers<[1], [0], [0], [1], [0, 0, 1, 1], [], []>} : vector<16x32xbf16>, vector<32x64xbf16>, vector<16x64xf32> -> vector<16x64xf32>
    %c0_107 = arith.constant 0 : index
    %c0_108 = arith.constant 0 : index
    %147 = vector.load %arg11[%c0_107, %c0_108] : memref<1x64xf32, #tpu.memory_space<vmem>>, vector<1x64xf32>
    %148 = vector.broadcast %147 : vector<1x64xf32> to vector<16x64xf32>
    %149 = arith.addf %146, %148 : vector<16x64xf32>
    %150 = vector.extract_strided_slice %149 {offsets = [0, 0], sizes = [16, 32], strides = [1, 1]} : vector<16x64xf32> to vector<16x32xf32>
    %151 = vector.extract_strided_slice %149 {offsets = [0, 32], sizes = [16, 32], strides = [1, 1]} : vector<16x64xf32> to vector<16x32xf32>
    %c1_109 = arith.constant 1 : index
    %c0_110 = arith.constant 0 : index
    %c0_111 = arith.constant 0 : index
    %152 = vector.load %arg14[%c1_109, %c0_110, %c0_111] : memref<2x16x32xf32, #tpu.memory_space<vmem>>, vector<1x16x32xf32>
    %153 = vector.shape_cast %152 : vector<1x16x32xf32> to vector<16x32xf32>
    %154 = vector.shape_cast %151 : vector<16x32xf32> to vector<1x16x32xf32>
    tpu.vector_store %arg14[%c1_109, %c0_110, %c0_111], %154 {strides = array<i32>} : memref<2x16x32xf32, #tpu.memory_space<vmem>>, vector<1x16x32xf32>,
    %155 = arith.truncf %141 : vector<16x32xf32> to vector<16x32xbf16>
    %156 = arith.truncf %150 : vector<16x32xf32> to vector<16x32xbf16>
    %cst_112 = arith.constant dense<0.000000e+00> : vector<16x16xf32>
    %157 = tpu.matmul %155, %156, %cst_112 {dimension_numbers = #tpu.dot_dimension_numbers<[1], [1], [0], [0], [0, 0, 1, 0], [], []>} : vector<16x32xbf16>, vector<16x32xbf16>, vector<16x16xf32> -> vector<16x16xf32>
    %158 = tpu.iota {dimensions = array<i32: 1>} : vector<16x16xi32>
    %c15_i32_113 = arith.constant 15 : i32
    %159 = tpu.dynamic_rotate %157 by %c15_i32_113 dim 0 : vector<16x16xf32>, i32 -> vector<16x16xf32>
    %c0_i32_114 = arith.constant 0 : i32
    %160 = vector.broadcast %c0_i32_114 : i32 to vector<16x16xi32>
    %161 = arith.shrsi %158, %160 : vector<16x16xi32>
    %c1_i32_115 = arith.constant 1 : i32
    %162 = vector.broadcast %c1_i32_115 : i32 to vector<16x16xi32>
    %163 = arith.andi %161, %162 : vector<16x16xi32>
    %c1_i32_116 = arith.constant 1 : i32
    %164 = vector.broadcast %c1_i32_116 : i32 to vector<16x16xi32>
    %165 = arith.cmpi eq, %163, %164 : vector<16x16xi32>
    %166 = arith.select %165, %159, %157 : vector<16x16xi1>, vector<16x16xf32>
    %c14_i32_117 = arith.constant 14 : i32
    %167 = tpu.dynamic_rotate %166 by %c14_i32_117 dim 0 : vector<16x16xf32>, i32 -> vector<16x16xf32>
    %c1_i32_118 = arith.constant 1 : i32
    %168 = vector.broadcast %c1_i32_118 : i32 to vector<16x16xi32>
    %169 = arith.shrsi %158, %168 : vector<16x16xi32>
    %c1_i32_119 = arith.constant 1 : i32
    %170 = vector.broadcast %c1_i32_119 : i32 to vector<16x16xi32>
    %171 = arith.andi %169, %170 : vector<16x16xi32>
    %c1_i32_120 = arith.constant 1 : i32
    %172 = vector.broadcast %c1_i32_120 : i32 to vector<16x16xi32>
    %173 = arith.cmpi eq, %171, %172 : vector<16x16xi32>
    %174 = arith.select %173, %167, %166 : vector<16x16xi1>, vector<16x16xf32>
    %c12_i32_121 = arith.constant 12 : i32
    %175 = tpu.dynamic_rotate %174 by %c12_i32_121 dim 0 : vector<16x16xf32>, i32 -> vector<16x16xf32>
    %c2_i32_122 = arith.constant 2 : i32
    %176 = vector.broadcast %c2_i32_122 : i32 to vector<16x16xi32>
    %177 = arith.shrsi %158, %176 : vector<16x16xi32>
    %c1_i32_123 = arith.constant 1 : i32
    %178 = vector.broadcast %c1_i32_123 : i32 to vector<16x16xi32>
    %179 = arith.andi %177, %178 : vector<16x16xi32>
    %c1_i32_124 = arith.constant 1 : i32
    %180 = vector.broadcast %c1_i32_124 : i32 to vector<16x16xi32>
    %181 = arith.cmpi eq, %179, %180 : vector<16x16xi32>
    %182 = arith.select %181, %175, %174 : vector<16x16xi1>, vector<16x16xf32>
    %c8_i32_125 = arith.constant 8 : i32
    %183 = tpu.dynamic_rotate %182 by %c8_i32_125 dim 0 : vector<16x16xf32>, i32 -> vector<16x16xf32>
    %c3_i32_126 = arith.constant 3 : i32
    %184 = vector.broadcast %c3_i32_126 : i32 to vector<16x16xi32>
    %185 = arith.shrsi %158, %184 : vector<16x16xi32>
    %c1_i32_127 = arith.constant 1 : i32
    %186 = vector.broadcast %c1_i32_127 : i32 to vector<16x16xi32>
    %187 = arith.andi %185, %186 : vector<16x16xi32>
    %c1_i32_128 = arith.constant 1 : i32
    %188 = vector.broadcast %c1_i32_128 : i32 to vector<16x16xi32>
    %189 = arith.cmpi eq, %187, %188 : vector<16x16xi32>
    %190 = arith.select %189, %183, %182 : vector<16x16xi1>, vector<16x16xf32>
    %cst_129 = arith.constant dense<0.000000e+00> : vector<16xf32>
    %191 = vector.multi_reduction <add>, %190, %cst_129 [1] : vector<16x16xf32> to vector<16xf32>
    %192 = vector.shape_cast %191 : vector<16xf32> to vector<16x1xf32>
    %cst_130 = arith.constant 3.125000e-02 : f32
    %193 = vector.broadcast %cst_130 : f32 to vector<16x1xf32>
    %194 = arith.mulf %192, %193 : vector<16x1xf32>
    %c1_131 = arith.constant 1 : index
    %c0_132 = arith.constant 0 : index
    %c0_133 = arith.constant 0 : index
    %195 = vector.load %arg15[%c1_131, %c0_132, %c0_133] : memref<2x16x1xf32, #tpu.memory_space<vmem>>, vector<1x16x1xf32>
    %196 = vector.shape_cast %195 : vector<1x16x1xf32> to vector<16x1xf32>
    %197 = vector.shape_cast %194 : vector<16x1xf32> to vector<1x16x1xf32>
    tpu.vector_store %arg15[%c1_131, %c0_132, %c0_133], %197 {strides = array<i32>} : memref<2x16x1xf32, #tpu.memory_space<vmem>>, vector<1x16x1xf32>,
    return
  }
}

module attributes {stable_mosaic.version = 11 : i64} {
  func.func @_dec_cross_final_kernel(%arg0: memref<2x2xi32, #tpu.memory_space<smem>>, %arg1: memref<2x2xf32, #tpu.memory_space<smem>>, %arg2: memref<2x16x32xf32, #tpu.memory_space<vmem>>, %arg3: memref<2x16x32xf32, #tpu.memory_space<vmem>>, %arg4: memref<2x16x32xf32, #tpu.memory_space<vmem>>, %arg5: memref<32x32xbf16, #tpu.memory_space<vmem>>, %arg6: memref<1x32xf32, #tpu.memory_space<vmem>>, %arg7: memref<16x16xf32, #tpu.memory_space<vmem>>, %arg8: memref<32x64xbf16, #tpu.memory_space<vmem>>, %arg9: memref<64x32xbf16, #tpu.memory_space<vmem>>, %arg10: memref<96x4xbf16, #tpu.memory_space<vmem>>, %arg11: memref<2x16x4xf32, #tpu.memory_space<vmem>>, %arg12: memref<1x32xf32, #tpu.memory_space<vmem>>, %arg13: memref<1x32xf32, #tpu.memory_space<vmem>>, %arg14: memref<32x4xbf16, #tpu.memory_space<vmem>>, %arg15: memref<1x4xf32, #tpu.memory_space<vmem>>, %arg16: memref<2x16x4xf32, #tpu.memory_space<vmem>>, %arg17: memref<32x32xf32, #tpu.memory_space<vmem>>) attributes {dimension_semantics = [], scalar_prefetch = 0 : i64, scratch_operands = 1 : i64, tpu.core_type = #tpu.core_type<tc>} {
    %c0 = arith.constant 0 : index
    %c0_0 = arith.constant 0 : index
    %c0_1 = arith.constant 0 : index
    %0 = vector.load %arg2[%c0, %c0_0, %c0_1] : memref<2x16x32xf32, #tpu.memory_space<vmem>>, vector<1x16x32xf32>
    %1 = vector.shape_cast %0 : vector<1x16x32xf32> to vector<16x32xf32>
    %c0_2 = arith.constant 0 : index
    %c0_3 = arith.constant 0 : index
    %2 = vector.load %arg17[%c0_2, %c0_3] : memref<32x32xf32, #tpu.memory_space<vmem>>, vector<16x32xf32>
    tpu.vector_store %arg17[%c0_2, %c0_3], %1 {strides = array<i32>} : memref<32x32xf32, #tpu.memory_space<vmem>>, vector<16x32xf32>,
    %c16 = arith.constant 16 : index
    %c0_4 = arith.constant 0 : index
    %3 = vector.load %arg17[%c16, %c0_4] : memref<32x32xf32, #tpu.memory_space<vmem>>, vector<16x32xf32>
    tpu.vector_store %arg17[%c16, %c0_4], %1 {strides = array<i32>} : memref<32x32xf32, #tpu.memory_space<vmem>>, vector<16x32xf32>,
    %cst = arith.constant 0.000000e+00 : f32
    %4 = vector.broadcast %cst : f32 to vector<16x32xf32>
    %c0_5 = arith.constant 0 : index
    %c0_6 = arith.constant 0 : index
    %5 = memref.load %arg1[%c0_5, %c0_6] : memref<2x2xf32, #tpu.memory_space<smem>>
    %c0_7 = arith.constant 0 : index
    %c0_8 = arith.constant 0 : index
    %6 = memref.load %arg0[%c0_7, %c0_8] : memref<2x2xi32, #tpu.memory_space<smem>>
    %7 = arith.index_cast %6 : i32 to index
    %c0_9 = arith.constant 0 : index
    %8 = vector.load %arg17[%7, %c0_9] : memref<32x32xf32, #tpu.memory_space<vmem>>, vector<16x32xf32>
    %9 = vector.broadcast %5 : f32 to vector<16x32xf32>
    %10 = arith.mulf %9, %8 : vector<16x32xf32>
    %11 = arith.addf %4, %10 : vector<16x32xf32>
    %c0_10 = arith.constant 0 : index
    %c1 = arith.constant 1 : index
    %12 = memref.load %arg1[%c0_10, %c1] : memref<2x2xf32, #tpu.memory_space<smem>>
    %c0_11 = arith.constant 0 : index
    %c1_12 = arith.constant 1 : index
    %13 = memref.load %arg0[%c0_11, %c1_12] : memref<2x2xi32, #tpu.memory_space<smem>>
    %14 = arith.index_cast %13 : i32 to index
    %c0_13 = arith.constant 0 : index
    %15 = vector.load %arg17[%14, %c0_13] : memref<32x32xf32, #tpu.memory_space<vmem>>, vector<16x32xf32>
    %16 = vector.broadcast %12 : f32 to vector<16x32xf32>
    %17 = arith.mulf %16, %15 : vector<16x32xf32>
    %18 = arith.addf %11, %17 : vector<16x32xf32>
    %c0_14 = arith.constant 0 : index
    %c0_15 = arith.constant 0 : index
    %c0_16 = arith.constant 0 : index
    %19 = vector.load %arg3[%c0_14, %c0_15, %c0_16] : memref<2x16x32xf32, #tpu.memory_space<vmem>>, vector<1x16x32xf32>
    %20 = vector.shape_cast %19 : vector<1x16x32xf32> to vector<16x32xf32>
    %c0_17 = arith.constant 0 : index
    %c0_18 = arith.constant 0 : index
    %21 = vector.load %arg5[%c0_17, %c0_18] : memref<32x32xbf16, #tpu.memory_space<vmem>>, vector<32x32xbf16>
    %22 = arith.truncf %18 : vector<16x32xf32> to vector<16x32xbf16>
    %cst_19 = arith.constant dense<0.000000e+00> : vector<16x32xf32>
    %23 = tpu.matmul %22, %21, %cst_19 {dimension_numbers = #tpu.dot_dimension_numbers<[1], [0], [0], [1], [0, 0, 1, 1], [], []>} : vector<16x32xbf16>, vector<32x32xbf16>, vector<16x32xf32> -> vector<16x32xf32>
    %24 = arith.addf %20, %23 : vector<16x32xf32>
    %c0_20 = arith.constant 0 : index
    %c0_21 = arith.constant 0 : index
    %25 = vector.load %arg6[%c0_20, %c0_21] : memref<1x32xf32, #tpu.memory_space<vmem>>, vector<1x32xf32>
    %26 = vector.broadcast %25 : vector<1x32xf32> to vector<16x32xf32>
    %27 = arith.addf %24, %26 : vector<16x32xf32>
    %c0_22 = arith.constant 0 : index
    %c0_23 = arith.constant 0 : index
    %28 = vector.load %arg7[%c0_22, %c0_23] : memref<16x16xf32, #tpu.memory_space<vmem>>, vector<16x16xf32>
    %cst_24 = arith.constant dense<0.000000e+00> : vector<16x32xf32>
    %29 = tpu.matmul %28, %27, %cst_24 {dimension_numbers = #tpu.dot_dimension_numbers<[1], [0], [0], [1], [0, 0, 1, 1], [], []>} : vector<16x16xf32>, vector<16x32xf32>, vector<16x32xf32> -> vector<16x32xf32>
    %30 = arith.subf %27, %29 : vector<16x32xf32>
    %c0_25 = arith.constant 0 : index
    %c0_26 = arith.constant 0 : index
    %31 = vector.load %arg8[%c0_25, %c0_26] : memref<32x64xbf16, #tpu.memory_space<vmem>>, vector<32x64xbf16>
    %32 = arith.truncf %30 : vector<16x32xf32> to vector<16x32xbf16>
    %cst_27 = arith.constant dense<0.000000e+00> : vector<16x64xf32>
    %33 = tpu.matmul %32, %31, %cst_27 {dimension_numbers = #tpu.dot_dimension_numbers<[1], [0], [0], [1], [0, 0, 1, 1], [], []>} : vector<16x32xbf16>, vector<32x64xbf16>, vector<16x64xf32> -> vector<16x64xf32>
    %cst_28 = arith.constant 5.000000e-01 : f32
    %34 = vector.broadcast %cst_28 : f32 to vector<16x64xf32>
    %35 = arith.mulf %34, %33 : vector<16x64xf32>
    %cst_29 = arith.constant 0.707106769 : f32
    %36 = vector.broadcast %cst_29 : f32 to vector<16x64xf32>
    %37 = arith.mulf %33, %36 : vector<16x64xf32>
    %cst_30 = arith.constant 0.000000e+00 : f32
    %38 = vector.broadcast %cst_30 : f32 to vector<16x64xf32>
    %39 = arith.cmpf oge, %37, %38 : vector<16x64xf32>
    %cst_31 = arith.constant 1.000000e+00 : f32
    %cst_32 = arith.constant -1.000000e+00 : f32
    %40 = vector.broadcast %cst_31 : f32 to vector<16x64xf32>
    %41 = vector.broadcast %cst_32 : f32 to vector<16x64xf32>
    %42 = arith.select %39, %40, %41 : vector<16x64xi1>, vector<16x64xf32>
    %43 = math.absf %37 : vector<16x64xf32>
    %cst_33 = arith.constant 0.327591091 : f32
    %44 = vector.broadcast %cst_33 : f32 to vector<16x64xf32>
    %45 = arith.mulf %44, %43 : vector<16x64xf32>
    %cst_34 = arith.constant 1.000000e+00 : f32
    %46 = vector.broadcast %cst_34 : f32 to vector<16x64xf32>
    %47 = arith.addf %46, %45 : vector<16x64xf32>
    %cst_35 = arith.constant 1.000000e+00 : f32
    %48 = vector.broadcast %cst_35 : f32 to vector<16x64xf32>
    %49 = arith.divf %48, %47 : vector<16x64xf32>
    %cst_36 = arith.constant 1.06140542 : f32
    %50 = vector.broadcast %cst_36 : f32 to vector<16x64xf32>
    %51 = arith.mulf %50, %49 : vector<16x64xf32>
    %cst_37 = arith.constant -1.45315206 : f32
    %52 = vector.broadcast %cst_37 : f32 to vector<16x64xf32>
    %53 = arith.addf %51, %52 : vector<16x64xf32>
    %54 = arith.mulf %53, %49 : vector<16x64xf32>
    %cst_38 = arith.constant 1.42141378 : f32
    %55 = vector.broadcast %cst_38 : f32 to vector<16x64xf32>
    %56 = arith.addf %54, %55 : vector<16x64xf32>
    %57 = arith.mulf %56, %49 : vector<16x64xf32>
    %cst_39 = arith.constant -0.284496725 : f32
    %58 = vector.broadcast %cst_39 : f32 to vector<16x64xf32>
    %59 = arith.addf %57, %58 : vector<16x64xf32>
    %60 = arith.mulf %59, %49 : vector<16x64xf32>
    %cst_40 = arith.constant 0.254829586 : f32
    %61 = vector.broadcast %cst_40 : f32 to vector<16x64xf32>
    %62 = arith.addf %60, %61 : vector<16x64xf32>
    %63 = arith.mulf %62, %49 : vector<16x64xf32>
    %cst_41 = arith.constant 0.000000e+00 : f32
    %64 = vector.broadcast %cst_41 : f32 to vector<16x64xf32>
    %65 = arith.subf %64, %43 : vector<16x64xf32>
    %66 = arith.mulf %65, %43 : vector<16x64xf32>
    %67 = math.exp %66 : vector<16x64xf32>
    %68 = arith.mulf %63, %67 : vector<16x64xf32>
    %cst_42 = arith.constant 1.000000e+00 : f32
    %69 = vector.broadcast %cst_42 : f32 to vector<16x64xf32>
    %70 = arith.subf %69, %68 : vector<16x64xf32>
    %71 = arith.mulf %42, %70 : vector<16x64xf32>
    %cst_43 = arith.constant 1.000000e+00 : f32
    %72 = vector.broadcast %cst_43 : f32 to vector<16x64xf32>
    %73 = arith.addf %72, %71 : vector<16x64xf32>
    %74 = arith.mulf %35, %73 : vector<16x64xf32>
    %c0_44 = arith.constant 0 : index
    %c0_45 = arith.constant 0 : index
    %75 = vector.load %arg9[%c0_44, %c0_45] : memref<64x32xbf16, #tpu.memory_space<vmem>>, vector<64x32xbf16>
    %76 = arith.truncf %74 : vector<16x64xf32> to vector<16x64xbf16>
    %cst_46 = arith.constant dense<0.000000e+00> : vector<16x32xf32>
    %77 = tpu.matmul %76, %75, %cst_46 {dimension_numbers = #tpu.dot_dimension_numbers<[1], [0], [0], [1], [0, 0, 1, 1], [], []>} : vector<16x64xbf16>, vector<64x32xbf16>, vector<16x32xf32> -> vector<16x32xf32>
    %78 = arith.addf %30, %77 : vector<16x32xf32>
    %c0_47 = arith.constant 0 : index
    %c0_48 = arith.constant 0 : index
    %79 = vector.load %arg7[%c0_47, %c0_48] : memref<16x16xf32, #tpu.memory_space<vmem>>, vector<16x16xf32>
    %cst_49 = arith.constant dense<0.000000e+00> : vector<16x32xf32>
    %80 = tpu.matmul %79, %78, %cst_49 {dimension_numbers = #tpu.dot_dimension_numbers<[1], [0], [0], [1], [0, 0, 1, 1], [], []>} : vector<16x16xf32>, vector<16x32xf32>, vector<16x32xf32> -> vector<16x32xf32>
    %81 = arith.subf %78, %80 : vector<16x32xf32>
    %c0_50 = arith.constant 0 : index
    %c0_51 = arith.constant 0 : index
    %c0_52 = arith.constant 0 : index
    %82 = vector.load %arg4[%c0_50, %c0_51, %c0_52] : memref<2x16x32xf32, #tpu.memory_space<vmem>>, vector<1x16x32xf32>
    %83 = vector.shape_cast %82 : vector<1x16x32xf32> to vector<16x32xf32>
    %84 = arith.addf %83, %29 : vector<16x32xf32>
    %85 = arith.addf %84, %80 : vector<16x32xf32>
    %c1_i32 = arith.constant 1 : i32
    %86 = tpu.dynamic_rotate %85 by %c1_i32 dim 0 : vector<16x32xf32>, i32 -> vector<16x32xf32>
    %c15_i32 = arith.constant 15 : i32
    %87 = tpu.dynamic_rotate %85 by %c15_i32 dim 0 : vector<16x32xf32>, i32 -> vector<16x32xf32>
    %88 = tpu.concatenate %86, %85, %87 in 1 : vector<16x32xf32>, vector<16x32xf32>, vector<16x32xf32> -> vector<16x96xf32>
    %c0_53 = arith.constant 0 : index
    %c0_54 = arith.constant 0 : index
    %89 = vector.load %arg10[%c0_53, %c0_54] : memref<96x4xbf16, #tpu.memory_space<vmem>>, vector<96x4xbf16>
    %90 = arith.truncf %88 : vector<16x96xf32> to vector<16x96xbf16>
    %cst_55 = arith.constant dense<0.000000e+00> : vector<16x4xf32>
    %91 = tpu.matmul %90, %89, %cst_55 {dimension_numbers = #tpu.dot_dimension_numbers<[1], [0], [0], [1], [0, 0, 1, 1], [], []>} : vector<16x96xbf16>, vector<96x4xbf16>, vector<16x4xf32> -> vector<16x4xf32>
    %c0_56 = arith.constant 0 : index
    %c0_57 = arith.constant 0 : index
    %92 = vector.load %arg12[%c0_56, %c0_57] : memref<1x32xf32, #tpu.memory_space<vmem>>, vector<1x32xf32>
    %c0_58 = arith.constant 0 : index
    %c0_59 = arith.constant 0 : index
    %93 = vector.load %arg13[%c0_58, %c0_59] : memref<1x32xf32, #tpu.memory_space<vmem>>, vector<1x32xf32>
    %cst_60 = arith.constant dense<0.000000e+00> : vector<16xf32>
    %94 = vector.multi_reduction <add>, %81, %cst_60 [1] : vector<16x32xf32> to vector<16xf32>
    %95 = vector.shape_cast %94 : vector<16xf32> to vector<16x1xf32>
    %cst_61 = arith.constant 3.200000e+01 : f32
    %96 = vector.broadcast %cst_61 : f32 to vector<16x1xf32>
    %97 = arith.divf %95, %96 : vector<16x1xf32>
    %98 = vector.broadcast %97 : vector<16x1xf32> to vector<16x32xf32>
    %99 = arith.subf %81, %98 : vector<16x32xf32>
    %100 = arith.mulf %99, %99 : vector<16x32xf32>
    %cst_62 = arith.constant dense<0.000000e+00> : vector<16xf32>
    %101 = vector.multi_reduction <add>, %100, %cst_62 [1] : vector<16x32xf32> to vector<16xf32>
    %102 = vector.shape_cast %101 : vector<16xf32> to vector<16x1xf32>
    %cst_63 = arith.constant 3.200000e+01 : f32
    %103 = vector.broadcast %cst_63 : f32 to vector<16x1xf32>
    %104 = arith.divf %102, %103 : vector<16x1xf32>
    %cst_64 = arith.constant 9.99999974E-6 : f32
    %105 = vector.broadcast %cst_64 : f32 to vector<16x1xf32>
    %106 = arith.addf %104, %105 : vector<16x1xf32>
    %107 = math.rsqrt %106 : vector<16x1xf32>
    %108 = vector.broadcast %107 : vector<16x1xf32> to vector<16x32xf32>
    %109 = arith.mulf %99, %108 : vector<16x32xf32>
    %110 = vector.broadcast %92 : vector<1x32xf32> to vector<16x32xf32>
    %111 = arith.mulf %109, %110 : vector<16x32xf32>
    %112 = vector.broadcast %93 : vector<1x32xf32> to vector<16x32xf32>
    %113 = arith.addf %111, %112 : vector<16x32xf32>
    %cst_65 = arith.constant dense<0.000000e+00> : vector<32xf32>
    %114 = vector.multi_reduction <add>, %113, %cst_65 [0] : vector<16x32xf32> to vector<32xf32>
    %115 = vector.shape_cast %114 : vector<32xf32> to vector<1x32xf32>
    %cst_66 = arith.constant 1.600000e+01 : f32
    %116 = vector.broadcast %cst_66 : f32 to vector<1x32xf32>
    %117 = arith.divf %115, %116 : vector<1x32xf32>
    %118 = vector.broadcast %117 : vector<1x32xf32> to vector<16x32xf32>
    %119 = arith.subf %113, %118 : vector<16x32xf32>
    %c0_67 = arith.constant 0 : index
    %c0_68 = arith.constant 0 : index
    %c0_69 = arith.constant 0 : index
    %120 = vector.load %arg11[%c0_67, %c0_68, %c0_69] : memref<2x16x4xf32, #tpu.memory_space<vmem>>, vector<1x16x4xf32>
    %121 = vector.shape_cast %120 : vector<1x16x4xf32> to vector<16x4xf32>
    %122 = arith.addf %121, %91 : vector<16x4xf32>
    %c0_70 = arith.constant 0 : index
    %c0_71 = arith.constant 0 : index
    %123 = vector.load %arg14[%c0_70, %c0_71] : memref<32x4xbf16, #tpu.memory_space<vmem>>, vector<32x4xbf16>
    %124 = arith.truncf %119 : vector<16x32xf32> to vector<16x32xbf16>
    %cst_72 = arith.constant dense<0.000000e+00> : vector<16x4xf32>
    %125 = tpu.matmul %124, %123, %cst_72 {dimension_numbers = #tpu.dot_dimension_numbers<[1], [0], [0], [1], [0, 0, 1, 1], [], []>} : vector<16x32xbf16>, vector<32x4xbf16>, vector<16x4xf32> -> vector<16x4xf32>
    %126 = arith.addf %122, %125 : vector<16x4xf32>
    %c0_73 = arith.constant 0 : index
    %c0_74 = arith.constant 0 : index
    %127 = vector.load %arg15[%c0_73, %c0_74] : memref<1x4xf32, #tpu.memory_space<vmem>>, vector<1x4xf32>
    %128 = vector.broadcast %127 : vector<1x4xf32> to vector<16x4xf32>
    %129 = arith.addf %126, %128 : vector<16x4xf32>
    %c0_75 = arith.constant 0 : index
    %c0_76 = arith.constant 0 : index
    %c0_77 = arith.constant 0 : index
    %130 = vector.load %arg16[%c0_75, %c0_76, %c0_77] : memref<2x16x4xf32, #tpu.memory_space<vmem>>, vector<1x16x4xf32>
    %131 = vector.shape_cast %130 : vector<1x16x4xf32> to vector<16x4xf32>
    %132 = vector.shape_cast %129 : vector<16x4xf32> to vector<1x16x4xf32>
    tpu.vector_store %arg16[%c0_75, %c0_76, %c0_77], %132 {strides = array<i32>} : memref<2x16x4xf32, #tpu.memory_space<vmem>>, vector<1x16x4xf32>,
    %c1_78 = arith.constant 1 : index
    %c0_79 = arith.constant 0 : index
    %c0_80 = arith.constant 0 : index
    %133 = vector.load %arg2[%c1_78, %c0_79, %c0_80] : memref<2x16x32xf32, #tpu.memory_space<vmem>>, vector<1x16x32xf32>
    %134 = vector.shape_cast %133 : vector<1x16x32xf32> to vector<16x32xf32>
    %c0_81 = arith.constant 0 : index
    %c0_82 = arith.constant 0 : index
    %135 = vector.load %arg17[%c0_81, %c0_82] : memref<32x32xf32, #tpu.memory_space<vmem>>, vector<16x32xf32>
    tpu.vector_store %arg17[%c0_81, %c0_82], %134 {strides = array<i32>} : memref<32x32xf32, #tpu.memory_space<vmem>>, vector<16x32xf32>,
    %c16_83 = arith.constant 16 : index
    %c0_84 = arith.constant 0 : index
    %136 = vector.load %arg17[%c16_83, %c0_84] : memref<32x32xf32, #tpu.memory_space<vmem>>, vector<16x32xf32>
    tpu.vector_store %arg17[%c16_83, %c0_84], %134 {strides = array<i32>} : memref<32x32xf32, #tpu.memory_space<vmem>>, vector<16x32xf32>,
    %cst_85 = arith.constant 0.000000e+00 : f32
    %137 = vector.broadcast %cst_85 : f32 to vector<16x32xf32>
    %c1_86 = arith.constant 1 : index
    %c0_87 = arith.constant 0 : index
    %138 = memref.load %arg1[%c1_86, %c0_87] : memref<2x2xf32, #tpu.memory_space<smem>>
    %c1_88 = arith.constant 1 : index
    %c0_89 = arith.constant 0 : index
    %139 = memref.load %arg0[%c1_88, %c0_89] : memref<2x2xi32, #tpu.memory_space<smem>>
    %140 = arith.index_cast %139 : i32 to index
    %c0_90 = arith.constant 0 : index
    %141 = vector.load %arg17[%140, %c0_90] : memref<32x32xf32, #tpu.memory_space<vmem>>, vector<16x32xf32>
    %142 = vector.broadcast %138 : f32 to vector<16x32xf32>
    %143 = arith.mulf %142, %141 : vector<16x32xf32>
    %144 = arith.addf %137, %143 : vector<16x32xf32>
    %c1_91 = arith.constant 1 : index
    %c1_92 = arith.constant 1 : index
    %145 = memref.load %arg1[%c1_91, %c1_92] : memref<2x2xf32, #tpu.memory_space<smem>>
    %c1_93 = arith.constant 1 : index
    %c1_94 = arith.constant 1 : index
    %146 = memref.load %arg0[%c1_93, %c1_94] : memref<2x2xi32, #tpu.memory_space<smem>>
    %147 = arith.index_cast %146 : i32 to index
    %c0_95 = arith.constant 0 : index
    %148 = vector.load %arg17[%147, %c0_95] : memref<32x32xf32, #tpu.memory_space<vmem>>, vector<16x32xf32>
    %149 = vector.broadcast %145 : f32 to vector<16x32xf32>
    %150 = arith.mulf %149, %148 : vector<16x32xf32>
    %151 = arith.addf %144, %150 : vector<16x32xf32>
    %c1_96 = arith.constant 1 : index
    %c0_97 = arith.constant 0 : index
    %c0_98 = arith.constant 0 : index
    %152 = vector.load %arg3[%c1_96, %c0_97, %c0_98] : memref<2x16x32xf32, #tpu.memory_space<vmem>>, vector<1x16x32xf32>
    %153 = vector.shape_cast %152 : vector<1x16x32xf32> to vector<16x32xf32>
    %c0_99 = arith.constant 0 : index
    %c0_100 = arith.constant 0 : index
    %154 = vector.load %arg5[%c0_99, %c0_100] : memref<32x32xbf16, #tpu.memory_space<vmem>>, vector<32x32xbf16>
    %155 = arith.truncf %151 : vector<16x32xf32> to vector<16x32xbf16>
    %cst_101 = arith.constant dense<0.000000e+00> : vector<16x32xf32>
    %156 = tpu.matmul %155, %154, %cst_101 {dimension_numbers = #tpu.dot_dimension_numbers<[1], [0], [0], [1], [0, 0, 1, 1], [], []>} : vector<16x32xbf16>, vector<32x32xbf16>, vector<16x32xf32> -> vector<16x32xf32>
    %157 = arith.addf %153, %156 : vector<16x32xf32>
    %c0_102 = arith.constant 0 : index
    %c0_103 = arith.constant 0 : index
    %158 = vector.load %arg6[%c0_102, %c0_103] : memref<1x32xf32, #tpu.memory_space<vmem>>, vector<1x32xf32>
    %159 = vector.broadcast %158 : vector<1x32xf32> to vector<16x32xf32>
    %160 = arith.addf %157, %159 : vector<16x32xf32>
    %c0_104 = arith.constant 0 : index
    %c0_105 = arith.constant 0 : index
    %161 = vector.load %arg7[%c0_104, %c0_105] : memref<16x16xf32, #tpu.memory_space<vmem>>, vector<16x16xf32>
    %cst_106 = arith.constant dense<0.000000e+00> : vector<16x32xf32>
    %162 = tpu.matmul %161, %160, %cst_106 {dimension_numbers = #tpu.dot_dimension_numbers<[1], [0], [0], [1], [0, 0, 1, 1], [], []>} : vector<16x16xf32>, vector<16x32xf32>, vector<16x32xf32> -> vector<16x32xf32>
    %163 = arith.subf %160, %162 : vector<16x32xf32>
    %c0_107 = arith.constant 0 : index
    %c0_108 = arith.constant 0 : index
    %164 = vector.load %arg8[%c0_107, %c0_108] : memref<32x64xbf16, #tpu.memory_space<vmem>>, vector<32x64xbf16>
    %165 = arith.truncf %163 : vector<16x32xf32> to vector<16x32xbf16>
    %cst_109 = arith.constant dense<0.000000e+00> : vector<16x64xf32>
    %166 = tpu.matmul %165, %164, %cst_109 {dimension_numbers = #tpu.dot_dimension_numbers<[1], [0], [0], [1], [0, 0, 1, 1], [], []>} : vector<16x32xbf16>, vector<32x64xbf16>, vector<16x64xf32> -> vector<16x64xf32>
    %cst_110 = arith.constant 5.000000e-01 : f32
    %167 = vector.broadcast %cst_110 : f32 to vector<16x64xf32>
    %168 = arith.mulf %167, %166 : vector<16x64xf32>
    %cst_111 = arith.constant 0.707106769 : f32
    %169 = vector.broadcast %cst_111 : f32 to vector<16x64xf32>
    %170 = arith.mulf %166, %169 : vector<16x64xf32>
    %cst_112 = arith.constant 0.000000e+00 : f32
    %171 = vector.broadcast %cst_112 : f32 to vector<16x64xf32>
    %172 = arith.cmpf oge, %170, %171 : vector<16x64xf32>
    %cst_113 = arith.constant 1.000000e+00 : f32
    %cst_114 = arith.constant -1.000000e+00 : f32
    %173 = vector.broadcast %cst_113 : f32 to vector<16x64xf32>
    %174 = vector.broadcast %cst_114 : f32 to vector<16x64xf32>
    %175 = arith.select %172, %173, %174 : vector<16x64xi1>, vector<16x64xf32>
    %176 = math.absf %170 : vector<16x64xf32>
    %cst_115 = arith.constant 0.327591091 : f32
    %177 = vector.broadcast %cst_115 : f32 to vector<16x64xf32>
    %178 = arith.mulf %177, %176 : vector<16x64xf32>
    %cst_116 = arith.constant 1.000000e+00 : f32
    %179 = vector.broadcast %cst_116 : f32 to vector<16x64xf32>
    %180 = arith.addf %179, %178 : vector<16x64xf32>
    %cst_117 = arith.constant 1.000000e+00 : f32
    %181 = vector.broadcast %cst_117 : f32 to vector<16x64xf32>
    %182 = arith.divf %181, %180 : vector<16x64xf32>
    %cst_118 = arith.constant 1.06140542 : f32
    %183 = vector.broadcast %cst_118 : f32 to vector<16x64xf32>
    %184 = arith.mulf %183, %182 : vector<16x64xf32>
    %cst_119 = arith.constant -1.45315206 : f32
    %185 = vector.broadcast %cst_119 : f32 to vector<16x64xf32>
    %186 = arith.addf %184, %185 : vector<16x64xf32>
    %187 = arith.mulf %186, %182 : vector<16x64xf32>
    %cst_120 = arith.constant 1.42141378 : f32
    %188 = vector.broadcast %cst_120 : f32 to vector<16x64xf32>
    %189 = arith.addf %187, %188 : vector<16x64xf32>
    %190 = arith.mulf %189, %182 : vector<16x64xf32>
    %cst_121 = arith.constant -0.284496725 : f32
    %191 = vector.broadcast %cst_121 : f32 to vector<16x64xf32>
    %192 = arith.addf %190, %191 : vector<16x64xf32>
    %193 = arith.mulf %192, %182 : vector<16x64xf32>
    %cst_122 = arith.constant 0.254829586 : f32
    %194 = vector.broadcast %cst_122 : f32 to vector<16x64xf32>
    %195 = arith.addf %193, %194 : vector<16x64xf32>
    %196 = arith.mulf %195, %182 : vector<16x64xf32>
    %cst_123 = arith.constant 0.000000e+00 : f32
    %197 = vector.broadcast %cst_123 : f32 to vector<16x64xf32>
    %198 = arith.subf %197, %176 : vector<16x64xf32>
    %199 = arith.mulf %198, %176 : vector<16x64xf32>
    %200 = math.exp %199 : vector<16x64xf32>
    %201 = arith.mulf %196, %200 : vector<16x64xf32>
    %cst_124 = arith.constant 1.000000e+00 : f32
    %202 = vector.broadcast %cst_124 : f32 to vector<16x64xf32>
    %203 = arith.subf %202, %201 : vector<16x64xf32>
    %204 = arith.mulf %175, %203 : vector<16x64xf32>
    %cst_125 = arith.constant 1.000000e+00 : f32
    %205 = vector.broadcast %cst_125 : f32 to vector<16x64xf32>
    %206 = arith.addf %205, %204 : vector<16x64xf32>
    %207 = arith.mulf %168, %206 : vector<16x64xf32>
    %c0_126 = arith.constant 0 : index
    %c0_127 = arith.constant 0 : index
    %208 = vector.load %arg9[%c0_126, %c0_127] : memref<64x32xbf16, #tpu.memory_space<vmem>>, vector<64x32xbf16>
    %209 = arith.truncf %207 : vector<16x64xf32> to vector<16x64xbf16>
    %cst_128 = arith.constant dense<0.000000e+00> : vector<16x32xf32>
    %210 = tpu.matmul %209, %208, %cst_128 {dimension_numbers = #tpu.dot_dimension_numbers<[1], [0], [0], [1], [0, 0, 1, 1], [], []>} : vector<16x64xbf16>, vector<64x32xbf16>, vector<16x32xf32> -> vector<16x32xf32>
    %211 = arith.addf %163, %210 : vector<16x32xf32>
    %c0_129 = arith.constant 0 : index
    %c0_130 = arith.constant 0 : index
    %212 = vector.load %arg7[%c0_129, %c0_130] : memref<16x16xf32, #tpu.memory_space<vmem>>, vector<16x16xf32>
    %cst_131 = arith.constant dense<0.000000e+00> : vector<16x32xf32>
    %213 = tpu.matmul %212, %211, %cst_131 {dimension_numbers = #tpu.dot_dimension_numbers<[1], [0], [0], [1], [0, 0, 1, 1], [], []>} : vector<16x16xf32>, vector<16x32xf32>, vector<16x32xf32> -> vector<16x32xf32>
    %214 = arith.subf %211, %213 : vector<16x32xf32>
    %c1_132 = arith.constant 1 : index
    %c0_133 = arith.constant 0 : index
    %c0_134 = arith.constant 0 : index
    %215 = vector.load %arg4[%c1_132, %c0_133, %c0_134] : memref<2x16x32xf32, #tpu.memory_space<vmem>>, vector<1x16x32xf32>
    %216 = vector.shape_cast %215 : vector<1x16x32xf32> to vector<16x32xf32>
    %217 = arith.addf %216, %162 : vector<16x32xf32>
    %218 = arith.addf %217, %213 : vector<16x32xf32>
    %c1_i32_135 = arith.constant 1 : i32
    %219 = tpu.dynamic_rotate %218 by %c1_i32_135 dim 0 : vector<16x32xf32>, i32 -> vector<16x32xf32>
    %c15_i32_136 = arith.constant 15 : i32
    %220 = tpu.dynamic_rotate %218 by %c15_i32_136 dim 0 : vector<16x32xf32>, i32 -> vector<16x32xf32>
    %221 = tpu.concatenate %219, %218, %220 in 1 : vector<16x32xf32>, vector<16x32xf32>, vector<16x32xf32> -> vector<16x96xf32>
    %c0_137 = arith.constant 0 : index
    %c0_138 = arith.constant 0 : index
    %222 = vector.load %arg10[%c0_137, %c0_138] : memref<96x4xbf16, #tpu.memory_space<vmem>>, vector<96x4xbf16>
    %223 = arith.truncf %221 : vector<16x96xf32> to vector<16x96xbf16>
    %cst_139 = arith.constant dense<0.000000e+00> : vector<16x4xf32>
    %224 = tpu.matmul %223, %222, %cst_139 {dimension_numbers = #tpu.dot_dimension_numbers<[1], [0], [0], [1], [0, 0, 1, 1], [], []>} : vector<16x96xbf16>, vector<96x4xbf16>, vector<16x4xf32> -> vector<16x4xf32>
    %c0_140 = arith.constant 0 : index
    %c0_141 = arith.constant 0 : index
    %225 = vector.load %arg12[%c0_140, %c0_141] : memref<1x32xf32, #tpu.memory_space<vmem>>, vector<1x32xf32>
    %c0_142 = arith.constant 0 : index
    %c0_143 = arith.constant 0 : index
    %226 = vector.load %arg13[%c0_142, %c0_143] : memref<1x32xf32, #tpu.memory_space<vmem>>, vector<1x32xf32>
    %cst_144 = arith.constant dense<0.000000e+00> : vector<16xf32>
    %227 = vector.multi_reduction <add>, %214, %cst_144 [1] : vector<16x32xf32> to vector<16xf32>
    %228 = vector.shape_cast %227 : vector<16xf32> to vector<16x1xf32>
    %cst_145 = arith.constant 3.200000e+01 : f32
    %229 = vector.broadcast %cst_145 : f32 to vector<16x1xf32>
    %230 = arith.divf %228, %229 : vector<16x1xf32>
    %231 = vector.broadcast %230 : vector<16x1xf32> to vector<16x32xf32>
    %232 = arith.subf %214, %231 : vector<16x32xf32>
    %233 = arith.mulf %232, %232 : vector<16x32xf32>
    %cst_146 = arith.constant dense<0.000000e+00> : vector<16xf32>
    %234 = vector.multi_reduction <add>, %233, %cst_146 [1] : vector<16x32xf32> to vector<16xf32>
    %235 = vector.shape_cast %234 : vector<16xf32> to vector<16x1xf32>
    %cst_147 = arith.constant 3.200000e+01 : f32
    %236 = vector.broadcast %cst_147 : f32 to vector<16x1xf32>
    %237 = arith.divf %235, %236 : vector<16x1xf32>
    %cst_148 = arith.constant 9.99999974E-6 : f32
    %238 = vector.broadcast %cst_148 : f32 to vector<16x1xf32>
    %239 = arith.addf %237, %238 : vector<16x1xf32>
    %240 = math.rsqrt %239 : vector<16x1xf32>
    %241 = vector.broadcast %240 : vector<16x1xf32> to vector<16x32xf32>
    %242 = arith.mulf %232, %241 : vector<16x32xf32>
    %243 = vector.broadcast %225 : vector<1x32xf32> to vector<16x32xf32>
    %244 = arith.mulf %242, %243 : vector<16x32xf32>
    %245 = vector.broadcast %226 : vector<1x32xf32> to vector<16x32xf32>
    %246 = arith.addf %244, %245 : vector<16x32xf32>
    %cst_149 = arith.constant dense<0.000000e+00> : vector<32xf32>
    %247 = vector.multi_reduction <add>, %246, %cst_149 [0] : vector<16x32xf32> to vector<32xf32>
    %248 = vector.shape_cast %247 : vector<32xf32> to vector<1x32xf32>
    %cst_150 = arith.constant 1.600000e+01 : f32
    %249 = vector.broadcast %cst_150 : f32 to vector<1x32xf32>
    %250 = arith.divf %248, %249 : vector<1x32xf32>
    %251 = vector.broadcast %250 : vector<1x32xf32> to vector<16x32xf32>
    %252 = arith.subf %246, %251 : vector<16x32xf32>
    %c1_151 = arith.constant 1 : index
    %c0_152 = arith.constant 0 : index
    %c0_153 = arith.constant 0 : index
    %253 = vector.load %arg11[%c1_151, %c0_152, %c0_153] : memref<2x16x4xf32, #tpu.memory_space<vmem>>, vector<1x16x4xf32>
    %254 = vector.shape_cast %253 : vector<1x16x4xf32> to vector<16x4xf32>
    %255 = arith.addf %254, %224 : vector<16x4xf32>
    %c0_154 = arith.constant 0 : index
    %c0_155 = arith.constant 0 : index
    %256 = vector.load %arg14[%c0_154, %c0_155] : memref<32x4xbf16, #tpu.memory_space<vmem>>, vector<32x4xbf16>
    %257 = arith.truncf %252 : vector<16x32xf32> to vector<16x32xbf16>
    %cst_156 = arith.constant dense<0.000000e+00> : vector<16x4xf32>
    %258 = tpu.matmul %257, %256, %cst_156 {dimension_numbers = #tpu.dot_dimension_numbers<[1], [0], [0], [1], [0, 0, 1, 1], [], []>} : vector<16x32xbf16>, vector<32x4xbf16>, vector<16x4xf32> -> vector<16x4xf32>
    %259 = arith.addf %255, %258 : vector<16x4xf32>
    %c0_157 = arith.constant 0 : index
    %c0_158 = arith.constant 0 : index
    %260 = vector.load %arg15[%c0_157, %c0_158] : memref<1x4xf32, #tpu.memory_space<vmem>>, vector<1x4xf32>
    %261 = vector.broadcast %260 : vector<1x4xf32> to vector<16x4xf32>
    %262 = arith.addf %259, %261 : vector<16x4xf32>
    %c1_159 = arith.constant 1 : index
    %c0_160 = arith.constant 0 : index
    %c0_161 = arith.constant 0 : index
    %263 = vector.load %arg16[%c1_159, %c0_160, %c0_161] : memref<2x16x4xf32, #tpu.memory_space<vmem>>, vector<1x16x4xf32>
    %264 = vector.shape_cast %263 : vector<1x16x4xf32> to vector<16x4xf32>
    %265 = vector.shape_cast %262 : vector<16x4xf32> to vector<1x16x4xf32>
    tpu.vector_store %arg16[%c1_159, %c0_160, %c0_161], %265 {strides = array<i32>} : memref<2x16x4xf32, #tpu.memory_space<vmem>>, vector<1x16x4xf32>,
    return
  }
}

</mosaic_0001>

<llo_original>
// kernel: fwd.10
$region0: #{fwd.10}
  #allocation0 [shape = 'u32[]', space=smem, size = 0x4, offset = 0x4, fixed_abs, tag = 'smem constant byte address 0x4 - core index']
  #allocation1 [shape = 'u32[144,128]{1,0:T(1,128)}', space=vmem, size = 0x12000, scoped, tag = 'internal scratch']
  %s0 = inlined_call_operand.vmem [shape: f32[2,16,4], index: 0, kind: input, shape index: {}]
  %s1 = inlined_call_operand.vmem [shape: f32[2,16,4], index: 1, kind: input, shape index: {}]
  %s2 = inlined_call_operand.vmem [shape: bf16[12,32], index: 2, kind: input, shape index: {}]
  %s3 = inlined_call_operand.vmem [shape: bf16[4,32], index: 3, kind: input, shape index: {}]
  %s4 = inlined_call_operand.vmem [shape: f32[2,16,32], index: 4, kind: output, shape index: {}]
  %s5 = sld [smem:[#allocation0]]
  $region26: #{fwd.10} parent=0
    _
  %s7 = ssub.s32 1, %s5
  %s8 = scalar_select 0, %s7, %s5
  // Predicated region
  $region2: #{fwd.10} parent=0 // pred_check
    _
  $region3: #{fwd.10} parent=0 // pred_check_branch
    %10 = sbr.rel (0) target = $region5
  $region4: #{fwd.10} parent=0 // pred_region
    _
  $region5: #{fwd.10} parent=0 // pred_fallthru
    _
  // Predicated region
  $region6: #{fwd.10} parent=0 // pred_check
    _
  $region7: #{fwd.10} parent=0 // pred_check_branch
    %12 = sbr.rel (0) target = $region9
  $region8: #{fwd.10} parent=0 // pred_region
    _
  $region9: #{fwd.10} parent=0 // pred_fallthru
    _
  // Predicated region
  $region10: #{fwd.10} parent=0 // pred_check
    _
  $region11: #{fwd.10} parent=0 // pred_check_branch
    %14 = sbr.rel (0) target = $region13
  $region12: #{fwd.10} parent=0 // pred_region
    _
  $region13: #{fwd.10} parent=0 // pred_fallthru
    _
  // Predicated region
  $region14: #{fwd.10} parent=0 // pred_check
    _
  $region15: #{fwd.10} parent=0 // pred_check_branch
    %16 = sbr.rel (0) target = $region17
  $region16: #{fwd.10} parent=0 // pred_region
    _
  $region17: #{fwd.10} parent=0 // pred_fallthru
    _
  %v18 = vld [vmem:[%s0] sm:$0xff]
  %v19 = vld [vmem:[%s0 + $0x8] sm:$0xff]
  %v20 = vrot.slane %v18, 7
  %v21 = vrot.slane %v19, 7
  %v22 = vlaneseq
  %v23 = vshrl.u32 %v22, 7
  %vm24 = vcmp.lt.s32.totalorder %v23, 1
  %v25 = vsel %vm24, %v20, %v21
  %v26 = vsel %vm24, %v21, %v20
  %v27 = vrot.slane %v18, 1
  %v28 = vrot.slane %v19, 1
  %vm29 = vcmp.lt.s32.totalorder %v23, 7
  %v30 = vsel %vm29, %v27, %v28
  %v31 = vsel %vm29, %v28, %v27
  %34 = vrot.lane.b32.xlu0 %v18, 4
  %v35 = vpop.permute.xlu0 %34
  %36 = vrot.lane.b32.xlu0 %v19, 4
  %v37 = vpop.permute.xlu0 %36
  %42 = vrot.lane.b32.xlu0 %v30, 8
  %v43 = vpop.permute.xlu0 %42
  %44 = vrot.lane.b32.xlu0 %v31, 8
  %v45 = vpop.permute.xlu0 %44
  %vm48 = vcmask 31744
  %v49 = vsel %vm48, %v26, %v35
  %v50 = vsel %vm48, %v25, %v37
  %vm51 = vcmask 64512
  %v52 = vsel %vm51, %v49, %v43
  %v53 = vsel %vm51, %v50, %v45
  %v54 = vld [vmem:[%s2] sm:$0xf]
  %v55 = vld [vmem:[%s2 + $0x4] sm:$0x3]
  %v56 = vpack.c.bf16 %v53, %v52
  %v57 = vld [vmem:[%s1] sm:$0xff]
  %v58 = vld [vmem:[%s1 + $0x8] sm:$0xff]
  %v59 = vld [vmem:[%s3] sm:$0x3]
  %v60 = vpack.c.bf16 %v58, %v57
  %v62 = vsel %vm48, %v60, 0
  %vm64 = vcmask 1041408
  %v66 = vsel %vm64, %v59, 0
  %68 = vmatprep.subr.bf16.mxu0 0
  %69 = vmatpush1.bf16.msra.mxu0 0
  %70 = vmatprep.subr.bf16.mxu0 0
  %71 = vmatpush1.bf16.msra.mxu0 0
  %72 = vmatprep.subr.bf16.mxu0 0
  %73 = vmatpush1.bf16.msra.mxu0 0
  %74 = vmatprep.subr.bf16.mxu0 0
  %75 = vmatpush1.bf16.msra.mxu0 0
  %76 = vmatprep.subr.bf16.mxu0 0
  %77 = vmatpush1.bf16.msra.mxu0 0
  %78 = vmatprep.subr.bf16.mxu0 0
  %79 = vmatpush1.bf16.msra.mxu0 0
  %80 = vmatprep.subr.bf16.mxu0 0
  %81 = vmatpush1.bf16.msra.mxu0 0
  %82 = vmatprep.subr.bf16.mxu0 0
  %83 = vmatpush1.bf16.msra.mxu0 %v66
  %84 = vmatprep.subr.bf16.mxu0 0
  %85 = vmatpush2.bf16.msra.mxu0 0
  %86 = vmatprep.subr.bf16.mxu0 0
  %87 = vmatpush2.bf16.msra.mxu0 0
  %88 = vmatprep.subr.bf16.mxu0 0
  %89 = vmatpush2.bf16.msra.mxu0 0
  %90 = vmatprep.subr.bf16.mxu0 0
  %91 = vmatpush2.bf16.msra.mxu0 0
  %92 = vmatprep.subr.bf16.mxu0 0
  %93 = vmatpush2.bf16.msra.mxu0 0
  %94 = vmatprep.subr.bf16.mxu0 0
  %95 = vmatpush2.bf16.msra.mxu0 0
  %96 = vmatprep.subr.bf16.mxu0 0
  %97 = vmatpush2.bf16.msra.mxu0 0
  %98 = vmatprep.subr.bf16.mxu0 0
  %99 = vmatpush2.bf16.msra.mxu0 0
  %100 = vmatprep.mubr.bf16.mxu0 0
  %101 = vmatmul.mubr.bf16.gmra.mxu0 %v62
  %v102 = vpop.f32.mrf.mxu0
  %v103 = vadd.f32 0.0, %v102
  %v104 = vpop.f32.mrf.mxu0
  %v105 = vpop.f32.mrf.mxu0
  %v106 = vadd.f32 0.0, %v105
  %v107 = vpop.f32.mrf.mxu0
  %108 = vdwg.mxu0
  %v111 = vunpack.c.l.b16 %v54
  %v112 = vunpack.c.l.b16 %v55
  %v113 = vpack.c.b16 %v112, %v111
  %vm114 = vcmask 97280
  %v116 = vsel %vm114, %v56, 0
  %vm118 = vcmask 1045504
  %v120 = vsel %vm118, %v113, 0
  %122 = vmatprep.subr.bf16.mxu0 0
  %123 = vmatpush1.bf16.msra.mxu0 0
  %124 = vmatprep.subr.bf16.mxu0 0
  %125 = vmatpush1.bf16.msra.mxu0 0
  %126 = vmatprep.subr.bf16.mxu0 0
  %127 = vmatpush1.bf16.msra.mxu0 0
  %128 = vmatprep.subr.bf16.mxu0 0
  %129 = vmatpush1.bf16.msra.mxu0 0
  %130 = vmatprep.subr.bf16.mxu0 0
  %131 = vmatpush1.bf16.msra.mxu0 0
  %132 = vmatprep.subr.bf16.mxu0 0
  %133 = vmatpush1.bf16.msra.mxu0 0
  %134 = vmatprep.subr.bf16.mxu0 0
  %135 = vmatpush1.bf16.msra.mxu0 0
  %136 = vmatprep.subr.bf16.mxu0 0
  %137 = vmatpush1.bf16.msra.mxu0 %v120
  %138 = vmatprep.subr.bf16.mxu0 0
  %139 = vmatpush2.bf16.msra.mxu0 0
  %140 = vmatprep.subr.bf16.mxu0 0
  %141 = vmatpush2.bf16.msra.mxu0 0
  %142 = vmatprep.subr.bf16.mxu0 0
  %143 = vmatpush2.bf16.msra.mxu0 0
  %144 = vmatprep.subr.bf16.mxu0 0
  %145 = vmatpush2.bf16.msra.mxu0 0
  %146 = vmatprep.subr.bf16.mxu0 0
  %147 = vmatpush2.bf16.msra.mxu0 0
  %148 = vmatprep.subr.bf16.mxu0 0
  %149 = vmatpush2.bf16.msra.mxu0 0
  %150 = vmatprep.subr.bf16.mxu0 0
  %151 = vmatpush2.bf16.msra.mxu0 0
  %152 = vmatprep.subr.bf16.mxu0 0
  %153 = vmatpush2.bf16.msra.mxu0 0
  %154 = vmatprep.mubr.bf16.mxu0 0
  %155 = vmatmul.mubr.bf16.gmra.mxu0 %v116
  %v156 = vpop.f32.mrf.mxu0
  %v157 = vadd.f32 %v103, %v156
  %v158 = vpop.f32.mrf.mxu0
  %v159 = vpop.f32.mrf.mxu0
  %v160 = vadd.f32 %v106, %v159
  %v161 = vpop.f32.mrf.mxu0
  %162 = vdwg.mxu0
  %vm163 = vcmask 261120
  %164 = vst.msk [vmem:[%s4] sm:$0xff] %vm163, %v157
  %165 = vst.msk [vmem:[%s4 + $0x8] sm:$0xff] %vm163, %v160
  %s166 = scalar_lea.vmem %s0, 16
  %v167 = vld [vmem:[%s166] sm:$0xff]
  %v168 = vld [vmem:[%s166 + $0x8] sm:$0xff]
  %v169 = vrot.slane %v167, 7
  %v170 = vrot.slane %v168, 7
  %v171 = vsel %vm24, %v169, %v170
  %v172 = vsel %vm24, %v170, %v169
  %v173 = vrot.slane %v167, 1
  %v174 = vrot.slane %v168, 1
  %v175 = vsel %vm29, %v173, %v174
  %v176 = vsel %vm29, %v174, %v173
  %179 = vrot.lane.b32.xlu0 %v167, 4
  %v180 = vpop.permute.xlu0 %179
  %181 = vrot.lane.b32.xlu0 %v168, 4
  %v182 = vpop.permute.xlu0 %181
  %187 = vrot.lane.b32.xlu0 %v175, 8
  %v188 = vpop.permute.xlu0 %187
  %189 = vrot.lane.b32.xlu0 %v176, 8
  %v190 = vpop.permute.xlu0 %189
  %v193 = vsel %vm48, %v172, %v180
  %v194 = vsel %vm48, %v171, %v182
  %v195 = vsel %vm51, %v193, %v188
  %v196 = vsel %vm51, %v194, %v190
  %v197 = vld [vmem:[%s2] sm:$0xf]
  %v198 = vld [vmem:[%s2 + $0x4] sm:$0x3]
  %v199 = vpack.c.bf16 %v196, %v195
  %s200 = scalar_lea.vmem %s1, 16
  %v201 = vld [vmem:[%s200] sm:$0xff]
  %v202 = vld [vmem:[%s200 + $0x8] sm:$0xff]
  %v203 = vld [vmem:[%s3] sm:$0x3]
  %v204 = vpack.c.bf16 %v202, %v201
  %v206 = vsel %vm48, %v204, 0
  %v209 = vsel %vm64, %v203, 0
  %211 = vmatprep.subr.bf16.mxu0 0
  %212 = vmatpush1.bf16.msra.mxu0 0
  %213 = vmatprep.subr.bf16.mxu0 0
  %214 = vmatpush1.bf16.msra.mxu0 0
  %215 = vmatprep.subr.bf16.mxu0 0
  %216 = vmatpush1.bf16.msra.mxu0 0
  %217 = vmatprep.subr.bf16.mxu0 0
  %218 = vmatpush1.bf16.msra.mxu0 0
  %219 = vmatprep.subr.bf16.mxu0 0
  %220 = vmatpush1.bf16.msra.mxu0 0
  %221 = vmatprep.subr.bf16.mxu0 0
  %222 = vmatpush1.bf16.msra.mxu0 0
  %223 = vmatprep.subr.bf16.mxu0 0
  %224 = vmatpush1.bf16.msra.mxu0 0
  %225 = vmatprep.subr.bf16.mxu0 0
  %226 = vmatpush1.bf16.msra.mxu0 %v209
  %227 = vmatprep.subr.bf16.mxu0 0
  %228 = vmatpush2.bf16.msra.mxu0 0
  %229 = vmatprep.subr.bf16.mxu0 0
  %230 = vmatpush2.bf16.msra.mxu0 0
  %231 = vmatprep.subr.bf16.mxu0 0
  %232 = vmatpush2.bf16.msra.mxu0 0
  %233 = vmatprep.subr.bf16.mxu0 0
  %234 = vmatpush2.bf16.msra.mxu0 0
  %235 = vmatprep.subr.bf16.mxu0 0
  %236 = vmatpush2.bf16.msra.mxu0 0
  %237 = vmatprep.subr.bf16.mxu0 0
  %238 = vmatpush2.bf16.msra.mxu0 0
  %239 = vmatprep.subr.bf16.mxu0 0
  %240 = vmatpush2.bf16.msra.mxu0 0
  %241 = vmatprep.subr.bf16.mxu0 0
  %242 = vmatpush2.bf16.msra.mxu0 0
  %243 = vmatprep.mubr.bf16.mxu0 0
  %244 = vmatmul.mubr.bf16.gmra.mxu0 %v206
  %v245 = vpop.f32.mrf.mxu0
  %v246 = vadd.f32 0.0, %v245
  %v247 = vpop.f32.mrf.mxu0
  %v248 = vpop.f32.mrf.mxu0
  %v249 = vadd.f32 0.0, %v248
  %v250 = vpop.f32.mrf.mxu0
  %251 = vdwg.mxu0
  %v254 = vunpack.c.l.b16 %v197
  %v255 = vunpack.c.l.b16 %v198
  %v256 = vpack.c.b16 %v255, %v254
  %v258 = vsel %vm114, %v199, 0
  %v261 = vsel %vm118, %v256, 0
  %263 = vmatprep.subr.bf16.mxu0 0
  %264 = vmatpush1.bf16.msra.mxu0 0
  %265 = vmatprep.subr.bf16.mxu0 0
  %266 = vmatpush1.bf16.msra.mxu0 0
  %267 = vmatprep.subr.bf16.mxu0 0
  %268 = vmatpush1.bf16.msra.mxu0 0
  %269 = vmatprep.subr.bf16.mxu0 0
  %270 = vmatpush1.bf16.msra.mxu0 0
  %271 = vmatprep.subr.bf16.mxu0 0
  %272 = vmatpush1.bf16.msra.mxu0 0
  %273 = vmatprep.subr.bf16.mxu0 0
  %274 = vmatpush1.bf16.msra.mxu0 0
  %275 = vmatprep.subr.bf16.mxu0 0
  %276 = vmatpush1.bf16.msra.mxu0 0
  %277 = vmatprep.subr.bf16.mxu0 0
  %278 = vmatpush1.bf16.msra.mxu0 %v261
  %279 = vmatprep.subr.bf16.mxu0 0
  %280 = vmatpush2.bf16.msra.mxu0 0
  %281 = vmatprep.subr.bf16.mxu0 0
  %282 = vmatpush2.bf16.msra.mxu0 0
  %283 = vmatprep.subr.bf16.mxu0 0
  %284 = vmatpush2.bf16.msra.mxu0 0
  %285 = vmatprep.subr.bf16.mxu0 0
  %286 = vmatpush2.bf16.msra.mxu0 0
  %287 = vmatprep.subr.bf16.mxu0 0
  %288 = vmatpush2.bf16.msra.mxu0 0
  %289 = vmatprep.subr.bf16.mxu0 0
  %290 = vmatpush2.bf16.msra.mxu0 0
  %291 = vmatprep.subr.bf16.mxu0 0
  %292 = vmatpush2.bf16.msra.mxu0 0
  %293 = vmatprep.subr.bf16.mxu0 0
  %294 = vmatpush2.bf16.msra.mxu0 0
  %295 = vmatprep.mubr.bf16.mxu0 0
  %296 = vmatmul.mubr.bf16.gmra.mxu0 %v258
  %v297 = vpop.f32.mrf.mxu0
  %v298 = vadd.f32 %v246, %v297
  %v299 = vpop.f32.mrf.mxu0
  %v300 = vpop.f32.mrf.mxu0
  %v301 = vadd.f32 %v249, %v300
  %v302 = vpop.f32.mrf.mxu0
  %303 = vdwg.mxu0
  %s304 = scalar_lea.vmem %s4, 16
  %305 = vst.msk [vmem:[%s304] sm:$0xff] %vm163, %v298
  %306 = vst.msk [vmem:[%s304 + $0x8] sm:$0xff] %vm163, %v301
  // Predicated region
  $region18: #{fwd.10} parent=0 // pred_check
    _
  $region19: #{fwd.10} parent=0 // pred_check_branch
    %308 = sbr.rel (0) target = $region21
  $region20: #{fwd.10} parent=0 // pred_region
    _
  $region21: #{fwd.10} parent=0 // pred_fallthru
    _
  // Predicated region
  $region22: #{fwd.10} parent=0 // pred_check
    _
  $region23: #{fwd.10} parent=0 // pred_check_branch
    %310 = sbr.rel (0) target = $region25
  $region24: #{fwd.10} parent=0 // pred_region
    _
  $region25: #{fwd.10} parent=0 // pred_fallthru
    _

// kernel: fwd.11
$region0: #{fwd.11}
  #allocation0 [shape = 'u32[]', space=smem, size = 0x4, offset = 0x4, fixed_abs, tag = 'smem constant byte address 0x4 - core index']
  #allocation1 [shape = 'u32[144,128]{1,0:T(1,128)}', space=vmem, size = 0x12000, scoped, tag = 'internal scratch']
  %s0 = inlined_call_operand.vmem [shape: f32[2,16,32], index: 0, kind: input, shape index: {}]
  %s1 = inlined_call_operand.vmem [shape: bf16[32,96], index: 1, kind: input, shape index: {}]
  %s2 = inlined_call_operand.vmem [shape: f32[1,96], index: 2, kind: input, shape index: {}]
  %s3 = inlined_call_operand.vmem [shape: f32[2,16,32], index: 3, kind: output, shape index: {0}]
  %s4 = inlined_call_operand.vmem [shape: f32[2,16,1], index: 4, kind: output, shape index: {1}]
  %5 = xla_tuple %s3, %s4
  %s6 = sld [smem:[#allocation0]]
  $region30: #{fwd.11} parent=0
    _
  %s8 = ssub.s32 1, %s6
  %s9 = scalar_select 0, %s8, %s6
  // Predicated region
  $region2: #{fwd.11} parent=0 // pred_check
    _
  $region3: #{fwd.11} parent=0 // pred_check_branch
    %11 = sbr.rel (0) target = $region5
  $region4: #{fwd.11} parent=0 // pred_region
    _
  $region5: #{fwd.11} parent=0 // pred_fallthru
    _
  // Predicated region
  $region6: #{fwd.11} parent=0 // pred_check
    _
  $region7: #{fwd.11} parent=0 // pred_check_branch
    %13 = sbr.rel (0) target = $region9
  $region8: #{fwd.11} parent=0 // pred_region
    _
  $region9: #{fwd.11} parent=0 // pred_fallthru
    _
  // Predicated region
  $region10: #{fwd.11} parent=0 // pred_check
    _
  $region11: #{fwd.11} parent=0 // pred_check_branch
    %15 = sbr.rel (0) target = $region13
  $region12: #{fwd.11} parent=0 // pred_region
    _
  $region13: #{fwd.11} parent=0 // pred_fallthru
    _
  %v17 = vld [vmem:[%s0] sm:$0xff]
  %v18 = vld [vmem:[%s0 + $0x8] sm:$0xff]
  %v19 = vld [vmem:[%s1] sm:$0xf]
  %v20 = vld [vmem:[%s1 + $0x4] sm:$0xf]
  %v21 = vld [vmem:[%s1 + $0x8] sm:$0xf]
  %v22 = vld [vmem:[%s1 + $0xc] sm:$0xf]
  %v23 = vpack.c.bf16 %v18, %v17
  %v24 = vld [vmem:[%s2] sm:$0x1]
  %v26 = vlaneseq
  %v27 = vshrl.u32 %v26, 7
  %v28 = vsub.s32 0, %v27
  %v29 = vrot.slane %v24, %v28
  %v35 = vunpack.c.l.b16 %v19
  %v36 = vunpack.c.l.b16 %v20
  %v37 = vunpack.c.l.b16 %v21
  %v38 = vunpack.c.l.b16 %v22
  %v39 = vpack.c.b16 %v36, %v35
  %v40 = vpack.c.b16 %v38, %v37
  %vm43 = vcmask 261120
  %v45 = vsel %vm43, %v23, 0
  %47 = vmatprep.subr.bf16.mxu0 0
  %48 = vmatpush1.bf16.msra.mxu0 0
  %49 = vmatprep.subr.bf16.mxu0 0
  %50 = vmatpush1.bf16.msra.mxu0 0
  %51 = vmatprep.subr.bf16.mxu0 0
  %52 = vmatpush1.bf16.msra.mxu0 0
  %53 = vmatprep.subr.bf16.mxu0 0
  %54 = vmatpush1.bf16.msra.mxu0 0
  %55 = vmatprep.subr.bf16.mxu0 0
  %56 = vmatpush1.bf16.msra.mxu0 0
  %57 = vmatprep.subr.bf16.mxu0 0
  %58 = vmatpush1.bf16.msra.mxu0 0
  %59 = vmatprep.subr.bf16.mxu0 0
  %60 = vmatpush1.bf16.msra.mxu0 %v40
  %61 = vmatprep.subr.bf16.mxu0 0
  %62 = vmatpush1.bf16.msra.mxu0 %v39
  %63 = vmatprep.subr.bf16.mxu0 0
  %64 = vmatpush2.bf16.msra.mxu0 0
  %65 = vmatprep.subr.bf16.mxu0 0
  %66 = vmatpush2.bf16.msra.mxu0 0
  %67 = vmatprep.subr.bf16.mxu0 0
  %68 = vmatpush2.bf16.msra.mxu0 0
  %69 = vmatprep.subr.bf16.mxu0 0
  %70 = vmatpush2.bf16.msra.mxu0 0
  %71 = vmatprep.subr.bf16.mxu0 0
  %72 = vmatpush2.bf16.msra.mxu0 0
  %73 = vmatprep.subr.bf16.mxu0 0
  %74 = vmatpush2.bf16.msra.mxu0 0
  %75 = vmatprep.subr.bf16.mxu0 0
  %76 = vmatpush2.bf16.msra.mxu0 0
  %77 = vmatprep.subr.bf16.mxu0 0
  %78 = vmatpush2.bf16.msra.mxu0 0
  %79 = vmatprep.mubr.bf16.mxu0 0
  %80 = vmatmul.mubr.bf16.gmra.mxu0 %v45
  %v81 = vpop.f32.mrf.mxu0
  %v82 = vadd.f32 %v29, %v81
  %v83 = vpop.f32.mrf.mxu0
  %v84 = vpop.f32.mrf.mxu0
  %v85 = vadd.f32 %v29, %v84
  %v86 = vpop.f32.mrf.mxu0
  %87 = vdwg.mxu0
  %90 = vrot.lane.b32.xlu0 %v82, 64
  %v91 = vpop.permute.xlu0 %90
  %92 = vrot.lane.b32.xlu0 %v85, 64
  %v93 = vpop.permute.xlu0 %92
  %96 = vst.msk [vmem:[%s3] sm:$0xff] %vm43, %v91
  %97 = vst.msk [vmem:[%s3 + $0x8] sm:$0xff] %vm43, %v93
  %v98 = vpack.c.bf16 %v85, %v82
  %100 = vrot.lane.b32.xlu0 %v98, 96
  %v101 = vpop.permute.xlu0 %100
  %v103 = vsel %vm43, %v98, 0
  %v106 = vsel %vm43, %v101, 0
  %108 = vmatprep.subr.bf16.mxu0 0
  %109 = vmatpush1.bf16.xpose.msra.mxu0 0
  %110 = vmatprep.subr.bf16.mxu0 0
  %111 = vmatpush1.bf16.xpose.msra.mxu0 0
  %112 = vmatprep.subr.bf16.mxu0 0
  %113 = vmatpush1.bf16.xpose.msra.mxu0 0
  %114 = vmatprep.subr.bf16.mxu0 0
  %115 = vmatpush1.bf16.xpose.msra.mxu0 0
  %116 = vmatprep.subr.bf16.mxu0 0
  %117 = vmatpush1.bf16.xpose.msra.mxu0 0
  %118 = vmatprep.subr.bf16.mxu0 0
  %119 = vmatpush1.bf16.xpose.msra.mxu0 0
  %120 = vmatprep.subr.bf16.mxu0 0
  %121 = vmatpush1.bf16.xpose.msra.mxu0 0
  %122 = vmatprep.subr.bf16.mxu0 0
  %123 = vmatpush1.bf16.xpose.msra.mxu0 %v106
  %124 = vmatprep.subr.bf16.mxu0 0
  %125 = vmatpush2.bf16.xpose.msra.mxu0 0
  %126 = vmatprep.subr.bf16.mxu0 0
  %127 = vmatpush2.bf16.xpose.msra.mxu0 0
  %128 = vmatprep.subr.bf16.mxu0 0
  %129 = vmatpush2.bf16.xpose.msra.mxu0 0
  %130 = vmatprep.subr.bf16.mxu0 0
  %131 = vmatpush2.bf16.xpose.msra.mxu0 0
  %132 = vmatprep.subr.bf16.mxu0 0
  %133 = vmatpush2.bf16.xpose.msra.mxu0 0
  %134 = vmatprep.subr.bf16.mxu0 0
  %135 = vmatpush2.bf16.xpose.msra.mxu0 0
  %136 = vmatprep.subr.bf16.mxu0 0
  %137 = vmatpush2.bf16.xpose.msra.mxu0 0
  %138 = vmatprep.subr.bf16.mxu0 0
  %139 = vmatpush2.bf16.xpose.msra.mxu0 0
  %140 = vmatprep.mubr.bf16.mxu0 0
  %141 = vmatmul.mubr.bf16.gmra.mxu0 %v103
  %v142 = vpop.f32.mrf.mxu0
  %v143 = vadd.f32 0.0, %v142
  %v144 = vpop.f32.mrf.mxu0
  %v145 = vpop.f32.mrf.mxu0
  %v146 = vadd.f32 0.0, %v145
  %v147 = vpop.f32.mrf.mxu0
  %148 = vdwg.mxu0
  %v149 = vlaneseq
  %v150 = vand.u32 %v149, 127
  %v151 = vrot.slane %v143, 1
  %v152 = vrot.slane %v146, 1
  %v153 = vlaneseq
  %v154 = vshrl.u32 %v153, 7
  %vm155 = vcmp.lt.s32.totalorder %v154, 7
  %v156 = vsel %vm155, %v151, %v152
  %v157 = vsel %vm155, %v152, %v151
  %v158 = vand.u32 %v150, 1
  %vm159 = vcmp.eq.s32.totalorder %v158, 1
  %v160 = vsel %vm159, %v156, %v143
  %v161 = vsel %vm159, %v157, %v146
  %v162 = vrot.slane %v160, 2
  %v163 = vrot.slane %v161, 2
  %vm164 = vcmp.lt.s32.totalorder %v154, 6
  %v165 = vsel %vm164, %v162, %v163
  %v166 = vsel %vm164, %v163, %v162
  %v167 = vshra.s32 %v150, 1
  %v168 = vand.u32 %v167, 1
  %vm169 = vcmp.eq.s32.totalorder %v168, 1
  %v170 = vsel %vm169, %v165, %v160
  %v171 = vsel %vm169, %v166, %v161
  %v172 = vrot.slane %v170, 4
  %v173 = vrot.slane %v171, 4
  %vm174 = vcmp.lt.s32.totalorder %v154, 4
  %v175 = vsel %vm174, %v172, %v173
  %v176 = vsel %vm174, %v173, %v172
  %v177 = vshra.s32 %v150, 2
  %v178 = vand.u32 %v177, 1
  %vm179 = vcmp.eq.s32.totalorder %v178, 1
  %v180 = vsel %vm179, %v175, %v170
  %v181 = vsel %vm179, %v176, %v171
  %v182 = vshra.s32 %v150, 3
  %v183 = vand.u32 %v182, 1
  %vm184 = vcmp.eq.s32.totalorder %v183, 1
  %v185 = vsel %vm184, %v181, %v180
  %v186 = vsel %vm184, %v180, %v181
  %vm187 = vcmask 130048
  %v188 = vsel %vm187, %v185, 0.0
  %189 = vadd.xlane.f32.xlu0 %v188
  %v190 = vpop.xlane.xlu0 %189
  %v191 = vsel %vm187, %v186, 0.0
  %192 = vadd.xlane.f32.xlu0 %v191
  %v193 = vpop.xlane.xlu0 %192
  %v194 = vmul.f32 %v190, 0.03125
  %v195 = vmul.f32 %v193, 0.03125
  %vm196 = vcmask 7168
  %197 = vst.msk [vmem:[%s4] sm:$0xff] %vm196, %v194
  %198 = vst.msk [vmem:[%s4 + $0x8] sm:$0xff] %vm196, %v195
  %s199 = scalar_lea.vmem %s0, 16
  %v200 = vld [vmem:[%s199] sm:$0xff]
  %v201 = vld [vmem:[%s199 + $0x8] sm:$0xff]
  %v202 = vld [vmem:[%s1] sm:$0xf]
  %v203 = vld [vmem:[%s1 + $0x4] sm:$0xf]
  %v204 = vld [vmem:[%s1 + $0x8] sm:$0xf]
  %v205 = vld [vmem:[%s1 + $0xc] sm:$0xf]
  %v206 = vpack.c.bf16 %v201, %v200
  %v207 = vld [vmem:[%s2] sm:$0x1]
  %v209 = vlaneseq
  %v210 = vshrl.u32 %v209, 7
  %v211 = vsub.s32 0, %v210
  %v212 = vrot.slane %v207, %v211
  %v218 = vunpack.c.l.b16 %v202
  %v219 = vunpack.c.l.b16 %v203
  %v220 = vunpack.c.l.b16 %v204
  %v221 = vunpack.c.l.b16 %v205
  %v222 = vpack.c.b16 %v219, %v218
  %v223 = vpack.c.b16 %v221, %v220
  %v227 = vsel %vm43, %v206, 0
  %229 = vmatprep.subr.bf16.mxu0 0
  %230 = vmatpush1.bf16.msra.mxu0 0
  %231 = vmatprep.subr.bf16.mxu0 0
  %232 = vmatpush1.bf16.msra.mxu0 0
  %233 = vmatprep.subr.bf16.mxu0 0
  %234 = vmatpush1.bf16.msra.mxu0 0
  %235 = vmatprep.subr.bf16.mxu0 0
  %236 = vmatpush1.bf16.msra.mxu0 0
  %237 = vmatprep.subr.bf16.mxu0 0
  %238 = vmatpush1.bf16.msra.mxu0 0
  %239 = vmatprep.subr.bf16.mxu0 0
  %240 = vmatpush1.bf16.msra.mxu0 0
  %241 = vmatprep.subr.bf16.mxu0 0
  %242 = vmatpush1.bf16.msra.mxu0 %v223
  %243 = vmatprep.subr.bf16.mxu0 0
  %244 = vmatpush1.bf16.msra.mxu0 %v222
  %245 = vmatprep.subr.bf16.mxu0 0
  %246 = vmatpush2.bf16.msra.mxu0 0
  %247 = vmatprep.subr.bf16.mxu0 0
  %248 = vmatpush2.bf16.msra.mxu0 0
  %249 = vmatprep.subr.bf16.mxu0 0
  %250 = vmatpush2.bf16.msra.mxu0 0
  %251 = vmatprep.subr.bf16.mxu0 0
  %252 = vmatpush2.bf16.msra.mxu0 0
  %253 = vmatprep.subr.bf16.mxu0 0
  %254 = vmatpush2.bf16.msra.mxu0 0
  %255 = vmatprep.subr.bf16.mxu0 0
  %256 = vmatpush2.bf16.msra.mxu0 0
  %257 = vmatprep.subr.bf16.mxu0 0
  %258 = vmatpush2.bf16.msra.mxu0 0
  %259 = vmatprep.subr.bf16.mxu0 0
  %260 = vmatpush2.bf16.msra.mxu0 0
  %261 = vmatprep.mubr.bf16.mxu0 0
  %262 = vmatmul.mubr.bf16.gmra.mxu0 %v227
  %v263 = vpop.f32.mrf.mxu0
  %v264 = vadd.f32 %v212, %v263
  %v265 = vpop.f32.mrf.mxu0
  %v266 = vpop.f32.mrf.mxu0
  %v267 = vadd.f32 %v212, %v266
  %v268 = vpop.f32.mrf.mxu0
  %269 = vdwg.mxu0
  %272 = vrot.lane.b32.xlu0 %v264, 64
  %v273 = vpop.permute.xlu0 %272
  %274 = vrot.lane.b32.xlu0 %v267, 64
  %v275 = vpop.permute.xlu0 %274
  %s278 = scalar_lea.vmem %s3, 16
  %279 = vst.msk [vmem:[%s278] sm:$0xff] %vm43, %v273
  %280 = vst.msk [vmem:[%s278 + $0x8] sm:$0xff] %vm43, %v275
  %v281 = vpack.c.bf16 %v267, %v264
  %283 = vrot.lane.b32.xlu0 %v281, 96
  %v284 = vpop.permute.xlu0 %283
  %v286 = vsel %vm43, %v281, 0
  %v289 = vsel %vm43, %v284, 0
  %291 = vmatprep.subr.bf16.mxu0 0
  %292 = vmatpush1.bf16.xpose.msra.mxu0 0
  %293 = vmatprep.subr.bf16.mxu0 0
  %294 = vmatpush1.bf16.xpose.msra.mxu0 0
  %295 = vmatprep.subr.bf16.mxu0 0
  %296 = vmatpush1.bf16.xpose.msra.mxu0 0
  %297 = vmatprep.subr.bf16.mxu0 0
  %298 = vmatpush1.bf16.xpose.msra.mxu0 0
  %299 = vmatprep.subr.bf16.mxu0 0
  %300 = vmatpush1.bf16.xpose.msra.mxu0 0
  %301 = vmatprep.subr.bf16.mxu0 0
  %302 = vmatpush1.bf16.xpose.msra.mxu0 0
  %303 = vmatprep.subr.bf16.mxu0 0
  %304 = vmatpush1.bf16.xpose.msra.mxu0 0
  %305 = vmatprep.subr.bf16.mxu0 0
  %306 = vmatpush1.bf16.xpose.msra.mxu0 %v289
  %307 = vmatprep.subr.bf16.mxu0 0
  %308 = vmatpush2.bf16.xpose.msra.mxu0 0
  %309 = vmatprep.subr.bf16.mxu0 0
  %310 = vmatpush2.bf16.xpose.msra.mxu0 0
  %311 = vmatprep.subr.bf16.mxu0 0
  %312 = vmatpush2.bf16.xpose.msra.mxu0 0
  %313 = vmatprep.subr.bf16.mxu0 0
  %314 = vmatpush2.bf16.xpose.msra.mxu0 0
  %315 = vmatprep.subr.bf16.mxu0 0
  %316 = vmatpush2.bf16.xpose.msra.mxu0 0
  %317 = vmatprep.subr.bf16.mxu0 0
  %318 = vmatpush2.bf16.xpose.msra.mxu0 0
  %319 = vmatprep.subr.bf16.mxu0 0
  %320 = vmatpush2.bf16.xpose.msra.mxu0 0
  %321 = vmatprep.subr.bf16.mxu0 0
  %322 = vmatpush2.bf16.xpose.msra.mxu0 0
  %323 = vmatprep.mubr.bf16.mxu0 0
  %324 = vmatmul.mubr.bf16.gmra.mxu0 %v286
  %v325 = vpop.f32.mrf.mxu0
  %v326 = vadd.f32 0.0, %v325
  %v327 = vpop.f32.mrf.mxu0
  %v328 = vpop.f32.mrf.mxu0
  %v329 = vadd.f32 0.0, %v328
  %v330 = vpop.f32.mrf.mxu0
  %331 = vdwg.mxu0
  %v332 = vrot.slane %v326, 1
  %v333 = vrot.slane %v329, 1
  %v334 = vsel %vm155, %v332, %v333
  %v335 = vsel %vm155, %v333, %v332
  %v336 = vsel %vm159, %v334, %v326
  %v337 = vsel %vm159, %v335, %v329
  %v338 = vrot.slane %v336, 2
  %v339 = vrot.slane %v337, 2
  %v340 = vsel %vm164, %v338, %v339
  %v341 = vsel %vm164, %v339, %v338
  %v342 = vsel %vm169, %v340, %v336
  %v343 = vsel %vm169, %v341, %v337
  %v344 = vrot.slane %v342, 4
  %v345 = vrot.slane %v343, 4
  %v346 = vsel %vm174, %v344, %v345
  %v347 = vsel %vm174, %v345, %v344
  %v348 = vsel %vm179, %v346, %v342
  %v349 = vsel %vm179, %v347, %v343
  %v350 = vsel %vm184, %v349, %v348
  %v351 = vsel %vm184, %v348, %v349
  %v352 = vsel %vm187, %v350, 0.0
  %353 = vadd.xlane.f32.xlu0 %v352
  %v354 = vpop.xlane.xlu0 %353
  %v355 = vsel %vm187, %v351, 0.0
  %356 = vadd.xlane.f32.xlu0 %v355
  %v357 = vpop.xlane.xlu0 %356
  %v358 = vmul.f32 %v354, 0.03125
  %v359 = vmul.f32 %v357, 0.03125
  %s360 = scalar_lea.vmem %s4, 16
  %361 = vst.msk [vmem:[%s360] sm:$0xff] %vm196, %v358
  %362 = vst.msk [vmem:[%s360 + $0x8] sm:$0xff] %vm196, %v359
  // Predicated region
  $region14: #{fwd.11} parent=0 // pred_check
    _
  $region15: #{fwd.11} parent=0 // pred_check_branch
    %364 = sbr.rel (0) target = $region17
  $region16: #{fwd.11} parent=0 // pred_region
    _
  $region17: #{fwd.11} parent=0 // pred_fallthru
    _
  // Predicated region
  $region18: #{fwd.11} parent=0 // pred_check
    _
  $region19: #{fwd.11} parent=0 // pred_check_branch
    %366 = sbr.rel (0) target = $region21
  $region20: #{fwd.11} parent=0 // pred_region
    _
  $region21: #{fwd.11} parent=0 // pred_fallthru
    _
  // Predicated region
  $region22: #{fwd.11} parent=0 // pred_check
    _
  $region23: #{fwd.11} parent=0 // pred_check_branch
    %368 = sbr.rel (0) target = $region25
  $region24: #{fwd.11} parent=0 // pred_region
    _
  $region25: #{fwd.11} parent=0 // pred_fallthru
    _
  // Predicated region
  $region26: #{fwd.11} parent=0 // pred_check
    _
  $region27: #{fwd.11} parent=0 // pred_check_branch
    %370 = sbr.rel (0) target = $region29
  $region28: #{fwd.11} parent=0 // pred_region
    _
  $region29: #{fwd.11} parent=0 // pred_fallthru
    _

// kernel: fwd.12
$region0: #{fwd.12}
  #allocation0 [shape = 'u32[]', space=smem, size = 0x4, offset = 0x4, fixed_abs, tag = 'smem constant byte address 0x4 - core index']
  #allocation1 [shape = 'u32[144,128]{1,0:T(1,128)}', space=vmem, size = 0x12000, scoped, tag = 'internal scratch']
  #allocation2 [shape = 'f32[32,32]{1,0:T(8,128)}', space=vmem, size = 0x4000, scoped, tag = 'scratch operand']
  %s0 = inlined_call_operand.vmem [shape: s32[2,2], index: 0, kind: input, shape index: {}]
  %s1 = inlined_call_operand.vmem [shape: f32[2,2], index: 1, kind: input, shape index: {}]
  %s2 = inlined_call_operand.vmem [shape: f32[2,16,32], index: 2, kind: input, shape index: {}]
  %s3 = inlined_call_operand.vmem [shape: f32[2,16,32], index: 3, kind: input, shape index: {}]
  %s4 = inlined_call_operand.vmem [shape: f32[2,16,32], index: 4, kind: input, shape index: {}]
  %s5 = inlined_call_operand.vmem [shape: bf16[32,32], index: 5, kind: input, shape index: {}]
  %s6 = inlined_call_operand.vmem [shape: f32[1,32], index: 6, kind: input, shape index: {}]
  %s7 = inlined_call_operand.vmem [shape: f32[16,16], index: 7, kind: input, shape index: {}]
  %s8 = inlined_call_operand.vmem [shape: bf16[32,32], index: 8, kind: input, shape index: {}]
  %s9 = inlined_call_operand.vmem [shape: f32[1,32], index: 9, kind: input, shape index: {}]
  %s10 = inlined_call_operand.vmem [shape: bf16[32,64], index: 10, kind: input, shape index: {}]
  %s11 = inlined_call_operand.vmem [shape: f32[1,64], index: 11, kind: input, shape index: {}]
  %s12 = inlined_call_operand.vmem [shape: f32[2,16,32], index: 12, kind: output, shape index: {0}]
  %s13 = inlined_call_operand.vmem [shape: f32[2,16,32], index: 13, kind: output, shape index: {1}]
  %s14 = inlined_call_operand.vmem [shape: f32[2,16,32], index: 14, kind: output, shape index: {2}]
  %s15 = inlined_call_operand.vmem [shape: f32[2,16,1], index: 15, kind: output, shape index: {3}]
  %16 = xla_tuple %s12, %s13, %s14, %s15
  %s17 = sld [smem:[#allocation0]]
  $region90: #{fwd.12} parent=0
    _
  %s19 = ssub.s32 1, %s17
  %s20 = scalar_select 0, %s19, %s17
  $region1: #{fwd.12} parent=0
    #allocation3 [shape = 'u8[1024]{0}', space=smem, size = 0x400, scoped, tag = 'input window, operand 0, single buffered']
    #allocation4 [shape = 's32[1]{0}', space=sflag, size = 0x4, scoped, tag = 'scoped memory for fwd.12']
    #allocation5 [shape = 'u8[1024]{0}', space=smem, size = 0x400, scoped, tag = 'input window, operand 1, single buffered']
    #allocation6 [shape = 's32[1]{0}', space=sflag, size = 0x4, scoped, tag = 'scoped memory for fwd.12']
    %21 = vsyncpa [#allocation4], 0
    %22 = vsyncpa [#allocation6], 0
    // Predicated region
    $region2: #{fwd.12} parent=1 // pred_check
      _
    $region3: #{fwd.12} parent=1 // pred_check_branch
      %24 = sbr.rel (0) target = $region5
    $region4: #{fwd.12} parent=1 // pred_region
      %s26 = ssub.s32 32, 32
      %27 = vsyncadd [#allocation4], %s26
      %s29 = sshll.u32 %s0, 4
      %s30 = int_to_ptr.vmem [resolvable:$true] %s29
      %32 = dma.vmem_to_smem %s30, 32, [#allocation3], [#allocation4]
    $region5: #{fwd.12} parent=1 // pred_fallthru
      _
    // Predicated region
    $region6: #{fwd.12} parent=1 // pred_check
      _
    $region7: #{fwd.12} parent=1 // pred_check_branch
      %34 = sbr.rel (0) target = $region9
    $region8: #{fwd.12} parent=1 // pred_region
      %s36 = ssub.s32 32, 32
      %37 = vsyncadd [#allocation6], %s36
      %s39 = sshll.u32 %s1, 4
      %s40 = int_to_ptr.vmem [resolvable:$true] %s39
      %42 = dma.vmem_to_smem %s40, 32, [#allocation5], [#allocation6]
    $region9: #{fwd.12} parent=1 // pred_fallthru
      _
    // Predicated region
    $region10: #{fwd.12} parent=1 // pred_check
      _
    $region11: #{fwd.12} parent=1 // pred_check_branch
      %44 = sbr.rel (0) target = $region13
    $region12: #{fwd.12} parent=1 // pred_region
      _
    $region13: #{fwd.12} parent=1 // pred_fallthru
      _
    // Predicated region
    $region14: #{fwd.12} parent=1 // pred_check
      _
    $region15: #{fwd.12} parent=1 // pred_check_branch
      %46 = sbr.rel (0) target = $region17
    $region16: #{fwd.12} parent=1 // pred_region
      _
    $region17: #{fwd.12} parent=1 // pred_fallthru
      _
    // Predicated region
    $region18: #{fwd.12} parent=1 // pred_check
      _
    $region19: #{fwd.12} parent=1 // pred_check_branch
      %48 = sbr.rel (0) target = $region21
    $region20: #{fwd.12} parent=1 // pred_region
      _
    $region21: #{fwd.12} parent=1 // pred_fallthru
      _
    // Predicated region
    $region22: #{fwd.12} parent=1 // pred_check
      _
    $region23: #{fwd.12} parent=1 // pred_check_branch
      %50 = sbr.rel (0) target = $region25
    $region24: #{fwd.12} parent=1 // pred_region
      _
    $region25: #{fwd.12} parent=1 // pred_fallthru
      _
    // Predicated region
    $region26: #{fwd.12} parent=1 // pred_check
      _
    $region27: #{fwd.12} parent=1 // pred_check_branch
      %52 = sbr.rel (0) target = $region29
    $region28: #{fwd.12} parent=1 // pred_region
      _
    $region29: #{fwd.12} parent=1 // pred_fallthru
      _
    // Predicated region
    $region30: #{fwd.12} parent=1 // pred_check
      _
    $region31: #{fwd.12} parent=1 // pred_check_branch
      %54 = sbr.rel (0) target = $region33
    $region32: #{fwd.12} parent=1 // pred_region
      _
    $region33: #{fwd.12} parent=1 // pred_fallthru
      _
    // Predicated region
    $region34: #{fwd.12} parent=1 // pred_check
      _
    $region35: #{fwd.12} parent=1 // pred_check_branch
      %56 = sbr.rel (0) target = $region37
    $region36: #{fwd.12} parent=1 // pred_region
      _
    $region37: #{fwd.12} parent=1 // pred_fallthru
      _
    // Predicated region
    $region38: #{fwd.12} parent=1 // pred_check
      _
    $region39: #{fwd.12} parent=1 // pred_check_branch
      %58 = sbr.rel (0) target = $region41
    $region40: #{fwd.12} parent=1 // pred_region
      _
    $region41: #{fwd.12} parent=1 // pred_fallthru
      _
    // Predicated region
    $region42: #{fwd.12} parent=1 // pred_check
      _
    $region43: #{fwd.12} parent=1 // pred_check_branch
      %60 = sbr.rel (0) target = $region45
    $region44: #{fwd.12} parent=1 // pred_region
      _
    $region45: #{fwd.12} parent=1 // pred_fallthru
      _
    // Predicated region
    $region46: #{fwd.12} parent=1 // pred_check
      _
    $region47: #{fwd.12} parent=1 // pred_check_branch
      %62 = sbr.rel (0) target = $region49
    $region48: #{fwd.12} parent=1 // pred_region
      _
    $region49: #{fwd.12} parent=1 // pred_fallthru
      _
    // Predicated region
    $region50: #{fwd.12} parent=1 // pred_check
      _
    $region51: #{fwd.12} parent=1 // pred_check_branch
      %64 = sbr.rel (0) target = $region53
    $region52: #{fwd.12} parent=1 // pred_region
      %65 = dma.done [#allocation4], 32
    $region53: #{fwd.12} parent=1 // pred_fallthru
      _
    // Predicated region
    $region54: #{fwd.12} parent=1 // pred_check
      _
    $region55: #{fwd.12} parent=1 // pred_check_branch
      %67 = sbr.rel (0) target = $region57
    $region56: #{fwd.12} parent=1 // pred_region
      %68 = dma.done [#allocation6], 32
    $region57: #{fwd.12} parent=1 // pred_fallthru
      _
    %69 = sfence
    %v71 = vld [vmem:[%s2] sm:$0xff]
    %v72 = vld [vmem:[%s2 + $0x8] sm:$0xff]
    %vm73 = vcmask 261120
    %74 = vst.msk [vmem:[#allocation2] sm:$0xff] %vm73, %v71
    %75 = vst.msk [vmem:[#allocation2 + $0x8] sm:$0xff] %vm73, %v72
    %76 = vst.msk [vmem:[#allocation2 + $0x10] sm:$0xff] %vm73, %v71
    %77 = vst.msk [vmem:[#allocation2 + $0x18] sm:$0xff] %vm73, %v72
    %s78 = sld [smem:[#allocation5]]
    %s79 = sld [smem:[#allocation3]]
    %s80 = scalar_lea.vmem [#allocation2], %s79
    %v81 = vld [vmem:[%s80] sm:$0xff]
    %v82 = vld [vmem:[%s80 + $0x8] sm:$0xff]
    %v83 = vstv %s78
    %v84 = vmul.f32 %v83, %v81
    %v85 = vmul.f32 %v83, %v82
    %v86 = vadd.f32 %v84, 0.0
    %v87 = vadd.f32 %v85, 0.0
    %s88 = sld [smem:[#allocation5 + $0x1]]
    %s89 = sld [smem:[#allocation3 + $0x1]]
    %s90 = scalar_lea.vmem [#allocation2], %s89
    %v91 = vld [vmem:[%s90] sm:$0xff]
    %v92 = vld [vmem:[%s90 + $0x8] sm:$0xff]
    %v93 = vstv %s88
    %v94 = vmul.f32 %v93, %v91
    %v95 = vmul.f32 %v93, %v92
    %v96 = vadd.f32 %v86, %v94
    %v97 = vadd.f32 %v87, %v95
    %v98 = vld [vmem:[%s3] sm:$0xff]
    %v99 = vld [vmem:[%s3 + $0x8] sm:$0xff]
    %v100 = vld [vmem:[%s5] sm:$0xf]
    %v101 = vld [vmem:[%s5 + $0x4] sm:$0xf]
    %v102 = vld [vmem:[%s5 + $0x8] sm:$0xf]
    %v103 = vld [vmem:[%s5 + $0xc] sm:$0xf]
    %v104 = vpack.c.bf16 %v97, %v96
    %v109 = vunpack.c.l.b16 %v100
    %v110 = vunpack.c.l.b16 %v101
    %v111 = vunpack.c.l.b16 %v102
    %v112 = vunpack.c.l.b16 %v103
    %v113 = vpack.c.b16 %v110, %v109
    %v114 = vpack.c.b16 %v112, %v111
    %v118 = vsel %vm73, %v104, 0
    %120 = vmatprep.subr.bf16.mxu0 0
    %121 = vmatpush1.bf16.msra.mxu0 0
    %122 = vmatprep.subr.bf16.mxu0 0
    %123 = vmatpush1.bf16.msra.mxu0 0
    %124 = vmatprep.subr.bf16.mxu0 0
    %125 = vmatpush1.bf16.msra.mxu0 0
    %126 = vmatprep.subr.bf16.mxu0 0
    %127 = vmatpush1.bf16.msra.mxu0 0
    %128 = vmatprep.subr.bf16.mxu0 0
    %129 = vmatpush1.bf16.msra.mxu0 0
    %130 = vmatprep.subr.bf16.mxu0 0
    %131 = vmatpush1.bf16.msra.mxu0 0
    %132 = vmatprep.subr.bf16.mxu0 0
    %133 = vmatpush1.bf16.msra.mxu0 %v114
    %134 = vmatprep.subr.bf16.mxu0 0
    %135 = vmatpush1.bf16.msra.mxu0 %v113
    %136 = vmatprep.subr.bf16.mxu0 0
    %137 = vmatpush2.bf16.msra.mxu0 0
    %138 = vmatprep.subr.bf16.mxu0 0
    %139 = vmatpush2.bf16.msra.mxu0 0
    %140 = vmatprep.subr.bf16.mxu0 0
    %141 = vmatpush2.bf16.msra.mxu0 0
    %142 = vmatprep.subr.bf16.mxu0 0
    %143 = vmatpush2.bf16.msra.mxu0 0
    %144 = vmatprep.subr.bf16.mxu0 0
    %145 = vmatpush2.bf16.msra.mxu0 0
    %146 = vmatprep.subr.bf16.mxu0 0
    %147 = vmatpush2.bf16.msra.mxu0 0
    %148 = vmatprep.subr.bf16.mxu0 0
    %149 = vmatpush2.bf16.msra.mxu0 0
    %150 = vmatprep.subr.bf16.mxu0 0
    %151 = vmatpush2.bf16.msra.mxu0 0
    %152 = vmatprep.mubr.bf16.mxu0 0
    %153 = vmatmul.mubr.bf16.gmra.mxu0 %v118
    %v154 = vpop.f32.mrf.mxu0
    %v155 = vadd.f32 0.0, %v154
    %v156 = vpop.f32.mrf.mxu0
    %v157 = vpop.f32.mrf.mxu0
    %v158 = vadd.f32 0.0, %v157
    %v159 = vpop.f32.mrf.mxu0
    %160 = vdwg.mxu0
    %v161 = vadd.f32 %v98, %v155
    %v162 = vadd.f32 %v99, %v158
    %v163 = vld [vmem:[%s6] sm:$0x1]
    %v165 = vlaneseq
    %v166 = vshrl.u32 %v165, 7
    %v167 = vsub.s32 0, %v166
    %v168 = vrot.slane %v163, %v167
    %v170 = vadd.f32 %v161, %v168
    %v171 = vadd.f32 %v162, %v168
    %v172 = vld [vmem:[%s7] sm:$0xff]
    %v173 = vld [vmem:[%s7 + $0x8] sm:$0xff]
    %vm174 = vcmask 130048
    %v176 = vsel %vm174, %v172, 0
    %v179 = vsel %vm174, %v173, 0
    %181 = vmatprep.subr.mxu0 0.0
    %182 = vmatpush1.msra.mxu0 0.0
    %183 = vmatprep.subr.mxu0 0.0
    %184 = vmatpush1.msra.mxu0 0.0
    %185 = vmatprep.subr.mxu0 0.0
    %186 = vmatpush1.msra.mxu0 0.0
    %187 = vmatprep.subr.mxu0 0.0
    %188 = vmatpush1.msra.mxu0 0.0
    %189 = vmatprep.subr.mxu0 0.0
    %190 = vmatpush1.msra.mxu0 0.0
    %191 = vmatprep.subr.mxu0 0.0
    %192 = vmatpush1.msra.mxu0 0.0
    %193 = vmatprep.subr.mxu0 0.0
    %194 = vmatpush1.msra.mxu0 0.0
    %195 = vmatprep.subr.mxu0 0.0
    %196 = vmatpush1.msra.mxu0 0.0
    %197 = vmatprep.subr.mxu0 0.0
    %198 = vmatpush1.msra.mxu0 0.0
    %199 = vmatprep.subr.mxu0 0.0
    %200 = vmatpush1.msra.mxu0 0.0
    %201 = vmatprep.subr.mxu0 0.0
    %202 = vmatpush1.msra.mxu0 0.0
    %203 = vmatprep.subr.mxu0 0.0
    %204 = vmatpush1.msra.mxu0 0.0
    %205 = vmatprep.subr.mxu0 0.0
    %206 = vmatpush1.msra.mxu0 0.0
    %207 = vmatprep.subr.mxu0 0.0
    %208 = vmatpush1.msra.mxu0 0.0
    %209 = vmatprep.subr.mxu0 0.0
    %210 = vmatpush1.msra.mxu0 %v171
    %211 = vmatprep.subr.mxu0 0.0
    %212 = vmatpush1.msra.mxu0 %v170
    %213 = vmatprep.subr.mxu0 0.0
    %214 = vmatpush2.msra.mxu0 0.0
    %215 = vmatprep.subr.mxu0 0.0
    %216 = vmatpush2.msra.mxu0 0.0
    %217 = vmatprep.subr.mxu0 0.0
    %218 = vmatpush2.msra.mxu0 0.0
    %219 = vmatprep.subr.mxu0 0.0
    %220 = vmatpush2.msra.mxu0 0.0
    %221 = vmatprep.subr.mxu0 0.0
    %222 = vmatpush2.msra.mxu0 0.0
    %223 = vmatprep.subr.mxu0 0.0
    %224 = vmatpush2.msra.mxu0 0.0
    %225 = vmatprep.subr.mxu0 0.0
    %226 = vmatpush2.msra.mxu0 0.0
    %227 = vmatprep.subr.mxu0 0.0
    %228 = vmatpush2.msra.mxu0 0.0
    %229 = vmatprep.subr.mxu0 0.0
    %230 = vmatpush2.msra.mxu0 0.0
    %231 = vmatprep.subr.mxu0 0.0
    %232 = vmatpush2.msra.mxu0 0.0
    %233 = vmatprep.subr.mxu0 0.0
    %234 = vmatpush2.msra.mxu0 0.0
    %235 = vmatprep.subr.mxu0 0.0
    %236 = vmatpush2.msra.mxu0 0.0
    %237 = vmatprep.subr.mxu0 0.0
    %238 = vmatpush2.msra.mxu0 0.0
    %239 = vmatprep.subr.mxu0 0.0
    %240 = vmatpush2.msra.mxu0 0.0
    %241 = vmatprep.subr.mxu0 0.0
    %242 = vmatpush2.msra.mxu0 0.0
    %243 = vmatprep.subr.mxu0 0.0
    %244 = vmatpush2.msra.mxu0 0.0
    %245 = vmatprep.mubr.f32.mxu0 0.0
    %246 = vmatmul.mubr.f32.gmra.mxu0 %v176
    %v247 = vpop.f32.mrf.mxu0
    %v248 = vadd.f32 0.0, %v247
    %v249 = vpop.f32.mrf.mxu0
    %250 = vmatprep.mubr.f32.mxu0 0.0
    %251 = vmatmul.mubr.f32.gmra.mxu0 %v179
    %v252 = vpop.f32.mrf.mxu0
    %v253 = vadd.f32 0.0, %v252
    %v254 = vpop.f32.mrf.mxu0
    %255 = vdwg.mxu0
    %v256 = vsub.f32 %v170, %v248
    %v257 = vsub.f32 %v171, %v253
    %258 = vst.msk [vmem:[%s12] sm:$0xff] %vm73, %v256
    %259 = vst.msk [vmem:[%s12 + $0x8] sm:$0xff] %vm73, %v257
    %260 = vst.msk [vmem:[%s13] sm:$0xff] %vm73, %v248
    %261 = vst.msk [vmem:[%s13 + $0x8] sm:$0xff] %vm73, %v253
    %v262 = vld [vmem:[%s8] sm:$0xf]
    %v263 = vld [vmem:[%s8 + $0x4] sm:$0xf]
    %v264 = vld [vmem:[%s8 + $0x8] sm:$0xf]
    %v265 = vld [vmem:[%s8 + $0xc] sm:$0xf]
    %v266 = vpack.c.bf16 %v257, %v256
    %v267 = vld [vmem:[%s9] sm:$0x1]
    %v269 = vlaneseq
    %v270 = vshrl.u32 %v269, 7
    %v271 = vsub.s32 0, %v270
    %v272 = vrot.slane %v267, %v271
    %v278 = vunpack.c.l.b16 %v262
    %v279 = vunpack.c.l.b16 %v263
    %v280 = vunpack.c.l.b16 %v264
    %v281 = vunpack.c.l.b16 %v265
    %v282 = vpack.c.b16 %v279, %v278
    %v283 = vpack.c.b16 %v281, %v280
    %v287 = vsel %vm73, %v266, 0
    %289 = vmatprep.subr.bf16.mxu0 0
    %290 = vmatpush1.bf16.msra.mxu0 0
    %291 = vmatprep.subr.bf16.mxu0 0
    %292 = vmatpush1.bf16.msra.mxu0 0
    %293 = vmatprep.subr.bf16.mxu0 0
    %294 = vmatpush1.bf16.msra.mxu0 0
    %295 = vmatprep.subr.bf16.mxu0 0
    %296 = vmatpush1.bf16.msra.mxu0 0
    %297 = vmatprep.subr.bf16.mxu0 0
    %298 = vmatpush1.bf16.msra.mxu0 0
    %299 = vmatprep.subr.bf16.mxu0 0
    %300 = vmatpush1.bf16.msra.mxu0 0
    %301 = vmatprep.subr.bf16.mxu0 0
    %302 = vmatpush1.bf16.msra.mxu0 %v283
    %303 = vmatprep.subr.bf16.mxu0 0
    %304 = vmatpush1.bf16.msra.mxu0 %v282
    %305 = vmatprep.subr.bf16.mxu0 0
    %306 = vmatpush2.bf16.msra.mxu0 0
    %307 = vmatprep.subr.bf16.mxu0 0
    %308 = vmatpush2.bf16.msra.mxu0 0
    %309 = vmatprep.subr.bf16.mxu0 0
    %310 = vmatpush2.bf16.msra.mxu0 0
    %311 = vmatprep.subr.bf16.mxu0 0
    %312 = vmatpush2.bf16.msra.mxu0 0
    %313 = vmatprep.subr.bf16.mxu0 0
    %314 = vmatpush2.bf16.msra.mxu0 0
    %315 = vmatprep.subr.bf16.mxu0 0
    %316 = vmatpush2.bf16.msra.mxu0 0
    %317 = vmatprep.subr.bf16.mxu0 0
    %318 = vmatpush2.bf16.msra.mxu0 0
    %319 = vmatprep.subr.bf16.mxu0 0
    %320 = vmatpush2.bf16.msra.mxu0 0
    %321 = vmatprep.mubr.bf16.mxu0 0
    %322 = vmatmul.mubr.bf16.gmra.mxu0 %v287
    %v323 = vpop.f32.mrf.mxu0
    %v324 = vadd.f32 %v272, %v323
    %v325 = vpop.f32.mrf.mxu0
    %v326 = vpop.f32.mrf.mxu0
    %v327 = vadd.f32 %v272, %v326
    %v328 = vpop.f32.mrf.mxu0
    %329 = vdwg.mxu0
    %v330 = vld [vmem:[%s4] sm:$0xff]
    %v331 = vld [vmem:[%s4 + $0x8] sm:$0xff]
    %v332 = vld [vmem:[%s10] sm:$0xf]
    %v333 = vld [vmem:[%s10 + $0x4] sm:$0xf]
    %v334 = vld [vmem:[%s10 + $0x8] sm:$0xf]
    %v335 = vld [vmem:[%s10 + $0xc] sm:$0xf]
    %v336 = vpack.c.bf16 %v331, %v330
    %v337 = vld [vmem:[%s11] sm:$0x1]
    %v339 = vlaneseq
    %v340 = vshrl.u32 %v339, 7
    %v341 = vsub.s32 0, %v340
    %v342 = vrot.slane %v337, %v341
    %v348 = vunpack.c.l.b16 %v332
    %v349 = vunpack.c.l.b16 %v333
    %v350 = vunpack.c.l.b16 %v334
    %v351 = vunpack.c.l.b16 %v335
    %v352 = vpack.c.b16 %v349, %v348
    %v353 = vpack.c.b16 %v351, %v350
    %v357 = vsel %vm73, %v336, 0
    %359 = vmatprep.subr.bf16.mxu0 0
    %360 = vmatpush1.bf16.msra.mxu0 0
    %361 = vmatprep.subr.bf16.mxu0 0
    %362 = vmatpush1.bf16.msra.mxu0 0
    %363 = vmatprep.subr.bf16.mxu0 0
    %364 = vmatpush1.bf16.msra.mxu0 0
    %365 = vmatprep.subr.bf16.mxu0 0
    %366 = vmatpush1.bf16.msra.mxu0 0
    %367 = vmatprep.subr.bf16.mxu0 0
    %368 = vmatpush1.bf16.msra.mxu0 0
    %369 = vmatprep.subr.bf16.mxu0 0
    %370 = vmatpush1.bf16.msra.mxu0 0
    %371 = vmatprep.subr.bf16.mxu0 0
    %372 = vmatpush1.bf16.msra.mxu0 %v353
    %373 = vmatprep.subr.bf16.mxu0 0
    %374 = vmatpush1.bf16.msra.mxu0 %v352
    %375 = vmatprep.subr.bf16.mxu0 0
    %376 = vmatpush2.bf16.msra.mxu0 0
    %377 = vmatprep.subr.bf16.mxu0 0
    %378 = vmatpush2.bf16.msra.mxu0 0
    %379 = vmatprep.subr.bf16.mxu0 0
    %380 = vmatpush2.bf16.msra.mxu0 0
    %381 = vmatprep.subr.bf16.mxu0 0
    %382 = vmatpush2.bf16.msra.mxu0 0
    %383 = vmatprep.subr.bf16.mxu0 0
    %384 = vmatpush2.bf16.msra.mxu0 0
    %385 = vmatprep.subr.bf16.mxu0 0
    %386 = vmatpush2.bf16.msra.mxu0 0
    %387 = vmatprep.subr.bf16.mxu0 0
    %388 = vmatpush2.bf16.msra.mxu0 0
    %389 = vmatprep.subr.bf16.mxu0 0
    %390 = vmatpush2.bf16.msra.mxu0 0
    %391 = vmatprep.mubr.bf16.mxu0 0
    %392 = vmatmul.mubr.bf16.gmra.mxu0 %v357
    %v393 = vpop.f32.mrf.mxu0
    %v394 = vadd.f32 %v342, %v393
    %v395 = vpop.f32.mrf.mxu0
    %v396 = vpop.f32.mrf.mxu0
    %v397 = vadd.f32 %v342, %v396
    %v398 = vpop.f32.mrf.mxu0
    %399 = vdwg.mxu0
    %402 = vrot.lane.b32.xlu0 %v394, 96
    %v403 = vpop.permute.xlu0 %402
    %404 = vrot.lane.b32.xlu0 %v397, 96
    %v405 = vpop.permute.xlu0 %404
    %408 = vst.msk [vmem:[%s14] sm:$0xff] %vm73, %v403
    %409 = vst.msk [vmem:[%s14 + $0x8] sm:$0xff] %vm73, %v405
    %v410 = vpack.c.bf16 %v327, %v324
    %v411 = vpack.c.bf16 %v397, %v394
    %v413 = vsel %vm73, %v410, 0
    %v416 = vsel %vm73, %v411, 0
    %418 = vmatprep.subr.bf16.mxu0 0
    %419 = vmatpush1.bf16.xpose.msra.mxu0 0
    %420 = vmatprep.subr.bf16.mxu0 0
    %421 = vmatpush1.bf16.xpose.msra.mxu0 0
    %422 = vmatprep.subr.bf16.mxu0 0
    %423 = vmatpush1.bf16.xpose.msra.mxu0 0
    %424 = vmatprep.subr.bf16.mxu0 0
    %425 = vmatpush1.bf16.xpose.msra.mxu0 0
    %426 = vmatprep.subr.bf16.mxu0 0
    %427 = vmatpush1.bf16.xpose.msra.mxu0 0
    %428 = vmatprep.subr.bf16.mxu0 0
    %429 = vmatpush1.bf16.xpose.msra.mxu0 0
    %430 = vmatprep.subr.bf16.mxu0 0
    %431 = vmatpush1.bf16.xpose.msra.mxu0 0
    %432 = vmatprep.subr.bf16.mxu0 0
    %433 = vmatpush1.bf16.xpose.msra.mxu0 %v416
    %434 = vmatprep.subr.bf16.mxu0 0
    %435 = vmatpush2.bf16.xpose.msra.mxu0 0
    %436 = vmatprep.subr.bf16.mxu0 0
    %437 = vmatpush2.bf16.xpose.msra.mxu0 0
    %438 = vmatprep.subr.bf16.mxu0 0
    %439 = vmatpush2.bf16.xpose.msra.mxu0 0
    %440 = vmatprep.subr.bf16.mxu0 0
    %441 = vmatpush2.bf16.xpose.msra.mxu0 0
    %442 = vmatprep.subr.bf16.mxu0 0
    %443 = vmatpush2.bf16.xpose.msra.mxu0 0
    %444 = vmatprep.subr.bf16.mxu0 0
    %445 = vmatpush2.bf16.xpose.msra.mxu0 0
    %446 = vmatprep.subr.bf16.mxu0 0
    %447 = vmatpush2.bf16.xpose.msra.mxu0 0
    %448 = vmatprep.subr.bf16.mxu0 0
    %449 = vmatpush2.bf16.xpose.msra.mxu0 0
    %450 = vmatprep.mubr.bf16.mxu0 0
    %451 = vmatmul.mubr.bf16.gmra.mxu0 %v413
    %v452 = vpop.f32.mrf.mxu0
    %v453 = vadd.f32 0.0, %v452
    %v454 = vpop.f32.mrf.mxu0
    %v455 = vpop.f32.mrf.mxu0
    %v456 = vadd.f32 0.0, %v455
    %v457 = vpop.f32.mrf.mxu0
    %458 = vdwg.mxu0
    %v459 = vlaneseq
    %v460 = vand.u32 %v459, 127
    %v461 = vrot.slane %v453, 1
    %v462 = vrot.slane %v456, 1
    %v463 = vlaneseq
    %v464 = vshrl.u32 %v463, 7
    %vm465 = vcmp.lt.s32.totalorder %v464, 7
    %v466 = vsel %vm465, %v461, %v462
    %v467 = vsel %vm465, %v462, %v461
    %v468 = vand.u32 %v460, 1
    %vm469 = vcmp.eq.s32.totalorder %v468, 1
    %v470 = vsel %vm469, %v466, %v453
    %v471 = vsel %vm469, %v467, %v456
    %v472 = vrot.slane %v470, 2
    %v473 = vrot.slane %v471, 2
    %vm474 = vcmp.lt.s32.totalorder %v464, 6
    %v475 = vsel %vm474, %v472, %v473
    %v476 = vsel %vm474, %v473, %v472
    %v477 = vshra.s32 %v460, 1
    %v478 = vand.u32 %v477, 1
    %vm479 = vcmp.eq.s32.totalorder %v478, 1
    %v480 = vsel %vm479, %v475, %v470
    %v481 = vsel %vm479, %v476, %v471
    %v482 = vrot.slane %v480, 4
    %v483 = vrot.slane %v481, 4
    %vm484 = vcmp.lt.s32.totalorder %v464, 4
    %v485 = vsel %vm484, %v482, %v483
    %v486 = vsel %vm484, %v483, %v482
    %v487 = vshra.s32 %v460, 2
    %v488 = vand.u32 %v487, 1
    %vm489 = vcmp.eq.s32.totalorder %v488, 1
    %v490 = vsel %vm489, %v485, %v480
    %v491 = vsel %vm489, %v486, %v481
    %v492 = vshra.s32 %v460, 3
    %v493 = vand.u32 %v492, 1
    %vm494 = vcmp.eq.s32.totalorder %v493, 1
    %v495 = vsel %vm494, %v491, %v490
    %v496 = vsel %vm494, %v490, %v491
    %v497 = vsel %vm174, %v495, 0.0
    %498 = vadd.xlane.f32.xlu0 %v497
    %v499 = vpop.xlane.xlu0 %498
    %v500 = vsel %vm174, %v496, 0.0
    %501 = vadd.xlane.f32.xlu0 %v500
    %v502 = vpop.xlane.xlu0 %501
    %v503 = vmul.f32 %v499, 0.03125
    %v504 = vmul.f32 %v502, 0.03125
    %vm505 = vcmask 7168
    %506 = vst.msk [vmem:[%s15] sm:$0xff] %vm505, %v503
    %507 = vst.msk [vmem:[%s15 + $0x8] sm:$0xff] %vm505, %v504
    %s508 = scalar_lea.vmem %s2, 16
    %v509 = vld [vmem:[%s508] sm:$0xff]
    %v510 = vld [vmem:[%s508 + $0x8] sm:$0xff]
    %511 = vst.msk [vmem:[#allocation2] sm:$0xff] %vm73, %v509
    %512 = vst.msk [vmem:[#allocation2 + $0x8] sm:$0xff] %vm73, %v510
    %513 = vst.msk [vmem:[#allocation2 + $0x10] sm:$0xff] %vm73, %v509
    %514 = vst.msk [vmem:[#allocation2 + $0x18] sm:$0xff] %vm73, %v510
    %s515 = sld [smem:[#allocation5 + $0x80]]
    %s516 = sld [smem:[#allocation3 + $0x80]]
    %s517 = scalar_lea.vmem [#allocation2], %s516
    %v518 = vld [vmem:[%s517] sm:$0xff]
    %v519 = vld [vmem:[%s517 + $0x8] sm:$0xff]
    %v520 = vstv %s515
    %v521 = vmul.f32 %v520, %v518
    %v522 = vmul.f32 %v520, %v519
    %v523 = vadd.f32 %v521, 0.0
    %v524 = vadd.f32 %v522, 0.0
    %s525 = sld [smem:[#allocation5 + $0x81]]
    %s526 = sld [smem:[#allocation3 + $0x81]]
    %s527 = scalar_lea.vmem [#allocation2], %s526
    %v528 = vld [vmem:[%s527] sm:$0xff]
    %v529 = vld [vmem:[%s527 + $0x8] sm:$0xff]
    %v530 = vstv %s525
    %v531 = vmul.f32 %v530, %v528
    %v532 = vmul.f32 %v530, %v529
    %v533 = vadd.f32 %v523, %v531
    %v534 = vadd.f32 %v524, %v532
    %s535 = scalar_lea.vmem %s3, 16
    %v536 = vld [vmem:[%s535] sm:$0xff]
    %v537 = vld [vmem:[%s535 + $0x8] sm:$0xff]
    %v538 = vld [vmem:[%s5] sm:$0xf]
    %v539 = vld [vmem:[%s5 + $0x4] sm:$0xf]
    %v540 = vld [vmem:[%s5 + $0x8] sm:$0xf]
    %v541 = vld [vmem:[%s5 + $0xc] sm:$0xf]
    %v542 = vpack.c.bf16 %v534, %v533
    %v547 = vunpack.c.l.b16 %v538
    %v548 = vunpack.c.l.b16 %v539
    %v549 = vunpack.c.l.b16 %v540
    %v550 = vunpack.c.l.b16 %v541
    %v551 = vpack.c.b16 %v548, %v547
    %v552 = vpack.c.b16 %v550, %v549
    %v556 = vsel %vm73, %v542, 0
    %558 = vmatprep.subr.bf16.mxu0 0
    %559 = vmatpush1.bf16.msra.mxu0 0
    %560 = vmatprep.subr.bf16.mxu0 0
    %561 = vmatpush1.bf16.msra.mxu0 0
    %562 = vmatprep.subr.bf16.mxu0 0
    %563 = vmatpush1.bf16.msra.mxu0 0
    %564 = vmatprep.subr.bf16.mxu0 0
    %565 = vmatpush1.bf16.msra.mxu0 0
    %566 = vmatprep.subr.bf16.mxu0 0
    %567 = vmatpush1.bf16.msra.mxu0 0
    %568 = vmatprep.subr.bf16.mxu0 0
    %569 = vmatpush1.bf16.msra.mxu0 0
    %570 = vmatprep.subr.bf16.mxu0 0
    %571 = vmatpush1.bf16.msra.mxu0 %v552
    %572 = vmatprep.subr.bf16.mxu0 0
    %573 = vmatpush1.bf16.msra.mxu0 %v551
    %574 = vmatprep.subr.bf16.mxu0 0
    %575 = vmatpush2.bf16.msra.mxu0 0
    %576 = vmatprep.subr.bf16.mxu0 0
    %577 = vmatpush2.bf16.msra.mxu0 0
    %578 = vmatprep.subr.bf16.mxu0 0
    %579 = vmatpush2.bf16.msra.mxu0 0
    %580 = vmatprep.subr.bf16.mxu0 0
    %581 = vmatpush2.bf16.msra.mxu0 0
    %582 = vmatprep.subr.bf16.mxu0 0
    %583 = vmatpush2.bf16.msra.mxu0 0
    %584 = vmatprep.subr.bf16.mxu0 0
    %585 = vmatpush2.bf16.msra.mxu0 0
    %586 = vmatprep.subr.bf16.mxu0 0
    %587 = vmatpush2.bf16.msra.mxu0 0
    %588 = vmatprep.subr.bf16.mxu0 0
    %589 = vmatpush2.bf16.msra.mxu0 0
    %590 = vmatprep.mubr.bf16.mxu0 0
    %591 = vmatmul.mubr.bf16.gmra.mxu0 %v556
    %v592 = vpop.f32.mrf.mxu0
    %v593 = vadd.f32 0.0, %v592
    %v594 = vpop.f32.mrf.mxu0
    %v595 = vpop.f32.mrf.mxu0
    %v596 = vadd.f32 0.0, %v595
    %v597 = vpop.f32.mrf.mxu0
    %598 = vdwg.mxu0
    %v599 = vadd.f32 %v536, %v593
    %v600 = vadd.f32 %v537, %v596
    %v601 = vld [vmem:[%s6] sm:$0x1]
    %v603 = vlaneseq
    %v604 = vshrl.u32 %v603, 7
    %v605 = vsub.s32 0, %v604
    %v606 = vrot.slane %v601, %v605
    %v608 = vadd.f32 %v599, %v606
    %v609 = vadd.f32 %v600, %v606
    %v610 = vld [vmem:[%s7] sm:$0xff]
    %v611 = vld [vmem:[%s7 + $0x8] sm:$0xff]
    %v613 = vsel %vm174, %v610, 0
    %v616 = vsel %vm174, %v611, 0
    %618 = vmatprep.subr.mxu0 0.0
    %619 = vmatpush1.msra.mxu0 0.0
    %620 = vmatprep.subr.mxu0 0.0
    %621 = vmatpush1.msra.mxu0 0.0
    %622 = vmatprep.subr.mxu0 0.0
    %623 = vmatpush1.msra.mxu0 0.0
    %624 = vmatprep.subr.mxu0 0.0
    %625 = vmatpush1.msra.mxu0 0.0
    %626 = vmatprep.subr.mxu0 0.0
    %627 = vmatpush1.msra.mxu0 0.0
    %628 = vmatprep.subr.mxu0 0.0
    %629 = vmatpush1.msra.mxu0 0.0
    %630 = vmatprep.subr.mxu0 0.0
    %631 = vmatpush1.msra.mxu0 0.0
    %632 = vmatprep.subr.mxu0 0.0
    %633 = vmatpush1.msra.mxu0 0.0
    %634 = vmatprep.subr.mxu0 0.0
    %635 = vmatpush1.msra.mxu0 0.0
    %636 = vmatprep.subr.mxu0 0.0
    %637 = vmatpush1.msra.mxu0 0.0
    %638 = vmatprep.subr.mxu0 0.0
    %639 = vmatpush1.msra.mxu0 0.0
    %640 = vmatprep.subr.mxu0 0.0
    %641 = vmatpush1.msra.mxu0 0.0
    %642 = vmatprep.subr.mxu0 0.0
    %643 = vmatpush1.msra.mxu0 0.0
    %644 = vmatprep.subr.mxu0 0.0
    %645 = vmatpush1.msra.mxu0 0.0
    %646 = vmatprep.subr.mxu0 0.0
    %647 = vmatpush1.msra.mxu0 %v609
    %648 = vmatprep.subr.mxu0 0.0
    %649 = vmatpush1.msra.mxu0 %v608
    %650 = vmatprep.subr.mxu0 0.0
    %651 = vmatpush2.msra.mxu0 0.0
    %652 = vmatprep.subr.mxu0 0.0
    %653 = vmatpush2.msra.mxu0 0.0
    %654 = vmatprep.subr.mxu0 0.0
    %655 = vmatpush2.msra.mxu0 0.0
    %656 = vmatprep.subr.mxu0 0.0
    %657 = vmatpush2.msra.mxu0 0.0
    %658 = vmatprep.subr.mxu0 0.0
    %659 = vmatpush2.msra.mxu0 0.0
    %660 = vmatprep.subr.mxu0 0.0
    %661 = vmatpush2.msra.mxu0 0.0
    %662 = vmatprep.subr.mxu0 0.0
    %663 = vmatpush2.msra.mxu0 0.0
    %664 = vmatprep.subr.mxu0 0.0
    %665 = vmatpush2.msra.mxu0 0.0
    %666 = vmatprep.subr.mxu0 0.0
    %667 = vmatpush2.msra.mxu0 0.0
    %668 = vmatprep.subr.mxu0 0.0
    %669 = vmatpush2.msra.mxu0 0.0
    %670 = vmatprep.subr.mxu0 0.0
    %671 = vmatpush2.msra.mxu0 0.0
    %672 = vmatprep.subr.mxu0 0.0
    %673 = vmatpush2.msra.mxu0 0.0
    %674 = vmatprep.subr.mxu0 0.0
    %675 = vmatpush2.msra.mxu0 0.0
    %676 = vmatprep.subr.mxu0 0.0
    %677 = vmatpush2.msra.mxu0 0.0
    %678 = vmatprep.subr.mxu0 0.0
    %679 = vmatpush2.msra.mxu0 0.0
    %680 = vmatprep.subr.mxu0 0.0
    %681 = vmatpush2.msra.mxu0 0.0
    %682 = vmatprep.mubr.f32.mxu0 0.0
    %683 = vmatmul.mubr.f32.gmra.mxu0 %v613
    %v684 = vpop.f32.mrf.mxu0
    %v685 = vadd.f32 0.0, %v684
    %v686 = vpop.f32.mrf.mxu0
    %687 = vmatprep.mubr.f32.mxu0 0.0
    %688 = vmatmul.mubr.f32.gmra.mxu0 %v616
    %v689 = vpop.f32.mrf.mxu0
    %v690 = vadd.f32 0.0, %v689
    %v691 = vpop.f32.mrf.mxu0
    %692 = vdwg.mxu0
    %v693 = vsub.f32 %v608, %v685
    %v694 = vsub.f32 %v609, %v690
    %s695 = scalar_lea.vmem %s12, 16
    %696 = vst.msk [vmem:[%s695] sm:$0xff] %vm73, %v693
    %697 = vst.msk [vmem:[%s695 + $0x8] sm:$0xff] %vm73, %v694
    %s698 = scalar_lea.vmem %s13, 16
    %699 = vst.msk [vmem:[%s698] sm:$0xff] %vm73, %v685
    %700 = vst.msk [vmem:[%s698 + $0x8] sm:$0xff] %vm73, %v690
    %v701 = vld [vmem:[%s8] sm:$0xf]
    %v702 = vld [vmem:[%s8 + $0x4] sm:$0xf]
    %v703 = vld [vmem:[%s8 + $0x8] sm:$0xf]
    %v704 = vld [vmem:[%s8 + $0xc] sm:$0xf]
    %v705 = vpack.c.bf16 %v694, %v693
    %v706 = vld [vmem:[%s9] sm:$0x1]
    %v708 = vlaneseq
    %v709 = vshrl.u32 %v708, 7
    %v710 = vsub.s32 0, %v709
    %v711 = vrot.slane %v706, %v710
    %v717 = vunpack.c.l.b16 %v701
    %v718 = vunpack.c.l.b16 %v702
    %v719 = vunpack.c.l.b16 %v703
    %v720 = vunpack.c.l.b16 %v704
    %v721 = vpack.c.b16 %v718, %v717
    %v722 = vpack.c.b16 %v720, %v719
    %v726 = vsel %vm73, %v705, 0
    %728 = vmatprep.subr.bf16.mxu0 0
    %729 = vmatpush1.bf16.msra.mxu0 0
    %730 = vmatprep.subr.bf16.mxu0 0
    %731 = vmatpush1.bf16.msra.mxu0 0
    %732 = vmatprep.subr.bf16.mxu0 0
    %733 = vmatpush1.bf16.msra.mxu0 0
    %734 = vmatprep.subr.bf16.mxu0 0
    %735 = vmatpush1.bf16.msra.mxu0 0
    %736 = vmatprep.subr.bf16.mxu0 0
    %737 = vmatpush1.bf16.msra.mxu0 0
    %738 = vmatprep.subr.bf16.mxu0 0
    %739 = vmatpush1.bf16.msra.mxu0 0
    %740 = vmatprep.subr.bf16.mxu0 0
    %741 = vmatpush1.bf16.msra.mxu0 %v722
    %742 = vmatprep.subr.bf16.mxu0 0
    %743 = vmatpush1.bf16.msra.mxu0 %v721
    %744 = vmatprep.subr.bf16.mxu0 0
    %745 = vmatpush2.bf16.msra.mxu0 0
    %746 = vmatprep.subr.bf16.mxu0 0
    %747 = vmatpush2.bf16.msra.mxu0 0
    %748 = vmatprep.subr.bf16.mxu0 0
    %749 = vmatpush2.bf16.msra.mxu0 0
    %750 = vmatprep.subr.bf16.mxu0 0
    %751 = vmatpush2.bf16.msra.mxu0 0
    %752 = vmatprep.subr.bf16.mxu0 0
    %753 = vmatpush2.bf16.msra.mxu0 0
    %754 = vmatprep.subr.bf16.mxu0 0
    %755 = vmatpush2.bf16.msra.mxu0 0
    %756 = vmatprep.subr.bf16.mxu0 0
    %757 = vmatpush2.bf16.msra.mxu0 0
    %758 = vmatprep.subr.bf16.mxu0 0
    %759 = vmatpush2.bf16.msra.mxu0 0
    %760 = vmatprep.mubr.bf16.mxu0 0
    %761 = vmatmul.mubr.bf16.gmra.mxu0 %v726
    %v762 = vpop.f32.mrf.mxu0
    %v763 = vadd.f32 %v711, %v762
    %v764 = vpop.f32.mrf.mxu0
    %v765 = vpop.f32.mrf.mxu0
    %v766 = vadd.f32 %v711, %v765
    %v767 = vpop.f32.mrf.mxu0
    %768 = vdwg.mxu0
    %s769 = scalar_lea.vmem %s4, 16
    %v770 = vld [vmem:[%s769] sm:$0xff]
    %v771 = vld [vmem:[%s769 + $0x8] sm:$0xff]
    %v772 = vld [vmem:[%s10] sm:$0xf]
    %v773 = vld [vmem:[%s10 + $0x4] sm:$0xf]
    %v774 = vld [vmem:[%s10 + $0x8] sm:$0xf]
    %v775 = vld [vmem:[%s10 + $0xc] sm:$0xf]
    %v776 = vpack.c.bf16 %v771, %v770
    %v777 = vld [vmem:[%s11] sm:$0x1]
    %v779 = vlaneseq
    %v780 = vshrl.u32 %v779, 7
    %v781 = vsub.s32 0, %v780
    %v782 = vrot.slane %v777, %v781
    %v788 = vunpack.c.l.b16 %v772
    %v789 = vunpack.c.l.b16 %v773
    %v790 = vunpack.c.l.b16 %v774
    %v791 = vunpack.c.l.b16 %v775
    %v792 = vpack.c.b16 %v789, %v788
    %v793 = vpack.c.b16 %v791, %v790
    %v797 = vsel %vm73, %v776, 0
    %799 = vmatprep.subr.bf16.mxu0 0
    %800 = vmatpush1.bf16.msra.mxu0 0
    %801 = vmatprep.subr.bf16.mxu0 0
    %802 = vmatpush1.bf16.msra.mxu0 0
    %803 = vmatprep.subr.bf16.mxu0 0
    %804 = vmatpush1.bf16.msra.mxu0 0
    %805 = vmatprep.subr.bf16.mxu0 0
    %806 = vmatpush1.bf16.msra.mxu0 0
    %807 = vmatprep.subr.bf16.mxu0 0
    %808 = vmatpush1.bf16.msra.mxu0 0
    %809 = vmatprep.subr.bf16.mxu0 0
    %810 = vmatpush1.bf16.msra.mxu0 0
    %811 = vmatprep.subr.bf16.mxu0 0
    %812 = vmatpush1.bf16.msra.mxu0 %v793
    %813 = vmatprep.subr.bf16.mxu0 0
    %814 = vmatpush1.bf16.msra.mxu0 %v792
    %815 = vmatprep.subr.bf16.mxu0 0
    %816 = vmatpush2.bf16.msra.mxu0 0
    %817 = vmatprep.subr.bf16.mxu0 0
    %818 = vmatpush2.bf16.msra.mxu0 0
    %819 = vmatprep.subr.bf16.mxu0 0
    %820 = vmatpush2.bf16.msra.mxu0 0
    %821 = vmatprep.subr.bf16.mxu0 0
    %822 = vmatpush2.bf16.msra.mxu0 0
    %823 = vmatprep.subr.bf16.mxu0 0
    %824 = vmatpush2.bf16.msra.mxu0 0
    %825 = vmatprep.subr.bf16.mxu0 0
    %826 = vmatpush2.bf16.msra.mxu0 0
    %827 = vmatprep.subr.bf16.mxu0 0
    %828 = vmatpush2.bf16.msra.mxu0 0
    %829 = vmatprep.subr.bf16.mxu0 0
    %830 = vmatpush2.bf16.msra.mxu0 0
    %831 = vmatprep.mubr.bf16.mxu0 0
    %832 = vmatmul.mubr.bf16.gmra.mxu0 %v797
    %v833 = vpop.f32.mrf.mxu0
    %v834 = vadd.f32 %v782, %v833
    %v835 = vpop.f32.mrf.mxu0
    %v836 = vpop.f32.mrf.mxu0
    %v837 = vadd.f32 %v782, %v836
    %v838 = vpop.f32.mrf.mxu0
    %839 = vdwg.mxu0
    %842 = vrot.lane.b32.xlu0 %v834, 96
    %v843 = vpop.permute.xlu0 %842
    %844 = vrot.lane.b32.xlu0 %v837, 96
    %v845 = vpop.permute.xlu0 %844
    %s848 = scalar_lea.vmem %s14, 16
    %849 = vst.msk [vmem:[%s848] sm:$0xff] %vm73, %v843
    %850 = vst.msk [vmem:[%s848 + $0x8] sm:$0xff] %vm73, %v845
    %v851 = vpack.c.bf16 %v766, %v763
    %v852 = vpack.c.bf16 %v837, %v834
    %v854 = vsel %vm73, %v851, 0
    %v857 = vsel %vm73, %v852, 0
    %859 = vmatprep.subr.bf16.mxu0 0
    %860 = vmatpush1.bf16.xpose.msra.mxu0 0
    %861 = vmatprep.subr.bf16.mxu0 0
    %862 = vmatpush1.bf16.xpose.msra.mxu0 0
    %863 = vmatprep.subr.bf16.mxu0 0
    %864 = vmatpush1.bf16.xpose.msra.mxu0 0
    %865 = vmatprep.subr.bf16.mxu0 0
    %866 = vmatpush1.bf16.xpose.msra.mxu0 0
    %867 = vmatprep.subr.bf16.mxu0 0
    %868 = vmatpush1.bf16.xpose.msra.mxu0 0
    %869 = vmatprep.subr.bf16.mxu0 0
    %870 = vmatpush1.bf16.xpose.msra.mxu0 0
    %871 = vmatprep.subr.bf16.mxu0 0
    %872 = vmatpush1.bf16.xpose.msra.mxu0 0
    %873 = vmatprep.subr.bf16.mxu0 0
    %874 = vmatpush1.bf16.xpose.msra.mxu0 %v857
    %875 = vmatprep.subr.bf16.mxu0 0
    %876 = vmatpush2.bf16.xpose.msra.mxu0 0
    %877 = vmatprep.subr.bf16.mxu0 0
    %878 = vmatpush2.bf16.xpose.msra.mxu0 0
    %879 = vmatprep.subr.bf16.mxu0 0
    %880 = vmatpush2.bf16.xpose.msra.mxu0 0
    %881 = vmatprep.subr.bf16.mxu0 0
    %882 = vmatpush2.bf16.xpose.msra.mxu0 0
    %883 = vmatprep.subr.bf16.mxu0 0
    %884 = vmatpush2.bf16.xpose.msra.mxu0 0
    %885 = vmatprep.subr.bf16.mxu0 0
    %886 = vmatpush2.bf16.xpose.msra.mxu0 0
    %887 = vmatprep.subr.bf16.mxu0 0
    %888 = vmatpush2.bf16.xpose.msra.mxu0 0
    %889 = vmatprep.subr.bf16.mxu0 0
    %890 = vmatpush2.bf16.xpose.msra.mxu0 0
    %891 = vmatprep.mubr.bf16.mxu0 0
    %892 = vmatmul.mubr.bf16.gmra.mxu0 %v854
    %v893 = vpop.f32.mrf.mxu0
    %v894 = vadd.f32 0.0, %v893
    %v895 = vpop.f32.mrf.mxu0
    %v896 = vpop.f32.mrf.mxu0
    %v897 = vadd.f32 0.0, %v896
    %v898 = vpop.f32.mrf.mxu0
    %899 = vdwg.mxu0
    %v900 = vrot.slane %v894, 1
    %v901 = vrot.slane %v897, 1
    %v902 = vsel %vm465, %v900, %v901
    %v903 = vsel %vm465, %v901, %v900
    %v904 = vsel %vm469, %v902, %v894
    %v905 = vsel %vm469, %v903, %v897
    %v906 = vrot.slane %v904, 2
    %v907 = vrot.slane %v905, 2
    %v908 = vsel %vm474, %v906, %v907
    %v909 = vsel %vm474, %v907, %v906
    %v910 = vsel %vm479, %v908, %v904
    %v911 = vsel %vm479, %v909, %v905
    %v912 = vrot.slane %v910, 4
    %v913 = vrot.slane %v911, 4
    %v914 = vsel %vm484, %v912, %v913
    %v915 = vsel %vm484, %v913, %v912
    %v916 = vsel %vm489, %v914, %v910
    %v917 = vsel %vm489, %v915, %v911
    %v918 = vsel %vm494, %v917, %v916
    %v919 = vsel %vm494, %v916, %v917
    %v920 = vsel %vm174, %v918, 0.0
    %921 = vadd.xlane.f32.xlu0 %v920
    %v922 = vpop.xlane.xlu0 %921
    %v923 = vsel %vm174, %v919, 0.0
    %924 = vadd.xlane.f32.xlu0 %v923
    %v925 = vpop.xlane.xlu0 %924
    %v926 = vmul.f32 %v922, 0.03125
    %v927 = vmul.f32 %v925, 0.03125
    %s928 = scalar_lea.vmem %s15, 16
    %929 = vst.msk [vmem:[%s928] sm:$0xff] %vm505, %v926
    %930 = vst.msk [vmem:[%s928 + $0x8] sm:$0xff] %vm505, %v927
    // Predicated region
    $region58: #{fwd.12} parent=1 // pred_check
      _
    $region59: #{fwd.12} parent=1 // pred_check_branch
      %932 = sbr.rel (0) target = $region61
    $region60: #{fwd.12} parent=1 // pred_region
      _
    $region61: #{fwd.12} parent=1 // pred_fallthru
      _
    // Predicated region
    $region62: #{fwd.12} parent=1 // pred_check
      _
    $region63: #{fwd.12} parent=1 // pred_check_branch
      %934 = sbr.rel (0) target = $region65
    $region64: #{fwd.12} parent=1 // pred_region
      _
    $region65: #{fwd.12} parent=1 // pred_fallthru
      _
    // Predicated region
    $region66: #{fwd.12} parent=1 // pred_check
      _
    $region67: #{fwd.12} parent=1 // pred_check_branch
      %936 = sbr.rel (0) target = $region69
    $region68: #{fwd.12} parent=1 // pred_region
      _
    $region69: #{fwd.12} parent=1 // pred_fallthru
      _
    // Predicated region
    $region70: #{fwd.12} parent=1 // pred_check
      _
    $region71: #{fwd.12} parent=1 // pred_check_branch
      %938 = sbr.rel (0) target = $region73
    $region72: #{fwd.12} parent=1 // pred_region
      _
    $region73: #{fwd.12} parent=1 // pred_fallthru
      _
    // Predicated region
    $region74: #{fwd.12} parent=1 // pred_check
      _
    $region75: #{fwd.12} parent=1 // pred_check_branch
      %940 = sbr.rel (0) target = $region77
    $region76: #{fwd.12} parent=1 // pred_region
      _
    $region77: #{fwd.12} parent=1 // pred_fallthru
      _
    // Predicated region
    $region78: #{fwd.12} parent=1 // pred_check
      _
    $region79: #{fwd.12} parent=1 // pred_check_branch
      %942 = sbr.rel (0) target = $region81
    $region80: #{fwd.12} parent=1 // pred_region
      _
    $region81: #{fwd.12} parent=1 // pred_fallthru
      _
    // Predicated region
    $region82: #{fwd.12} parent=1 // pred_check
      _
    $region83: #{fwd.12} parent=1 // pred_check_branch
      %944 = sbr.rel (0) target = $region85
    $region84: #{fwd.12} parent=1 // pred_region
      _
    $region85: #{fwd.12} parent=1 // pred_fallthru
      _
    // Predicated region
    $region86: #{fwd.12} parent=1 // pred_check
      _
    $region87: #{fwd.12} parent=1 // pred_check_branch
      %946 = sbr.rel (0) target = $region89
    $region88: #{fwd.12} parent=1 // pred_region
      _
    $region89: #{fwd.12} parent=1 // pred_fallthru
      _
    %947 = vsyncpa [#allocation4], 1
    %948 = vsyncpa [#allocation6], 1

// kernel: fwd.9
$region0: #{fwd.9}
  #allocation0 [shape = 'u32[]', space=smem, size = 0x4, offset = 0x4, fixed_abs, tag = 'smem constant byte address 0x4 - core index']
  #allocation1 [shape = 'u32[144,128]{1,0:T(1,128)}', space=vmem, size = 0x12000, scoped, tag = 'internal scratch']
  #allocation2 [shape = 'f32[32,32]{1,0:T(8,128)}', space=vmem, size = 0x4000, scoped, tag = 'scratch operand']
  %s0 = inlined_call_operand.vmem [shape: s32[2,2], index: 0, kind: input, shape index: {}]
  %s1 = inlined_call_operand.vmem [shape: f32[2,2], index: 1, kind: input, shape index: {}]
  %s2 = inlined_call_operand.vmem [shape: f32[2,16,32], index: 2, kind: input, shape index: {}]
  %s3 = inlined_call_operand.vmem [shape: f32[2,16,32], index: 3, kind: input, shape index: {}]
  %s4 = inlined_call_operand.vmem [shape: bf16[32,32], index: 4, kind: input, shape index: {}]
  %s5 = inlined_call_operand.vmem [shape: f32[1,32], index: 5, kind: input, shape index: {}]
  %s6 = inlined_call_operand.vmem [shape: f32[16,16], index: 6, kind: input, shape index: {}]
  %s7 = inlined_call_operand.vmem [shape: bf16[32,64], index: 7, kind: input, shape index: {}]
  %s8 = inlined_call_operand.vmem [shape: bf16[64,32], index: 8, kind: input, shape index: {}]
  %s9 = inlined_call_operand.vmem [shape: f32[1,32], index: 9, kind: input, shape index: {}]
  %s10 = inlined_call_operand.vmem [shape: f32[1,32], index: 10, kind: input, shape index: {}]
  %s11 = inlined_call_operand.vmem [shape: f32[2,16,32], index: 11, kind: output, shape index: {}]
  %s12 = sld [smem:[#allocation0]]
  $region62: #{fwd.9} parent=0
    _
  %s14 = ssub.s32 1, %s12
  %s15 = scalar_select 0, %s14, %s12
  $region1: #{fwd.9} parent=0
    #allocation3 [shape = 'u8[1024]{0}', space=smem, size = 0x400, scoped, tag = 'input window, operand 0, single buffered']
    #allocation4 [shape = 's32[1]{0}', space=sflag, size = 0x4, scoped, tag = 'scoped memory for fwd.9']
    #allocation5 [shape = 'u8[1024]{0}', space=smem, size = 0x400, scoped, tag = 'input window, operand 1, single buffered']
    #allocation6 [shape = 's32[1]{0}', space=sflag, size = 0x4, scoped, tag = 'scoped memory for fwd.9']
    %16 = vsyncpa [#allocation4], 0
    %17 = vsyncpa [#allocation6], 0
    // Predicated region
    $region2: #{fwd.9} parent=1 // pred_check
      _
    $region3: #{fwd.9} parent=1 // pred_check_branch
      %19 = sbr.rel (0) target = $region5
    $region4: #{fwd.9} parent=1 // pred_region
      %s21 = ssub.s32 32, 32
      %22 = vsyncadd [#allocation4], %s21
      %s24 = sshll.u32 %s0, 4
      %s25 = int_to_ptr.vmem [resolvable:$true] %s24
      %27 = dma.vmem_to_smem %s25, 32, [#allocation3], [#allocation4]
    $region5: #{fwd.9} parent=1 // pred_fallthru
      _
    // Predicated region
    $region6: #{fwd.9} parent=1 // pred_check
      _
    $region7: #{fwd.9} parent=1 // pred_check_branch
      %29 = sbr.rel (0) target = $region9
    $region8: #{fwd.9} parent=1 // pred_region
      %s31 = ssub.s32 32, 32
      %32 = vsyncadd [#allocation6], %s31
      %s34 = sshll.u32 %s1, 4
      %s35 = int_to_ptr.vmem [resolvable:$true] %s34
      %37 = dma.vmem_to_smem %s35, 32, [#allocation5], [#allocation6]
    $region9: #{fwd.9} parent=1 // pred_fallthru
      _
    // Predicated region
    $region10: #{fwd.9} parent=1 // pred_check
      _
    $region11: #{fwd.9} parent=1 // pred_check_branch
      %39 = sbr.rel (0) target = $region13
    $region12: #{fwd.9} parent=1 // pred_region
      _
    $region13: #{fwd.9} parent=1 // pred_fallthru
      _
    // Predicated region
    $region14: #{fwd.9} parent=1 // pred_check
      _
    $region15: #{fwd.9} parent=1 // pred_check_branch
      %41 = sbr.rel (0) target = $region17
    $region16: #{fwd.9} parent=1 // pred_region
      _
    $region17: #{fwd.9} parent=1 // pred_fallthru
      _
    // Predicated region
    $region18: #{fwd.9} parent=1 // pred_check
      _
    $region19: #{fwd.9} parent=1 // pred_check_branch
      %43 = sbr.rel (0) target = $region21
    $region20: #{fwd.9} parent=1 // pred_region
      _
    $region21: #{fwd.9} parent=1 // pred_fallthru
      _
    // Predicated region
    $region22: #{fwd.9} parent=1 // pred_check
      _
    $region23: #{fwd.9} parent=1 // pred_check_branch
      %45 = sbr.rel (0) target = $region25
    $region24: #{fwd.9} parent=1 // pred_region
      _
    $region25: #{fwd.9} parent=1 // pred_fallthru
      _
    // Predicated region
    $region26: #{fwd.9} parent=1 // pred_check
      _
    $region27: #{fwd.9} parent=1 // pred_check_branch
      %47 = sbr.rel (0) target = $region29
    $region28: #{fwd.9} parent=1 // pred_region
      _
    $region29: #{fwd.9} parent=1 // pred_fallthru
      _
    // Predicated region
    $region30: #{fwd.9} parent=1 // pred_check
      _
    $region31: #{fwd.9} parent=1 // pred_check_branch
      %49 = sbr.rel (0) target = $region33
    $region32: #{fwd.9} parent=1 // pred_region
      _
    $region33: #{fwd.9} parent=1 // pred_fallthru
      _
    // Predicated region
    $region34: #{fwd.9} parent=1 // pred_check
      _
    $region35: #{fwd.9} parent=1 // pred_check_branch
      %51 = sbr.rel (0) target = $region37
    $region36: #{fwd.9} parent=1 // pred_region
      _
    $region37: #{fwd.9} parent=1 // pred_fallthru
      _
    // Predicated region
    $region38: #{fwd.9} parent=1 // pred_check
      _
    $region39: #{fwd.9} parent=1 // pred_check_branch
      %53 = sbr.rel (0) target = $region41
    $region40: #{fwd.9} parent=1 // pred_region
      _
    $region41: #{fwd.9} parent=1 // pred_fallthru
      _
    // Predicated region
    $region42: #{fwd.9} parent=1 // pred_check
      _
    $region43: #{fwd.9} parent=1 // pred_check_branch
      %55 = sbr.rel (0) target = $region45
    $region44: #{fwd.9} parent=1 // pred_region
      _
    $region45: #{fwd.9} parent=1 // pred_fallthru
      _
    // Predicated region
    $region46: #{fwd.9} parent=1 // pred_check
      _
    $region47: #{fwd.9} parent=1 // pred_check_branch
      %57 = sbr.rel (0) target = $region49
    $region48: #{fwd.9} parent=1 // pred_region
      %58 = dma.done [#allocation4], 32
    $region49: #{fwd.9} parent=1 // pred_fallthru
      _
    // Predicated region
    $region50: #{fwd.9} parent=1 // pred_check
      _
    $region51: #{fwd.9} parent=1 // pred_check_branch
      %60 = sbr.rel (0) target = $region53
    $region52: #{fwd.9} parent=1 // pred_region
      %61 = dma.done [#allocation6], 32
    $region53: #{fwd.9} parent=1 // pred_fallthru
      _
    %62 = sfence
    %v64 = vld [vmem:[%s2] sm:$0xff]
    %v65 = vld [vmem:[%s2 + $0x8] sm:$0xff]
    %vm66 = vcmask 261120
    %67 = vst.msk [vmem:[#allocation2] sm:$0xff] %vm66, %v64
    %68 = vst.msk [vmem:[#allocation2 + $0x8] sm:$0xff] %vm66, %v65
    %69 = vst.msk [vmem:[#allocation2 + $0x10] sm:$0xff] %vm66, %v64
    %70 = vst.msk [vmem:[#allocation2 + $0x18] sm:$0xff] %vm66, %v65
    %s71 = sld [smem:[#allocation5]]
    %s72 = sld [smem:[#allocation3]]
    %s73 = scalar_lea.vmem [#allocation2], %s72
    %v74 = vld [vmem:[%s73] sm:$0xff]
    %v75 = vld [vmem:[%s73 + $0x8] sm:$0xff]
    %v76 = vstv %s71
    %v77 = vmul.f32 %v76, %v74
    %v78 = vmul.f32 %v76, %v75
    %v79 = vadd.f32 %v77, 0.0
    %v80 = vadd.f32 %v78, 0.0
    %s81 = sld [smem:[#allocation5 + $0x1]]
    %s82 = sld [smem:[#allocation3 + $0x1]]
    %s83 = scalar_lea.vmem [#allocation2], %s82
    %v84 = vld [vmem:[%s83] sm:$0xff]
    %v85 = vld [vmem:[%s83 + $0x8] sm:$0xff]
    %v86 = vstv %s81
    %v87 = vmul.f32 %v86, %v84
    %v88 = vmul.f32 %v86, %v85
    %v89 = vadd.f32 %v79, %v87
    %v90 = vadd.f32 %v80, %v88
    %v91 = vld [vmem:[%s3] sm:$0xff]
    %v92 = vld [vmem:[%s3 + $0x8] sm:$0xff]
    %v93 = vld [vmem:[%s4] sm:$0xf]
    %v94 = vld [vmem:[%s4 + $0x4] sm:$0xf]
    %v95 = vld [vmem:[%s4 + $0x8] sm:$0xf]
    %v96 = vld [vmem:[%s4 + $0xc] sm:$0xf]
    %v97 = vpack.c.bf16 %v90, %v89
    %v102 = vunpack.c.l.b16 %v93
    %v103 = vunpack.c.l.b16 %v94
    %v104 = vunpack.c.l.b16 %v95
    %v105 = vunpack.c.l.b16 %v96
    %v106 = vpack.c.b16 %v103, %v102
    %v107 = vpack.c.b16 %v105, %v104
    %v111 = vsel %vm66, %v97, 0
    %113 = vmatprep.subr.bf16.mxu0 0
    %114 = vmatpush1.bf16.msra.mxu0 0
    %115 = vmatprep.subr.bf16.mxu0 0
    %116 = vmatpush1.bf16.msra.mxu0 0
    %117 = vmatprep.subr.bf16.mxu0 0
    %118 = vmatpush1.bf16.msra.mxu0 0
    %119 = vmatprep.subr.bf16.mxu0 0
    %120 = vmatpush1.bf16.msra.mxu0 0
    %121 = vmatprep.subr.bf16.mxu0 0
    %122 = vmatpush1.bf16.msra.mxu0 0
    %123 = vmatprep.subr.bf16.mxu0 0
    %124 = vmatpush1.bf16.msra.mxu0 0
    %125 = vmatprep.subr.bf16.mxu0 0
    %126 = vmatpush1.bf16.msra.mxu0 %v107
    %127 = vmatprep.subr.bf16.mxu0 0
    %128 = vmatpush1.bf16.msra.mxu0 %v106
    %129 = vmatprep.subr.bf16.mxu0 0
    %130 = vmatpush2.bf16.msra.mxu0 0
    %131 = vmatprep.subr.bf16.mxu0 0
    %132 = vmatpush2.bf16.msra.mxu0 0
    %133 = vmatprep.subr.bf16.mxu0 0
    %134 = vmatpush2.bf16.msra.mxu0 0
    %135 = vmatprep.subr.bf16.mxu0 0
    %136 = vmatpush2.bf16.msra.mxu0 0
    %137 = vmatprep.subr.bf16.mxu0 0
    %138 = vmatpush2.bf16.msra.mxu0 0
    %139 = vmatprep.subr.bf16.mxu0 0
    %140 = vmatpush2.bf16.msra.mxu0 0
    %141 = vmatprep.subr.bf16.mxu0 0
    %142 = vmatpush2.bf16.msra.mxu0 0
    %143 = vmatprep.subr.bf16.mxu0 0
    %144 = vmatpush2.bf16.msra.mxu0 0
    %145 = vmatprep.mubr.bf16.mxu0 0
    %146 = vmatmul.mubr.bf16.gmra.mxu0 %v111
    %v147 = vpop.f32.mrf.mxu0
    %v148 = vadd.f32 0.0, %v147
    %v149 = vpop.f32.mrf.mxu0
    %v150 = vpop.f32.mrf.mxu0
    %v151 = vadd.f32 0.0, %v150
    %v152 = vpop.f32.mrf.mxu0
    %153 = vdwg.mxu0
    %v154 = vadd.f32 %v91, %v148
    %v155 = vadd.f32 %v92, %v151
    %v156 = vld [vmem:[%s5] sm:$0x1]
    %v158 = vlaneseq
    %v159 = vshrl.u32 %v158, 7
    %v160 = vsub.s32 0, %v159
    %v161 = vrot.slane %v156, %v160
    %v163 = vadd.f32 %v154, %v161
    %v164 = vadd.f32 %v155, %v161
    %v165 = vld [vmem:[%s6] sm:$0xff]
    %v166 = vld [vmem:[%s6 + $0x8] sm:$0xff]
    %vm167 = vcmask 130048
    %v169 = vsel %vm167, %v165, 0
    %v172 = vsel %vm167, %v166, 0
    %174 = vmatprep.subr.mxu0 0.0
    %175 = vmatpush1.msra.mxu0 0.0
    %176 = vmatprep.subr.mxu0 0.0
    %177 = vmatpush1.msra.mxu0 0.0
    %178 = vmatprep.subr.mxu0 0.0
    %179 = vmatpush1.msra.mxu0 0.0
    %180 = vmatprep.subr.mxu0 0.0
    %181 = vmatpush1.msra.mxu0 0.0
    %182 = vmatprep.subr.mxu0 0.0
    %183 = vmatpush1.msra.mxu0 0.0
    %184 = vmatprep.subr.mxu0 0.0
    %185 = vmatpush1.msra.mxu0 0.0
    %186 = vmatprep.subr.mxu0 0.0
    %187 = vmatpush1.msra.mxu0 0.0
    %188 = vmatprep.subr.mxu0 0.0
    %189 = vmatpush1.msra.mxu0 0.0
    %190 = vmatprep.subr.mxu0 0.0
    %191 = vmatpush1.msra.mxu0 0.0
    %192 = vmatprep.subr.mxu0 0.0
    %193 = vmatpush1.msra.mxu0 0.0
    %194 = vmatprep.subr.mxu0 0.0
    %195 = vmatpush1.msra.mxu0 0.0
    %196 = vmatprep.subr.mxu0 0.0
    %197 = vmatpush1.msra.mxu0 0.0
    %198 = vmatprep.subr.mxu0 0.0
    %199 = vmatpush1.msra.mxu0 0.0
    %200 = vmatprep.subr.mxu0 0.0
    %201 = vmatpush1.msra.mxu0 0.0
    %202 = vmatprep.subr.mxu0 0.0
    %203 = vmatpush1.msra.mxu0 %v164
    %204 = vmatprep.subr.mxu0 0.0
    %205 = vmatpush1.msra.mxu0 %v163
    %206 = vmatprep.subr.mxu0 0.0
    %207 = vmatpush2.msra.mxu0 0.0
    %208 = vmatprep.subr.mxu0 0.0
    %209 = vmatpush2.msra.mxu0 0.0
    %210 = vmatprep.subr.mxu0 0.0
    %211 = vmatpush2.msra.mxu0 0.0
    %212 = vmatprep.subr.mxu0 0.0
    %213 = vmatpush2.msra.mxu0 0.0
    %214 = vmatprep.subr.mxu0 0.0
    %215 = vmatpush2.msra.mxu0 0.0
    %216 = vmatprep.subr.mxu0 0.0
    %217 = vmatpush2.msra.mxu0 0.0
    %218 = vmatprep.subr.mxu0 0.0
    %219 = vmatpush2.msra.mxu0 0.0
    %220 = vmatprep.subr.mxu0 0.0
    %221 = vmatpush2.msra.mxu0 0.0
    %222 = vmatprep.subr.mxu0 0.0
    %223 = vmatpush2.msra.mxu0 0.0
    %224 = vmatprep.subr.mxu0 0.0
    %225 = vmatpush2.msra.mxu0 0.0
    %226 = vmatprep.subr.mxu0 0.0
    %227 = vmatpush2.msra.mxu0 0.0
    %228 = vmatprep.subr.mxu0 0.0
    %229 = vmatpush2.msra.mxu0 0.0
    %230 = vmatprep.subr.mxu0 0.0
    %231 = vmatpush2.msra.mxu0 0.0
    %232 = vmatprep.subr.mxu0 0.0
    %233 = vmatpush2.msra.mxu0 0.0
    %234 = vmatprep.subr.mxu0 0.0
    %235 = vmatpush2.msra.mxu0 0.0
    %236 = vmatprep.subr.mxu0 0.0
    %237 = vmatpush2.msra.mxu0 0.0
    %238 = vmatprep.mubr.f32.mxu0 0.0
    %239 = vmatmul.mubr.f32.gmra.mxu0 %v169
    %v240 = vpop.f32.mrf.mxu0
    %v241 = vadd.f32 0.0, %v240
    %v242 = vpop.f32.mrf.mxu0
    %243 = vmatprep.mubr.f32.mxu0 0.0
    %244 = vmatmul.mubr.f32.gmra.mxu0 %v172
    %v245 = vpop.f32.mrf.mxu0
    %v246 = vadd.f32 0.0, %v245
    %v247 = vpop.f32.mrf.mxu0
    %248 = vdwg.mxu0
    %v249 = vsub.f32 %v163, %v241
    %v250 = vsub.f32 %v164, %v246
    %v251 = vld [vmem:[%s7] sm:$0xf]
    %v252 = vld [vmem:[%s7 + $0x4] sm:$0xf]
    %v253 = vld [vmem:[%s7 + $0x8] sm:$0xf]
    %v254 = vld [vmem:[%s7 + $0xc] sm:$0xf]
    %v255 = vpack.c.bf16 %v250, %v249
    %v260 = vunpack.c.l.b16 %v251
    %v261 = vunpack.c.l.b16 %v252
    %v262 = vunpack.c.l.b16 %v253
    %v263 = vunpack.c.l.b16 %v254
    %v264 = vpack.c.b16 %v261, %v260
    %v265 = vpack.c.b16 %v263, %v262
    %v269 = vsel %vm66, %v255, 0
    %271 = vmatprep.subr.bf16.mxu0 0
    %272 = vmatpush1.bf16.msra.mxu0 0
    %273 = vmatprep.subr.bf16.mxu0 0
    %274 = vmatpush1.bf16.msra.mxu0 0
    %275 = vmatprep.subr.bf16.mxu0 0
    %276 = vmatpush1.bf16.msra.mxu0 0
    %277 = vmatprep.subr.bf16.mxu0 0
    %278 = vmatpush1.bf16.msra.mxu0 0
    %279 = vmatprep.subr.bf16.mxu0 0
    %280 = vmatpush1.bf16.msra.mxu0 0
    %281 = vmatprep.subr.bf16.mxu0 0
    %282 = vmatpush1.bf16.msra.mxu0 0
    %283 = vmatprep.subr.bf16.mxu0 0
    %284 = vmatpush1.bf16.msra.mxu0 %v265
    %285 = vmatprep.subr.bf16.mxu0 0
    %286 = vmatpush1.bf16.msra.mxu0 %v264
    %287 = vmatprep.subr.bf16.mxu0 0
    %288 = vmatpush2.bf16.msra.mxu0 0
    %289 = vmatprep.subr.bf16.mxu0 0
    %290 = vmatpush2.bf16.msra.mxu0 0
    %291 = vmatprep.subr.bf16.mxu0 0
    %292 = vmatpush2.bf16.msra.mxu0 0
    %293 = vmatprep.subr.bf16.mxu0 0
    %294 = vmatpush2.bf16.msra.mxu0 0
    %295 = vmatprep.subr.bf16.mxu0 0
    %296 = vmatpush2.bf16.msra.mxu0 0
    %297 = vmatprep.subr.bf16.mxu0 0
    %298 = vmatpush2.bf16.msra.mxu0 0
    %299 = vmatprep.subr.bf16.mxu0 0
    %300 = vmatpush2.bf16.msra.mxu0 0
    %301 = vmatprep.subr.bf16.mxu0 0
    %302 = vmatpush2.bf16.msra.mxu0 0
    %303 = vmatprep.mubr.bf16.mxu0 0
    %304 = vmatmul.mubr.bf16.gmra.mxu0 %v269
    %v305 = vpop.f32.mrf.mxu0
    %v306 = vadd.f32 0.0, %v305
    %v307 = vpop.f32.mrf.mxu0
    %v308 = vpop.f32.mrf.mxu0
    %v309 = vadd.f32 0.0, %v308
    %v310 = vpop.f32.mrf.mxu0
    %311 = vdwg.mxu0
    %v312 = vmul.f32 %v306, 0.5
    %v313 = vmul.f32 %v309, 0.5
    %v314 = vmul.f32 %v306, 0.70710677
    %v315 = vmul.f32 %v309, 0.70710677
    %vm316 = vcmp.ge.f32.partialorder %v314, 0.0
    %vm317 = vcmp.ge.f32.partialorder %v315, 0.0
    %v318 = vsel %vm316, 1.0, -1.0
    %v319 = vsel %vm317, 1.0, -1.0
    %v320 = vand.u32 2147483647, %v314
    %v321 = vand.u32 2147483647, %v315
    %v322 = vmul.f32 %v320, 0.3275911
    %v323 = vmul.f32 %v321, 0.3275911
    %v324 = vadd.f32 %v322, 1.0
    %v325 = vadd.f32 %v323, 1.0
    %v326 = vrcp.pop %v324
    %v327 = vmul.f32 1.0, %v326
    %v328 = vrcp.pop %v325
    %v329 = vmul.f32 1.0, %v328
    %v330 = vmul.f32 %v327, 1.0614054
    %v331 = vmul.f32 %v329, 1.0614054
    %v332 = vadd.f32 %v330, -1.4531521
    %v333 = vadd.f32 %v331, -1.4531521
    %v334 = vmul.f32 %v332, %v327
    %v335 = vmul.f32 %v333, %v329
    %v336 = vadd.f32 %v334, 1.4214138
    %v337 = vadd.f32 %v335, 1.4214138
    %v338 = vmul.f32 %v336, %v327
    %v339 = vmul.f32 %v337, %v329
    %v340 = vadd.f32 %v338, -0.28449672
    %v341 = vadd.f32 %v339, -0.28449672
    %v342 = vmul.f32 %v340, %v327
    %v343 = vmul.f32 %v341, %v329
    %v344 = vadd.f32 %v342, 0.2548296
    %v345 = vadd.f32 %v343, 0.2548296
    %v346 = vmul.f32 %v344, %v327
    %v347 = vmul.f32 %v345, %v329
    %v348 = vsub.f32 0.0, %v320
    %v349 = vsub.f32 0.0, %v321
    %v350 = vmul.f32 %v348, %v320
    %v351 = vmul.f32 %v349, %v321
    %v352 = vmul.f32 %v350, 1.442695
    %v353 = vpow.pop %v352
    %v354 = vmul.f32 %v351, 1.442695
    %v355 = vpow.pop %v354
    %v356 = vmul.f32 %v346, %v353
    %v357 = vmul.f32 %v347, %v355
    %v358 = vsub.f32 1.0, %v356
    %v359 = vsub.f32 1.0, %v357
    %v360 = vmul.f32 %v318, %v358
    %v361 = vmul.f32 %v319, %v359
    %v362 = vadd.f32 %v360, 1.0
    %v363 = vadd.f32 %v361, 1.0
    %v364 = vmul.f32 %v312, %v362
    %v365 = vmul.f32 %v313, %v363
    %v366 = vld [vmem:[%s8] sm:$0xf]
    %v367 = vld [vmem:[%s8 + $0x4] sm:$0xf]
    %v368 = vld [vmem:[%s8 + $0x8] sm:$0xf]
    %v369 = vld [vmem:[%s8 + $0xc] sm:$0xf]
    %v370 = vld [vmem:[%s8 + $0x10] sm:$0xf]
    %v371 = vld [vmem:[%s8 + $0x14] sm:$0xf]
    %v372 = vld [vmem:[%s8 + $0x18] sm:$0xf]
    %v373 = vld [vmem:[%s8 + $0x1c] sm:$0xf]
    %v374 = vpack.c.bf16 %v365, %v364
    %v383 = vunpack.c.l.b16 %v366
    %v384 = vunpack.c.l.b16 %v367
    %v385 = vunpack.c.l.b16 %v368
    %v386 = vunpack.c.l.b16 %v369
    %v387 = vunpack.c.l.b16 %v370
    %v388 = vunpack.c.l.b16 %v371
    %v389 = vunpack.c.l.b16 %v372
    %v390 = vunpack.c.l.b16 %v373
    %v391 = vpack.c.b16 %v384, %v383
    %v392 = vpack.c.b16 %v386, %v385
    %v393 = vpack.c.b16 %v388, %v387
    %v394 = vpack.c.b16 %v390, %v389
    %vm399 = vcmask 523264
    %v401 = vsel %vm399, %v374, 0
    %403 = vmatprep.subr.bf16.mxu0 0
    %404 = vmatpush1.bf16.msra.mxu0 0
    %405 = vmatprep.subr.bf16.mxu0 0
    %406 = vmatpush1.bf16.msra.mxu0 0
    %407 = vmatprep.subr.bf16.mxu0 0
    %408 = vmatpush1.bf16.msra.mxu0 0
    %409 = vmatprep.subr.bf16.mxu0 0
    %410 = vmatpush1.bf16.msra.mxu0 0
    %411 = vmatprep.subr.bf16.mxu0 0
    %412 = vmatpush1.bf16.msra.mxu0 %v394
    %413 = vmatprep.subr.bf16.mxu0 0
    %414 = vmatpush1.bf16.msra.mxu0 %v393
    %415 = vmatprep.subr.bf16.mxu0 0
    %416 = vmatpush1.bf16.msra.mxu0 %v392
    %417 = vmatprep.subr.bf16.mxu0 0
    %418 = vmatpush1.bf16.msra.mxu0 %v391
    %419 = vmatprep.subr.bf16.mxu0 0
    %420 = vmatpush2.bf16.msra.mxu0 0
    %421 = vmatprep.subr.bf16.mxu0 0
    %422 = vmatpush2.bf16.msra.mxu0 0
    %423 = vmatprep.subr.bf16.mxu0 0
    %424 = vmatpush2.bf16.msra.mxu0 0
    %425 = vmatprep.subr.bf16.mxu0 0
    %426 = vmatpush2.bf16.msra.mxu0 0
    %427 = vmatprep.subr.bf16.mxu0 0
    %428 = vmatpush2.bf16.msra.mxu0 0
    %429 = vmatprep.subr.bf16.mxu0 0
    %430 = vmatpush2.bf16.msra.mxu0 0
    %431 = vmatprep.subr.bf16.mxu0 0
    %432 = vmatpush2.bf16.msra.mxu0 0
    %433 = vmatprep.subr.bf16.mxu0 0
    %434 = vmatpush2.bf16.msra.mxu0 0
    %435 = vmatprep.mubr.bf16.mxu0 0
    %436 = vmatmul.mubr.bf16.gmra.mxu0 %v401
    %v437 = vpop.f32.mrf.mxu0
    %v438 = vadd.f32 0.0, %v437
    %v439 = vpop.f32.mrf.mxu0
    %v440 = vpop.f32.mrf.mxu0
    %v441 = vadd.f32 0.0, %v440
    %v442 = vpop.f32.mrf.mxu0
    %443 = vdwg.mxu0
    %v444 = vadd.f32 %v249, %v438
    %v445 = vadd.f32 %v250, %v441
    %446 = vmatprep.subr.mxu0 0.0
    %447 = vmatpush1.msra.mxu0 0.0
    %448 = vmatprep.subr.mxu0 0.0
    %449 = vmatpush1.msra.mxu0 0.0
    %450 = vmatprep.subr.mxu0 0.0
    %451 = vmatpush1.msra.mxu0 0.0
    %452 = vmatprep.subr.mxu0 0.0
    %453 = vmatpush1.msra.mxu0 0.0
    %454 = vmatprep.subr.mxu0 0.0
    %455 = vmatpush1.msra.mxu0 0.0
    %456 = vmatprep.subr.mxu0 0.0
    %457 = vmatpush1.msra.mxu0 0.0
    %458 = vmatprep.subr.mxu0 0.0
    %459 = vmatpush1.msra.mxu0 0.0
    %460 = vmatprep.subr.mxu0 0.0
    %461 = vmatpush1.msra.mxu0 0.0
    %462 = vmatprep.subr.mxu0 0.0
    %463 = vmatpush1.msra.mxu0 0.0
    %464 = vmatprep.subr.mxu0 0.0
    %465 = vmatpush1.msra.mxu0 0.0
    %466 = vmatprep.subr.mxu0 0.0
    %467 = vmatpush1.msra.mxu0 0.0
    %468 = vmatprep.subr.mxu0 0.0
    %469 = vmatpush1.msra.mxu0 0.0
    %470 = vmatprep.subr.mxu0 0.0
    %471 = vmatpush1.msra.mxu0 0.0
    %472 = vmatprep.subr.mxu0 0.0
    %473 = vmatpush1.msra.mxu0 0.0
    %474 = vmatprep.subr.mxu0 0.0
    %475 = vmatpush1.msra.mxu0 %v445
    %476 = vmatprep.subr.mxu0 0.0
    %477 = vmatpush1.msra.mxu0 %v444
    %478 = vmatprep.subr.mxu0 0.0
    %479 = vmatpush2.msra.mxu0 0.0
    %480 = vmatprep.subr.mxu0 0.0
    %481 = vmatpush2.msra.mxu0 0.0
    %482 = vmatprep.subr.mxu0 0.0
    %483 = vmatpush2.msra.mxu0 0.0
    %484 = vmatprep.subr.mxu0 0.0
    %485 = vmatpush2.msra.mxu0 0.0
    %486 = vmatprep.subr.mxu0 0.0
    %487 = vmatpush2.msra.mxu0 0.0
    %488 = vmatprep.subr.mxu0 0.0
    %489 = vmatpush2.msra.mxu0 0.0
    %490 = vmatprep.subr.mxu0 0.0
    %491 = vmatpush2.msra.mxu0 0.0
    %492 = vmatprep.subr.mxu0 0.0
    %493 = vmatpush2.msra.mxu0 0.0
    %494 = vmatprep.subr.mxu0 0.0
    %495 = vmatpush2.msra.mxu0 0.0
    %496 = vmatprep.subr.mxu0 0.0
    %497 = vmatpush2.msra.mxu0 0.0
    %498 = vmatprep.subr.mxu0 0.0
    %499 = vmatpush2.msra.mxu0 0.0
    %500 = vmatprep.subr.mxu0 0.0
    %501 = vmatpush2.msra.mxu0 0.0
    %502 = vmatprep.subr.mxu0 0.0
    %503 = vmatpush2.msra.mxu0 0.0
    %504 = vmatprep.subr.mxu0 0.0
    %505 = vmatpush2.msra.mxu0 0.0
    %506 = vmatprep.subr.mxu0 0.0
    %507 = vmatpush2.msra.mxu0 0.0
    %508 = vmatprep.subr.mxu0 0.0
    %509 = vmatpush2.msra.mxu0 0.0
    %510 = vmatprep.mubr.f32.mxu0 0.0
    %511 = vmatmul.mubr.f32.gmra.mxu0 %v169
    %v512 = vpop.f32.mrf.mxu0
    %v513 = vadd.f32 0.0, %v512
    %v514 = vpop.f32.mrf.mxu0
    %515 = vmatprep.mubr.f32.mxu0 0.0
    %516 = vmatmul.mubr.f32.gmra.mxu0 %v172
    %v517 = vpop.f32.mrf.mxu0
    %v518 = vadd.f32 0.0, %v517
    %v519 = vpop.f32.mrf.mxu0
    %520 = vdwg.mxu0
    %v521 = vsub.f32 %v444, %v513
    %v522 = vsub.f32 %v445, %v518
    %v523 = vld [vmem:[%s9] sm:$0x1]
    %v524 = vld [vmem:[%s10] sm:$0x1]
    %v525 = vsel %vm66, %v521, 0.0
    %526 = vadd.xlane.f32.xlu0 %v525
    %v527 = vpop.xlane.xlu0 %526
    %v528 = vsel %vm66, %v522, 0.0
    %529 = vadd.xlane.f32.xlu0 %v528
    %v530 = vpop.xlane.xlu0 %529
    %v531 = vrcp.pop 32.0
    %v532 = vmul.f32 %v527, %v531
    %v533 = vmul.f32 %v530, %v531
    %v534 = vsub.f32 %v521, %v532
    %v535 = vsub.f32 %v522, %v533
    %v536 = vmul.f32 %v534, %v534
    %v537 = vmul.f32 %v535, %v535
    %v538 = vsel %vm66, %v536, 0.0
    %539 = vadd.xlane.f32.xlu0 %v538
    %v540 = vpop.xlane.xlu0 %539
    %v541 = vsel %vm66, %v537, 0.0
    %542 = vadd.xlane.f32.xlu0 %v541
    %v543 = vpop.xlane.xlu0 %542
    %v544 = vmul.f32 %v540, %v531
    %v545 = vmul.f32 %v543, %v531
    %v546 = vadd.f32 %v544, 1e-05
    %v547 = vadd.f32 %v545, 1e-05
    %v548 = vrsqrt.pop %v546
    %v549 = vrsqrt.pop %v547
    %v550 = vmul.f32 %v534, %v548
    %v551 = vmul.f32 %v535, %v549
    %v553 = vlaneseq
    %v554 = vshrl.u32 %v553, 7
    %v555 = vsub.s32 0, %v554
    %v556 = vrot.slane %v523, %v555
    %v558 = vmul.f32 %v550, %v556
    %v559 = vmul.f32 %v551, %v556
    %v561 = vlaneseq
    %v562 = vshrl.u32 %v561, 7
    %v563 = vsub.s32 0, %v562
    %v564 = vrot.slane %v524, %v563
    %v566 = vadd.f32 %v558, %v564
    %v567 = vadd.f32 %v559, %v564
    %v568 = vsel %vm66, %v566, 0.0
    %v569 = vsel %vm66, %v567, 0.0
    %v570 = vadd.f32 %v568, %v569
    %v571 = vrot.slane %v570, 4
    %v572 = vadd.f32 %v570, %v571
    %v573 = vrot.slane %v572, 2
    %v574 = vadd.f32 %v572, %v573
    %v575 = vrot.slane %v574, 1
    %v576 = vadd.f32 %v574, %v575
    %v577 = vrcp.pop 16.0
    %v578 = vmul.f32 %v576, %v577
    %v579 = vsub.f32 %v566, %v578
    %v580 = vsub.f32 %v567, %v578
    %581 = vst.msk [vmem:[%s11] sm:$0xff] %vm66, %v579
    %582 = vst.msk [vmem:[%s11 + $0x8] sm:$0xff] %vm66, %v580
    %s583 = scalar_lea.vmem %s2, 16
    %v584 = vld [vmem:[%s583] sm:$0xff]
    %v585 = vld [vmem:[%s583 + $0x8] sm:$0xff]
    %586 = vst.msk [vmem:[#allocation2] sm:$0xff] %vm66, %v584
    %587 = vst.msk [vmem:[#allocation2 + $0x8] sm:$0xff] %vm66, %v585
    %588 = vst.msk [vmem:[#allocation2 + $0x10] sm:$0xff] %vm66, %v584
    %589 = vst.msk [vmem:[#allocation2 + $0x18] sm:$0xff] %vm66, %v585
    %s590 = sld [smem:[#allocation5 + $0x80]]
    %s591 = sld [smem:[#allocation3 + $0x80]]
    %s592 = scalar_lea.vmem [#allocation2], %s591
    %v593 = vld [vmem:[%s592] sm:$0xff]
    %v594 = vld [vmem:[%s592 + $0x8] sm:$0xff]
    %v595 = vstv %s590
    %v596 = vmul.f32 %v595, %v593
    %v597 = vmul.f32 %v595, %v594
    %v598 = vadd.f32 %v596, 0.0
    %v599 = vadd.f32 %v597, 0.0
    %s600 = sld [smem:[#allocation5 + $0x81]]
    %s601 = sld [smem:[#allocation3 + $0x81]]
    %s602 = scalar_lea.vmem [#allocation2], %s601
    %v603 = vld [vmem:[%s602] sm:$0xff]
    %v604 = vld [vmem:[%s602 + $0x8] sm:$0xff]
    %v605 = vstv %s600
    %v606 = vmul.f32 %v605, %v603
    %v607 = vmul.f32 %v605, %v604
    %v608 = vadd.f32 %v598, %v606
    %v609 = vadd.f32 %v599, %v607
    %s610 = scalar_lea.vmem %s3, 16
    %v611 = vld [vmem:[%s610] sm:$0xff]
    %v612 = vld [vmem:[%s610 + $0x8] sm:$0xff]
    %v613 = vld [vmem:[%s4] sm:$0xf]
    %v614 = vld [vmem:[%s4 + $0x4] sm:$0xf]
    %v615 = vld [vmem:[%s4 + $0x8] sm:$0xf]
    %v616 = vld [vmem:[%s4 + $0xc] sm:$0xf]
    %v617 = vpack.c.bf16 %v609, %v608
    %v622 = vunpack.c.l.b16 %v613
    %v623 = vunpack.c.l.b16 %v614
    %v624 = vunpack.c.l.b16 %v615
    %v625 = vunpack.c.l.b16 %v616
    %v626 = vpack.c.b16 %v623, %v622
    %v627 = vpack.c.b16 %v625, %v624
    %v631 = vsel %vm66, %v617, 0
    %633 = vmatprep.subr.bf16.mxu0 0
    %634 = vmatpush1.bf16.msra.mxu0 0
    %635 = vmatprep.subr.bf16.mxu0 0
    %636 = vmatpush1.bf16.msra.mxu0 0
    %637 = vmatprep.subr.bf16.mxu0 0
    %638 = vmatpush1.bf16.msra.mxu0 0
    %639 = vmatprep.subr.bf16.mxu0 0
    %640 = vmatpush1.bf16.msra.mxu0 0
    %641 = vmatprep.subr.bf16.mxu0 0
    %642 = vmatpush1.bf16.msra.mxu0 0
    %643 = vmatprep.subr.bf16.mxu0 0
    %644 = vmatpush1.bf16.msra.mxu0 0
    %645 = vmatprep.subr.bf16.mxu0 0
    %646 = vmatpush1.bf16.msra.mxu0 %v627
    %647 = vmatprep.subr.bf16.mxu0 0
    %648 = vmatpush1.bf16.msra.mxu0 %v626
    %649 = vmatprep.subr.bf16.mxu0 0
    %650 = vmatpush2.bf16.msra.mxu0 0
    %651 = vmatprep.subr.bf16.mxu0 0
    %652 = vmatpush2.bf16.msra.mxu0 0
    %653 = vmatprep.subr.bf16.mxu0 0
    %654 = vmatpush2.bf16.msra.mxu0 0
    %655 = vmatprep.subr.bf16.mxu0 0
    %656 = vmatpush2.bf16.msra.mxu0 0
    %657 = vmatprep.subr.bf16.mxu0 0
    %658 = vmatpush2.bf16.msra.mxu0 0
    %659 = vmatprep.subr.bf16.mxu0 0
    %660 = vmatpush2.bf16.msra.mxu0 0
    %661 = vmatprep.subr.bf16.mxu0 0
    %662 = vmatpush2.bf16.msra.mxu0 0
    %663 = vmatprep.subr.bf16.mxu0 0
    %664 = vmatpush2.bf16.msra.mxu0 0
    %665 = vmatprep.mubr.bf16.mxu0 0
    %666 = vmatmul.mubr.bf16.gmra.mxu0 %v631
    %v667 = vpop.f32.mrf.mxu0
    %v668 = vadd.f32 0.0, %v667
    %v669 = vpop.f32.mrf.mxu0
    %v670 = vpop.f32.mrf.mxu0
    %v671 = vadd.f32 0.0, %v670
    %v672 = vpop.f32.mrf.mxu0
    %673 = vdwg.mxu0
    %v674 = vadd.f32 %v611, %v668
    %v675 = vadd.f32 %v612, %v671
    %v676 = vld [vmem:[%s5] sm:$0x1]
    %v678 = vlaneseq
    %v679 = vshrl.u32 %v678, 7
    %v680 = vsub.s32 0, %v679
    %v681 = vrot.slane %v676, %v680
    %v683 = vadd.f32 %v674, %v681
    %v684 = vadd.f32 %v675, %v681
    %v685 = vld [vmem:[%s6] sm:$0xff]
    %v686 = vld [vmem:[%s6 + $0x8] sm:$0xff]
    %v688 = vsel %vm167, %v685, 0
    %v691 = vsel %vm167, %v686, 0
    %693 = vmatprep.subr.mxu0 0.0
    %694 = vmatpush1.msra.mxu0 0.0
    %695 = vmatprep.subr.mxu0 0.0
    %696 = vmatpush1.msra.mxu0 0.0
    %697 = vmatprep.subr.mxu0 0.0
    %698 = vmatpush1.msra.mxu0 0.0
    %699 = vmatprep.subr.mxu0 0.0
    %700 = vmatpush1.msra.mxu0 0.0
    %701 = vmatprep.subr.mxu0 0.0
    %702 = vmatpush1.msra.mxu0 0.0
    %703 = vmatprep.subr.mxu0 0.0
    %704 = vmatpush1.msra.mxu0 0.0
    %705 = vmatprep.subr.mxu0 0.0
    %706 = vmatpush1.msra.mxu0 0.0
    %707 = vmatprep.subr.mxu0 0.0
    %708 = vmatpush1.msra.mxu0 0.0
    %709 = vmatprep.subr.mxu0 0.0
    %710 = vmatpush1.msra.mxu0 0.0
    %711 = vmatprep.subr.mxu0 0.0
    %712 = vmatpush1.msra.mxu0 0.0
    %713 = vmatprep.subr.mxu0 0.0
    %714 = vmatpush1.msra.mxu0 0.0
    %715 = vmatprep.subr.mxu0 0.0
    %716 = vmatpush1.msra.mxu0 0.0
    %717 = vmatprep.subr.mxu0 0.0
    %718 = vmatpush1.msra.mxu0 0.0
    %719 = vmatprep.subr.mxu0 0.0
    %720 = vmatpush1.msra.mxu0 0.0
    %721 = vmatprep.subr.mxu0 0.0
    %722 = vmatpush1.msra.mxu0 %v684
    %723 = vmatprep.subr.mxu0 0.0
    %724 = vmatpush1.msra.mxu0 %v683
    %725 = vmatprep.subr.mxu0 0.0
    %726 = vmatpush2.msra.mxu0 0.0
    %727 = vmatprep.subr.mxu0 0.0
    %728 = vmatpush2.msra.mxu0 0.0
    %729 = vmatprep.subr.mxu0 0.0
    %730 = vmatpush2.msra.mxu0 0.0
    %731 = vmatprep.subr.mxu0 0.0
    %732 = vmatpush2.msra.mxu0 0.0
    %733 = vmatprep.subr.mxu0 0.0
    %734 = vmatpush2.msra.mxu0 0.0
    %735 = vmatprep.subr.mxu0 0.0
    %736 = vmatpush2.msra.mxu0 0.0
    %737 = vmatprep.subr.mxu0 0.0
    %738 = vmatpush2.msra.mxu0 0.0
    %739 = vmatprep.subr.mxu0 0.0
    %740 = vmatpush2.msra.mxu0 0.0
    %741 = vmatprep.subr.mxu0 0.0
    %742 = vmatpush2.msra.mxu0 0.0
    %743 = vmatprep.subr.mxu0 0.0
    %744 = vmatpush2.msra.mxu0 0.0
    %745 = vmatprep.subr.mxu0 0.0
    %746 = vmatpush2.msra.mxu0 0.0
    %747 = vmatprep.subr.mxu0 0.0
    %748 = vmatpush2.msra.mxu0 0.0
    %749 = vmatprep.subr.mxu0 0.0
    %750 = vmatpush2.msra.mxu0 0.0
    %751 = vmatprep.subr.mxu0 0.0
    %752 = vmatpush2.msra.mxu0 0.0
    %753 = vmatprep.subr.mxu0 0.0
    %754 = vmatpush2.msra.mxu0 0.0
    %755 = vmatprep.subr.mxu0 0.0
    %756 = vmatpush2.msra.mxu0 0.0
    %757 = vmatprep.mubr.f32.mxu0 0.0
    %758 = vmatmul.mubr.f32.gmra.mxu0 %v688
    %v759 = vpop.f32.mrf.mxu0
    %v760 = vadd.f32 0.0, %v759
    %v761 = vpop.f32.mrf.mxu0
    %762 = vmatprep.mubr.f32.mxu0 0.0
    %763 = vmatmul.mubr.f32.gmra.mxu0 %v691
    %v764 = vpop.f32.mrf.mxu0
    %v765 = vadd.f32 0.0, %v764
    %v766 = vpop.f32.mrf.mxu0
    %767 = vdwg.mxu0
    %v768 = vsub.f32 %v683, %v760
    %v769 = vsub.f32 %v684, %v765
    %v770 = vld [vmem:[%s7] sm:$0xf]
    %v771 = vld [vmem:[%s7 + $0x4] sm:$0xf]
    %v772 = vld [vmem:[%s7 + $0x8] sm:$0xf]
    %v773 = vld [vmem:[%s7 + $0xc] sm:$0xf]
    %v774 = vpack.c.bf16 %v769, %v768
    %v779 = vunpack.c.l.b16 %v770
    %v780 = vunpack.c.l.b16 %v771
    %v781 = vunpack.c.l.b16 %v772
    %v782 = vunpack.c.l.b16 %v773
    %v783 = vpack.c.b16 %v780, %v779
    %v784 = vpack.c.b16 %v782, %v781
    %v788 = vsel %vm66, %v774, 0
    %790 = vmatprep.subr.bf16.mxu0 0
    %791 = vmatpush1.bf16.msra.mxu0 0
    %792 = vmatprep.subr.bf16.mxu0 0
    %793 = vmatpush1.bf16.msra.mxu0 0
    %794 = vmatprep.subr.bf16.mxu0 0
    %795 = vmatpush1.bf16.msra.mxu0 0
    %796 = vmatprep.subr.bf16.mxu0 0
    %797 = vmatpush1.bf16.msra.mxu0 0
    %798 = vmatprep.subr.bf16.mxu0 0
    %799 = vmatpush1.bf16.msra.mxu0 0
    %800 = vmatprep.subr.bf16.mxu0 0
    %801 = vmatpush1.bf16.msra.mxu0 0
    %802 = vmatprep.subr.bf16.mxu0 0
    %803 = vmatpush1.bf16.msra.mxu0 %v784
    %804 = vmatprep.subr.bf16.mxu0 0
    %805 = vmatpush1.bf16.msra.mxu0 %v783
    %806 = vmatprep.subr.bf16.mxu0 0
    %807 = vmatpush2.bf16.msra.mxu0 0
    %808 = vmatprep.subr.bf16.mxu0 0
    %809 = vmatpush2.bf16.msra.mxu0 0
    %810 = vmatprep.subr.bf16.mxu0 0
    %811 = vmatpush2.bf16.msra.mxu0 0
    %812 = vmatprep.subr.bf16.mxu0 0
    %813 = vmatpush2.bf16.msra.mxu0 0
    %814 = vmatprep.subr.bf16.mxu0 0
    %815 = vmatpush2.bf16.msra.mxu0 0
    %816 = vmatprep.subr.bf16.mxu0 0
    %817 = vmatpush2.bf16.msra.mxu0 0
    %818 = vmatprep.subr.bf16.mxu0 0
    %819 = vmatpush2.bf16.msra.mxu0 0
    %820 = vmatprep.subr.bf16.mxu0 0
    %821 = vmatpush2.bf16.msra.mxu0 0
    %822 = vmatprep.mubr.bf16.mxu0 0
    %823 = vmatmul.mubr.bf16.gmra.mxu0 %v788
    %v824 = vpop.f32.mrf.mxu0
    %v825 = vadd.f32 0.0, %v824
    %v826 = vpop.f32.mrf.mxu0
    %v827 = vpop.f32.mrf.mxu0
    %v828 = vadd.f32 0.0, %v827
    %v829 = vpop.f32.mrf.mxu0
    %830 = vdwg.mxu0
    %v831 = vmul.f32 %v825, 0.5
    %v832 = vmul.f32 %v828, 0.5
    %v833 = vmul.f32 %v825, 0.70710677
    %v834 = vmul.f32 %v828, 0.70710677
    %vm835 = vcmp.ge.f32.partialorder %v833, 0.0
    %vm836 = vcmp.ge.f32.partialorder %v834, 0.0
    %v837 = vsel %vm835, 1.0, -1.0
    %v838 = vsel %vm836, 1.0, -1.0
    %v839 = vand.u32 2147483647, %v833
    %v840 = vand.u32 2147483647, %v834
    %v841 = vmul.f32 %v839, 0.3275911
    %v842 = vmul.f32 %v840, 0.3275911
    %v843 = vadd.f32 %v841, 1.0
    %v844 = vadd.f32 %v842, 1.0
    %v845 = vrcp.pop %v843
    %v846 = vmul.f32 1.0, %v845
    %v847 = vrcp.pop %v844
    %v848 = vmul.f32 1.0, %v847
    %v849 = vmul.f32 %v846, 1.0614054
    %v850 = vmul.f32 %v848, 1.0614054
    %v851 = vadd.f32 %v849, -1.4531521
    %v852 = vadd.f32 %v850, -1.4531521
    %v853 = vmul.f32 %v851, %v846
    %v854 = vmul.f32 %v852, %v848
    %v855 = vadd.f32 %v853, 1.4214138
    %v856 = vadd.f32 %v854, 1.4214138
    %v857 = vmul.f32 %v855, %v846
    %v858 = vmul.f32 %v856, %v848
    %v859 = vadd.f32 %v857, -0.28449672
    %v860 = vadd.f32 %v858, -0.28449672
    %v861 = vmul.f32 %v859, %v846
    %v862 = vmul.f32 %v860, %v848
    %v863 = vadd.f32 %v861, 0.2548296
    %v864 = vadd.f32 %v862, 0.2548296
    %v865 = vmul.f32 %v863, %v846
    %v866 = vmul.f32 %v864, %v848
    %v867 = vsub.f32 0.0, %v839
    %v868 = vsub.f32 0.0, %v840
    %v869 = vmul.f32 %v867, %v839
    %v870 = vmul.f32 %v868, %v840
    %v871 = vmul.f32 %v869, 1.442695
    %v872 = vpow.pop %v871
    %v873 = vmul.f32 %v870, 1.442695
    %v874 = vpow.pop %v873
    %v875 = vmul.f32 %v865, %v872
    %v876 = vmul.f32 %v866, %v874
    %v877 = vsub.f32 1.0, %v875
    %v878 = vsub.f32 1.0, %v876
    %v879 = vmul.f32 %v837, %v877
    %v880 = vmul.f32 %v838, %v878
    %v881 = vadd.f32 %v879, 1.0
    %v882 = vadd.f32 %v880, 1.0
    %v883 = vmul.f32 %v831, %v881
    %v884 = vmul.f32 %v832, %v882
    %v885 = vld [vmem:[%s8] sm:$0xf]
    %v886 = vld [vmem:[%s8 + $0x4] sm:$0xf]
    %v887 = vld [vmem:[%s8 + $0x8] sm:$0xf]
    %v888 = vld [vmem:[%s8 + $0xc] sm:$0xf]
    %v889 = vld [vmem:[%s8 + $0x10] sm:$0xf]
    %v890 = vld [vmem:[%s8 + $0x14] sm:$0xf]
    %v891 = vld [vmem:[%s8 + $0x18] sm:$0xf]
    %v892 = vld [vmem:[%s8 + $0x1c] sm:$0xf]
    %v893 = vpack.c.bf16 %v884, %v883
    %v902 = vunpack.c.l.b16 %v885
    %v903 = vunpack.c.l.b16 %v886
    %v904 = vunpack.c.l.b16 %v887
    %v905 = vunpack.c.l.b16 %v888
    %v906 = vunpack.c.l.b16 %v889
    %v907 = vunpack.c.l.b16 %v890
    %v908 = vunpack.c.l.b16 %v891
    %v909 = vunpack.c.l.b16 %v892
    %v910 = vpack.c.b16 %v903, %v902
    %v911 = vpack.c.b16 %v905, %v904
    %v912 = vpack.c.b16 %v907, %v906
    %v913 = vpack.c.b16 %v909, %v908
    %v919 = vsel %vm399, %v893, 0
    %921 = vmatprep.subr.bf16.mxu0 0
    %922 = vmatpush1.bf16.msra.mxu0 0
    %923 = vmatprep.subr.bf16.mxu0 0
    %924 = vmatpush1.bf16.msra.mxu0 0
    %925 = vmatprep.subr.bf16.mxu0 0
    %926 = vmatpush1.bf16.msra.mxu0 0
    %927 = vmatprep.subr.bf16.mxu0 0
    %928 = vmatpush1.bf16.msra.mxu0 0
    %929 = vmatprep.subr.bf16.mxu0 0
    %930 = vmatpush1.bf16.msra.mxu0 %v913
    %931 = vmatprep.subr.bf16.mxu0 0
    %932 = vmatpush1.bf16.msra.mxu0 %v912
    %933 = vmatprep.subr.bf16.mxu0 0
    %934 = vmatpush1.bf16.msra.mxu0 %v911
    %935 = vmatprep.subr.bf16.mxu0 0
    %936 = vmatpush1.bf16.msra.mxu0 %v910
    %937 = vmatprep.subr.bf16.mxu0 0
    %938 = vmatpush2.bf16.msra.mxu0 0
    %939 = vmatprep.subr.bf16.mxu0 0
    %940 = vmatpush2.bf16.msra.mxu0 0
    %941 = vmatprep.subr.bf16.mxu0 0
    %942 = vmatpush2.bf16.msra.mxu0 0
    %943 = vmatprep.subr.bf16.mxu0 0
    %944 = vmatpush2.bf16.msra.mxu0 0
    %945 = vmatprep.subr.bf16.mxu0 0
    %946 = vmatpush2.bf16.msra.mxu0 0
    %947 = vmatprep.subr.bf16.mxu0 0
    %948 = vmatpush2.bf16.msra.mxu0 0
    %949 = vmatprep.subr.bf16.mxu0 0
    %950 = vmatpush2.bf16.msra.mxu0 0
    %951 = vmatprep.subr.bf16.mxu0 0
    %952 = vmatpush2.bf16.msra.mxu0 0
    %953 = vmatprep.mubr.bf16.mxu0 0
    %954 = vmatmul.mubr.bf16.gmra.mxu0 %v919
    %v955 = vpop.f32.mrf.mxu0
    %v956 = vadd.f32 0.0, %v955
    %v957 = vpop.f32.mrf.mxu0
    %v958 = vpop.f32.mrf.mxu0
    %v959 = vadd.f32 0.0, %v958
    %v960 = vpop.f32.mrf.mxu0
    %961 = vdwg.mxu0
    %v962 = vadd.f32 %v768, %v956
    %v963 = vadd.f32 %v769, %v959
    %964 = vmatprep.subr.mxu0 0.0
    %965 = vmatpush1.msra.mxu0 0.0
    %966 = vmatprep.subr.mxu0 0.0
    %967 = vmatpush1.msra.mxu0 0.0
    %968 = vmatprep.subr.mxu0 0.0
    %969 = vmatpush1.msra.mxu0 0.0
    %970 = vmatprep.subr.mxu0 0.0
    %971 = vmatpush1.msra.mxu0 0.0
    %972 = vmatprep.subr.mxu0 0.0
    %973 = vmatpush1.msra.mxu0 0.0
    %974 = vmatprep.subr.mxu0 0.0
    %975 = vmatpush1.msra.mxu0 0.0
    %976 = vmatprep.subr.mxu0 0.0
    %977 = vmatpush1.msra.mxu0 0.0
    %978 = vmatprep.subr.mxu0 0.0
    %979 = vmatpush1.msra.mxu0 0.0
    %980 = vmatprep.subr.mxu0 0.0
    %981 = vmatpush1.msra.mxu0 0.0
    %982 = vmatprep.subr.mxu0 0.0
    %983 = vmatpush1.msra.mxu0 0.0
    %984 = vmatprep.subr.mxu0 0.0
    %985 = vmatpush1.msra.mxu0 0.0
    %986 = vmatprep.subr.mxu0 0.0
    %987 = vmatpush1.msra.mxu0 0.0
    %988 = vmatprep.subr.mxu0 0.0
    %989 = vmatpush1.msra.mxu0 0.0
    %990 = vmatprep.subr.mxu0 0.0
    %991 = vmatpush1.msra.mxu0 0.0
    %992 = vmatprep.subr.mxu0 0.0
    %993 = vmatpush1.msra.mxu0 %v963
    %994 = vmatprep.subr.mxu0 0.0
    %995 = vmatpush1.msra.mxu0 %v962
    %996 = vmatprep.subr.mxu0 0.0
    %997 = vmatpush2.msra.mxu0 0.0
    %998 = vmatprep.subr.mxu0 0.0
    %999 = vmatpush2.msra.mxu0 0.0
    %1000 = vmatprep.subr.mxu0 0.0
    %1001 = vmatpush2.msra.mxu0 0.0
    %1002 = vmatprep.subr.mxu0 0.0
    %1003 = vmatpush2.msra.mxu0 0.0
    %1004 = vmatprep.subr.mxu0 0.0
    %1005 = vmatpush2.msra.mxu0 0.0
    %1006 = vmatprep.subr.mxu0 0.0
    %1007 = vmatpush2.msra.mxu0 0.0
    %1008 = vmatprep.subr.mxu0 0.0
    %1009 = vmatpush2.msra.mxu0 0.0
    %1010 = vmatprep.subr.mxu0 0.0
    %1011 = vmatpush2.msra.mxu0 0.0
    %1012 = vmatprep.subr.mxu0 0.0
    %1013 = vmatpush2.msra.mxu0 0.0
    %1014 = vmatprep.subr.mxu0 0.0
    %1015 = vmatpush2.msra.mxu0 0.0
    %1016 = vmatprep.subr.mxu0 0.0
    %1017 = vmatpush2.msra.mxu0 0.0
    %1018 = vmatprep.subr.mxu0 0.0
    %1019 = vmatpush2.msra.mxu0 0.0
    %1020 = vmatprep.subr.mxu0 0.0
    %1021 = vmatpush2.msra.mxu0 0.0
    %1022 = vmatprep.subr.mxu0 0.0
    %1023 = vmatpush2.msra.mxu0 0.0
    %1024 = vmatprep.subr.mxu0 0.0
    %1025 = vmatpush2.msra.mxu0 0.0
    %1026 = vmatprep.subr.mxu0 0.0
    %1027 = vmatpush2.msra.mxu0 0.0
    %1028 = vmatprep.mubr.f32.mxu0 0.0
    %1029 = vmatmul.mubr.f32.gmra.mxu0 %v688
    %v1030 = vpop.f32.mrf.mxu0
    %v1031 = vadd.f32 0.0, %v1030
    %v1032 = vpop.f32.mrf.mxu0
    %1033 = vmatprep.mubr.f32.mxu0 0.0
    %1034 = vmatmul.mubr.f32.gmra.mxu0 %v691
    %v1035 = vpop.f32.mrf.mxu0
    %v1036 = vadd.f32 0.0, %v1035
    %v1037 = vpop.f32.mrf.mxu0
    %1038 = vdwg.mxu0
    %v1039 = vsub.f32 %v962, %v1031
    %v1040 = vsub.f32 %v963, %v1036
    %v1041 = vld [vmem:[%s9] sm:$0x1]
    %v1042 = vld [vmem:[%s10] sm:$0x1]
    %v1043 = vsel %vm66, %v1039, 0.0
    %1044 = vadd.xlane.f32.xlu0 %v1043
    %v1045 = vpop.xlane.xlu0 %1044
    %v1046 = vsel %vm66, %v1040, 0.0
    %1047 = vadd.xlane.f32.xlu0 %v1046
    %v1048 = vpop.xlane.xlu0 %1047
    %v1049 = vmul.f32 %v1045, %v531
    %v1050 = vmul.f32 %v1048, %v531
    %v1051 = vsub.f32 %v1039, %v1049
    %v1052 = vsub.f32 %v1040, %v1050
    %v1053 = vmul.f32 %v1051, %v1051
    %v1054 = vmul.f32 %v1052, %v1052
    %v1055 = vsel %vm66, %v1053, 0.0
    %1056 = vadd.xlane.f32.xlu0 %v1055
    %v1057 = vpop.xlane.xlu0 %1056
    %v1058 = vsel %vm66, %v1054, 0.0
    %1059 = vadd.xlane.f32.xlu0 %v1058
    %v1060 = vpop.xlane.xlu0 %1059
    %v1061 = vmul.f32 %v1057, %v531
    %v1062 = vmul.f32 %v1060, %v531
    %v1063 = vadd.f32 %v1061, 1e-05
    %v1064 = vadd.f32 %v1062, 1e-05
    %v1065 = vrsqrt.pop %v1063
    %v1066 = vrsqrt.pop %v1064
    %v1067 = vmul.f32 %v1051, %v1065
    %v1068 = vmul.f32 %v1052, %v1066
    %v1070 = vlaneseq
    %v1071 = vshrl.u32 %v1070, 7
    %v1072 = vsub.s32 0, %v1071
    %v1073 = vrot.slane %v1041, %v1072
    %v1075 = vmul.f32 %v1067, %v1073
    %v1076 = vmul.f32 %v1068, %v1073
    %v1078 = vlaneseq
    %v1079 = vshrl.u32 %v1078, 7
    %v1080 = vsub.s32 0, %v1079
    %v1081 = vrot.slane %v1042, %v1080
    %v1083 = vadd.f32 %v1075, %v1081
    %v1084 = vadd.f32 %v1076, %v1081
    %v1085 = vsel %vm66, %v1083, 0.0
    %v1086 = vsel %vm66, %v1084, 0.0
    %v1087 = vadd.f32 %v1085, %v1086
    %v1088 = vrot.slane %v1087, 4
    %v1089 = vadd.f32 %v1087, %v1088
    %v1090 = vrot.slane %v1089, 2
    %v1091 = vadd.f32 %v1089, %v1090
    %v1092 = vrot.slane %v1091, 1
    %v1093 = vadd.f32 %v1091, %v1092
    %v1094 = vmul.f32 %v1093, %v577
    %v1095 = vsub.f32 %v1083, %v1094
    %v1096 = vsub.f32 %v1084, %v1094
    %s1097 = scalar_lea.vmem %s11, 16
    %1098 = vst.msk [vmem:[%s1097] sm:$0xff] %vm66, %v1095
    %1099 = vst.msk [vmem:[%s1097 + $0x8] sm:$0xff] %vm66, %v1096
    // Predicated region
    $region54: #{fwd.9} parent=1 // pred_check
      _
    $region55: #{fwd.9} parent=1 // pred_check_branch
      %1101 = sbr.rel (0) target = $region57
    $region56: #{fwd.9} parent=1 // pred_region
      _
    $region57: #{fwd.9} parent=1 // pred_fallthru
      _
    // Predicated region
    $region58: #{fwd.9} parent=1 // pred_check
      _
    $region59: #{fwd.9} parent=1 // pred_check_branch
      %1103 = sbr.rel (0) target = $region61
    $region60: #{fwd.9} parent=1 // pred_region
      _
    $region61: #{fwd.9} parent=1 // pred_fallthru
      _
    %1104 = vsyncpa [#allocation4], 1
    %1105 = vsyncpa [#allocation6], 1

// kernel: fwd.13
$region0: #{fwd.13}
  #allocation0 [shape = 'u32[]', space=smem, size = 0x4, offset = 0x4, fixed_abs, tag = 'smem constant byte address 0x4 - core index']
  #allocation1 [shape = 'u32[144,128]{1,0:T(1,128)}', space=vmem, size = 0x12000, scoped, tag = 'internal scratch']
  #allocation2 [shape = 'f32[32,32]{1,0:T(8,128)}', space=vmem, size = 0x4000, scoped, tag = 'scratch operand']
  %s0 = inlined_call_operand.vmem [shape: s32[2,2], index: 0, kind: input, shape index: {}]
  %s1 = inlined_call_operand.vmem [shape: f32[2,2], index: 1, kind: input, shape index: {}]
  %s2 = inlined_call_operand.vmem [shape: f32[2,16,32], index: 2, kind: input, shape index: {}]
  %s3 = inlined_call_operand.vmem [shape: f32[2,16,32], index: 3, kind: input, shape index: {}]
  %s4 = inlined_call_operand.vmem [shape: f32[2,16,32], index: 4, kind: input, shape index: {}]
  %s5 = inlined_call_operand.vmem [shape: bf16[32,32], index: 5, kind: input, shape index: {}]
  %s6 = inlined_call_operand.vmem [shape: f32[1,32], index: 6, kind: input, shape index: {}]
  %s7 = inlined_call_operand.vmem [shape: f32[16,16], index: 7, kind: input, shape index: {}]
  %s8 = inlined_call_operand.vmem [shape: bf16[32,64], index: 8, kind: input, shape index: {}]
  %s9 = inlined_call_operand.vmem [shape: bf16[64,32], index: 9, kind: input, shape index: {}]
  %s10 = inlined_call_operand.vmem [shape: bf16[96,4], index: 10, kind: input, shape index: {}]
  %s11 = inlined_call_operand.vmem [shape: f32[2,16,4], index: 11, kind: input, shape index: {}]
  %s12 = inlined_call_operand.vmem [shape: f32[1,32], index: 12, kind: input, shape index: {}]
  %s13 = inlined_call_operand.vmem [shape: f32[1,32], index: 13, kind: input, shape index: {}]
  %s14 = inlined_call_operand.vmem [shape: bf16[32,4], index: 14, kind: input, shape index: {}]
  %s15 = inlined_call_operand.vmem [shape: f32[1,4], index: 15, kind: input, shape index: {}]
  %s16 = inlined_call_operand.vmem [shape: f32[2,16,4], index: 16, kind: output, shape index: {}]
  %s17 = sld [smem:[#allocation0]]
  $region82: #{fwd.13} parent=0
    _
  %s19 = ssub.s32 1, %s17
  %s20 = scalar_select 0, %s19, %s17
  $region1: #{fwd.13} parent=0
    #allocation3 [shape = 'u8[1024]{0}', space=smem, size = 0x400, scoped, tag = 'input window, operand 0, single buffered']
    #allocation4 [shape = 's32[1]{0}', space=sflag, size = 0x4, scoped, tag = 'scoped memory for fwd.13']
    #allocation5 [shape = 'u8[1024]{0}', space=smem, size = 0x400, scoped, tag = 'input window, operand 1, single buffered']
    #allocation6 [shape = 's32[1]{0}', space=sflag, size = 0x4, scoped, tag = 'scoped memory for fwd.13']
    %21 = vsyncpa [#allocation4], 0
    %22 = vsyncpa [#allocation6], 0
    // Predicated region
    $region2: #{fwd.13} parent=1 // pred_check
      _
    $region3: #{fwd.13} parent=1 // pred_check_branch
      %24 = sbr.rel (0) target = $region5
    $region4: #{fwd.13} parent=1 // pred_region
      %s26 = ssub.s32 32, 32
      %27 = vsyncadd [#allocation4], %s26
      %s29 = sshll.u32 %s0, 4
      %s30 = int_to_ptr.vmem [resolvable:$true] %s29
      %32 = dma.vmem_to_smem %s30, 32, [#allocation3], [#allocation4]
    $region5: #{fwd.13} parent=1 // pred_fallthru
      _
    // Predicated region
    $region6: #{fwd.13} parent=1 // pred_check
      _
    $region7: #{fwd.13} parent=1 // pred_check_branch
      %34 = sbr.rel (0) target = $region9
    $region8: #{fwd.13} parent=1 // pred_region
      %s36 = ssub.s32 32, 32
      %37 = vsyncadd [#allocation6], %s36
      %s39 = sshll.u32 %s1, 4
      %s40 = int_to_ptr.vmem [resolvable:$true] %s39
      %42 = dma.vmem_to_smem %s40, 32, [#allocation5], [#allocation6]
    $region9: #{fwd.13} parent=1 // pred_fallthru
      _
    // Predicated region
    $region10: #{fwd.13} parent=1 // pred_check
      _
    $region11: #{fwd.13} parent=1 // pred_check_branch
      %44 = sbr.rel (0) target = $region13
    $region12: #{fwd.13} parent=1 // pred_region
      _
    $region13: #{fwd.13} parent=1 // pred_fallthru
      _
    // Predicated region
    $region14: #{fwd.13} parent=1 // pred_check
      _
    $region15: #{fwd.13} parent=1 // pred_check_branch
      %46 = sbr.rel (0) target = $region17
    $region16: #{fwd.13} parent=1 // pred_region
      _
    $region17: #{fwd.13} parent=1 // pred_fallthru
      _
    // Predicated region
    $region18: #{fwd.13} parent=1 // pred_check
      _
    $region19: #{fwd.13} parent=1 // pred_check_branch
      %48 = sbr.rel (0) target = $region21
    $region20: #{fwd.13} parent=1 // pred_region
      _
    $region21: #{fwd.13} parent=1 // pred_fallthru
      _
    // Predicated region
    $region22: #{fwd.13} parent=1 // pred_check
      _
    $region23: #{fwd.13} parent=1 // pred_check_branch
      %50 = sbr.rel (0) target = $region25
    $region24: #{fwd.13} parent=1 // pred_region
      _
    $region25: #{fwd.13} parent=1 // pred_fallthru
      _
    // Predicated region
    $region26: #{fwd.13} parent=1 // pred_check
      _
    $region27: #{fwd.13} parent=1 // pred_check_branch
      %52 = sbr.rel (0) target = $region29
    $region28: #{fwd.13} parent=1 // pred_region
      _
    $region29: #{fwd.13} parent=1 // pred_fallthru
      _
    // Predicated region
    $region30: #{fwd.13} parent=1 // pred_check
      _
    $region31: #{fwd.13} parent=1 // pred_check_branch
      %54 = sbr.rel (0) target = $region33
    $region32: #{fwd.13} parent=1 // pred_region
      _
    $region33: #{fwd.13} parent=1 // pred_fallthru
      _
    // Predicated region
    $region34: #{fwd.13} parent=1 // pred_check
      _
    $region35: #{fwd.13} parent=1 // pred_check_branch
      %56 = sbr.rel (0) target = $region37
    $region36: #{fwd.13} parent=1 // pred_region
      _
    $region37: #{fwd.13} parent=1 // pred_fallthru
      _
    // Predicated region
    $region38: #{fwd.13} parent=1 // pred_check
      _
    $region39: #{fwd.13} parent=1 // pred_check_branch
      %58 = sbr.rel (0) target = $region41
    $region40: #{fwd.13} parent=1 // pred_region
      _
    $region41: #{fwd.13} parent=1 // pred_fallthru
      _
    // Predicated region
    $region42: #{fwd.13} parent=1 // pred_check
      _
    $region43: #{fwd.13} parent=1 // pred_check_branch
      %60 = sbr.rel (0) target = $region45
    $region44: #{fwd.13} parent=1 // pred_region
      _
    $region45: #{fwd.13} parent=1 // pred_fallthru
      _
    // Predicated region
    $region46: #{fwd.13} parent=1 // pred_check
      _
    $region47: #{fwd.13} parent=1 // pred_check_branch
      %62 = sbr.rel (0) target = $region49
    $region48: #{fwd.13} parent=1 // pred_region
      _
    $region49: #{fwd.13} parent=1 // pred_fallthru
      _
    // Predicated region
    $region50: #{fwd.13} parent=1 // pred_check
      _
    $region51: #{fwd.13} parent=1 // pred_check_branch
      %64 = sbr.rel (0) target = $region53
    $region52: #{fwd.13} parent=1 // pred_region
      _
    $region53: #{fwd.13} parent=1 // pred_fallthru
      _
    // Predicated region
    $region54: #{fwd.13} parent=1 // pred_check
      _
    $region55: #{fwd.13} parent=1 // pred_check_branch
      %66 = sbr.rel (0) target = $region57
    $region56: #{fwd.13} parent=1 // pred_region
      _
    $region57: #{fwd.13} parent=1 // pred_fallthru
      _
    // Predicated region
    $region58: #{fwd.13} parent=1 // pred_check
      _
    $region59: #{fwd.13} parent=1 // pred_check_branch
      %68 = sbr.rel (0) target = $region61
    $region60: #{fwd.13} parent=1 // pred_region
      _
    $region61: #{fwd.13} parent=1 // pred_fallthru
      _
    // Predicated region
    $region62: #{fwd.13} parent=1 // pred_check
      _
    $region63: #{fwd.13} parent=1 // pred_check_branch
      %70 = sbr.rel (0) target = $region65
    $region64: #{fwd.13} parent=1 // pred_region
      _
    $region65: #{fwd.13} parent=1 // pred_fallthru
      _
    // Predicated region
    $region66: #{fwd.13} parent=1 // pred_check
      _
    $region67: #{fwd.13} parent=1 // pred_check_branch
      %72 = sbr.rel (0) target = $region69
    $region68: #{fwd.13} parent=1 // pred_region
      %73 = dma.done [#allocation4], 32
    $region69: #{fwd.13} parent=1 // pred_fallthru
      _
    // Predicated region
    $region70: #{fwd.13} parent=1 // pred_check
      _
    $region71: #{fwd.13} parent=1 // pred_check_branch
      %75 = sbr.rel (0) target = $region73
    $region72: #{fwd.13} parent=1 // pred_region
      %76 = dma.done [#allocation6], 32
    $region73: #{fwd.13} parent=1 // pred_fallthru
      _
    %77 = sfence
    %v79 = vld [vmem:[%s2] sm:$0xff]
    %v80 = vld [vmem:[%s2 + $0x8] sm:$0xff]
    %vm81 = vcmask 261120
    %82 = vst.msk [vmem:[#allocation2] sm:$0xff] %vm81, %v79
    %83 = vst.msk [vmem:[#allocation2 + $0x8] sm:$0xff] %vm81, %v80
    %84 = vst.msk [vmem:[#allocation2 + $0x10] sm:$0xff] %vm81, %v79
    %85 = vst.msk [vmem:[#allocation2 + $0x18] sm:$0xff] %vm81, %v80
    %s86 = sld [smem:[#allocation5]]
    %s87 = sld [smem:[#allocation3]]
    %s88 = scalar_lea.vmem [#allocation2], %s87
    %v89 = vld [vmem:[%s88] sm:$0xff]
    %v90 = vld [vmem:[%s88 + $0x8] sm:$0xff]
    %v91 = vstv %s86
    %v92 = vmul.f32 %v91, %v89
    %v93 = vmul.f32 %v91, %v90
    %v94 = vadd.f32 %v92, 0.0
    %v95 = vadd.f32 %v93, 0.0
    %s96 = sld [smem:[#allocation5 + $0x1]]
    %s97 = sld [smem:[#allocation3 + $0x1]]
    %s98 = scalar_lea.vmem [#allocation2], %s97
    %v99 = vld [vmem:[%s98] sm:$0xff]
    %v100 = vld [vmem:[%s98 + $0x8] sm:$0xff]
    %v101 = vstv %s96
    %v102 = vmul.f32 %v101, %v99
    %v103 = vmul.f32 %v101, %v100
    %v104 = vadd.f32 %v94, %v102
    %v105 = vadd.f32 %v95, %v103
    %v106 = vld [vmem:[%s3] sm:$0xff]
    %v107 = vld [vmem:[%s3 + $0x8] sm:$0xff]
    %v108 = vld [vmem:[%s5] sm:$0xf]
    %v109 = vld [vmem:[%s5 + $0x4] sm:$0xf]
    %v110 = vld [vmem:[%s5 + $0x8] sm:$0xf]
    %v111 = vld [vmem:[%s5 + $0xc] sm:$0xf]
    %v112 = vpack.c.bf16 %v105, %v104
    %v117 = vunpack.c.l.b16 %v108
    %v118 = vunpack.c.l.b16 %v109
    %v119 = vunpack.c.l.b16 %v110
    %v120 = vunpack.c.l.b16 %v111
    %v121 = vpack.c.b16 %v118, %v117
    %v122 = vpack.c.b16 %v120, %v119
    %v126 = vsel %vm81, %v112, 0
    %128 = vmatprep.subr.bf16.mxu0 0
    %129 = vmatpush1.bf16.msra.mxu0 0
    %130 = vmatprep.subr.bf16.mxu0 0
    %131 = vmatpush1.bf16.msra.mxu0 0
    %132 = vmatprep.subr.bf16.mxu0 0
    %133 = vmatpush1.bf16.msra.mxu0 0
    %134 = vmatprep.subr.bf16.mxu0 0
    %135 = vmatpush1.bf16.msra.mxu0 0
    %136 = vmatprep.subr.bf16.mxu0 0
    %137 = vmatpush1.bf16.msra.mxu0 0
    %138 = vmatprep.subr.bf16.mxu0 0
    %139 = vmatpush1.bf16.msra.mxu0 0
    %140 = vmatprep.subr.bf16.mxu0 0
    %141 = vmatpush1.bf16.msra.mxu0 %v122
    %142 = vmatprep.subr.bf16.mxu0 0
    %143 = vmatpush1.bf16.msra.mxu0 %v121
    %144 = vmatprep.subr.bf16.mxu0 0
    %145 = vmatpush2.bf16.msra.mxu0 0
    %146 = vmatprep.subr.bf16.mxu0 0
    %147 = vmatpush2.bf16.msra.mxu0 0
    %148 = vmatprep.subr.bf16.mxu0 0
    %149 = vmatpush2.bf16.msra.mxu0 0
    %150 = vmatprep.subr.bf16.mxu0 0
    %151 = vmatpush2.bf16.msra.mxu0 0
    %152 = vmatprep.subr.bf16.mxu0 0
    %153 = vmatpush2.bf16.msra.mxu0 0
    %154 = vmatprep.subr.bf16.mxu0 0
    %155 = vmatpush2.bf16.msra.mxu0 0
    %156 = vmatprep.subr.bf16.mxu0 0
    %157 = vmatpush2.bf16.msra.mxu0 0
    %158 = vmatprep.subr.bf16.mxu0 0
    %159 = vmatpush2.bf16.msra.mxu0 0
    %160 = vmatprep.mubr.bf16.mxu0 0
    %161 = vmatmul.mubr.bf16.gmra.mxu0 %v126
    %v162 = vpop.f32.mrf.mxu0
    %v163 = vadd.f32 0.0, %v162
    %v164 = vpop.f32.mrf.mxu0
    %v165 = vpop.f32.mrf.mxu0
    %v166 = vadd.f32 0.0, %v165
    %v167 = vpop.f32.mrf.mxu0
    %168 = vdwg.mxu0
    %v169 = vadd.f32 %v106, %v163
    %v170 = vadd.f32 %v107, %v166
    %v171 = vld [vmem:[%s6] sm:$0x1]
    %v173 = vlaneseq
    %v174 = vshrl.u32 %v173, 7
    %v175 = vsub.s32 0, %v174
    %v176 = vrot.slane %v171, %v175
    %v178 = vadd.f32 %v169, %v176
    %v179 = vadd.f32 %v170, %v176
    %v180 = vld [vmem:[%s7] sm:$0xff]
    %v181 = vld [vmem:[%s7 + $0x8] sm:$0xff]
    %vm182 = vcmask 130048
    %v184 = vsel %vm182, %v180, 0
    %v187 = vsel %vm182, %v181, 0
    %189 = vmatprep.subr.mxu0 0.0
    %190 = vmatpush1.msra.mxu0 0.0
    %191 = vmatprep.subr.mxu0 0.0
    %192 = vmatpush1.msra.mxu0 0.0
    %193 = vmatprep.subr.mxu0 0.0
    %194 = vmatpush1.msra.mxu0 0.0
    %195 = vmatprep.subr.mxu0 0.0
    %196 = vmatpush1.msra.mxu0 0.0
    %197 = vmatprep.subr.mxu0 0.0
    %198 = vmatpush1.msra.mxu0 0.0
    %199 = vmatprep.subr.mxu0 0.0
    %200 = vmatpush1.msra.mxu0 0.0
    %201 = vmatprep.subr.mxu0 0.0
    %202 = vmatpush1.msra.mxu0 0.0
    %203 = vmatprep.subr.mxu0 0.0
    %204 = vmatpush1.msra.mxu0 0.0
    %205 = vmatprep.subr.mxu0 0.0
    %206 = vmatpush1.msra.mxu0 0.0
    %207 = vmatprep.subr.mxu0 0.0
    %208 = vmatpush1.msra.mxu0 0.0
    %209 = vmatprep.subr.mxu0 0.0
    %210 = vmatpush1.msra.mxu0 0.0
    %211 = vmatprep.subr.mxu0 0.0
    %212 = vmatpush1.msra.mxu0 0.0
    %213 = vmatprep.subr.mxu0 0.0
    %214 = vmatpush1.msra.mxu0 0.0
    %215 = vmatprep.subr.mxu0 0.0
    %216 = vmatpush1.msra.mxu0 0.0
    %217 = vmatprep.subr.mxu0 0.0
    %218 = vmatpush1.msra.mxu0 %v179
    %219 = vmatprep.subr.mxu0 0.0
    %220 = vmatpush1.msra.mxu0 %v178
    %221 = vmatprep.subr.mxu0 0.0
    %222 = vmatpush2.msra.mxu0 0.0
    %223 = vmatprep.subr.mxu0 0.0
    %224 = vmatpush2.msra.mxu0 0.0
    %225 = vmatprep.subr.mxu0 0.0
    %226 = vmatpush2.msra.mxu0 0.0
    %227 = vmatprep.subr.mxu0 0.0
    %228 = vmatpush2.msra.mxu0 0.0
    %229 = vmatprep.subr.mxu0 0.0
    %230 = vmatpush2.msra.mxu0 0.0
    %231 = vmatprep.subr.mxu0 0.0
    %232 = vmatpush2.msra.mxu0 0.0
    %233 = vmatprep.subr.mxu0 0.0
    %234 = vmatpush2.msra.mxu0 0.0
    %235 = vmatprep.subr.mxu0 0.0
    %236 = vmatpush2.msra.mxu0 0.0
    %237 = vmatprep.subr.mxu0 0.0
    %238 = vmatpush2.msra.mxu0 0.0
    %239 = vmatprep.subr.mxu0 0.0
    %240 = vmatpush2.msra.mxu0 0.0
    %241 = vmatprep.subr.mxu0 0.0
    %242 = vmatpush2.msra.mxu0 0.0
    %243 = vmatprep.subr.mxu0 0.0
    %244 = vmatpush2.msra.mxu0 0.0
    %245 = vmatprep.subr.mxu0 0.0
    %246 = vmatpush2.msra.mxu0 0.0
    %247 = vmatprep.subr.mxu0 0.0
    %248 = vmatpush2.msra.mxu0 0.0
    %249 = vmatprep.subr.mxu0 0.0
    %250 = vmatpush2.msra.mxu0 0.0
    %251 = vmatprep.subr.mxu0 0.0
    %252 = vmatpush2.msra.mxu0 0.0
    %253 = vmatprep.mubr.f32.mxu0 0.0
    %254 = vmatmul.mubr.f32.gmra.mxu0 %v184
    %v255 = vpop.f32.mrf.mxu0
    %v256 = vadd.f32 0.0, %v255
    %v257 = vpop.f32.mrf.mxu0
    %258 = vmatprep.mubr.f32.mxu0 0.0
    %259 = vmatmul.mubr.f32.gmra.mxu0 %v187
    %v260 = vpop.f32.mrf.mxu0
    %v261 = vadd.f32 0.0, %v260
    %v262 = vpop.f32.mrf.mxu0
    %263 = vdwg.mxu0
    %v264 = vsub.f32 %v178, %v256
    %v265 = vsub.f32 %v179, %v261
    %v266 = vld [vmem:[%s8] sm:$0xf]
    %v267 = vld [vmem:[%s8 + $0x4] sm:$0xf]
    %v268 = vld [vmem:[%s8 + $0x8] sm:$0xf]
    %v269 = vld [vmem:[%s8 + $0xc] sm:$0xf]
    %v270 = vpack.c.bf16 %v265, %v264
    %v275 = vunpack.c.l.b16 %v266
    %v276 = vunpack.c.l.b16 %v267
    %v277 = vunpack.c.l.b16 %v268
    %v278 = vunpack.c.l.b16 %v269
    %v279 = vpack.c.b16 %v276, %v275
    %v280 = vpack.c.b16 %v278, %v277
    %v284 = vsel %vm81, %v270, 0
    %286 = vmatprep.subr.bf16.mxu0 0
    %287 = vmatpush1.bf16.msra.mxu0 0
    %288 = vmatprep.subr.bf16.mxu0 0
    %289 = vmatpush1.bf16.msra.mxu0 0
    %290 = vmatprep.subr.bf16.mxu0 0
    %291 = vmatpush1.bf16.msra.mxu0 0
    %292 = vmatprep.subr.bf16.mxu0 0
    %293 = vmatpush1.bf16.msra.mxu0 0
    %294 = vmatprep.subr.bf16.mxu0 0
    %295 = vmatpush1.bf16.msra.mxu0 0
    %296 = vmatprep.subr.bf16.mxu0 0
    %297 = vmatpush1.bf16.msra.mxu0 0
    %298 = vmatprep.subr.bf16.mxu0 0
    %299 = vmatpush1.bf16.msra.mxu0 %v280
    %300 = vmatprep.subr.bf16.mxu0 0
    %301 = vmatpush1.bf16.msra.mxu0 %v279
    %302 = vmatprep.subr.bf16.mxu0 0
    %303 = vmatpush2.bf16.msra.mxu0 0
    %304 = vmatprep.subr.bf16.mxu0 0
    %305 = vmatpush2.bf16.msra.mxu0 0
    %306 = vmatprep.subr.bf16.mxu0 0
    %307 = vmatpush2.bf16.msra.mxu0 0
    %308 = vmatprep.subr.bf16.mxu0 0
    %309 = vmatpush2.bf16.msra.mxu0 0
    %310 = vmatprep.subr.bf16.mxu0 0
    %311 = vmatpush2.bf16.msra.mxu0 0
    %312 = vmatprep.subr.bf16.mxu0 0
    %313 = vmatpush2.bf16.msra.mxu0 0
    %314 = vmatprep.subr.bf16.mxu0 0
    %315 = vmatpush2.bf16.msra.mxu0 0
    %316 = vmatprep.subr.bf16.mxu0 0
    %317 = vmatpush2.bf16.msra.mxu0 0
    %318 = vmatprep.mubr.bf16.mxu0 0
    %319 = vmatmul.mubr.bf16.gmra.mxu0 %v284
    %v320 = vpop.f32.mrf.mxu0
    %v321 = vadd.f32 0.0, %v320
    %v322 = vpop.f32.mrf.mxu0
    %v323 = vpop.f32.mrf.mxu0
    %v324 = vadd.f32 0.0, %v323
    %v325 = vpop.f32.mrf.mxu0
    %326 = vdwg.mxu0
    %v327 = vmul.f32 %v321, 0.5
    %v328 = vmul.f32 %v324, 0.5
    %v329 = vmul.f32 %v321, 0.70710677
    %v330 = vmul.f32 %v324, 0.70710677
    %vm331 = vcmp.ge.f32.partialorder %v329, 0.0
    %vm332 = vcmp.ge.f32.partialorder %v330, 0.0
    %v333 = vsel %vm331, 1.0, -1.0
    %v334 = vsel %vm332, 1.0, -1.0
    %v335 = vand.u32 2147483647, %v329
    %v336 = vand.u32 2147483647, %v330
    %v337 = vmul.f32 %v335, 0.3275911
    %v338 = vmul.f32 %v336, 0.3275911
    %v339 = vadd.f32 %v337, 1.0
    %v340 = vadd.f32 %v338, 1.0
    %v341 = vrcp.pop %v339
    %v342 = vmul.f32 1.0, %v341
    %v343 = vrcp.pop %v340
    %v344 = vmul.f32 1.0, %v343
    %v345 = vmul.f32 %v342, 1.0614054
    %v346 = vmul.f32 %v344, 1.0614054
    %v347 = vadd.f32 %v345, -1.4531521
    %v348 = vadd.f32 %v346, -1.4531521
    %v349 = vmul.f32 %v347, %v342
    %v350 = vmul.f32 %v348, %v344
    %v351 = vadd.f32 %v349, 1.4214138
    %v352 = vadd.f32 %v350, 1.4214138
    %v353 = vmul.f32 %v351, %v342
    %v354 = vmul.f32 %v352, %v344
    %v355 = vadd.f32 %v353, -0.28449672
    %v356 = vadd.f32 %v354, -0.28449672
    %v357 = vmul.f32 %v355, %v342
    %v358 = vmul.f32 %v356, %v344
    %v359 = vadd.f32 %v357, 0.2548296
    %v360 = vadd.f32 %v358, 0.2548296
    %v361 = vmul.f32 %v359, %v342
    %v362 = vmul.f32 %v360, %v344
    %v363 = vsub.f32 0.0, %v335
    %v364 = vsub.f32 0.0, %v336
    %v365 = vmul.f32 %v363, %v335
    %v366 = vmul.f32 %v364, %v336
    %v367 = vmul.f32 %v365, 1.442695
    %v368 = vpow.pop %v367
    %v369 = vmul.f32 %v366, 1.442695
    %v370 = vpow.pop %v369
    %v371 = vmul.f32 %v361, %v368
    %v372 = vmul.f32 %v362, %v370
    %v373 = vsub.f32 1.0, %v371
    %v374 = vsub.f32 1.0, %v372
    %v375 = vmul.f32 %v333, %v373
    %v376 = vmul.f32 %v334, %v374
    %v377 = vadd.f32 %v375, 1.0
    %v378 = vadd.f32 %v376, 1.0
    %v379 = vmul.f32 %v327, %v377
    %v380 = vmul.f32 %v328, %v378
    %v381 = vld [vmem:[%s9] sm:$0xf]
    %v382 = vld [vmem:[%s9 + $0x4] sm:$0xf]
    %v383 = vld [vmem:[%s9 + $0x8] sm:$0xf]
    %v384 = vld [vmem:[%s9 + $0xc] sm:$0xf]
    %v385 = vld [vmem:[%s9 + $0x10] sm:$0xf]
    %v386 = vld [vmem:[%s9 + $0x14] sm:$0xf]
    %v387 = vld [vmem:[%s9 + $0x18] sm:$0xf]
    %v388 = vld [vmem:[%s9 + $0x1c] sm:$0xf]
    %v389 = vpack.c.bf16 %v380, %v379
    %v398 = vunpack.c.l.b16 %v381
    %v399 = vunpack.c.l.b16 %v382
    %v400 = vunpack.c.l.b16 %v383
    %v401 = vunpack.c.l.b16 %v384
    %v402 = vunpack.c.l.b16 %v385
    %v403 = vunpack.c.l.b16 %v386
    %v404 = vunpack.c.l.b16 %v387
    %v405 = vunpack.c.l.b16 %v388
    %v406 = vpack.c.b16 %v399, %v398
    %v407 = vpack.c.b16 %v401, %v400
    %v408 = vpack.c.b16 %v403, %v402
    %v409 = vpack.c.b16 %v405, %v404
    %vm414 = vcmask 523264
    %v416 = vsel %vm414, %v389, 0
    %418 = vmatprep.subr.bf16.mxu0 0
    %419 = vmatpush1.bf16.msra.mxu0 0
    %420 = vmatprep.subr.bf16.mxu0 0
    %421 = vmatpush1.bf16.msra.mxu0 0
    %422 = vmatprep.subr.bf16.mxu0 0
    %423 = vmatpush1.bf16.msra.mxu0 0
    %424 = vmatprep.subr.bf16.mxu0 0
    %425 = vmatpush1.bf16.msra.mxu0 0
    %426 = vmatprep.subr.bf16.mxu0 0
    %427 = vmatpush1.bf16.msra.mxu0 %v409
    %428 = vmatprep.subr.bf16.mxu0 0
    %429 = vmatpush1.bf16.msra.mxu0 %v408
    %430 = vmatprep.subr.bf16.mxu0 0
    %431 = vmatpush1.bf16.msra.mxu0 %v407
    %432 = vmatprep.subr.bf16.mxu0 0
    %433 = vmatpush1.bf16.msra.mxu0 %v406
    %434 = vmatprep.subr.bf16.mxu0 0
    %435 = vmatpush2.bf16.msra.mxu0 0
    %436 = vmatprep.subr.bf16.mxu0 0
    %437 = vmatpush2.bf16.msra.mxu0 0
    %438 = vmatprep.subr.bf16.mxu0 0
    %439 = vmatpush2.bf16.msra.mxu0 0
    %440 = vmatprep.subr.bf16.mxu0 0
    %441 = vmatpush2.bf16.msra.mxu0 0
    %442 = vmatprep.subr.bf16.mxu0 0
    %443 = vmatpush2.bf16.msra.mxu0 0
    %444 = vmatprep.subr.bf16.mxu0 0
    %445 = vmatpush2.bf16.msra.mxu0 0
    %446 = vmatprep.subr.bf16.mxu0 0
    %447 = vmatpush2.bf16.msra.mxu0 0
    %448 = vmatprep.subr.bf16.mxu0 0
    %449 = vmatpush2.bf16.msra.mxu0 0
    %450 = vmatprep.mubr.bf16.mxu0 0
    %451 = vmatmul.mubr.bf16.gmra.mxu0 %v416
    %v452 = vpop.f32.mrf.mxu0
    %v453 = vadd.f32 0.0, %v452
    %v454 = vpop.f32.mrf.mxu0
    %v455 = vpop.f32.mrf.mxu0
    %v456 = vadd.f32 0.0, %v455
    %v457 = vpop.f32.mrf.mxu0
    %458 = vdwg.mxu0
    %v459 = vadd.f32 %v264, %v453
    %v460 = vadd.f32 %v265, %v456
    %461 = vmatprep.subr.mxu0 0.0
    %462 = vmatpush1.msra.mxu0 0.0
    %463 = vmatprep.subr.mxu0 0.0
    %464 = vmatpush1.msra.mxu0 0.0
    %465 = vmatprep.subr.mxu0 0.0
    %466 = vmatpush1.msra.mxu0 0.0
    %467 = vmatprep.subr.mxu0 0.0
    %468 = vmatpush1.msra.mxu0 0.0
    %469 = vmatprep.subr.mxu0 0.0
    %470 = vmatpush1.msra.mxu0 0.0
    %471 = vmatprep.subr.mxu0 0.0
    %472 = vmatpush1.msra.mxu0 0.0
    %473 = vmatprep.subr.mxu0 0.0
    %474 = vmatpush1.msra.mxu0 0.0
    %475 = vmatprep.subr.mxu0 0.0
    %476 = vmatpush1.msra.mxu0 0.0
    %477 = vmatprep.subr.mxu0 0.0
    %478 = vmatpush1.msra.mxu0 0.0
    %479 = vmatprep.subr.mxu0 0.0
    %480 = vmatpush1.msra.mxu0 0.0
    %481 = vmatprep.subr.mxu0 0.0
    %482 = vmatpush1.msra.mxu0 0.0
    %483 = vmatprep.subr.mxu0 0.0
    %484 = vmatpush1.msra.mxu0 0.0
    %485 = vmatprep.subr.mxu0 0.0
    %486 = vmatpush1.msra.mxu0 0.0
    %487 = vmatprep.subr.mxu0 0.0
    %488 = vmatpush1.msra.mxu0 0.0
    %489 = vmatprep.subr.mxu0 0.0
    %490 = vmatpush1.msra.mxu0 %v460
    %491 = vmatprep.subr.mxu0 0.0
    %492 = vmatpush1.msra.mxu0 %v459
    %493 = vmatprep.subr.mxu0 0.0
    %494 = vmatpush2.msra.mxu0 0.0
    %495 = vmatprep.subr.mxu0 0.0
    %496 = vmatpush2.msra.mxu0 0.0
    %497 = vmatprep.subr.mxu0 0.0
    %498 = vmatpush2.msra.mxu0 0.0
    %499 = vmatprep.subr.mxu0 0.0
    %500 = vmatpush2.msra.mxu0 0.0
    %501 = vmatprep.subr.mxu0 0.0
    %502 = vmatpush2.msra.mxu0 0.0
    %503 = vmatprep.subr.mxu0 0.0
    %504 = vmatpush2.msra.mxu0 0.0
    %505 = vmatprep.subr.mxu0 0.0
    %506 = vmatpush2.msra.mxu0 0.0
    %507 = vmatprep.subr.mxu0 0.0
    %508 = vmatpush2.msra.mxu0 0.0
    %509 = vmatprep.subr.mxu0 0.0
    %510 = vmatpush2.msra.mxu0 0.0
    %511 = vmatprep.subr.mxu0 0.0
    %512 = vmatpush2.msra.mxu0 0.0
    %513 = vmatprep.subr.mxu0 0.0
    %514 = vmatpush2.msra.mxu0 0.0
    %515 = vmatprep.subr.mxu0 0.0
    %516 = vmatpush2.msra.mxu0 0.0
    %517 = vmatprep.subr.mxu0 0.0
    %518 = vmatpush2.msra.mxu0 0.0
    %519 = vmatprep.subr.mxu0 0.0
    %520 = vmatpush2.msra.mxu0 0.0
    %521 = vmatprep.subr.mxu0 0.0
    %522 = vmatpush2.msra.mxu0 0.0
    %523 = vmatprep.subr.mxu0 0.0
    %524 = vmatpush2.msra.mxu0 0.0
    %525 = vmatprep.mubr.f32.mxu0 0.0
    %526 = vmatmul.mubr.f32.gmra.mxu0 %v184
    %v527 = vpop.f32.mrf.mxu0
    %v528 = vadd.f32 0.0, %v527
    %v529 = vpop.f32.mrf.mxu0
    %530 = vmatprep.mubr.f32.mxu0 0.0
    %531 = vmatmul.mubr.f32.gmra.mxu0 %v187
    %v532 = vpop.f32.mrf.mxu0
    %v533 = vadd.f32 0.0, %v532
    %v534 = vpop.f32.mrf.mxu0
    %535 = vdwg.mxu0
    %v536 = vsub.f32 %v459, %v528
    %v537 = vsub.f32 %v460, %v533
    %v538 = vld [vmem:[%s4] sm:$0xff]
    %v539 = vld [vmem:[%s4 + $0x8] sm:$0xff]
    %v540 = vadd.f32 %v538, %v256
    %v541 = vadd.f32 %v539, %v261
    %v542 = vadd.f32 %v540, %v528
    %v543 = vadd.f32 %v541, %v533
    %v544 = vrot.slane %v542, 7
    %v545 = vrot.slane %v543, 7
    %v546 = vlaneseq
    %v547 = vshrl.u32 %v546, 7
    %vm548 = vcmp.lt.s32.totalorder %v547, 1
    %v549 = vsel %vm548, %v544, %v545
    %v550 = vsel %vm548, %v545, %v544
    %v551 = vrot.slane %v542, 1
    %v552 = vrot.slane %v543, 1
    %vm553 = vcmp.lt.s32.totalorder %v547, 7
    %v554 = vsel %vm553, %v551, %v552
    %v555 = vsel %vm553, %v552, %v551
    %558 = vrot.lane.b32.xlu0 %v542, 32
    %v559 = vpop.permute.xlu0 %558
    %560 = vrot.lane.b32.xlu0 %v543, 32
    %v561 = vpop.permute.xlu0 %560
    %566 = vrot.lane.b32.xlu0 %v554, 64
    %v567 = vpop.permute.xlu0 %566
    %568 = vrot.lane.b32.xlu0 %v555, 64
    %v569 = vpop.permute.xlu0 %568
    %v572 = vsel %vm81, %v550, %v559
    %v573 = vsel %vm81, %v549, %v561
    %v574 = vsel %vm414, %v572, %v567
    %v575 = vsel %vm414, %v573, %v569
    %v576 = vld [vmem:[%s10] sm:$0xf]
    %v577 = vld [vmem:[%s10 + $0x4] sm:$0xf]
    %v578 = vld [vmem:[%s10 + $0x8] sm:$0xf]
    %v579 = vld [vmem:[%s10 + $0xc] sm:$0xf]
    %v580 = vld [vmem:[%s10 + $0x10] sm:$0xf]
    %v581 = vld [vmem:[%s10 + $0x14] sm:$0xf]
    %v582 = vld [vmem:[%s10 + $0x18] sm:$0xf]
    %v583 = vld [vmem:[%s10 + $0x1c] sm:$0xf]
    %v584 = vld [vmem:[%s10 + $0x20] sm:$0xf]
    %v585 = vld [vmem:[%s10 + $0x24] sm:$0xf]
    %v586 = vld [vmem:[%s10 + $0x28] sm:$0xf]
    %v587 = vld [vmem:[%s10 + $0x2c] sm:$0xf]
    %v588 = vpack.c.bf16 %v575, %v574
    %v601 = vunpack.c.l.b16 %v576
    %v602 = vunpack.c.l.b16 %v577
    %v603 = vunpack.c.l.b16 %v578
    %v604 = vunpack.c.l.b16 %v579
    %v605 = vunpack.c.l.b16 %v580
    %v606 = vunpack.c.l.b16 %v581
    %v607 = vunpack.c.l.b16 %v582
    %v608 = vunpack.c.l.b16 %v583
    %v609 = vunpack.c.l.b16 %v584
    %v610 = vunpack.c.l.b16 %v585
    %v611 = vunpack.c.l.b16 %v586
    %v612 = vunpack.c.l.b16 %v587
    %v613 = vpack.c.b16 %v602, %v601
    %v614 = vpack.c.b16 %v604, %v603
    %v615 = vpack.c.b16 %v606, %v605
    %v616 = vpack.c.b16 %v608, %v607
    %v617 = vpack.c.b16 %v610, %v609
    %v618 = vpack.c.b16 %v612, %v611
    %vm625 = vcmask 785408
    %v627 = vsel %vm625, %v588, 0
    %629 = vmatprep.subr.bf16.mxu0 0
    %630 = vmatpush1.bf16.msra.mxu0 0
    %631 = vmatprep.subr.bf16.mxu0 0
    %632 = vmatpush1.bf16.msra.mxu0 0
    %633 = vmatprep.subr.bf16.mxu0 0
    %634 = vmatpush1.bf16.msra.mxu0 %v618
    %635 = vmatprep.subr.bf16.mxu0 0
    %636 = vmatpush1.bf16.msra.mxu0 %v617
    %637 = vmatprep.subr.bf16.mxu0 0
    %638 = vmatpush1.bf16.msra.mxu0 %v616
    %639 = vmatprep.subr.bf16.mxu0 0
    %640 = vmatpush1.bf16.msra.mxu0 %v615
    %641 = vmatprep.subr.bf16.mxu0 0
    %642 = vmatpush1.bf16.msra.mxu0 %v614
    %643 = vmatprep.subr.bf16.mxu0 0
    %644 = vmatpush1.bf16.msra.mxu0 %v613
    %645 = vmatprep.subr.bf16.mxu0 0
    %646 = vmatpush2.bf16.msra.mxu0 0
    %647 = vmatprep.subr.bf16.mxu0 0
    %648 = vmatpush2.bf16.msra.mxu0 0
    %649 = vmatprep.subr.bf16.mxu0 0
    %650 = vmatpush2.bf16.msra.mxu0 0
    %651 = vmatprep.subr.bf16.mxu0 0
    %652 = vmatpush2.bf16.msra.mxu0 0
    %653 = vmatprep.subr.bf16.mxu0 0
    %654 = vmatpush2.bf16.msra.mxu0 0
    %655 = vmatprep.subr.bf16.mxu0 0
    %656 = vmatpush2.bf16.msra.mxu0 0
    %657 = vmatprep.subr.bf16.mxu0 0
    %658 = vmatpush2.bf16.msra.mxu0 0
    %659 = vmatprep.subr.bf16.mxu0 0
    %660 = vmatpush2.bf16.msra.mxu0 0
    %661 = vmatprep.mubr.bf16.mxu0 0
    %662 = vmatmul.mubr.bf16.gmra.mxu0 %v627
    %v663 = vpop.f32.mrf.mxu0
    %v664 = vadd.f32 0.0, %v663
    %v665 = vpop.f32.mrf.mxu0
    %v666 = vpop.f32.mrf.mxu0
    %v667 = vadd.f32 0.0, %v666
    %v668 = vpop.f32.mrf.mxu0
    %669 = vdwg.mxu0
    %v670 = vld [vmem:[%s12] sm:$0x1]
    %v671 = vld [vmem:[%s13] sm:$0x1]
    %v672 = vsel %vm81, %v536, 0.0
    %673 = vadd.xlane.f32.xlu0 %v672
    %v674 = vpop.xlane.xlu0 %673
    %v675 = vsel %vm81, %v537, 0.0
    %676 = vadd.xlane.f32.xlu0 %v675
    %v677 = vpop.xlane.xlu0 %676
    %v678 = vrcp.pop 32.0
    %v679 = vmul.f32 %v674, %v678
    %v680 = vmul.f32 %v677, %v678
    %v681 = vsub.f32 %v536, %v679
    %v682 = vsub.f32 %v537, %v680
    %v683 = vmul.f32 %v681, %v681
    %v684 = vmul.f32 %v682, %v682
    %v685 = vsel %vm81, %v683, 0.0
    %686 = vadd.xlane.f32.xlu0 %v685
    %v687 = vpop.xlane.xlu0 %686
    %v688 = vsel %vm81, %v684, 0.0
    %689 = vadd.xlane.f32.xlu0 %v688
    %v690 = vpop.xlane.xlu0 %689
    %v691 = vmul.f32 %v687, %v678
    %v692 = vmul.f32 %v690, %v678
    %v693 = vadd.f32 %v691, 1e-05
    %v694 = vadd.f32 %v692, 1e-05
    %v695 = vrsqrt.pop %v693
    %v696 = vrsqrt.pop %v694
    %v697 = vmul.f32 %v681, %v695
    %v698 = vmul.f32 %v682, %v696
    %v700 = vlaneseq
    %v701 = vshrl.u32 %v700, 7
    %v702 = vsub.s32 0, %v701
    %v703 = vrot.slane %v670, %v702
    %v705 = vmul.f32 %v697, %v703
    %v706 = vmul.f32 %v698, %v703
    %v708 = vlaneseq
    %v709 = vshrl.u32 %v708, 7
    %v710 = vsub.s32 0, %v709
    %v711 = vrot.slane %v671, %v710
    %v713 = vadd.f32 %v705, %v711
    %v714 = vadd.f32 %v706, %v711
    %v715 = vsel %vm81, %v713, 0.0
    %v716 = vsel %vm81, %v714, 0.0
    %v717 = vadd.f32 %v715, %v716
    %v718 = vrot.slane %v717, 4
    %v719 = vadd.f32 %v717, %v718
    %v720 = vrot.slane %v719, 2
    %v721 = vadd.f32 %v719, %v720
    %v722 = vrot.slane %v721, 1
    %v723 = vadd.f32 %v721, %v722
    %v724 = vrcp.pop 16.0
    %v725 = vmul.f32 %v723, %v724
    %v726 = vsub.f32 %v713, %v725
    %v727 = vsub.f32 %v714, %v725
    %v728 = vld [vmem:[%s11] sm:$0xff]
    %v729 = vld [vmem:[%s11 + $0x8] sm:$0xff]
    %v730 = vadd.f32 %v728, %v664
    %v731 = vadd.f32 %v729, %v667
    %v732 = vld [vmem:[%s14] sm:$0xf]
    %v733 = vld [vmem:[%s14 + $0x4] sm:$0xf]
    %v734 = vld [vmem:[%s14 + $0x8] sm:$0xf]
    %v735 = vld [vmem:[%s14 + $0xc] sm:$0xf]
    %v736 = vpack.c.bf16 %v727, %v726
    %v741 = vunpack.c.l.b16 %v732
    %v742 = vunpack.c.l.b16 %v733
    %v743 = vunpack.c.l.b16 %v734
    %v744 = vunpack.c.l.b16 %v735
    %v745 = vpack.c.b16 %v742, %v741
    %v746 = vpack.c.b16 %v744, %v743
    %v750 = vsel %vm81, %v736, 0
    %752 = vmatprep.subr.bf16.mxu0 0
    %753 = vmatpush1.bf16.msra.mxu0 0
    %754 = vmatprep.subr.bf16.mxu0 0
    %755 = vmatpush1.bf16.msra.mxu0 0
    %756 = vmatprep.subr.bf16.mxu0 0
    %757 = vmatpush1.bf16.msra.mxu0 0
    %758 = vmatprep.subr.bf16.mxu0 0
    %759 = vmatpush1.bf16.msra.mxu0 0
    %760 = vmatprep.subr.bf16.mxu0 0
    %761 = vmatpush1.bf16.msra.mxu0 0
    %762 = vmatprep.subr.bf16.mxu0 0
    %763 = vmatpush1.bf16.msra.mxu0 0
    %764 = vmatprep.subr.bf16.mxu0 0
    %765 = vmatpush1.bf16.msra.mxu0 %v746
    %766 = vmatprep.subr.bf16.mxu0 0
    %767 = vmatpush1.bf16.msra.mxu0 %v745
    %768 = vmatprep.subr.bf16.mxu0 0
    %769 = vmatpush2.bf16.msra.mxu0 0
    %770 = vmatprep.subr.bf16.mxu0 0
    %771 = vmatpush2.bf16.msra.mxu0 0
    %772 = vmatprep.subr.bf16.mxu0 0
    %773 = vmatpush2.bf16.msra.mxu0 0
    %774 = vmatprep.subr.bf16.mxu0 0
    %775 = vmatpush2.bf16.msra.mxu0 0
    %776 = vmatprep.subr.bf16.mxu0 0
    %777 = vmatpush2.bf16.msra.mxu0 0
    %778 = vmatprep.subr.bf16.mxu0 0
    %779 = vmatpush2.bf16.msra.mxu0 0
    %780 = vmatprep.subr.bf16.mxu0 0
    %781 = vmatpush2.bf16.msra.mxu0 0
    %782 = vmatprep.subr.bf16.mxu0 0
    %783 = vmatpush2.bf16.msra.mxu0 0
    %784 = vmatprep.mubr.bf16.mxu0 0
    %785 = vmatmul.mubr.bf16.gmra.mxu0 %v750
    %v786 = vpop.f32.mrf.mxu0
    %v787 = vadd.f32 0.0, %v786
    %v788 = vpop.f32.mrf.mxu0
    %v789 = vpop.f32.mrf.mxu0
    %v790 = vadd.f32 0.0, %v789
    %v791 = vpop.f32.mrf.mxu0
    %792 = vdwg.mxu0
    %v793 = vadd.f32 %v730, %v787
    %v794 = vadd.f32 %v731, %v790
    %v795 = vld [vmem:[%s15] sm:$0x1]
    %v797 = vlaneseq
    %v798 = vshrl.u32 %v797, 7
    %v799 = vsub.s32 0, %v798
    %v800 = vrot.slane %v795, %v799
    %v802 = vadd.f32 %v793, %v800
    %v803 = vadd.f32 %v794, %v800
    %vm804 = vcmask 31744
    %805 = vst.msk [vmem:[%s16] sm:$0xff] %vm804, %v802
    %806 = vst.msk [vmem:[%s16 + $0x8] sm:$0xff] %vm804, %v803
    %s807 = scalar_lea.vmem %s2, 16
    %v808 = vld [vmem:[%s807] sm:$0xff]
    %v809 = vld [vmem:[%s807 + $0x8] sm:$0xff]
    %810 = vst.msk [vmem:[#allocation2] sm:$0xff] %vm81, %v808
    %811 = vst.msk [vmem:[#allocation2 + $0x8] sm:$0xff] %vm81, %v809
    %812 = vst.msk [vmem:[#allocation2 + $0x10] sm:$0xff] %vm81, %v808
    %813 = vst.msk [vmem:[#allocation2 + $0x18] sm:$0xff] %vm81, %v809
    %s814 = sld [smem:[#allocation5 + $0x80]]
    %s815 = sld [smem:[#allocation3 + $0x80]]
    %s816 = scalar_lea.vmem [#allocation2], %s815
    %v817 = vld [vmem:[%s816] sm:$0xff]
    %v818 = vld [vmem:[%s816 + $0x8] sm:$0xff]
    %v819 = vstv %s814
    %v820 = vmul.f32 %v819, %v817
    %v821 = vmul.f32 %v819, %v818
    %v822 = vadd.f32 %v820, 0.0
    %v823 = vadd.f32 %v821, 0.0
    %s824 = sld [smem:[#allocation5 + $0x81]]
    %s825 = sld [smem:[#allocation3 + $0x81]]
    %s826 = scalar_lea.vmem [#allocation2], %s825
    %v827 = vld [vmem:[%s826] sm:$0xff]
    %v828 = vld [vmem:[%s826 + $0x8] sm:$0xff]
    %v829 = vstv %s824
    %v830 = vmul.f32 %v829, %v827
    %v831 = vmul.f32 %v829, %v828
    %v832 = vadd.f32 %v822, %v830
    %v833 = vadd.f32 %v823, %v831
    %s834 = scalar_lea.vmem %s3, 16
    %v835 = vld [vmem:[%s834] sm:$0xff]
    %v836 = vld [vmem:[%s834 + $0x8] sm:$0xff]
    %v837 = vld [vmem:[%s5] sm:$0xf]
    %v838 = vld [vmem:[%s5 + $0x4] sm:$0xf]
    %v839 = vld [vmem:[%s5 + $0x8] sm:$0xf]
    %v840 = vld [vmem:[%s5 + $0xc] sm:$0xf]
    %v841 = vpack.c.bf16 %v833, %v832
    %v846 = vunpack.c.l.b16 %v837
    %v847 = vunpack.c.l.b16 %v838
    %v848 = vunpack.c.l.b16 %v839
    %v849 = vunpack.c.l.b16 %v840
    %v850 = vpack.c.b16 %v847, %v846
    %v851 = vpack.c.b16 %v849, %v848
    %v855 = vsel %vm81, %v841, 0
    %857 = vmatprep.subr.bf16.mxu0 0
    %858 = vmatpush1.bf16.msra.mxu0 0
    %859 = vmatprep.subr.bf16.mxu0 0
    %860 = vmatpush1.bf16.msra.mxu0 0
    %861 = vmatprep.subr.bf16.mxu0 0
    %862 = vmatpush1.bf16.msra.mxu0 0
    %863 = vmatprep.subr.bf16.mxu0 0
    %864 = vmatpush1.bf16.msra.mxu0 0
    %865 = vmatprep.subr.bf16.mxu0 0
    %866 = vmatpush1.bf16.msra.mxu0 0
    %867 = vmatprep.subr.bf16.mxu0 0
    %868 = vmatpush1.bf16.msra.mxu0 0
    %869 = vmatprep.subr.bf16.mxu0 0
    %870 = vmatpush1.bf16.msra.mxu0 %v851
    %871 = vmatprep.subr.bf16.mxu0 0
    %872 = vmatpush1.bf16.msra.mxu0 %v850
    %873 = vmatprep.subr.bf16.mxu0 0
    %874 = vmatpush2.bf16.msra.mxu0 0
    %875 = vmatprep.subr.bf16.mxu0 0
    %876 = vmatpush2.bf16.msra.mxu0 0
    %877 = vmatprep.subr.bf16.mxu0 0
    %878 = vmatpush2.bf16.msra.mxu0 0
    %879 = vmatprep.subr.bf16.mxu0 0
    %880 = vmatpush2.bf16.msra.mxu0 0
    %881 = vmatprep.subr.bf16.mxu0 0
    %882 = vmatpush2.bf16.msra.mxu0 0
    %883 = vmatprep.subr.bf16.mxu0 0
    %884 = vmatpush2.bf16.msra.mxu0 0
    %885 = vmatprep.subr.bf16.mxu0 0
    %886 = vmatpush2.bf16.msra.mxu0 0
    %887 = vmatprep.subr.bf16.mxu0 0
    %888 = vmatpush2.bf16.msra.mxu0 0
    %889 = vmatprep.mubr.bf16.mxu0 0
    %890 = vmatmul.mubr.bf16.gmra.mxu0 %v855
    %v891 = vpop.f32.mrf.mxu0
    %v892 = vadd.f32 0.0, %v891
    %v893 = vpop.f32.mrf.mxu0
    %v894 = vpop.f32.mrf.mxu0
    %v895 = vadd.f32 0.0, %v894
    %v896 = vpop.f32.mrf.mxu0
    %897 = vdwg.mxu0
    %v898 = vadd.f32 %v835, %v892
    %v899 = vadd.f32 %v836, %v895
    %v900 = vld [vmem:[%s6] sm:$0x1]
    %v902 = vlaneseq
    %v903 = vshrl.u32 %v902, 7
    %v904 = vsub.s32 0, %v903
    %v905 = vrot.slane %v900, %v904
    %v907 = vadd.f32 %v898, %v905
    %v908 = vadd.f32 %v899, %v905
    %v909 = vld [vmem:[%s7] sm:$0xff]
    %v910 = vld [vmem:[%s7 + $0x8] sm:$0xff]
    %v912 = vsel %vm182, %v909, 0
    %v915 = vsel %vm182, %v910, 0
    %917 = vmatprep.subr.mxu0 0.0
    %918 = vmatpush1.msra.mxu0 0.0
    %919 = vmatprep.subr.mxu0 0.0
    %920 = vmatpush1.msra.mxu0 0.0
    %921 = vmatprep.subr.mxu0 0.0
    %922 = vmatpush1.msra.mxu0 0.0
    %923 = vmatprep.subr.mxu0 0.0
    %924 = vmatpush1.msra.mxu0 0.0
    %925 = vmatprep.subr.mxu0 0.0
    %926 = vmatpush1.msra.mxu0 0.0
    %927 = vmatprep.subr.mxu0 0.0
    %928 = vmatpush1.msra.mxu0 0.0
    %929 = vmatprep.subr.mxu0 0.0
    %930 = vmatpush1.msra.mxu0 0.0
    %931 = vmatprep.subr.mxu0 0.0
    %932 = vmatpush1.msra.mxu0 0.0
    %933 = vmatprep.subr.mxu0 0.0
    %934 = vmatpush1.msra.mxu0 0.0
    %935 = vmatprep.subr.mxu0 0.0
    %936 = vmatpush1.msra.mxu0 0.0
    %937 = vmatprep.subr.mxu0 0.0
    %938 = vmatpush1.msra.mxu0 0.0
    %939 = vmatprep.subr.mxu0 0.0
    %940 = vmatpush1.msra.mxu0 0.0
    %941 = vmatprep.subr.mxu0 0.0
    %942 = vmatpush1.msra.mxu0 0.0
    %943 = vmatprep.subr.mxu0 0.0
    %944 = vmatpush1.msra.mxu0 0.0
    %945 = vmatprep.subr.mxu0 0.0
    %946 = vmatpush1.msra.mxu0 %v908
    %947 = vmatprep.subr.mxu0 0.0
    %948 = vmatpush1.msra.mxu0 %v907
    %949 = vmatprep.subr.mxu0 0.0
    %950 = vmatpush2.msra.mxu0 0.0
    %951 = vmatprep.subr.mxu0 0.0
    %952 = vmatpush2.msra.mxu0 0.0
    %953 = vmatprep.subr.mxu0 0.0
    %954 = vmatpush2.msra.mxu0 0.0
    %955 = vmatprep.subr.mxu0 0.0
    %956 = vmatpush2.msra.mxu0 0.0
    %957 = vmatprep.subr.mxu0 0.0
    %958 = vmatpush2.msra.mxu0 0.0
    %959 = vmatprep.subr.mxu0 0.0
    %960 = vmatpush2.msra.mxu0 0.0
    %961 = vmatprep.subr.mxu0 0.0
    %962 = vmatpush2.msra.mxu0 0.0
    %963 = vmatprep.subr.mxu0 0.0
    %964 = vmatpush2.msra.mxu0 0.0
    %965 = vmatprep.subr.mxu0 0.0
    %966 = vmatpush2.msra.mxu0 0.0
    %967 = vmatprep.subr.mxu0 0.0
    %968 = vmatpush2.msra.mxu0 0.0
    %969 = vmatprep.subr.mxu0 0.0
    %970 = vmatpush2.msra.mxu0 0.0
    %971 = vmatprep.subr.mxu0 0.0
    %972 = vmatpush2.msra.mxu0 0.0
    %973 = vmatprep.subr.mxu0 0.0
    %974 = vmatpush2.msra.mxu0 0.0
    %975 = vmatprep.subr.mxu0 0.0
    %976 = vmatpush2.msra.mxu0 0.0
    %977 = vmatprep.subr.mxu0 0.0
    %978 = vmatpush2.msra.mxu0 0.0
    %979 = vmatprep.subr.mxu0 0.0
    %980 = vmatpush2.msra.mxu0 0.0
    %981 = vmatprep.mubr.f32.mxu0 0.0
    %982 = vmatmul.mubr.f32.gmra.mxu0 %v912
    %v983 = vpop.f32.mrf.mxu0
    %v984 = vadd.f32 0.0, %v983
    %v985 = vpop.f32.mrf.mxu0
    %986 = vmatprep.mubr.f32.mxu0 0.0
    %987 = vmatmul.mubr.f32.gmra.mxu0 %v915
    %v988 = vpop.f32.mrf.mxu0
    %v989 = vadd.f32 0.0, %v988
    %v990 = vpop.f32.mrf.mxu0
    %991 = vdwg.mxu0
    %v992 = vsub.f32 %v907, %v984
    %v993 = vsub.f32 %v908, %v989
    %v994 = vld [vmem:[%s8] sm:$0xf]
    %v995 = vld [vmem:[%s8 + $0x4] sm:$0xf]
    %v996 = vld [vmem:[%s8 + $0x8] sm:$0xf]
    %v997 = vld [vmem:[%s8 + $0xc] sm:$0xf]
    %v998 = vpack.c.bf16 %v993, %v992
    %v1003 = vunpack.c.l.b16 %v994
    %v1004 = vunpack.c.l.b16 %v995
    %v1005 = vunpack.c.l.b16 %v996
    %v1006 = vunpack.c.l.b16 %v997
    %v1007 = vpack.c.b16 %v1004, %v1003
    %v1008 = vpack.c.b16 %v1006, %v1005
    %v1012 = vsel %vm81, %v998, 0
    %1014 = vmatprep.subr.bf16.mxu0 0
    %1015 = vmatpush1.bf16.msra.mxu0 0
    %1016 = vmatprep.subr.bf16.mxu0 0
    %1017 = vmatpush1.bf16.msra.mxu0 0
    %1018 = vmatprep.subr.bf16.mxu0 0
    %1019 = vmatpush1.bf16.msra.mxu0 0
    %1020 = vmatprep.subr.bf16.mxu0 0
    %1021 = vmatpush1.bf16.msra.mxu0 0
    %1022 = vmatprep.subr.bf16.mxu0 0
    %1023 = vmatpush1.bf16.msra.mxu0 0
    %1024 = vmatprep.subr.bf16.mxu0 0
    %1025 = vmatpush1.bf16.msra.mxu0 0
    %1026 = vmatprep.subr.bf16.mxu0 0
    %1027 = vmatpush1.bf16.msra.mxu0 %v1008
    %1028 = vmatprep.subr.bf16.mxu0 0
    %1029 = vmatpush1.bf16.msra.mxu0 %v1007
    %1030 = vmatprep.subr.bf16.mxu0 0
    %1031 = vmatpush2.bf16.msra.mxu0 0
    %1032 = vmatprep.subr.bf16.mxu0 0
    %1033 = vmatpush2.bf16.msra.mxu0 0
    %1034 = vmatprep.subr.bf16.mxu0 0
    %1035 = vmatpush2.bf16.msra.mxu0 0
    %1036 = vmatprep.subr.bf16.mxu0 0
    %1037 = vmatpush2.bf16.msra.mxu0 0
    %1038 = vmatprep.subr.bf16.mxu0 0
    %1039 = vmatpush2.bf16.msra.mxu0 0
    %1040 = vmatprep.subr.bf16.mxu0 0
    %1041 = vmatpush2.bf16.msra.mxu0 0
    %1042 = vmatprep.subr.bf16.mxu0 0
    %1043 = vmatpush2.bf16.msra.mxu0 0
    %1044 = vmatprep.subr.bf16.mxu0 0
    %1045 = vmatpush2.bf16.msra.mxu0 0
    %1046 = vmatprep.mubr.bf16.mxu0 0
    %1047 = vmatmul.mubr.bf16.gmra.mxu0 %v1012
    %v1048 = vpop.f32.mrf.mxu0
    %v1049 = vadd.f32 0.0, %v1048
    %v1050 = vpop.f32.mrf.mxu0
    %v1051 = vpop.f32.mrf.mxu0
    %v1052 = vadd.f32 0.0, %v1051
    %v1053 = vpop.f32.mrf.mxu0
    %1054 = vdwg.mxu0
    %v1055 = vmul.f32 %v1049, 0.5
    %v1056 = vmul.f32 %v1052, 0.5
    %v1057 = vmul.f32 %v1049, 0.70710677
    %v1058 = vmul.f32 %v1052, 0.70710677
    %vm1059 = vcmp.ge.f32.partialorder %v1057, 0.0
    %vm1060 = vcmp.ge.f32.partialorder %v1058, 0.0
    %v1061 = vsel %vm1059, 1.0, -1.0
    %v1062 = vsel %vm1060, 1.0, -1.0
    %v1063 = vand.u32 2147483647, %v1057
    %v1064 = vand.u32 2147483647, %v1058
    %v1065 = vmul.f32 %v1063, 0.3275911
    %v1066 = vmul.f32 %v1064, 0.3275911
    %v1067 = vadd.f32 %v1065, 1.0
    %v1068 = vadd.f32 %v1066, 1.0
    %v1069 = vrcp.pop %v1067
    %v1070 = vmul.f32 1.0, %v1069
    %v1071 = vrcp.pop %v1068
    %v1072 = vmul.f32 1.0, %v1071
    %v1073 = vmul.f32 %v1070, 1.0614054
    %v1074 = vmul.f32 %v1072, 1.0614054
    %v1075 = vadd.f32 %v1073, -1.4531521
    %v1076 = vadd.f32 %v1074, -1.4531521
    %v1077 = vmul.f32 %v1075, %v1070
    %v1078 = vmul.f32 %v1076, %v1072
    %v1079 = vadd.f32 %v1077, 1.4214138
    %v1080 = vadd.f32 %v1078, 1.4214138
    %v1081 = vmul.f32 %v1079, %v1070
    %v1082 = vmul.f32 %v1080, %v1072
    %v1083 = vadd.f32 %v1081, -0.28449672
    %v1084 = vadd.f32 %v1082, -0.28449672
    %v1085 = vmul.f32 %v1083, %v1070
    %v1086 = vmul.f32 %v1084, %v1072
    %v1087 = vadd.f32 %v1085, 0.2548296
    %v1088 = vadd.f32 %v1086, 0.2548296
    %v1089 = vmul.f32 %v1087, %v1070
    %v1090 = vmul.f32 %v1088, %v1072
    %v1091 = vsub.f32 0.0, %v1063
    %v1092 = vsub.f32 0.0, %v1064
    %v1093 = vmul.f32 %v1091, %v1063
    %v1094 = vmul.f32 %v1092, %v1064
    %v1095 = vmul.f32 %v1093, 1.442695
    %v1096 = vpow.pop %v1095
    %v1097 = vmul.f32 %v1094, 1.442695
    %v1098 = vpow.pop %v1097
    %v1099 = vmul.f32 %v1089, %v1096
    %v1100 = vmul.f32 %v1090, %v1098
    %v1101 = vsub.f32 1.0, %v1099
    %v1102 = vsub.f32 1.0, %v1100
    %v1103 = vmul.f32 %v1061, %v1101
    %v1104 = vmul.f32 %v1062, %v1102
    %v1105 = vadd.f32 %v1103, 1.0
    %v1106 = vadd.f32 %v1104, 1.0
    %v1107 = vmul.f32 %v1055, %v1105
    %v1108 = vmul.f32 %v1056, %v1106
    %v1109 = vld [vmem:[%s9] sm:$0xf]
    %v1110 = vld [vmem:[%s9 + $0x4] sm:$0xf]
    %v1111 = vld [vmem:[%s9 + $0x8] sm:$0xf]
    %v1112 = vld [vmem:[%s9 + $0xc] sm:$0xf]
    %v1113 = vld [vmem:[%s9 + $0x10] sm:$0xf]
    %v1114 = vld [vmem:[%s9 + $0x14] sm:$0xf]
    %v1115 = vld [vmem:[%s9 + $0x18] sm:$0xf]
    %v1116 = vld [vmem:[%s9 + $0x1c] sm:$0xf]
    %v1117 = vpack.c.bf16 %v1108, %v1107
    %v1126 = vunpack.c.l.b16 %v1109
    %v1127 = vunpack.c.l.b16 %v1110
    %v1128 = vunpack.c.l.b16 %v1111
    %v1129 = vunpack.c.l.b16 %v1112
    %v1130 = vunpack.c.l.b16 %v1113
    %v1131 = vunpack.c.l.b16 %v1114
    %v1132 = vunpack.c.l.b16 %v1115
    %v1133 = vunpack.c.l.b16 %v1116
    %v1134 = vpack.c.b16 %v1127, %v1126
    %v1135 = vpack.c.b16 %v1129, %v1128
    %v1136 = vpack.c.b16 %v1131, %v1130
    %v1137 = vpack.c.b16 %v1133, %v1132
    %v1143 = vsel %vm414, %v1117, 0
    %1145 = vmatprep.subr.bf16.mxu0 0
    %1146 = vmatpush1.bf16.msra.mxu0 0
    %1147 = vmatprep.subr.bf16.mxu0 0
    %1148 = vmatpush1.bf16.msra.mxu0 0
    %1149 = vmatprep.subr.bf16.mxu0 0
    %1150 = vmatpush1.bf16.msra.mxu0 0
    %1151 = vmatprep.subr.bf16.mxu0 0
    %1152 = vmatpush1.bf16.msra.mxu0 0
    %1153 = vmatprep.subr.bf16.mxu0 0
    %1154 = vmatpush1.bf16.msra.mxu0 %v1137
    %1155 = vmatprep.subr.bf16.mxu0 0
    %1156 = vmatpush1.bf16.msra.mxu0 %v1136
    %1157 = vmatprep.subr.bf16.mxu0 0
    %1158 = vmatpush1.bf16.msra.mxu0 %v1135
    %1159 = vmatprep.subr.bf16.mxu0 0
    %1160 = vmatpush1.bf16.msra.mxu0 %v1134
    %1161 = vmatprep.subr.bf16.mxu0 0
    %1162 = vmatpush2.bf16.msra.mxu0 0
    %1163 = vmatprep.subr.bf16.mxu0 0
    %1164 = vmatpush2.bf16.msra.mxu0 0
    %1165 = vmatprep.subr.bf16.mxu0 0
    %1166 = vmatpush2.bf16.msra.mxu0 0
    %1167 = vmatprep.subr.bf16.mxu0 0
    %1168 = vmatpush2.bf16.msra.mxu0 0
    %1169 = vmatprep.subr.bf16.mxu0 0
    %1170 = vmatpush2.bf16.msra.mxu0 0
    %1171 = vmatprep.subr.bf16.mxu0 0
    %1172 = vmatpush2.bf16.msra.mxu0 0
    %1173 = vmatprep.subr.bf16.mxu0 0
    %1174 = vmatpush2.bf16.msra.mxu0 0
    %1175 = vmatprep.subr.bf16.mxu0 0
    %1176 = vmatpush2.bf16.msra.mxu0 0
    %1177 = vmatprep.mubr.bf16.mxu0 0
    %1178 = vmatmul.mubr.bf16.gmra.mxu0 %v1143
    %v1179 = vpop.f32.mrf.mxu0
    %v1180 = vadd.f32 0.0, %v1179
    %v1181 = vpop.f32.mrf.mxu0
    %v1182 = vpop.f32.mrf.mxu0
    %v1183 = vadd.f32 0.0, %v1182
    %v1184 = vpop.f32.mrf.mxu0
    %1185 = vdwg.mxu0
    %v1186 = vadd.f32 %v992, %v1180
    %v1187 = vadd.f32 %v993, %v1183
    %1188 = vmatprep.subr.mxu0 0.0
    %1189 = vmatpush1.msra.mxu0 0.0
    %1190 = vmatprep.subr.mxu0 0.0
    %1191 = vmatpush1.msra.mxu0 0.0
    %1192 = vmatprep.subr.mxu0 0.0
    %1193 = vmatpush1.msra.mxu0 0.0
    %1194 = vmatprep.subr.mxu0 0.0
    %1195 = vmatpush1.msra.mxu0 0.0
    %1196 = vmatprep.subr.mxu0 0.0
    %1197 = vmatpush1.msra.mxu0 0.0
    %1198 = vmatprep.subr.mxu0 0.0
    %1199 = vmatpush1.msra.mxu0 0.0
    %1200 = vmatprep.subr.mxu0 0.0
    %1201 = vmatpush1.msra.mxu0 0.0
    %1202 = vmatprep.subr.mxu0 0.0
    %1203 = vmatpush1.msra.mxu0 0.0
    %1204 = vmatprep.subr.mxu0 0.0
    %1205 = vmatpush1.msra.mxu0 0.0
    %1206 = vmatprep.subr.mxu0 0.0
    %1207 = vmatpush1.msra.mxu0 0.0
    %1208 = vmatprep.subr.mxu0 0.0
    %1209 = vmatpush1.msra.mxu0 0.0
    %1210 = vmatprep.subr.mxu0 0.0
    %1211 = vmatpush1.msra.mxu0 0.0
    %1212 = vmatprep.subr.mxu0 0.0
    %1213 = vmatpush1.msra.mxu0 0.0
    %1214 = vmatprep.subr.mxu0 0.0
    %1215 = vmatpush1.msra.mxu0 0.0
    %1216 = vmatprep.subr.mxu0 0.0
    %1217 = vmatpush1.msra.mxu0 %v1187
    %1218 = vmatprep.subr.mxu0 0.0
    %1219 = vmatpush1.msra.mxu0 %v1186
    %1220 = vmatprep.subr.mxu0 0.0
    %1221 = vmatpush2.msra.mxu0 0.0
    %1222 = vmatprep.subr.mxu0 0.0
    %1223 = vmatpush2.msra.mxu0 0.0
    %1224 = vmatprep.subr.mxu0 0.0
    %1225 = vmatpush2.msra.mxu0 0.0
    %1226 = vmatprep.subr.mxu0 0.0
    %1227 = vmatpush2.msra.mxu0 0.0
    %1228 = vmatprep.subr.mxu0 0.0
    %1229 = vmatpush2.msra.mxu0 0.0
    %1230 = vmatprep.subr.mxu0 0.0
    %1231 = vmatpush2.msra.mxu0 0.0
    %1232 = vmatprep.subr.mxu0 0.0
    %1233 = vmatpush2.msra.mxu0 0.0
    %1234 = vmatprep.subr.mxu0 0.0
    %1235 = vmatpush2.msra.mxu0 0.0
    %1236 = vmatprep.subr.mxu0 0.0
    %1237 = vmatpush2.msra.mxu0 0.0
    %1238 = vmatprep.subr.mxu0 0.0
    %1239 = vmatpush2.msra.mxu0 0.0
    %1240 = vmatprep.subr.mxu0 0.0
    %1241 = vmatpush2.msra.mxu0 0.0
    %1242 = vmatprep.subr.mxu0 0.0
    %1243 = vmatpush2.msra.mxu0 0.0
    %1244 = vmatprep.subr.mxu0 0.0
    %1245 = vmatpush2.msra.mxu0 0.0
    %1246 = vmatprep.subr.mxu0 0.0
    %1247 = vmatpush2.msra.mxu0 0.0
    %1248 = vmatprep.subr.mxu0 0.0
    %1249 = vmatpush2.msra.mxu0 0.0
    %1250 = vmatprep.subr.mxu0 0.0
    %1251 = vmatpush2.msra.mxu0 0.0
    %1252 = vmatprep.mubr.f32.mxu0 0.0
    %1253 = vmatmul.mubr.f32.gmra.mxu0 %v912
    %v1254 = vpop.f32.mrf.mxu0
    %v1255 = vadd.f32 0.0, %v1254
    %v1256 = vpop.f32.mrf.mxu0
    %1257 = vmatprep.mubr.f32.mxu0 0.0
    %1258 = vmatmul.mubr.f32.gmra.mxu0 %v915
    %v1259 = vpop.f32.mrf.mxu0
    %v1260 = vadd.f32 0.0, %v1259
    %v1261 = vpop.f32.mrf.mxu0
    %1262 = vdwg.mxu0
    %v1263 = vsub.f32 %v1186, %v1255
    %v1264 = vsub.f32 %v1187, %v1260
    %s1265 = scalar_lea.vmem %s4, 16
    %v1266 = vld [vmem:[%s1265] sm:$0xff]
    %v1267 = vld [vmem:[%s1265 + $0x8] sm:$0xff]
    %v1268 = vadd.f32 %v1266, %v984
    %v1269 = vadd.f32 %v1267, %v989
    %v1270 = vadd.f32 %v1268, %v1255
    %v1271 = vadd.f32 %v1269, %v1260
    %v1272 = vrot.slane %v1270, 7
    %v1273 = vrot.slane %v1271, 7
    %v1274 = vsel %vm548, %v1272, %v1273
    %v1275 = vsel %vm548, %v1273, %v1272
    %v1276 = vrot.slane %v1270, 1
    %v1277 = vrot.slane %v1271, 1
    %v1278 = vsel %vm553, %v1276, %v1277
    %v1279 = vsel %vm553, %v1277, %v1276
    %1282 = vrot.lane.b32.xlu0 %v1270, 32
    %v1283 = vpop.permute.xlu0 %1282
    %1284 = vrot.lane.b32.xlu0 %v1271, 32
    %v1285 = vpop.permute.xlu0 %1284
    %1290 = vrot.lane.b32.xlu0 %v1278, 64
    %v1291 = vpop.permute.xlu0 %1290
    %1292 = vrot.lane.b32.xlu0 %v1279, 64
    %v1293 = vpop.permute.xlu0 %1292
    %v1296 = vsel %vm81, %v1275, %v1283
    %v1297 = vsel %vm81, %v1274, %v1285
    %v1298 = vsel %vm414, %v1296, %v1291
    %v1299 = vsel %vm414, %v1297, %v1293
    %v1300 = vld [vmem:[%s10] sm:$0xf]
    %v1301 = vld [vmem:[%s10 + $0x4] sm:$0xf]
    %v1302 = vld [vmem:[%s10 + $0x8] sm:$0xf]
    %v1303 = vld [vmem:[%s10 + $0xc] sm:$0xf]
    %v1304 = vld [vmem:[%s10 + $0x10] sm:$0xf]
    %v1305 = vld [vmem:[%s10 + $0x14] sm:$0xf]
    %v1306 = vld [vmem:[%s10 + $0x18] sm:$0xf]
    %v1307 = vld [vmem:[%s10 + $0x1c] sm:$0xf]
    %v1308 = vld [vmem:[%s10 + $0x20] sm:$0xf]
    %v1309 = vld [vmem:[%s10 + $0x24] sm:$0xf]
    %v1310 = vld [vmem:[%s10 + $0x28] sm:$0xf]
    %v1311 = vld [vmem:[%s10 + $0x2c] sm:$0xf]
    %v1312 = vpack.c.bf16 %v1299, %v1298
    %v1325 = vunpack.c.l.b16 %v1300
    %v1326 = vunpack.c.l.b16 %v1301
    %v1327 = vunpack.c.l.b16 %v1302
    %v1328 = vunpack.c.l.b16 %v1303
    %v1329 = vunpack.c.l.b16 %v1304
    %v1330 = vunpack.c.l.b16 %v1305
    %v1331 = vunpack.c.l.b16 %v1306
    %v1332 = vunpack.c.l.b16 %v1307
    %v1333 = vunpack.c.l.b16 %v1308
    %v1334 = vunpack.c.l.b16 %v1309
    %v1335 = vunpack.c.l.b16 %v1310
    %v1336 = vunpack.c.l.b16 %v1311
    %v1337 = vpack.c.b16 %v1326, %v1325
    %v1338 = vpack.c.b16 %v1328, %v1327
    %v1339 = vpack.c.b16 %v1330, %v1329
    %v1340 = vpack.c.b16 %v1332, %v1331
    %v1341 = vpack.c.b16 %v1334, %v1333
    %v1342 = vpack.c.b16 %v1336, %v1335
    %v1350 = vsel %vm625, %v1312, 0
    %1352 = vmatprep.subr.bf16.mxu0 0
    %1353 = vmatpush1.bf16.msra.mxu0 0
    %1354 = vmatprep.subr.bf16.mxu0 0
    %1355 = vmatpush1.bf16.msra.mxu0 0
    %1356 = vmatprep.subr.bf16.mxu0 0
    %1357 = vmatpush1.bf16.msra.mxu0 %v1342
    %1358 = vmatprep.subr.bf16.mxu0 0
    %1359 = vmatpush1.bf16.msra.mxu0 %v1341
    %1360 = vmatprep.subr.bf16.mxu0 0
    %1361 = vmatpush1.bf16.msra.mxu0 %v1340
    %1362 = vmatprep.subr.bf16.mxu0 0
    %1363 = vmatpush1.bf16.msra.mxu0 %v1339
    %1364 = vmatprep.subr.bf16.mxu0 0
    %1365 = vmatpush1.bf16.msra.mxu0 %v1338
    %1366 = vmatprep.subr.bf16.mxu0 0
    %1367 = vmatpush1.bf16.msra.mxu0 %v1337
    %1368 = vmatprep.subr.bf16.mxu0 0
    %1369 = vmatpush2.bf16.msra.mxu0 0
    %1370 = vmatprep.subr.bf16.mxu0 0
    %1371 = vmatpush2.bf16.msra.mxu0 0
    %1372 = vmatprep.subr.bf16.mxu0 0
    %1373 = vmatpush2.bf16.msra.mxu0 0
    %1374 = vmatprep.subr.bf16.mxu0 0
    %1375 = vmatpush2.bf16.msra.mxu0 0
    %1376 = vmatprep.subr.bf16.mxu0 0
    %1377 = vmatpush2.bf16.msra.mxu0 0
    %1378 = vmatprep.subr.bf16.mxu0 0
    %1379 = vmatpush2.bf16.msra.mxu0 0
    %1380 = vmatprep.subr.bf16.mxu0 0
    %1381 = vmatpush2.bf16.msra.mxu0 0
    %1382 = vmatprep.subr.bf16.mxu0 0
    %1383 = vmatpush2.bf16.msra.mxu0 0
    %1384 = vmatprep.mubr.bf16.mxu0 0
    %1385 = vmatmul.mubr.bf16.gmra.mxu0 %v1350
    %v1386 = vpop.f32.mrf.mxu0
    %v1387 = vadd.f32 0.0, %v1386
    %v1388 = vpop.f32.mrf.mxu0
    %v1389 = vpop.f32.mrf.mxu0
    %v1390 = vadd.f32 0.0, %v1389
    %v1391 = vpop.f32.mrf.mxu0
    %1392 = vdwg.mxu0
    %v1393 = vld [vmem:[%s12] sm:$0x1]
    %v1394 = vld [vmem:[%s13] sm:$0x1]
    %v1395 = vsel %vm81, %v1263, 0.0
    %1396 = vadd.xlane.f32.xlu0 %v1395
    %v1397 = vpop.xlane.xlu0 %1396
    %v1398 = vsel %vm81, %v1264, 0.0
    %1399 = vadd.xlane.f32.xlu0 %v1398
    %v1400 = vpop.xlane.xlu0 %1399
    %v1401 = vmul.f32 %v1397, %v678
    %v1402 = vmul.f32 %v1400, %v678
    %v1403 = vsub.f32 %v1263, %v1401
    %v1404 = vsub.f32 %v1264, %v1402
    %v1405 = vmul.f32 %v1403, %v1403
    %v1406 = vmul.f32 %v1404, %v1404
    %v1407 = vsel %vm81, %v1405, 0.0
    %1408 = vadd.xlane.f32.xlu0 %v1407
    %v1409 = vpop.xlane.xlu0 %1408
    %v1410 = vsel %vm81, %v1406, 0.0
    %1411 = vadd.xlane.f32.xlu0 %v1410
    %v1412 = vpop.xlane.xlu0 %1411
    %v1413 = vmul.f32 %v1409, %v678
    %v1414 = vmul.f32 %v1412, %v678
    %v1415 = vadd.f32 %v1413, 1e-05
    %v1416 = vadd.f32 %v1414, 1e-05
    %v1417 = vrsqrt.pop %v1415
    %v1418 = vrsqrt.pop %v1416
    %v1419 = vmul.f32 %v1403, %v1417
    %v1420 = vmul.f32 %v1404, %v1418
    %v1422 = vlaneseq
    %v1423 = vshrl.u32 %v1422, 7
    %v1424 = vsub.s32 0, %v1423
    %v1425 = vrot.slane %v1393, %v1424
    %v1427 = vmul.f32 %v1419, %v1425
    %v1428 = vmul.f32 %v1420, %v1425
    %v1430 = vlaneseq
    %v1431 = vshrl.u32 %v1430, 7
    %v1432 = vsub.s32 0, %v1431
    %v1433 = vrot.slane %v1394, %v1432
    %v1435 = vadd.f32 %v1427, %v1433
    %v1436 = vadd.f32 %v1428, %v1433
    %v1437 = vsel %vm81, %v1435, 0.0
    %v1438 = vsel %vm81, %v1436, 0.0
    %v1439 = vadd.f32 %v1437, %v1438
    %v1440 = vrot.slane %v1439, 4
    %v1441 = vadd.f32 %v1439, %v1440
    %v1442 = vrot.slane %v1441, 2
    %v1443 = vadd.f32 %v1441, %v1442
    %v1444 = vrot.slane %v1443, 1
    %v1445 = vadd.f32 %v1443, %v1444
    %v1446 = vmul.f32 %v1445, %v724
    %v1447 = vsub.f32 %v1435, %v1446
    %v1448 = vsub.f32 %v1436, %v1446
    %s1449 = scalar_lea.vmem %s11, 16
    %v1450 = vld [vmem:[%s1449] sm:$0xff]
    %v1451 = vld [vmem:[%s1449 + $0x8] sm:$0xff]
    %v1452 = vadd.f32 %v1450, %v1387
    %v1453 = vadd.f32 %v1451, %v1390
    %v1454 = vld [vmem:[%s14] sm:$0xf]
    %v1455 = vld [vmem:[%s14 + $0x4] sm:$0xf]
    %v1456 = vld [vmem:[%s14 + $0x8] sm:$0xf]
    %v1457 = vld [vmem:[%s14 + $0xc] sm:$0xf]
    %v1458 = vpack.c.bf16 %v1448, %v1447
    %v1463 = vunpack.c.l.b16 %v1454
    %v1464 = vunpack.c.l.b16 %v1455
    %v1465 = vunpack.c.l.b16 %v1456
    %v1466 = vunpack.c.l.b16 %v1457
    %v1467 = vpack.c.b16 %v1464, %v1463
    %v1468 = vpack.c.b16 %v1466, %v1465
    %v1472 = vsel %vm81, %v1458, 0
    %1474 = vmatprep.subr.bf16.mxu0 0
    %1475 = vmatpush1.bf16.msra.mxu0 0
    %1476 = vmatprep.subr.bf16.mxu0 0
    %1477 = vmatpush1.bf16.msra.mxu0 0
    %1478 = vmatprep.subr.bf16.mxu0 0
    %1479 = vmatpush1.bf16.msra.mxu0 0
    %1480 = vmatprep.subr.bf16.mxu0 0
    %1481 = vmatpush1.bf16.msra.mxu0 0
    %1482 = vmatprep.subr.bf16.mxu0 0
    %1483 = vmatpush1.bf16.msra.mxu0 0
    %1484 = vmatprep.subr.bf16.mxu0 0
    %1485 = vmatpush1.bf16.msra.mxu0 0
    %1486 = vmatprep.subr.bf16.mxu0 0
    %1487 = vmatpush1.bf16.msra.mxu0 %v1468
    %1488 = vmatprep.subr.bf16.mxu0 0
    %1489 = vmatpush1.bf16.msra.mxu0 %v1467
    %1490 = vmatprep.subr.bf16.mxu0 0
    %1491 = vmatpush2.bf16.msra.mxu0 0
    %1492 = vmatprep.subr.bf16.mxu0 0
    %1493 = vmatpush2.bf16.msra.mxu0 0
    %1494 = vmatprep.subr.bf16.mxu0 0
    %1495 = vmatpush2.bf16.msra.mxu0 0
    %1496 = vmatprep.subr.bf16.mxu0 0
    %1497 = vmatpush2.bf16.msra.mxu0 0
    %1498 = vmatprep.subr.bf16.mxu0 0
    %1499 = vmatpush2.bf16.msra.mxu0 0
    %1500 = vmatprep.subr.bf16.mxu0 0
    %1501 = vmatpush2.bf16.msra.mxu0 0
    %1502 = vmatprep.subr.bf16.mxu0 0
    %1503 = vmatpush2.bf16.msra.mxu0 0
    %1504 = vmatprep.subr.bf16.mxu0 0
    %1505 = vmatpush2.bf16.msra.mxu0 0
    %1506 = vmatprep.mubr.bf16.mxu0 0
    %1507 = vmatmul.mubr.bf16.gmra.mxu0 %v1472
    %v1508 = vpop.f32.mrf.mxu0
    %v1509 = vadd.f32 0.0, %v1508
    %v1510 = vpop.f32.mrf.mxu0
    %v1511 = vpop.f32.mrf.mxu0
    %v1512 = vadd.f32 0.0, %v1511
    %v1513 = vpop.f32.mrf.mxu0
    %1514 = vdwg.mxu0
    %v1515 = vadd.f32 %v1452, %v1509
    %v1516 = vadd.f32 %v1453, %v1512
    %v1517 = vld [vmem:[%s15] sm:$0x1]
    %v1519 = vlaneseq
    %v1520 = vshrl.u32 %v1519, 7
    %v1521 = vsub.s32 0, %v1520
    %v1522 = vrot.slane %v1517, %v1521
    %v1524 = vadd.f32 %v1515, %v1522
    %v1525 = vadd.f32 %v1516, %v1522
    %s1526 = scalar_lea.vmem %s16, 16
    %1527 = vst.msk [vmem:[%s1526] sm:$0xff] %vm804, %v1524
    %1528 = vst.msk [vmem:[%s1526 + $0x8] sm:$0xff] %vm804, %v1525
    // Predicated region
    $region74: #{fwd.13} parent=1 // pred_check
      _
    $region75: #{fwd.13} parent=1 // pred_check_branch
      %1530 = sbr.rel (0) target = $region77
    $region76: #{fwd.13} parent=1 // pred_region
      _
    $region77: #{fwd.13} parent=1 // pred_fallthru
      _
    // Predicated region
    $region78: #{fwd.13} parent=1 // pred_check
      _
    $region79: #{fwd.13} parent=1 // pred_check_branch
      %1532 = sbr.rel (0) target = $region81
    $region80: #{fwd.13} parent=1 // pred_region
      _
    $region81: #{fwd.13} parent=1 // pred_fallthru
      _
    %1533 = vsyncpa [#allocation4], 1
    %1534 = vsyncpa [#allocation6], 1

</llo_original>
